<compile_context>
chip_gen: v7x
topology: tpu7x:2x2x1
jax: 0.10.0
libtpu: 0.0.40
codegen_flags: <defaults>
</compile_context>

<pallas_src>
import functools

import jax
import jax.numpy as jnp
from jax import lax
from jax.experimental import pallas as pl
from jax.experimental.pallas import tpu as pltpu


def _resnet_block_kernel(x_ref, w1_ref, w2_ref, o_ref, *, H, W, compute_dtype):
    """x_ref/o_ref: (1, C, H*W); w*_ref: (9, C, C) with tap index t = dy*3 + dx."""
    C = x_ref.shape[1]
    L = H * W
    prec = (lax.Precision.HIGHEST if compute_dtype == jnp.float32
            else lax.Precision.DEFAULT)

    # Lane-only boundary masks for the in-kernel ReflectionPad2d(1).  (1, L)
    # only: they depend purely on the lane index and broadcast over sublanes.
    lane = lax.broadcasted_iota(jnp.int32, (1, L), 1)
    colx = lane % W
    is_x0 = colx == 0                              # x == 0
    is_xl = colx == (W - 1)                        # x == W-1
    is_y0 = lane < W                               # y == 0
    is_yl = lane >= (H - 1) * W                    # y == H-1

    def conv3x3_instnorm(a, w_ref):
        """a: (C, L) f32.  Reflection-padded 3x3 conv as 9 accumulated MXU
        matmuls (no im2col), then InstanceNorm2d (affine=False, eps=1e-5)."""
        left = pltpu.roll(a, 1, axis=1)            # left[f]  = a[f-1]
        right = pltpu.roll(a, L - 1, axis=1)       # right[f] = a[f+1]
        sx = (jnp.where(is_x0, right, left),       # column x-1 (reflect @ x=0)
              a,                                   # column x
              jnp.where(is_xl, left, right))       # column x+1 (reflect @ x=W-1)
        acc = None
        for dx in range(3):
            s = sx[dx]
            up = pltpu.roll(s, W, axis=1)          # row y-1
            dn = pltpu.roll(s, L - W, axis=1)      # row y+1
            rows = (jnp.where(is_y0, dn, up),      # dy=0 (reflect @ y=0)
                    s,                             # dy=1
                    jnp.where(is_yl, up, dn))      # dy=2 (reflect @ y=H-1)
            for dy in range(3):
                t = dy * 3 + dx
                # Cast only at the MXU input; f32 accumulation.
                p = jnp.dot(w_ref[t], rows[dy].astype(compute_dtype),
                            preferred_element_type=jnp.float32,
                            precision=prec)
                acc = p if acc is None else acc + p
        # InstanceNorm2d, one-pass sum / sum-of-squares stats in f32.
        inv_l = 1.0 / L
        mean = jnp.sum(acc, axis=-1, keepdims=True) * inv_l
        var = jnp.sum(acc * acc, axis=-1, keepdims=True) * inv_l - mean * mean
        var = jnp.maximum(var, 0.0)                # guard one-pass cancellation
        return (acc - mean) * lax.rsqrt(var + 1e-5)

    h = conv3x3_instnorm(x_ref[0], w1_ref)
    h = jnp.where(h > 0, h, 0.2 * h)               # LeakyReLU(0.2)
    y = conv3x3_instnorm(h, w2_ref)
    o_ref[0] = (y + x_ref[0]).astype(o_ref.dtype)  # residual add, x read in place


def _vmem_limit_bytes():
    # ~3/4 of physical VMEM: ~96 MiB on v5e/v6e (128 MiB), ~48 MiB on v7x (64 MiB).
    try:
        cap = pltpu.get_tpu_info().vmem_capacity_bytes
    except Exception:  # conservative fallback if the query is unavailable
        cap = 64 * 1024 * 1024
    return int(max(16 * 1024 * 1024, min(cap * 3 // 4, 100 * 1024 * 1024)))


def resnet_block(x, params, *, compute_dtype=jnp.float32):
    """x: (N, C, H, W) float32.  params: (w1, w2), each OIHW (C, C, 3, 3).
    Conv biases are intentionally absent: InstanceNorm cancels them exactly."""
    w1, w2 = params
    N, C, H, W = x.shape
    L = H * W

    def prep_w(w):
        # (O, I, 3, 3) -> (3, 3, O, I) -> (9, O, I); t = dy*3 + dx matches the
        # in-kernel tap order.  Cast once here (bf16 for production).
        return jnp.transpose(w, (2, 3, 0, 1)).reshape(9, C, C).astype(compute_dtype)

    w1p, w2p = prep_w(w1), prep_w(w2)
    xf = x.reshape(N, C, L)                        # lane-dense, free reshape

    kernel = functools.partial(_resnet_block_kernel, H=H, W=W,
                               compute_dtype=compute_dtype)
    out = pl.pallas_call(
        kernel,
        out_shape=jax.ShapeDtypeStruct((N, C, L), jnp.float32),
        grid=(N,),
        in_specs=[
            pl.BlockSpec((1, C, L), lambda n: (n, 0, 0)),      # x (lane-dense)
            pl.BlockSpec((9, C, C), lambda n: (0, 0, 0)),      # w1 (grid-resident)
            pl.BlockSpec((9, C, C), lambda n: (0, 0, 0)),      # w2 (grid-resident)
        ],
        out_specs=pl.BlockSpec((1, C, L), lambda n: (n, 0, 0)),
        compiler_params=pltpu.CompilerParams(
            dimension_semantics=("parallel",),                 # megacore over N
            vmem_limit_bytes=_vmem_limit_bytes()),
    )(xf, w1p, w2p)
    return out.reshape(N, C, H, W)


def _reference(x, w1, b1, w2, b2):
    """Pure-JAX reference of the PyTorch forward (WITH conv biases)."""
    def conv(xp, w, b):
        y = lax.conv_general_dilated(
            xp, w, (1, 1), "VALID",
            dimension_numbers=("NCHW", "OIHW", "NCHW"),
            precision=lax.Precision.HIGHEST)
        return y + b[None, :, None, None]

    def inorm(y, eps=1e-5):
        m = jnp.mean(y, axis=(2, 3), keepdims=True)
        v = jnp.mean((y - m) ** 2, axis=(2, 3), keepdims=True)
        return (y - m) * lax.rsqrt(v + eps)

    xp = jnp.pad(x, ((0, 0), (0, 0), (1, 1), (1, 1)), mode="reflect")
    h = inorm(conv(xp, w1, b1))
    h = jnp.where(h > 0, h, 0.2 * h)
    hp = jnp.pad(h, ((0, 0), (0, 0), (1, 1), (1, 1)), mode="reflect")
    return inorm(conv(hp, w2, b2)) + x


if __name__ == "__main__":
    N, C, H, W = 2, 4, 16, 16
    key = jax.random.PRNGKey(0)
    kx, kw1, kb1, kw2, kb2 = jax.random.split(key, 5)

    x = jax.random.normal(kx, (N, C, H, W), jnp.float32)

    # Deterministic Conv2d-style (kaiming-uniform-ish) init, biases included.
    fan_in = C * 3 * 3
    bound = 1.0 / (fan_in ** 0.5)
    w1 = jax.random.uniform(kw1, (C, C, 3, 3), jnp.float32, -bound, bound)
    b1 = jax.random.uniform(kb1, (C,), jnp.float32, -bound, bound)
    w2 = jax.random.uniform(kw2, (C, C, 3, 3), jnp.float32, -bound, bound)
    b2 = jax.random.uniform(kb2, (C,), jnp.float32, -bound, bound)

    out = resnet_block(x, (w1, w2))                # kernel: biases cancelled by IN
    jax.block_until_ready(out)

    ref = _reference(x, w1, b1, w2, b2)            # reference keeps the biases
    err = float(jnp.max(jnp.abs(out - ref)))
    assert out.shape == (N, C, H, W) and out.dtype == jnp.float32
    assert jnp.allclose(out, ref, atol=1e-4, rtol=1e-4), f"max abs err {err}"
    print("KERNEL_OK")
</pallas_src>

<mosaic_0001>
module attributes {stable_mosaic.version = 11 : i64} {
  func.func @_resnet_block_kernel(%arg0: i32, %arg1: memref<1x4x256xf32, #tpu.memory_space<vmem>>, %arg2: memref<9x4x4xf32, #tpu.memory_space<vmem>>, %arg3: memref<9x4x4xf32, #tpu.memory_space<vmem>>, %arg4: memref<1x4x256xf32, #tpu.memory_space<vmem>>) attributes {dimension_semantics = [#tpu.dimension_semantics<parallel>], iteration_bounds = array<i64: 2>, scalar_prefetch = 0 : i64, scratch_operands = 0 : i64, tpu.core_type = #tpu.core_type<tc>, window_params = [{transform_indices = @transform_0, window_bounds = array<i64: 1, 4, 256>}, {pipeline_mode = #tpu.pipeline_mode<synchronous>, transform_indices = @transform_1, window_bounds = array<i64: 9, 4, 4>}, {pipeline_mode = #tpu.pipeline_mode<synchronous>, transform_indices = @transform_2, window_bounds = array<i64: 9, 4, 4>}, {transform_indices = @transform_3, window_bounds = array<i64: 1, 4, 256>}]} {
    %0 = tpu.iota {dimensions = array<i32: 1>} : vector<1x256xi32>
    %c16_i32 = arith.constant 16 : i32
    %c0_i32 = arith.constant 0 : i32
    %1 = arith.cmpi eq, %c16_i32, %c0_i32 : i32
    %c1_i32 = arith.constant 1 : i32
    %2 = arith.select %1, %c1_i32, %c16_i32 : i32
    %3 = vector.broadcast %2 : i32 to vector<1x256xi32>
    %4 = arith.remsi %0, %3 : vector<1x256xi32>
    %c0_i32_0 = arith.constant 0 : i32
    %5 = vector.broadcast %c0_i32_0 : i32 to vector<1x256xi32>
    %6 = arith.cmpi ne, %4, %5 : vector<1x256xi32>
    %c0_i32_1 = arith.constant 0 : i32
    %7 = vector.broadcast %c0_i32_1 : i32 to vector<1x256xi32>
    %8 = arith.cmpi slt, %4, %7 : vector<1x256xi32>
    %c0_i32_2 = arith.constant 0 : i32
    %9 = arith.cmpi slt, %2, %c0_i32_2 : i32
    %10 = vector.broadcast %9 : i1 to vector<1x256xi1>
    %11 = vector.broadcast %10 : vector<1x256xi1> to vector<1x256xi1>
    %12 = arith.xori %8, %11 : vector<1x256xi1>
    %13 = arith.andi %12, %6 : vector<1x256xi1>
    %14 = vector.broadcast %2 : i32 to vector<1x256xi32>
    %15 = arith.addi %4, %14 : vector<1x256xi32>
    %16 = arith.select %13, %15, %4 : vector<1x256xi1>, vector<1x256xi32>
    %c0_i32_3 = arith.constant 0 : i32
    %17 = vector.broadcast %c0_i32_3 : i32 to vector<1x256xi32>
    %18 = arith.cmpi eq, %16, %17 : vector<1x256xi32>
    %c15_i32 = arith.constant 15 : i32
    %19 = vector.broadcast %c15_i32 : i32 to vector<1x256xi32>
    %20 = arith.cmpi eq, %16, %19 : vector<1x256xi32>
    %c16_i32_4 = arith.constant 16 : i32
    %21 = vector.broadcast %c16_i32_4 : i32 to vector<1x256xi32>
    %22 = arith.cmpi slt, %0, %21 : vector<1x256xi32>
    %c240_i32 = arith.constant 240 : i32
    %23 = vector.broadcast %c240_i32 : i32 to vector<1x256xi32>
    %24 = arith.cmpi sge, %0, %23 : vector<1x256xi32>
    %c0 = arith.constant 0 : index
    %c0_5 = arith.constant 0 : index
    %c0_6 = arith.constant 0 : index
    %25 = vector.load %arg1[%c0, %c0_5, %c0_6] : memref<1x4x256xf32, #tpu.memory_space<vmem>>, vector<1x4x256xf32>
    %26 = vector.shape_cast %25 : vector<1x4x256xf32> to vector<4x256xf32>
    %c1_i32_7 = arith.constant 1 : i32
    %27 = tpu.dynamic_rotate %26 by %c1_i32_7 dim 1 : vector<4x256xf32>, i32 -> vector<4x256xf32>
    %c255_i32 = arith.constant 255 : i32
    %28 = tpu.dynamic_rotate %26 by %c255_i32 dim 1 : vector<4x256xf32>, i32 -> vector<4x256xf32>
    %29 = vector.shape_cast %18 : vector<1x256xi1> to vector<1x256xi1>
    %30 = vector.broadcast %29 : vector<1x256xi1> to vector<4x256xi1>
    %31 = arith.select %30, %28, %27 : vector<4x256xi1>, vector<4x256xf32>
    %32 = vector.shape_cast %20 : vector<1x256xi1> to vector<1x256xi1>
    %33 = vector.broadcast %32 : vector<1x256xi1> to vector<4x256xi1>
    %34 = arith.select %33, %27, %28 : vector<4x256xi1>, vector<4x256xf32>
    %c16_i32_8 = arith.constant 16 : i32
    %35 = tpu.dynamic_rotate %31 by %c16_i32_8 dim 1 : vector<4x256xf32>, i32 -> vector<4x256xf32>
    %c240_i32_9 = arith.constant 240 : i32
    %36 = tpu.dynamic_rotate %31 by %c240_i32_9 dim 1 : vector<4x256xf32>, i32 -> vector<4x256xf32>
    %37 = vector.shape_cast %22 : vector<1x256xi1> to vector<1x256xi1>
    %38 = vector.broadcast %37 : vector<1x256xi1> to vector<4x256xi1>
    %39 = arith.select %38, %36, %35 : vector<4x256xi1>, vector<4x256xf32>
    %40 = vector.shape_cast %24 : vector<1x256xi1> to vector<1x256xi1>
    %41 = vector.broadcast %40 : vector<1x256xi1> to vector<4x256xi1>
    %42 = arith.select %41, %35, %36 : vector<4x256xi1>, vector<4x256xf32>
    %c0_10 = arith.constant 0 : index
    %c0_11 = arith.constant 0 : index
    %c0_12 = arith.constant 0 : index
    %43 = vector.load %arg2[%c0_10, %c0_11, %c0_12] : memref<9x4x4xf32, #tpu.memory_space<vmem>>, vector<1x4x4xf32>
    %44 = vector.shape_cast %43 : vector<1x4x4xf32> to vector<4x4xf32>
    %cst = arith.constant dense<0.000000e+00> : vector<4x256xf32>
    %45 = tpu.matmul %44, %39, %cst {dimension_numbers = #tpu.dot_dimension_numbers<[1], [0], [0], [1], [0, 0, 1, 1], [], []>, precision = #tpu.contract_precision<fp32>} : vector<4x4xf32>, vector<4x256xf32>, vector<4x256xf32> -> vector<4x256xf32>
    %c3 = arith.constant 3 : index
    %c0_13 = arith.constant 0 : index
    %c0_14 = arith.constant 0 : index
    %46 = vector.load %arg2[%c3, %c0_13, %c0_14] : memref<9x4x4xf32, #tpu.memory_space<vmem>>, vector<1x4x4xf32>
    %47 = vector.shape_cast %46 : vector<1x4x4xf32> to vector<4x4xf32>
    %cst_15 = arith.constant dense<0.000000e+00> : vector<4x256xf32>
    %48 = tpu.matmul %47, %31, %cst_15 {dimension_numbers = #tpu.dot_dimension_numbers<[1], [0], [0], [1], [0, 0, 1, 1], [], []>, precision = #tpu.contract_precision<fp32>} : vector<4x4xf32>, vector<4x256xf32>, vector<4x256xf32> -> vector<4x256xf32>
    %49 = arith.addf %45, %48 : vector<4x256xf32>
    %c6 = arith.constant 6 : index
    %c0_16 = arith.constant 0 : index
    %c0_17 = arith.constant 0 : index
    %50 = vector.load %arg2[%c6, %c0_16, %c0_17] : memref<9x4x4xf32, #tpu.memory_space<vmem>>, vector<1x4x4xf32>
    %51 = vector.shape_cast %50 : vector<1x4x4xf32> to vector<4x4xf32>
    %cst_18 = arith.constant dense<0.000000e+00> : vector<4x256xf32>
    %52 = tpu.matmul %51, %42, %cst_18 {dimension_numbers = #tpu.dot_dimension_numbers<[1], [0], [0], [1], [0, 0, 1, 1], [], []>, precision = #tpu.contract_precision<fp32>} : vector<4x4xf32>, vector<4x256xf32>, vector<4x256xf32> -> vector<4x256xf32>
    %53 = arith.addf %49, %52 : vector<4x256xf32>
    %c16_i32_19 = arith.constant 16 : i32
    %54 = tpu.dynamic_rotate %26 by %c16_i32_19 dim 1 : vector<4x256xf32>, i32 -> vector<4x256xf32>
    %c240_i32_20 = arith.constant 240 : i32
    %55 = tpu.dynamic_rotate %26 by %c240_i32_20 dim 1 : vector<4x256xf32>, i32 -> vector<4x256xf32>
    %56 = vector.shape_cast %22 : vector<1x256xi1> to vector<1x256xi1>
    %57 = vector.broadcast %56 : vector<1x256xi1> to vector<4x256xi1>
    %58 = arith.select %57, %55, %54 : vector<4x256xi1>, vector<4x256xf32>
    %59 = vector.shape_cast %24 : vector<1x256xi1> to vector<1x256xi1>
    %60 = vector.broadcast %59 : vector<1x256xi1> to vector<4x256xi1>
    %61 = arith.select %60, %54, %55 : vector<4x256xi1>, vector<4x256xf32>
    %c1 = arith.constant 1 : index
    %c0_21 = arith.constant 0 : index
    %c0_22 = arith.constant 0 : index
    %62 = vector.load %arg2[%c1, %c0_21, %c0_22] : memref<9x4x4xf32, #tpu.memory_space<vmem>>, vector<1x4x4xf32>
    %63 = vector.shape_cast %62 : vector<1x4x4xf32> to vector<4x4xf32>
    %cst_23 = arith.constant dense<0.000000e+00> : vector<4x256xf32>
    %64 = tpu.matmul %63, %58, %cst_23 {dimension_numbers = #tpu.dot_dimension_numbers<[1], [0], [0], [1], [0, 0, 1, 1], [], []>, precision = #tpu.contract_precision<fp32>} : vector<4x4xf32>, vector<4x256xf32>, vector<4x256xf32> -> vector<4x256xf32>
    %65 = arith.addf %53, %64 : vector<4x256xf32>
    %c4 = arith.constant 4 : index
    %c0_24 = arith.constant 0 : index
    %c0_25 = arith.constant 0 : index
    %66 = vector.load %arg2[%c4, %c0_24, %c0_25] : memref<9x4x4xf32, #tpu.memory_space<vmem>>, vector<1x4x4xf32>
    %67 = vector.shape_cast %66 : vector<1x4x4xf32> to vector<4x4xf32>
    %cst_26 = arith.constant dense<0.000000e+00> : vector<4x256xf32>
    %68 = tpu.matmul %67, %26, %cst_26 {dimension_numbers = #tpu.dot_dimension_numbers<[1], [0], [0], [1], [0, 0, 1, 1], [], []>, precision = #tpu.contract_precision<fp32>} : vector<4x4xf32>, vector<4x256xf32>, vector<4x256xf32> -> vector<4x256xf32>
    %69 = arith.addf %65, %68 : vector<4x256xf32>
    %c7 = arith.constant 7 : index
    %c0_27 = arith.constant 0 : index
    %c0_28 = arith.constant 0 : index
    %70 = vector.load %arg2[%c7, %c0_27, %c0_28] : memref<9x4x4xf32, #tpu.memory_space<vmem>>, vector<1x4x4xf32>
    %71 = vector.shape_cast %70 : vector<1x4x4xf32> to vector<4x4xf32>
    %cst_29 = arith.constant dense<0.000000e+00> : vector<4x256xf32>
    %72 = tpu.matmul %71, %61, %cst_29 {dimension_numbers = #tpu.dot_dimension_numbers<[1], [0], [0], [1], [0, 0, 1, 1], [], []>, precision = #tpu.contract_precision<fp32>} : vector<4x4xf32>, vector<4x256xf32>, vector<4x256xf32> -> vector<4x256xf32>
    %73 = arith.addf %69, %72 : vector<4x256xf32>
    %c16_i32_30 = arith.constant 16 : i32
    %74 = tpu.dynamic_rotate %34 by %c16_i32_30 dim 1 : vector<4x256xf32>, i32 -> vector<4x256xf32>
    %c240_i32_31 = arith.constant 240 : i32
    %75 = tpu.dynamic_rotate %34 by %c240_i32_31 dim 1 : vector<4x256xf32>, i32 -> vector<4x256xf32>
    %76 = vector.shape_cast %22 : vector<1x256xi1> to vector<1x256xi1>
    %77 = vector.broadcast %76 : vector<1x256xi1> to vector<4x256xi1>
    %78 = arith.select %77, %75, %74 : vector<4x256xi1>, vector<4x256xf32>
    %79 = vector.shape_cast %24 : vector<1x256xi1> to vector<1x256xi1>
    %80 = vector.broadcast %79 : vector<1x256xi1> to vector<4x256xi1>
    %81 = arith.select %80, %74, %75 : vector<4x256xi1>, vector<4x256xf32>
    %c2 = arith.constant 2 : index
    %c0_32 = arith.constant 0 : index
    %c0_33 = arith.constant 0 : index
    %82 = vector.load %arg2[%c2, %c0_32, %c0_33] : memref<9x4x4xf32, #tpu.memory_space<vmem>>, vector<1x4x4xf32>
    %83 = vector.shape_cast %82 : vector<1x4x4xf32> to vector<4x4xf32>
    %cst_34 = arith.constant dense<0.000000e+00> : vector<4x256xf32>
    %84 = tpu.matmul %83, %78, %cst_34 {dimension_numbers = #tpu.dot_dimension_numbers<[1], [0], [0], [1], [0, 0, 1, 1], [], []>, precision = #tpu.contract_precision<fp32>} : vector<4x4xf32>, vector<4x256xf32>, vector<4x256xf32> -> vector<4x256xf32>
    %85 = arith.addf %73, %84 : vector<4x256xf32>
    %c5 = arith.constant 5 : index
    %c0_35 = arith.constant 0 : index
    %c0_36 = arith.constant 0 : index
    %86 = vector.load %arg2[%c5, %c0_35, %c0_36] : memref<9x4x4xf32, #tpu.memory_space<vmem>>, vector<1x4x4xf32>
    %87 = vector.shape_cast %86 : vector<1x4x4xf32> to vector<4x4xf32>
    %cst_37 = arith.constant dense<0.000000e+00> : vector<4x256xf32>
    %88 = tpu.matmul %87, %34, %cst_37 {dimension_numbers = #tpu.dot_dimension_numbers<[1], [0], [0], [1], [0, 0, 1, 1], [], []>, precision = #tpu.contract_precision<fp32>} : vector<4x4xf32>, vector<4x256xf32>, vector<4x256xf32> -> vector<4x256xf32>
    %89 = arith.addf %85, %88 : vector<4x256xf32>
    %c8 = arith.constant 8 : index
    %c0_38 = arith.constant 0 : index
    %c0_39 = arith.constant 0 : index
    %90 = vector.load %arg2[%c8, %c0_38, %c0_39] : memref<9x4x4xf32, #tpu.memory_space<vmem>>, vector<1x4x4xf32>
    %91 = vector.shape_cast %90 : vector<1x4x4xf32> to vector<4x4xf32>
    %cst_40 = arith.constant dense<0.000000e+00> : vector<4x256xf32>
    %92 = tpu.matmul %91, %81, %cst_40 {dimension_numbers = #tpu.dot_dimension_numbers<[1], [0], [0], [1], [0, 0, 1, 1], [], []>, precision = #tpu.contract_precision<fp32>} : vector<4x4xf32>, vector<4x256xf32>, vector<4x256xf32> -> vector<4x256xf32>
    %93 = arith.addf %89, %92 : vector<4x256xf32>
    %cst_41 = arith.constant dense<0.000000e+00> : vector<4xf32>
    %94 = vector.multi_reduction <add>, %93, %cst_41 [1] : vector<4x256xf32> to vector<4xf32>
    %95 = vector.shape_cast %94 : vector<4xf32> to vector<4x1xf32>
    %cst_42 = arith.constant 3.906250e-03 : f32
    %96 = vector.broadcast %cst_42 : f32 to vector<4x1xf32>
    %97 = arith.mulf %95, %96 : vector<4x1xf32>
    %98 = arith.mulf %93, %93 : vector<4x256xf32>
    %cst_43 = arith.constant dense<0.000000e+00> : vector<4xf32>
    %99 = vector.multi_reduction <add>, %98, %cst_43 [1] : vector<4x256xf32> to vector<4xf32>
    %100 = vector.shape_cast %99 : vector<4xf32> to vector<4x1xf32>
    %cst_44 = arith.constant 3.906250e-03 : f32
    %101 = vector.broadcast %cst_44 : f32 to vector<4x1xf32>
    %102 = arith.mulf %100, %101 : vector<4x1xf32>
    %103 = arith.mulf %97, %97 : vector<4x1xf32>
    %104 = arith.subf %102, %103 : vector<4x1xf32>
    %cst_45 = arith.constant 0.000000e+00 : f32
    %105 = vector.broadcast %cst_45 : f32 to vector<4x1xf32>
    %106 = arith.maximumf %104, %105 : vector<4x1xf32>
    %107 = vector.broadcast %97 : vector<4x1xf32> to vector<4x256xf32>
    %108 = arith.subf %93, %107 : vector<4x256xf32>
    %cst_46 = arith.constant 9.99999974E-6 : f32
    %109 = vector.broadcast %cst_46 : f32 to vector<4x1xf32>
    %110 = arith.addf %106, %109 : vector<4x1xf32>
    %111 = math.rsqrt %110 : vector<4x1xf32>
    %112 = vector.broadcast %111 : vector<4x1xf32> to vector<4x256xf32>
    %113 = arith.mulf %108, %112 : vector<4x256xf32>
    %cst_47 = arith.constant 0.000000e+00 : f32
    %114 = vector.broadcast %cst_47 : f32 to vector<4x256xf32>
    %115 = arith.cmpf ogt, %113, %114 : vector<4x256xf32>
    %cst_48 = arith.constant 2.000000e-01 : f32
    %116 = vector.broadcast %cst_48 : f32 to vector<4x256xf32>
    %117 = arith.mulf %116, %113 : vector<4x256xf32>
    %118 = arith.select %115, %113, %117 : vector<4x256xi1>, vector<4x256xf32>
    %c1_i32_49 = arith.constant 1 : i32
    %119 = tpu.dynamic_rotate %118 by %c1_i32_49 dim 1 : vector<4x256xf32>, i32 -> vector<4x256xf32>
    %c255_i32_50 = arith.constant 255 : i32
    %120 = tpu.dynamic_rotate %118 by %c255_i32_50 dim 1 : vector<4x256xf32>, i32 -> vector<4x256xf32>
    %121 = vector.shape_cast %18 : vector<1x256xi1> to vector<1x256xi1>
    %122 = vector.broadcast %121 : vector<1x256xi1> to vector<4x256xi1>
    %123 = arith.select %122, %120, %119 : vector<4x256xi1>, vector<4x256xf32>
    %124 = vector.shape_cast %20 : vector<1x256xi1> to vector<1x256xi1>
    %125 = vector.broadcast %124 : vector<1x256xi1> to vector<4x256xi1>
    %126 = arith.select %125, %119, %120 : vector<4x256xi1>, vector<4x256xf32>
    %c16_i32_51 = arith.constant 16 : i32
    %127 = tpu.dynamic_rotate %123 by %c16_i32_51 dim 1 : vector<4x256xf32>, i32 -> vector<4x256xf32>
    %c240_i32_52 = arith.constant 240 : i32
    %128 = tpu.dynamic_rotate %123 by %c240_i32_52 dim 1 : vector<4x256xf32>, i32 -> vector<4x256xf32>
    %129 = vector.shape_cast %22 : vector<1x256xi1> to vector<1x256xi1>
    %130 = vector.broadcast %129 : vector<1x256xi1> to vector<4x256xi1>
    %131 = arith.select %130, %128, %127 : vector<4x256xi1>, vector<4x256xf32>
    %132 = vector.shape_cast %24 : vector<1x256xi1> to vector<1x256xi1>
    %133 = vector.broadcast %132 : vector<1x256xi1> to vector<4x256xi1>
    %134 = arith.select %133, %127, %128 : vector<4x256xi1>, vector<4x256xf32>
    %c0_53 = arith.constant 0 : index
    %c0_54 = arith.constant 0 : index
    %c0_55 = arith.constant 0 : index
    %135 = vector.load %arg3[%c0_53, %c0_54, %c0_55] : memref<9x4x4xf32, #tpu.memory_space<vmem>>, vector<1x4x4xf32>
    %136 = vector.shape_cast %135 : vector<1x4x4xf32> to vector<4x4xf32>
    %cst_56 = arith.constant dense<0.000000e+00> : vector<4x256xf32>
    %137 = tpu.matmul %136, %131, %cst_56 {dimension_numbers = #tpu.dot_dimension_numbers<[1], [0], [0], [1], [0, 0, 1, 1], [], []>, precision = #tpu.contract_precision<fp32>} : vector<4x4xf32>, vector<4x256xf32>, vector<4x256xf32> -> vector<4x256xf32>
    %c3_57 = arith.constant 3 : index
    %c0_58 = arith.constant 0 : index
    %c0_59 = arith.constant 0 : index
    %138 = vector.load %arg3[%c3_57, %c0_58, %c0_59] : memref<9x4x4xf32, #tpu.memory_space<vmem>>, vector<1x4x4xf32>
    %139 = vector.shape_cast %138 : vector<1x4x4xf32> to vector<4x4xf32>
    %cst_60 = arith.constant dense<0.000000e+00> : vector<4x256xf32>
    %140 = tpu.matmul %139, %123, %cst_60 {dimension_numbers = #tpu.dot_dimension_numbers<[1], [0], [0], [1], [0, 0, 1, 1], [], []>, precision = #tpu.contract_precision<fp32>} : vector<4x4xf32>, vector<4x256xf32>, vector<4x256xf32> -> vector<4x256xf32>
    %141 = arith.addf %137, %140 : vector<4x256xf32>
    %c6_61 = arith.constant 6 : index
    %c0_62 = arith.constant 0 : index
    %c0_63 = arith.constant 0 : index
    %142 = vector.load %arg3[%c6_61, %c0_62, %c0_63] : memref<9x4x4xf32, #tpu.memory_space<vmem>>, vector<1x4x4xf32>
    %143 = vector.shape_cast %142 : vector<1x4x4xf32> to vector<4x4xf32>
    %cst_64 = arith.constant dense<0.000000e+00> : vector<4x256xf32>
    %144 = tpu.matmul %143, %134, %cst_64 {dimension_numbers = #tpu.dot_dimension_numbers<[1], [0], [0], [1], [0, 0, 1, 1], [], []>, precision = #tpu.contract_precision<fp32>} : vector<4x4xf32>, vector<4x256xf32>, vector<4x256xf32> -> vector<4x256xf32>
    %145 = arith.addf %141, %144 : vector<4x256xf32>
    %c16_i32_65 = arith.constant 16 : i32
    %146 = tpu.dynamic_rotate %118 by %c16_i32_65 dim 1 : vector<4x256xf32>, i32 -> vector<4x256xf32>
    %c240_i32_66 = arith.constant 240 : i32
    %147 = tpu.dynamic_rotate %118 by %c240_i32_66 dim 1 : vector<4x256xf32>, i32 -> vector<4x256xf32>
    %148 = vector.shape_cast %22 : vector<1x256xi1> to vector<1x256xi1>
    %149 = vector.broadcast %148 : vector<1x256xi1> to vector<4x256xi1>
    %150 = arith.select %149, %147, %146 : vector<4x256xi1>, vector<4x256xf32>
    %151 = vector.shape_cast %24 : vector<1x256xi1> to vector<1x256xi1>
    %152 = vector.broadcast %151 : vector<1x256xi1> to vector<4x256xi1>
    %153 = arith.select %152, %146, %147 : vector<4x256xi1>, vector<4x256xf32>
    %c1_67 = arith.constant 1 : index
    %c0_68 = arith.constant 0 : index
    %c0_69 = arith.constant 0 : index
    %154 = vector.load %arg3[%c1_67, %c0_68, %c0_69] : memref<9x4x4xf32, #tpu.memory_space<vmem>>, vector<1x4x4xf32>
    %155 = vector.shape_cast %154 : vector<1x4x4xf32> to vector<4x4xf32>
    %cst_70 = arith.constant dense<0.000000e+00> : vector<4x256xf32>
    %156 = tpu.matmul %155, %150, %cst_70 {dimension_numbers = #tpu.dot_dimension_numbers<[1], [0], [0], [1], [0, 0, 1, 1], [], []>, precision = #tpu.contract_precision<fp32>} : vector<4x4xf32>, vector<4x256xf32>, vector<4x256xf32> -> vector<4x256xf32>
    %157 = arith.addf %145, %156 : vector<4x256xf32>
    %c4_71 = arith.constant 4 : index
    %c0_72 = arith.constant 0 : index
    %c0_73 = arith.constant 0 : index
    %158 = vector.load %arg3[%c4_71, %c0_72, %c0_73] : memref<9x4x4xf32, #tpu.memory_space<vmem>>, vector<1x4x4xf32>
    %159 = vector.shape_cast %158 : vector<1x4x4xf32> to vector<4x4xf32>
    %cst_74 = arith.constant dense<0.000000e+00> : vector<4x256xf32>
    %160 = tpu.matmul %159, %118, %cst_74 {dimension_numbers = #tpu.dot_dimension_numbers<[1], [0], [0], [1], [0, 0, 1, 1], [], []>, precision = #tpu.contract_precision<fp32>} : vector<4x4xf32>, vector<4x256xf32>, vector<4x256xf32> -> vector<4x256xf32>
    %161 = arith.addf %157, %160 : vector<4x256xf32>
    %c7_75 = arith.constant 7 : index
    %c0_76 = arith.constant 0 : index
    %c0_77 = arith.constant 0 : index
    %162 = vector.load %arg3[%c7_75, %c0_76, %c0_77] : memref<9x4x4xf32, #tpu.memory_space<vmem>>, vector<1x4x4xf32>
    %163 = vector.shape_cast %162 : vector<1x4x4xf32> to vector<4x4xf32>
    %cst_78 = arith.constant dense<0.000000e+00> : vector<4x256xf32>
    %164 = tpu.matmul %163, %153, %cst_78 {dimension_numbers = #tpu.dot_dimension_numbers<[1], [0], [0], [1], [0, 0, 1, 1], [], []>, precision = #tpu.contract_precision<fp32>} : vector<4x4xf32>, vector<4x256xf32>, vector<4x256xf32> -> vector<4x256xf32>
    %165 = arith.addf %161, %164 : vector<4x256xf32>
    %c16_i32_79 = arith.constant 16 : i32
    %166 = tpu.dynamic_rotate %126 by %c16_i32_79 dim 1 : vector<4x256xf32>, i32 -> vector<4x256xf32>
    %c240_i32_80 = arith.constant 240 : i32
    %167 = tpu.dynamic_rotate %126 by %c240_i32_80 dim 1 : vector<4x256xf32>, i32 -> vector<4x256xf32>
    %168 = vector.shape_cast %22 : vector<1x256xi1> to vector<1x256xi1>
    %169 = vector.broadcast %168 : vector<1x256xi1> to vector<4x256xi1>
    %170 = arith.select %169, %167, %166 : vector<4x256xi1>, vector<4x256xf32>
    %171 = vector.shape_cast %24 : vector<1x256xi1> to vector<1x256xi1>
    %172 = vector.broadcast %171 : vector<1x256xi1> to vector<4x256xi1>
    %173 = arith.select %172, %166, %167 : vector<4x256xi1>, vector<4x256xf32>
    %c2_81 = arith.constant 2 : index
    %c0_82 = arith.constant 0 : index
    %c0_83 = arith.constant 0 : index
    %174 = vector.load %arg3[%c2_81, %c0_82, %c0_83] : memref<9x4x4xf32, #tpu.memory_space<vmem>>, vector<1x4x4xf32>
    %175 = vector.shape_cast %174 : vector<1x4x4xf32> to vector<4x4xf32>
    %cst_84 = arith.constant dense<0.000000e+00> : vector<4x256xf32>
    %176 = tpu.matmul %175, %170, %cst_84 {dimension_numbers = #tpu.dot_dimension_numbers<[1], [0], [0], [1], [0, 0, 1, 1], [], []>, precision = #tpu.contract_precision<fp32>} : vector<4x4xf32>, vector<4x256xf32>, vector<4x256xf32> -> vector<4x256xf32>
    %177 = arith.addf %165, %176 : vector<4x256xf32>
    %c5_85 = arith.constant 5 : index
    %c0_86 = arith.constant 0 : index
    %c0_87 = arith.constant 0 : index
    %178 = vector.load %arg3[%c5_85, %c0_86, %c0_87] : memref<9x4x4xf32, #tpu.memory_space<vmem>>, vector<1x4x4xf32>
    %179 = vector.shape_cast %178 : vector<1x4x4xf32> to vector<4x4xf32>
    %cst_88 = arith.constant dense<0.000000e+00> : vector<4x256xf32>
    %180 = tpu.matmul %179, %126, %cst_88 {dimension_numbers = #tpu.dot_dimension_numbers<[1], [0], [0], [1], [0, 0, 1, 1], [], []>, precision = #tpu.contract_precision<fp32>} : vector<4x4xf32>, vector<4x256xf32>, vector<4x256xf32> -> vector<4x256xf32>
    %181 = arith.addf %177, %180 : vector<4x256xf32>
    %c8_89 = arith.constant 8 : index
    %c0_90 = arith.constant 0 : index
    %c0_91 = arith.constant 0 : index
    %182 = vector.load %arg3[%c8_89, %c0_90, %c0_91] : memref<9x4x4xf32, #tpu.memory_space<vmem>>, vector<1x4x4xf32>
    %183 = vector.shape_cast %182 : vector<1x4x4xf32> to vector<4x4xf32>
    %cst_92 = arith.constant dense<0.000000e+00> : vector<4x256xf32>
    %184 = tpu.matmul %183, %173, %cst_92 {dimension_numbers = #tpu.dot_dimension_numbers<[1], [0], [0], [1], [0, 0, 1, 1], [], []>, precision = #tpu.contract_precision<fp32>} : vector<4x4xf32>, vector<4x256xf32>, vector<4x256xf32> -> vector<4x256xf32>
    %185 = arith.addf %181, %184 : vector<4x256xf32>
    %cst_93 = arith.constant dense<0.000000e+00> : vector<4xf32>
    %186 = vector.multi_reduction <add>, %185, %cst_93 [1] : vector<4x256xf32> to vector<4xf32>
    %187 = vector.shape_cast %186 : vector<4xf32> to vector<4x1xf32>
    %cst_94 = arith.constant 3.906250e-03 : f32
    %188 = vector.broadcast %cst_94 : f32 to vector<4x1xf32>
    %189 = arith.mulf %187, %188 : vector<4x1xf32>
    %190 = arith.mulf %185, %185 : vector<4x256xf32>
    %cst_95 = arith.constant dense<0.000000e+00> : vector<4xf32>
    %191 = vector.multi_reduction <add>, %190, %cst_95 [1] : vector<4x256xf32> to vector<4xf32>
    %192 = vector.shape_cast %191 : vector<4xf32> to vector<4x1xf32>
    %cst_96 = arith.constant 3.906250e-03 : f32
    %193 = vector.broadcast %cst_96 : f32 to vector<4x1xf32>
    %194 = arith.mulf %192, %193 : vector<4x1xf32>
    %195 = arith.mulf %189, %189 : vector<4x1xf32>
    %196 = arith.subf %194, %195 : vector<4x1xf32>
    %cst_97 = arith.constant 0.000000e+00 : f32
    %197 = vector.broadcast %cst_97 : f32 to vector<4x1xf32>
    %198 = arith.maximumf %196, %197 : vector<4x1xf32>
    %199 = vector.broadcast %189 : vector<4x1xf32> to vector<4x256xf32>
    %200 = arith.subf %185, %199 : vector<4x256xf32>
    %cst_98 = arith.constant 9.99999974E-6 : f32
    %201 = vector.broadcast %cst_98 : f32 to vector<4x1xf32>
    %202 = arith.addf %198, %201 : vector<4x1xf32>
    %203 = math.rsqrt %202 : vector<4x1xf32>
    %204 = vector.broadcast %203 : vector<4x1xf32> to vector<4x256xf32>
    %205 = arith.mulf %200, %204 : vector<4x256xf32>
    %c0_99 = arith.constant 0 : index
    %c0_100 = arith.constant 0 : index
    %c0_101 = arith.constant 0 : index
    %206 = vector.load %arg1[%c0_99, %c0_100, %c0_101] : memref<1x4x256xf32, #tpu.memory_space<vmem>>, vector<1x4x256xf32>
    %207 = vector.shape_cast %206 : vector<1x4x256xf32> to vector<4x256xf32>
    %208 = arith.addf %205, %207 : vector<4x256xf32>
    %c0_102 = arith.constant 0 : index
    %c0_103 = arith.constant 0 : index
    %c0_104 = arith.constant 0 : index
    %209 = vector.load %arg4[%c0_102, %c0_103, %c0_104] : memref<1x4x256xf32, #tpu.memory_space<vmem>>, vector<1x4x256xf32>
    %210 = vector.shape_cast %209 : vector<1x4x256xf32> to vector<4x256xf32>
    %211 = vector.shape_cast %208 : vector<4x256xf32> to vector<1x4x256xf32>
    tpu.vector_store %arg4[%c0_102, %c0_103, %c0_104], %211 {strides = array<i32>} : memref<1x4x256xf32, #tpu.memory_space<vmem>>, vector<1x4x256xf32>,
    return
  }
  func.func @transform_0(%arg0: i32) -> (i32, i32, i32) {
    %c0_i32 = arith.constant 0 : i32
    %c0_i32_0 = arith.constant 0 : i32
    %c0_i32_1 = arith.constant 0 : i32
    return %arg0, %c0_i32, %c0_i32_0 : i32, i32, i32
  }
  func.func @transform_1(%arg0: i32) -> (i32, i32, i32) {
    %c0_i32 = arith.constant 0 : i32
    %c0_i32_0 = arith.constant 0 : i32
    %c0_i32_1 = arith.constant 0 : i32
    %c0_i32_2 = arith.constant 0 : i32
    return %c0_i32, %c0_i32_0, %c0_i32_1 : i32, i32, i32
  }
  func.func @transform_2(%arg0: i32) -> (i32, i32, i32) {
    %c0_i32 = arith.constant 0 : i32
    %c0_i32_0 = arith.constant 0 : i32
    %c0_i32_1 = arith.constant 0 : i32
    %c0_i32_2 = arith.constant 0 : i32
    return %c0_i32, %c0_i32_0, %c0_i32_1 : i32, i32, i32
  }
  func.func @transform_3(%arg0: i32) -> (i32, i32, i32) {
    %c0_i32 = arith.constant 0 : i32
    %c0_i32_0 = arith.constant 0 : i32
    %c0_i32_1 = arith.constant 0 : i32
    return %arg0, %c0_i32, %c0_i32_0 : i32, i32, i32
  }
}

</mosaic_0001>

<llo_original>
// kernel: tpu_custom_call.1
$region0: #{tpu_custom_call.1}
  #allocation0 [shape = 'u32[]', space=smem, size = 0x4, offset = 0x4, fixed_abs, tag = 'smem constant byte address 0x4 - core index']
  #allocation1 [shape = 'u32[144,128]{1,0:T(1,128)}', space=vmem, size = 0x12000, scoped, tag = 'internal scratch']
  %s0 = inlined_call_operand.vmem [shape: f32[2,4,256], index: 0, kind: input, shape index: {}]
  %s1 = inlined_call_operand.vmem [shape: f32[9,4,4], index: 1, kind: input, shape index: {}]
  %s2 = inlined_call_operand.vmem [shape: f32[9,4,4], index: 2, kind: input, shape index: {}]
  %s3 = inlined_call_operand.hbm [shape: f32[2,4,256], index: 3, kind: output, shape index: {}]
  %s4 = sld [smem:[#allocation0]]
  $region45: #{tpu_custom_call.1} parent=0
    _
  %s6 = ssub.s32 1, %s4
  %s7 = scalar_select 0, %s6, %s4
  $region1: #{tpu_custom_call.1} parent=0
    #allocation2 [shape = 'u8[8192]{0}', space=vmem, size = 0x2000, scoped, tag = 'output window, operand 0']
    #allocation3 [shape = 's32[2]{0}', space=sflag, size = 0x8, scoped, tag = 'scoped memory for tpu_custom_call.1']
    %8 = vsyncpa [#allocation3], 0
    %s9 = scalar_lea.sflag [#allocation3], 1
    %10 = vsyncpa %s9, 0
    loop: start=0, step=1, limit=4
    $region2: #{tpu_custom_call.1} parent=1 // loop_pre_header
      _
    $region3: #{tpu_custom_call.1} parent=1 // loop_header
      %s12 = sphi 0, %s16
      %p13 = scmp.ge.s32.totalorder %s12, 4
      %s22 = sphi 0, %s24
      %s25 = sphi 0, %s22
      %s26 = sphi 0, %s25
      %s42 = sphi 0, %s26
      %s46 = sphi 0, %s46
      %s48 = sphi 0, %s46
      %s49 = sphi 0, %s48
      %s63 = sphi 0, %s49
      %s67 = sphi 0, %s67
      %s69 = sphi 0, %s67
      %s70 = sphi 0, %s69
      %s84 = sphi 0, %s70
      %s90 = sphi 0, %s92
      %s93 = sphi 0, %s90
      %s94 = sphi 0, %s93
      %s110 = sphi 0, %s94
    $region4: #{tpu_custom_call.1} parent=1 // loop_header_branch
      %15 = sbr.rel (%p13) target = $region8
    $region5: #{tpu_custom_call.1} parent=1 // loop_body
      %s17 = ssub.s32 %s12, 1
      %s18 = ssub.s32 %s12, 2
      %s19 = sadd.s32 %s12, 1
      %s20 = ssub.s32 %s12, %s19
      %p21 = scmp.eq.s32.totalorder %s20, 0
      %s23 = sadd.s32 %s22, 1
      %s24 = scalar_select %p21, %s22, %s23
      %p27 = pneg %p21
      %p28 = scmp.eq.s32.totalorder %s12, 1
      %p29 = por %p27, %p28
      %p30 = scmp.ne.s32.totalorder %s22, %s25
      %p31 = scmp.eq.s32.totalorder %s12, 0
      %p32 = por %p30, %p31
      %p33 = scmp.ne.s32.totalorder %s22, %s25
      %p34 = scmp.eq.s32.totalorder %s17, 1
      %p35 = por %p33, %p34
      %p36 = scmp.ne.s32.totalorder %s25, %s26
      %p37 = scmp.eq.s32.totalorder %s17, 0
      %p38 = por %p36, %p37
      %p39 = scmp.ne.s32.totalorder %s25, %s26
      %p40 = scmp.eq.s32.totalorder %s18, 1
      %p41 = por %p39, %p40
      %p43 = scmp.ne.s32.totalorder %s26, %s42
      %p44 = scmp.eq.s32.totalorder %s18, 0
      %p45 = por %p43, %p44
      %s47 = sadd.s32 %s46, 1
      %p50 = scmp.eq.s32.totalorder %s12, 1
      %p51 = scmp.ne.s32.totalorder %s46, %s48
      %p52 = scmp.eq.s32.totalorder %s12, 0
      %p53 = por %p51, %p52
      %p54 = scmp.ne.s32.totalorder %s46, %s48
      %p55 = scmp.eq.s32.totalorder %s17, 1
      %p56 = por %p54, %p55
      %p57 = scmp.ne.s32.totalorder %s48, %s49
      %p58 = scmp.eq.s32.totalorder %s17, 0
      %p59 = por %p57, %p58
      %p60 = scmp.ne.s32.totalorder %s48, %s49
      %p61 = scmp.eq.s32.totalorder %s18, 1
      %p62 = por %p60, %p61
      %p64 = scmp.ne.s32.totalorder %s49, %s63
      %p65 = scmp.eq.s32.totalorder %s18, 0
      %p66 = por %p64, %p65
      %s68 = sadd.s32 %s67, 1
      %p71 = scmp.eq.s32.totalorder %s12, 1
      %p72 = scmp.ne.s32.totalorder %s67, %s69
      %p73 = scmp.eq.s32.totalorder %s12, 0
      %p74 = por %p72, %p73
      %p75 = scmp.ne.s32.totalorder %s67, %s69
      %p76 = scmp.eq.s32.totalorder %s17, 1
      %p77 = por %p75, %p76
      %p78 = scmp.ne.s32.totalorder %s69, %s70
      %p79 = scmp.eq.s32.totalorder %s17, 0
      %p80 = por %p78, %p79
      %p81 = scmp.ne.s32.totalorder %s69, %s70
      %p82 = scmp.eq.s32.totalorder %s18, 1
      %p83 = por %p81, %p82
      %p85 = scmp.ne.s32.totalorder %s70, %s84
      %p86 = scmp.eq.s32.totalorder %s18, 0
      %p87 = por %p85, %p86
      %s88 = ssub.s32 %s12, %s19
      %p89 = scmp.eq.s32.totalorder %s88, 0
      %s91 = sadd.s32 %s90, 1
      %s92 = scalar_select %p89, %s90, %s91
      %p95 = pneg %p89
      %p96 = scmp.eq.s32.totalorder %s12, 1
      %p97 = por %p95, %p96
      %p98 = scmp.ne.s32.totalorder %s90, %s93
      %p99 = scmp.eq.s32.totalorder %s12, 0
      %p100 = por %p98, %p99
      %p101 = scmp.ne.s32.totalorder %s90, %s93
      %p102 = scmp.eq.s32.totalorder %s17, 1
      %p103 = por %p101, %p102
      %p104 = scmp.ne.s32.totalorder %s93, %s94
      %p105 = scmp.eq.s32.totalorder %s17, 0
      %p106 = por %p104, %p105
      %p107 = scmp.ne.s32.totalorder %s93, %s94
      %p108 = scmp.eq.s32.totalorder %s18, 1
      %p109 = por %p107, %p108
      %p111 = scmp.ne.s32.totalorder %s94, %s110
      %p112 = scmp.eq.s32.totalorder %s18, 0
      %p113 = por %p111, %p112
      %p114 = scmp.le.s32.totalorder 1, %s12
      %p115 = scmp.lt.s32.totalorder %s12, 3
      %p116 = pnand %p114, %p115
      %p117 = pneg %p116
      // Predicated region
      $region9: #{tpu_custom_call.1} parent=5 // pred_check
        _
      $region10: #{tpu_custom_call.1} parent=5 // pred_check_branch
        %119 = sbr.rel (%p116) target = $region12
      $region11: #{tpu_custom_call.1} parent=5 // pred_region
        %s120 = ssub.s32 %s12, 1
        // Predicated region
        $region13: #{tpu_custom_call.1} parent=11 // pred_check
          %p121 = pneg %p59
        $region14: #{tpu_custom_call.1} parent=11 // pred_check_branch
          %123 = sbr.rel (%p121) target = $region16
        $region15: #{tpu_custom_call.1} parent=11 // pred_region
          _
        $region16: #{tpu_custom_call.1} parent=11 // pred_fallthru
          _
        // Predicated region
        $region17: #{tpu_custom_call.1} parent=11 // pred_check
          %p124 = pneg %p80
        $region18: #{tpu_custom_call.1} parent=11 // pred_check_branch
          %126 = sbr.rel (%p124) target = $region20
        $region19: #{tpu_custom_call.1} parent=11 // pred_region
          _
        $region20: #{tpu_custom_call.1} parent=11 // pred_fallthru
          _
      $region12: #{tpu_custom_call.1} parent=5 // pred_fallthru
        _
      %p127 = scmp.lt.s32.totalorder %s12, 2
      // Predicated region
      $region21: #{tpu_custom_call.1} parent=5 // pred_check
        %p128 = pneg %p127
      $region22: #{tpu_custom_call.1} parent=5 // pred_check_branch
        %130 = sbr.rel (%p128) target = $region24
      $region23: #{tpu_custom_call.1} parent=5 // pred_region
        // Predicated region
        $region25: #{tpu_custom_call.1} parent=23 // pred_check
          %p131 = pneg %p32
        $region26: #{tpu_custom_call.1} parent=23 // pred_check_branch
          %133 = sbr.rel (%p131) target = $region28
        $region27: #{tpu_custom_call.1} parent=23 // pred_region
          %p134 = scmp.lt.s32.totalorder %s12, 1
          %s135 = scalar_select %p134, %s12, 1
          %s136 = smul.addr %s135, 2
          %s137 = smul.addr %s136, 4
          %s138 = scalar_lea.vmem %s0, %s137
        $region28: #{tpu_custom_call.1} parent=23 // pred_fallthru
          _
      $region24: #{tpu_custom_call.1} parent=5 // pred_fallthru
        _
      %p139 = scmp.le.s32.totalorder 1, %s12
      %p140 = scmp.lt.s32.totalorder %s12, 3
      %p141 = pnand %p139, %p140
      %p142 = pneg %p141
      // Predicated region
      $region29: #{tpu_custom_call.1} parent=5 // pred_check
        _
      $region30: #{tpu_custom_call.1} parent=5 // pred_check_branch
        %144 = sbr.rel (%p141) target = $region32
      $region31: #{tpu_custom_call.1} parent=5 // pred_region
        %s145 = ssub.s32 %s12, 1
        %p146 = scmp.lt.s32.totalorder %s17, 1
        %s147 = scalar_select %p146, %s17, 1
        %s148 = smul.addr %s147, 2
        %s149 = smul.addr %s148, 4
        %s150 = scalar_lea.vmem %s0, %s149
        %p151 = pneg %p38
        %p152 = pneg %p35
        %p153 = pneg %p59
        %p154 = pneg %p56
        %p155 = pneg %p80
        %p156 = pneg %p77
        %p157 = pneg %p106
        %p158 = pneg %p103
        %s159 = sand.u32 %s93, 1
        %s160 = scalar_lea.sflag [#allocation3], %s159
        %s161 = sand.u32 %s93, 1
        %s162 = smul.addr %s161, 8
        %s163 = scalar_lea.vmem [#allocation2], %s162
        %p164 = scmp.lt.s32.totalorder %s17, 1
        %s165 = scalar_select %p164, %s17, 1
        %s166 = smul.addr %s165, 2
        %s167 = smul.addr %s166, 4
        %s168 = scalar_lea.vmem %s0, %s167
        %v169 = vlaneseq
        %v170 = vand.u32 %v169, 127
        %v171 = vadd.s32 %v170, 128
        %vm172 = vcmp.lt.s32.totalorder %v170, 0
        %v173 = vsub.s32 0, %v170
        %v174 = vsel %vm172, %v173, %v170
        %v175 = vshrl.u32 %v174, 4
        %v176 = vand.u32 %v174, 15
        %v177 = vsub.s32 0, %v176
        %v178 = vsel %vm172, %v177, %v176
        %vm179 = vcmp.lt.s32.totalorder %v171, 0
        %v180 = vsub.s32 0, %v171
        %v181 = vsel %vm179, %v180, %v171
        %v182 = vshrl.u32 %v181, 4
        %v183 = vand.u32 %v181, 15
        %v184 = vsub.s32 0, %v183
        %v185 = vsel %vm179, %v184, %v183
        %vm186 = vcmp.ne.s32.totalorder %v178, 0
        %vm187 = vcmp.ne.s32.totalorder %v185, 0
        %vm188 = vcmp.lt.s32.totalorder %v178, 0
        %vm189 = vcmp.lt.s32.totalorder %v185, 0
        %vm190 = vmand %vm188, %vm186
        %vm191 = vmand %vm189, %vm187
        %v192 = vadd.s32 %v178, 16
        %v193 = vadd.s32 %v185, 16
        %v194 = vsel %vm190, %v192, %v178
        %v195 = vsel %vm191, %v193, %v185
        %vm196 = vcmp.eq.s32.totalorder %v194, 0
        %vm197 = vcmp.eq.s32.totalorder %v195, 0
        %vm198 = vcmp.eq.s32.totalorder %v194, 15
        %vm199 = vcmp.eq.s32.totalorder %v195, 15
        %vm200 = vcmp.lt.s32.totalorder %v170, 16
        %vm201 = vcmp.lt.s32.totalorder %v171, 16
        %vm202 = vcmp.ge.s32.totalorder %v170, 240
        %vm203 = vcmp.ge.s32.totalorder %v171, 240
        %v204 = vld [vmem:[%s168] sm:$0xff]
        %v206 = vcombine.high %v204, %v204
        %208 = vrot.lane.b32.xlu0 %v204, 1
        %v209 = vpop.permute.xlu0 %208
        %210 = vrot.lane.b32.xlu0 %v206, 1
        %v211 = vpop.permute.xlu0 %210
        %vm212 = vcmp.lt.s32.totalorder %v170, 1
        %v213 = vsel %vm212, %v209, %v211
        %v214 = vsel %vm212, %v211, %v209
        %215 = vrot.lane.b32.xlu0 %v204, 127
        %v216 = vpop.permute.xlu0 %215
        %217 = vrot.lane.b32.xlu0 %v206, 127
        %v218 = vpop.permute.xlu0 %217
        %vm219 = vcmp.lt.s32.totalorder %v170, 127
        %v220 = vsel %vm219, %v216, %v218
        %v221 = vsel %vm219, %v218, %v216
        %v222 = vsel %vm196, 1, 0
        %v223 = vsel %vm197, 1, 0
        %vm224 = vcmp.eq.s32.totalorder %v222, 1
        %vm225 = vcmp.eq.s32.totalorder %v223, 1
        %v226 = vsel %vm224, %v220, %v214
        %v227 = vsel %vm225, %v221, %v213
        %v228 = vsel %vm198, 1, 0
        %v229 = vsel %vm199, 1, 0
        %vm230 = vcmp.eq.s32.totalorder %v228, 1
        %vm231 = vcmp.eq.s32.totalorder %v229, 1
        %v232 = vsel %vm230, %v214, %v220
        %v233 = vsel %vm231, %v213, %v221
        %234 = vrot.lane.b32.xlu0 %v226, 16
        %v235 = vpop.permute.xlu0 %234
        %236 = vrot.lane.b32.xlu0 %v227, 16
        %v237 = vpop.permute.xlu0 %236
        %v238 = vsel %vm200, %v235, %v237
        %v239 = vsel %vm200, %v237, %v235
        %240 = vrot.lane.b32.xlu0 %v226, 112
        %v241 = vpop.permute.xlu0 %240
        %242 = vrot.lane.b32.xlu0 %v227, 112
        %v243 = vpop.permute.xlu0 %242
        %vm244 = vcmp.lt.s32.totalorder %v170, 112
        %v245 = vsel %vm244, %v241, %v243
        %v246 = vsel %vm244, %v243, %v241
        %v247 = vsel %vm200, 1, 0
        %v248 = vsel %vm201, 1, 0
        %vm249 = vcmp.eq.s32.totalorder %v247, 1
        %vm250 = vcmp.eq.s32.totalorder %v248, 1
        %v251 = vsel %vm249, %v245, %v239
        %v252 = vsel %vm250, %v246, %v238
        %v253 = vsel %vm202, 1, 0
        %v254 = vsel %vm203, 1, 0
        %vm255 = vcmp.eq.s32.totalorder %v253, 1
        %vm256 = vcmp.eq.s32.totalorder %v254, 1
        %v257 = vsel %vm255, %v239, %v245
        %v258 = vsel %vm256, %v238, %v246
        %v259 = vld [vmem:[%s1] sm:$0xf]
        %s260 = scalar_lea.vmem %s1, 12
        %v261 = vld [vmem:[%s260] sm:$0xf]
        %vm262 = vcmask 31744
        %v264 = vsel %vm262, %v261, 0
        %vm266 = vcmask 1043456
        %v268 = vsel %vm266, %v226, 0
        %v271 = vsel %vm266, %v227, 0
        %v273 = vand.u32 %v271, 4294901760
        %274 = vmatprep.subr.mxu0 %v273
        %v275 = vand.u32 %v268, 4294901760
        %276 = vmatpush1.msra.mxu0 %v275
        %277 = vmatprep.subr.mxu0 0.0
        %278 = vmatpush1.msra.mxu0 0.0
        %279 = vmatprep.subr.mxu0 0.0
        %280 = vmatpush1.msra.mxu0 0.0
        %281 = vmatprep.subr.mxu0 0.0
        %282 = vmatpush1.msra.mxu0 0.0
        %283 = vmatprep.subr.mxu0 0.0
        %284 = vmatpush1.msra.mxu0 0.0
        %285 = vmatprep.subr.mxu0 0.0
        %286 = vmatpush1.msra.mxu0 0.0
        %287 = vmatprep.subr.mxu0 0.0
        %288 = vmatpush1.msra.mxu0 0.0
        %289 = vmatprep.subr.mxu0 0.0
        %290 = vmatpush1.msra.mxu0 0.0
        %291 = vmatprep.subr.mxu0 0.0
        %292 = vmatpush1.msra.mxu0 0.0
        %293 = vmatprep.subr.mxu0 0.0
        %294 = vmatpush1.msra.mxu0 0.0
        %295 = vmatprep.subr.mxu0 0.0
        %296 = vmatpush1.msra.mxu0 0.0
        %297 = vmatprep.subr.mxu0 0.0
        %298 = vmatpush1.msra.mxu0 0.0
        %299 = vmatprep.subr.mxu0 0.0
        %300 = vmatpush1.msra.mxu0 0.0
        %301 = vmatprep.subr.mxu0 0.0
        %302 = vmatpush1.msra.mxu0 0.0
        %303 = vmatprep.subr.mxu0 0.0
        %304 = vmatpush1.msra.mxu0 0.0
        %305 = vmatprep.subr.mxu0 0.0
        %306 = vmatpush1.msra.mxu0 0.0
        %307 = vmatprep.subr.mxu0 0.0
        %308 = vmatpush1.msra.mxu0 0.0
        %309 = vmatprep.subr.mxu0 0.0
        %310 = vmatpush1.msra.mxu0 0.0
        %311 = vmatprep.subr.mxu0 0.0
        %312 = vmatpush1.msra.mxu0 0.0
        %313 = vmatprep.subr.mxu0 0.0
        %314 = vmatpush1.msra.mxu0 0.0
        %315 = vmatprep.subr.mxu0 0.0
        %316 = vmatpush1.msra.mxu0 0.0
        %317 = vmatprep.subr.mxu0 0.0
        %318 = vmatpush1.msra.mxu0 0.0
        %319 = vmatprep.subr.mxu0 0.0
        %320 = vmatpush1.msra.mxu0 0.0
        %321 = vmatprep.subr.mxu0 0.0
        %322 = vmatpush1.msra.mxu0 0.0
        %323 = vmatprep.subr.mxu0 0.0
        %324 = vmatpush1.msra.mxu0 0.0
        %325 = vmatprep.subr.mxu0 0.0
        %326 = vmatpush1.msra.mxu0 0.0
        %327 = vmatprep.subr.mxu0 0.0
        %328 = vmatpush1.msra.mxu0 0.0
        %329 = vmatprep.subr.mxu0 0.0
        %330 = vmatpush1.msra.mxu0 0.0
        %331 = vmatprep.subr.mxu0 0.0
        %332 = vmatpush1.msra.mxu0 0.0
        %333 = vmatprep.subr.mxu0 0.0
        %334 = vmatpush1.msra.mxu0 0.0
        %335 = vmatprep.subr.mxu0 0.0
        %336 = vmatpush1.msra.mxu0 0.0
        %337 = vmatprep.subr.mxu0 0.0
        %338 = vmatpush1.msra.mxu0 0.0
        %339 = vmatprep.mubr.f32.mxu0 0.0
        %v340 = vand.u32 %v264, 4294901760
        %v341 = vsub.f32 %v264, %v340
        %v342 = vand.u32 %v341, 4294901760
        %v343 = vsub.f32 %v341, %v342
        %v344 = vand.u32 %v343, 4294901760
        %345 = vmatmul.mubr.f32.gmra.mrb[0].mxu0 %v344
        %v346 = vpop.f32.mrb[0].mxu0
        %v347 = vadd.f32 0.0, %v346
        %v348 = vpop.f32.mrb[0].mxu0
        %v349 = vadd.f32 0.0, %v348
        %350 = vdwg.mxu0
        %v351 = vand.u32 %v271, 4294901760
        %v352 = vsub.f32 %v271, %v351
        %v353 = vand.u32 %v352, 4294901760
        %v354 = vsub.f32 %v352, %v353
        %v355 = vand.u32 %v354, 4294901760
        %356 = vmatprep.subr.mxu0 %v355
        %v357 = vand.u32 %v268, 4294901760
        %v358 = vsub.f32 %v268, %v357
        %v359 = vand.u32 %v358, 4294901760
        %v360 = vsub.f32 %v358, %v359
        %v361 = vand.u32 %v360, 4294901760
        %362 = vmatpush1.msra.mxu0 %v361
        %363 = vmatprep.subr.mxu0 0.0
        %364 = vmatpush1.msra.mxu0 0.0
        %365 = vmatprep.subr.mxu0 0.0
        %366 = vmatpush1.msra.mxu0 0.0
        %367 = vmatprep.subr.mxu0 0.0
        %368 = vmatpush1.msra.mxu0 0.0
        %369 = vmatprep.subr.mxu0 0.0
        %370 = vmatpush1.msra.mxu0 0.0
        %371 = vmatprep.subr.mxu0 0.0
        %372 = vmatpush1.msra.mxu0 0.0
        %373 = vmatprep.subr.mxu0 0.0
        %374 = vmatpush1.msra.mxu0 0.0
        %375 = vmatprep.subr.mxu0 0.0
        %376 = vmatpush1.msra.mxu0 0.0
        %377 = vmatprep.subr.mxu0 0.0
        %378 = vmatpush1.msra.mxu0 0.0
        %379 = vmatprep.subr.mxu0 0.0
        %380 = vmatpush1.msra.mxu0 0.0
        %381 = vmatprep.subr.mxu0 0.0
        %382 = vmatpush1.msra.mxu0 0.0
        %383 = vmatprep.subr.mxu0 0.0
        %384 = vmatpush1.msra.mxu0 0.0
        %385 = vmatprep.subr.mxu0 0.0
        %386 = vmatpush1.msra.mxu0 0.0
        %387 = vmatprep.subr.mxu0 0.0
        %388 = vmatpush1.msra.mxu0 0.0
        %389 = vmatprep.subr.mxu0 0.0
        %390 = vmatpush1.msra.mxu0 0.0
        %391 = vmatprep.subr.mxu0 0.0
        %392 = vmatpush1.msra.mxu0 0.0
        %393 = vmatprep.subr.mxu0 0.0
        %394 = vmatpush1.msra.mxu0 0.0
        %395 = vmatprep.subr.mxu0 0.0
        %396 = vmatpush1.msra.mxu0 0.0
        %397 = vmatprep.subr.mxu0 0.0
        %398 = vmatpush1.msra.mxu0 0.0
        %399 = vmatprep.subr.mxu0 0.0
        %400 = vmatpush1.msra.mxu0 0.0
        %401 = vmatprep.subr.mxu0 0.0
        %402 = vmatpush1.msra.mxu0 0.0
        %403 = vmatprep.subr.mxu0 0.0
        %404 = vmatpush1.msra.mxu0 0.0
        %405 = vmatprep.subr.mxu0 0.0
        %406 = vmatpush1.msra.mxu0 0.0
        %407 = vmatprep.subr.mxu0 0.0
        %408 = vmatpush1.msra.mxu0 0.0
        %409 = vmatprep.subr.mxu0 0.0
        %410 = vmatpush1.msra.mxu0 0.0
        %411 = vmatprep.subr.mxu0 0.0
        %412 = vmatpush1.msra.mxu0 0.0
        %413 = vmatprep.subr.mxu0 0.0
        %414 = vmatpush1.msra.mxu0 0.0
        %415 = vmatprep.subr.mxu0 0.0
        %416 = vmatpush1.msra.mxu0 0.0
        %417 = vmatprep.subr.mxu0 0.0
        %418 = vmatpush1.msra.mxu0 0.0
        %419 = vmatprep.subr.mxu0 0.0
        %420 = vmatpush1.msra.mxu0 0.0
        %421 = vmatprep.subr.mxu0 0.0
        %422 = vmatpush1.msra.mxu0 0.0
        %423 = vmatprep.subr.mxu0 0.0
        %424 = vmatpush1.msra.mxu0 0.0
        %425 = vmatprep.mubr.f32.mxu0 0.0
        %v426 = vand.u32 %v264, 4294901760
        %427 = vmatmul.mubr.f32.gmra.mrb[0].mxu0 %v426
        %v428 = vpop.f32.mrb[0].mxu0
        %v429 = vadd.f32 %v347, %v428
        %v430 = vpop.f32.mrb[0].mxu0
        %v431 = vadd.f32 %v349, %v430
        %432 = vdwg.mxu0
        %v433 = vand.u32 %v271, 4294901760
        %v434 = vsub.f32 %v271, %v433
        %435 = vmatprep.subr.mxu0 %v434
        %v436 = vand.u32 %v268, 4294901760
        %v437 = vsub.f32 %v268, %v436
        %438 = vmatpush1.msra.mxu0 %v437
        %439 = vmatprep.subr.mxu0 0.0
        %440 = vmatpush1.msra.mxu0 0.0
        %441 = vmatprep.subr.mxu0 0.0
        %442 = vmatpush1.msra.mxu0 0.0
        %443 = vmatprep.subr.mxu0 0.0
        %444 = vmatpush1.msra.mxu0 0.0
        %445 = vmatprep.subr.mxu0 0.0
        %446 = vmatpush1.msra.mxu0 0.0
        %447 = vmatprep.subr.mxu0 0.0
        %448 = vmatpush1.msra.mxu0 0.0
        %449 = vmatprep.subr.mxu0 0.0
        %450 = vmatpush1.msra.mxu0 0.0
        %451 = vmatprep.subr.mxu0 0.0
        %452 = vmatpush1.msra.mxu0 0.0
        %453 = vmatprep.subr.mxu0 0.0
        %454 = vmatpush1.msra.mxu0 0.0
        %455 = vmatprep.subr.mxu0 0.0
        %456 = vmatpush1.msra.mxu0 0.0
        %457 = vmatprep.subr.mxu0 0.0
        %458 = vmatpush1.msra.mxu0 0.0
        %459 = vmatprep.subr.mxu0 0.0
        %460 = vmatpush1.msra.mxu0 0.0
        %461 = vmatprep.subr.mxu0 0.0
        %462 = vmatpush1.msra.mxu0 0.0
        %463 = vmatprep.subr.mxu0 0.0
        %464 = vmatpush1.msra.mxu0 0.0
        %465 = vmatprep.subr.mxu0 0.0
        %466 = vmatpush1.msra.mxu0 0.0
        %467 = vmatprep.subr.mxu0 0.0
        %468 = vmatpush1.msra.mxu0 0.0
        %469 = vmatprep.subr.mxu0 0.0
        %470 = vmatpush1.msra.mxu0 0.0
        %471 = vmatprep.subr.mxu0 0.0
        %472 = vmatpush1.msra.mxu0 0.0
        %473 = vmatprep.subr.mxu0 0.0
        %474 = vmatpush1.msra.mxu0 0.0
        %475 = vmatprep.subr.mxu0 0.0
        %476 = vmatpush1.msra.mxu0 0.0
        %477 = vmatprep.subr.mxu0 0.0
        %478 = vmatpush1.msra.mxu0 0.0
        %479 = vmatprep.subr.mxu0 0.0
        %480 = vmatpush1.msra.mxu0 0.0
        %481 = vmatprep.subr.mxu0 0.0
        %482 = vmatpush1.msra.mxu0 0.0
        %483 = vmatprep.subr.mxu0 0.0
        %484 = vmatpush1.msra.mxu0 0.0
        %485 = vmatprep.subr.mxu0 0.0
        %486 = vmatpush1.msra.mxu0 0.0
        %487 = vmatprep.subr.mxu0 0.0
        %488 = vmatpush1.msra.mxu0 0.0
        %489 = vmatprep.subr.mxu0 0.0
        %490 = vmatpush1.msra.mxu0 0.0
        %491 = vmatprep.subr.mxu0 0.0
        %492 = vmatpush1.msra.mxu0 0.0
        %493 = vmatprep.subr.mxu0 0.0
        %494 = vmatpush1.msra.mxu0 0.0
        %495 = vmatprep.subr.mxu0 0.0
        %496 = vmatpush1.msra.mxu0 0.0
        %497 = vmatprep.subr.mxu0 0.0
        %498 = vmatpush1.msra.mxu0 0.0
        %499 = vmatprep.subr.mxu0 0.0
        %500 = vmatpush1.msra.mxu0 0.0
        %501 = vmatprep.mubr.f32.mxu0 0.0
        %v502 = vand.u32 %v264, 4294901760
        %v503 = vsub.f32 %v264, %v502
        %504 = vmatmul.mubr.f32.gmra.mrb[0].mxu0 %v503
        %v505 = vpop.f32.mrb[0].mxu0
        %v506 = vadd.f32 %v429, %v505
        %v507 = vpop.f32.mrb[0].mxu0
        %v508 = vadd.f32 %v431, %v507
        %509 = vdwg.mxu0
        %v510 = vand.u32 %v271, 4294901760
        %511 = vmatprep.subr.mxu0 %v510
        %v512 = vand.u32 %v268, 4294901760
        %513 = vmatpush1.msra.mxu0 %v512
        %514 = vmatprep.subr.mxu0 0.0
        %515 = vmatpush1.msra.mxu0 0.0
        %516 = vmatprep.subr.mxu0 0.0
        %517 = vmatpush1.msra.mxu0 0.0
        %518 = vmatprep.subr.mxu0 0.0
        %519 = vmatpush1.msra.mxu0 0.0
        %520 = vmatprep.subr.mxu0 0.0
        %521 = vmatpush1.msra.mxu0 0.0
        %522 = vmatprep.subr.mxu0 0.0
        %523 = vmatpush1.msra.mxu0 0.0
        %524 = vmatprep.subr.mxu0 0.0
        %525 = vmatpush1.msra.mxu0 0.0
        %526 = vmatprep.subr.mxu0 0.0
        %527 = vmatpush1.msra.mxu0 0.0
        %528 = vmatprep.subr.mxu0 0.0
        %529 = vmatpush1.msra.mxu0 0.0
        %530 = vmatprep.subr.mxu0 0.0
        %531 = vmatpush1.msra.mxu0 0.0
        %532 = vmatprep.subr.mxu0 0.0
        %533 = vmatpush1.msra.mxu0 0.0
        %534 = vmatprep.subr.mxu0 0.0
        %535 = vmatpush1.msra.mxu0 0.0
        %536 = vmatprep.subr.mxu0 0.0
        %537 = vmatpush1.msra.mxu0 0.0
        %538 = vmatprep.subr.mxu0 0.0
        %539 = vmatpush1.msra.mxu0 0.0
        %540 = vmatprep.subr.mxu0 0.0
        %541 = vmatpush1.msra.mxu0 0.0
        %542 = vmatprep.subr.mxu0 0.0
        %543 = vmatpush1.msra.mxu0 0.0
        %544 = vmatprep.subr.mxu0 0.0
        %545 = vmatpush1.msra.mxu0 0.0
        %546 = vmatprep.subr.mxu0 0.0
        %547 = vmatpush1.msra.mxu0 0.0
        %548 = vmatprep.subr.mxu0 0.0
        %549 = vmatpush1.msra.mxu0 0.0
        %550 = vmatprep.subr.mxu0 0.0
        %551 = vmatpush1.msra.mxu0 0.0
        %552 = vmatprep.subr.mxu0 0.0
        %553 = vmatpush1.msra.mxu0 0.0
        %554 = vmatprep.subr.mxu0 0.0
        %555 = vmatpush1.msra.mxu0 0.0
        %556 = vmatprep.subr.mxu0 0.0
        %557 = vmatpush1.msra.mxu0 0.0
        %558 = vmatprep.subr.mxu0 0.0
        %559 = vmatpush1.msra.mxu0 0.0
        %560 = vmatprep.subr.mxu0 0.0
        %561 = vmatpush1.msra.mxu0 0.0
        %562 = vmatprep.subr.mxu0 0.0
        %563 = vmatpush1.msra.mxu0 0.0
        %564 = vmatprep.subr.mxu0 0.0
        %565 = vmatpush1.msra.mxu0 0.0
        %566 = vmatprep.subr.mxu0 0.0
        %567 = vmatpush1.msra.mxu0 0.0
        %568 = vmatprep.subr.mxu0 0.0
        %569 = vmatpush1.msra.mxu0 0.0
        %570 = vmatprep.subr.mxu0 0.0
        %571 = vmatpush1.msra.mxu0 0.0
        %572 = vmatprep.subr.mxu0 0.0
        %573 = vmatpush1.msra.mxu0 0.0
        %574 = vmatprep.subr.mxu0 0.0
        %575 = vmatpush1.msra.mxu0 0.0
        %576 = vmatprep.mubr.f32.mxu0 0.0
        %v577 = vand.u32 %v264, 4294901760
        %v578 = vsub.f32 %v264, %v577
        %v579 = vand.u32 %v578, 4294901760
        %580 = vmatmul.mubr.f32.gmra.mrb[0].mxu0 %v579
        %v581 = vpop.f32.mrb[0].mxu0
        %v582 = vadd.f32 %v506, %v581
        %v583 = vpop.f32.mrb[0].mxu0
        %v584 = vadd.f32 %v508, %v583
        %585 = vdwg.mxu0
        %v586 = vand.u32 %v271, 4294901760
        %v587 = vsub.f32 %v271, %v586
        %v588 = vand.u32 %v587, 4294901760
        %589 = vmatprep.subr.mxu0 %v588
        %v590 = vand.u32 %v268, 4294901760
        %v591 = vsub.f32 %v268, %v590
        %v592 = vand.u32 %v591, 4294901760
        %593 = vmatpush1.msra.mxu0 %v592
        %594 = vmatprep.subr.mxu0 0.0
        %595 = vmatpush1.msra.mxu0 0.0
        %596 = vmatprep.subr.mxu0 0.0
        %597 = vmatpush1.msra.mxu0 0.0
        %598 = vmatprep.subr.mxu0 0.0
        %599 = vmatpush1.msra.mxu0 0.0
        %600 = vmatprep.subr.mxu0 0.0
        %601 = vmatpush1.msra.mxu0 0.0
        %602 = vmatprep.subr.mxu0 0.0
        %603 = vmatpush1.msra.mxu0 0.0
        %604 = vmatprep.subr.mxu0 0.0
        %605 = vmatpush1.msra.mxu0 0.0
        %606 = vmatprep.subr.mxu0 0.0
        %607 = vmatpush1.msra.mxu0 0.0
        %608 = vmatprep.subr.mxu0 0.0
        %609 = vmatpush1.msra.mxu0 0.0
        %610 = vmatprep.subr.mxu0 0.0
        %611 = vmatpush1.msra.mxu0 0.0
        %612 = vmatprep.subr.mxu0 0.0
        %613 = vmatpush1.msra.mxu0 0.0
        %614 = vmatprep.subr.mxu0 0.0
        %615 = vmatpush1.msra.mxu0 0.0
        %616 = vmatprep.subr.mxu0 0.0
        %617 = vmatpush1.msra.mxu0 0.0
        %618 = vmatprep.subr.mxu0 0.0
        %619 = vmatpush1.msra.mxu0 0.0
        %620 = vmatprep.subr.mxu0 0.0
        %621 = vmatpush1.msra.mxu0 0.0
        %622 = vmatprep.subr.mxu0 0.0
        %623 = vmatpush1.msra.mxu0 0.0
        %624 = vmatprep.subr.mxu0 0.0
        %625 = vmatpush1.msra.mxu0 0.0
        %626 = vmatprep.subr.mxu0 0.0
        %627 = vmatpush1.msra.mxu0 0.0
        %628 = vmatprep.subr.mxu0 0.0
        %629 = vmatpush1.msra.mxu0 0.0
        %630 = vmatprep.subr.mxu0 0.0
        %631 = vmatpush1.msra.mxu0 0.0
        %632 = vmatprep.subr.mxu0 0.0
        %633 = vmatpush1.msra.mxu0 0.0
        %634 = vmatprep.subr.mxu0 0.0
        %635 = vmatpush1.msra.mxu0 0.0
        %636 = vmatprep.subr.mxu0 0.0
        %637 = vmatpush1.msra.mxu0 0.0
        %638 = vmatprep.subr.mxu0 0.0
        %639 = vmatpush1.msra.mxu0 0.0
        %640 = vmatprep.subr.mxu0 0.0
        %641 = vmatpush1.msra.mxu0 0.0
        %642 = vmatprep.subr.mxu0 0.0
        %643 = vmatpush1.msra.mxu0 0.0
        %644 = vmatprep.subr.mxu0 0.0
        %645 = vmatpush1.msra.mxu0 0.0
        %646 = vmatprep.subr.mxu0 0.0
        %647 = vmatpush1.msra.mxu0 0.0
        %648 = vmatprep.subr.mxu0 0.0
        %649 = vmatpush1.msra.mxu0 0.0
        %650 = vmatprep.subr.mxu0 0.0
        %651 = vmatpush1.msra.mxu0 0.0
        %652 = vmatprep.subr.mxu0 0.0
        %653 = vmatpush1.msra.mxu0 0.0
        %654 = vmatprep.subr.mxu0 0.0
        %655 = vmatpush1.msra.mxu0 0.0
        %656 = vmatprep.mubr.f32.mxu0 0.0
        %v657 = vand.u32 %v264, 4294901760
        %658 = vmatmul.mubr.f32.gmra.mrb[0].mxu0 %v657
        %v659 = vpop.f32.mrb[0].mxu0
        %v660 = vadd.f32 %v582, %v659
        %v661 = vpop.f32.mrb[0].mxu0
        %v662 = vadd.f32 %v584, %v661
        %663 = vdwg.mxu0
        %v664 = vand.u32 %v271, 4294901760
        %665 = vmatprep.subr.mxu0 %v664
        %v666 = vand.u32 %v268, 4294901760
        %667 = vmatpush1.msra.mxu0 %v666
        %668 = vmatprep.subr.mxu0 0.0
        %669 = vmatpush1.msra.mxu0 0.0
        %670 = vmatprep.subr.mxu0 0.0
        %671 = vmatpush1.msra.mxu0 0.0
        %672 = vmatprep.subr.mxu0 0.0
        %673 = vmatpush1.msra.mxu0 0.0
        %674 = vmatprep.subr.mxu0 0.0
        %675 = vmatpush1.msra.mxu0 0.0
        %676 = vmatprep.subr.mxu0 0.0
        %677 = vmatpush1.msra.mxu0 0.0
        %678 = vmatprep.subr.mxu0 0.0
        %679 = vmatpush1.msra.mxu0 0.0
        %680 = vmatprep.subr.mxu0 0.0
        %681 = vmatpush1.msra.mxu0 0.0
        %682 = vmatprep.subr.mxu0 0.0
        %683 = vmatpush1.msra.mxu0 0.0
        %684 = vmatprep.subr.mxu0 0.0
        %685 = vmatpush1.msra.mxu0 0.0
        %686 = vmatprep.subr.mxu0 0.0
        %687 = vmatpush1.msra.mxu0 0.0
        %688 = vmatprep.subr.mxu0 0.0
        %689 = vmatpush1.msra.mxu0 0.0
        %690 = vmatprep.subr.mxu0 0.0
        %691 = vmatpush1.msra.mxu0 0.0
        %692 = vmatprep.subr.mxu0 0.0
        %693 = vmatpush1.msra.mxu0 0.0
        %694 = vmatprep.subr.mxu0 0.0
        %695 = vmatpush1.msra.mxu0 0.0
        %696 = vmatprep.subr.mxu0 0.0
        %697 = vmatpush1.msra.mxu0 0.0
        %698 = vmatprep.subr.mxu0 0.0
        %699 = vmatpush1.msra.mxu0 0.0
        %700 = vmatprep.subr.mxu0 0.0
        %701 = vmatpush1.msra.mxu0 0.0
        %702 = vmatprep.subr.mxu0 0.0
        %703 = vmatpush1.msra.mxu0 0.0
        %704 = vmatprep.subr.mxu0 0.0
        %705 = vmatpush1.msra.mxu0 0.0
        %706 = vmatprep.subr.mxu0 0.0
        %707 = vmatpush1.msra.mxu0 0.0
        %708 = vmatprep.subr.mxu0 0.0
        %709 = vmatpush1.msra.mxu0 0.0
        %710 = vmatprep.subr.mxu0 0.0
        %711 = vmatpush1.msra.mxu0 0.0
        %712 = vmatprep.subr.mxu0 0.0
        %713 = vmatpush1.msra.mxu0 0.0
        %714 = vmatprep.subr.mxu0 0.0
        %715 = vmatpush1.msra.mxu0 0.0
        %716 = vmatprep.subr.mxu0 0.0
        %717 = vmatpush1.msra.mxu0 0.0
        %718 = vmatprep.subr.mxu0 0.0
        %719 = vmatpush1.msra.mxu0 0.0
        %720 = vmatprep.subr.mxu0 0.0
        %721 = vmatpush1.msra.mxu0 0.0
        %722 = vmatprep.subr.mxu0 0.0
        %723 = vmatpush1.msra.mxu0 0.0
        %724 = vmatprep.subr.mxu0 0.0
        %725 = vmatpush1.msra.mxu0 0.0
        %726 = vmatprep.subr.mxu0 0.0
        %727 = vmatpush1.msra.mxu0 0.0
        %728 = vmatprep.subr.mxu0 0.0
        %729 = vmatpush1.msra.mxu0 0.0
        %730 = vmatprep.mubr.f32.mxu0 0.0
        %v731 = vand.u32 %v264, 4294901760
        %732 = vmatmul.mubr.f32.gmra.mrb[0].mxu0 %v731
        %v733 = vpop.f32.mrb[0].mxu0
        %v734 = vadd.f32 %v660, %v733
        %v735 = vpop.f32.mrb[0].mxu0
        %v736 = vadd.f32 %v662, %v735
        %737 = vdwg.mxu0
        %v739 = vsel %vm262, %v259, 0
        %v742 = vsel %vm266, %v251, 0
        %v745 = vsel %vm266, %v252, 0
        %v747 = vand.u32 %v745, 4294901760
        %748 = vmatprep.subr.mxu0 %v747
        %v749 = vand.u32 %v742, 4294901760
        %750 = vmatpush1.msra.mxu0 %v749
        %751 = vmatprep.subr.mxu0 0.0
        %752 = vmatpush1.msra.mxu0 0.0
        %753 = vmatprep.subr.mxu0 0.0
        %754 = vmatpush1.msra.mxu0 0.0
        %755 = vmatprep.subr.mxu0 0.0
        %756 = vmatpush1.msra.mxu0 0.0
        %757 = vmatprep.subr.mxu0 0.0
        %758 = vmatpush1.msra.mxu0 0.0
        %759 = vmatprep.subr.mxu0 0.0
        %760 = vmatpush1.msra.mxu0 0.0
        %761 = vmatprep.subr.mxu0 0.0
        %762 = vmatpush1.msra.mxu0 0.0
        %763 = vmatprep.subr.mxu0 0.0
        %764 = vmatpush1.msra.mxu0 0.0
        %765 = vmatprep.subr.mxu0 0.0
        %766 = vmatpush1.msra.mxu0 0.0
        %767 = vmatprep.subr.mxu0 0.0
        %768 = vmatpush1.msra.mxu0 0.0
        %769 = vmatprep.subr.mxu0 0.0
        %770 = vmatpush1.msra.mxu0 0.0
        %771 = vmatprep.subr.mxu0 0.0
        %772 = vmatpush1.msra.mxu0 0.0
        %773 = vmatprep.subr.mxu0 0.0
        %774 = vmatpush1.msra.mxu0 0.0
        %775 = vmatprep.subr.mxu0 0.0
        %776 = vmatpush1.msra.mxu0 0.0
        %777 = vmatprep.subr.mxu0 0.0
        %778 = vmatpush1.msra.mxu0 0.0
        %779 = vmatprep.subr.mxu0 0.0
        %780 = vmatpush1.msra.mxu0 0.0
        %781 = vmatprep.subr.mxu0 0.0
        %782 = vmatpush1.msra.mxu0 0.0
        %783 = vmatprep.subr.mxu0 0.0
        %784 = vmatpush1.msra.mxu0 0.0
        %785 = vmatprep.subr.mxu0 0.0
        %786 = vmatpush1.msra.mxu0 0.0
        %787 = vmatprep.subr.mxu0 0.0
        %788 = vmatpush1.msra.mxu0 0.0
        %789 = vmatprep.subr.mxu0 0.0
        %790 = vmatpush1.msra.mxu0 0.0
        %791 = vmatprep.subr.mxu0 0.0
        %792 = vmatpush1.msra.mxu0 0.0
        %793 = vmatprep.subr.mxu0 0.0
        %794 = vmatpush1.msra.mxu0 0.0
        %795 = vmatprep.subr.mxu0 0.0
        %796 = vmatpush1.msra.mxu0 0.0
        %797 = vmatprep.subr.mxu0 0.0
        %798 = vmatpush1.msra.mxu0 0.0
        %799 = vmatprep.subr.mxu0 0.0
        %800 = vmatpush1.msra.mxu0 0.0
        %801 = vmatprep.subr.mxu0 0.0
        %802 = vmatpush1.msra.mxu0 0.0
        %803 = vmatprep.subr.mxu0 0.0
        %804 = vmatpush1.msra.mxu0 0.0
        %805 = vmatprep.subr.mxu0 0.0
        %806 = vmatpush1.msra.mxu0 0.0
        %807 = vmatprep.subr.mxu0 0.0
        %808 = vmatpush1.msra.mxu0 0.0
        %809 = vmatprep.subr.mxu0 0.0
        %810 = vmatpush1.msra.mxu0 0.0
        %811 = vmatprep.subr.mxu0 0.0
        %812 = vmatpush1.msra.mxu0 0.0
        %813 = vmatprep.mubr.f32.mxu0 0.0
        %v814 = vand.u32 %v739, 4294901760
        %v815 = vsub.f32 %v739, %v814
        %v816 = vand.u32 %v815, 4294901760
        %v817 = vsub.f32 %v815, %v816
        %v818 = vand.u32 %v817, 4294901760
        %819 = vmatmul.mubr.f32.gmra.mrb[0].mxu0 %v818
        %v820 = vpop.f32.mrb[0].mxu0
        %v821 = vadd.f32 %v734, %v820
        %v822 = vpop.f32.mrb[0].mxu0
        %v823 = vadd.f32 %v736, %v822
        %824 = vdwg.mxu0
        %v825 = vand.u32 %v745, 4294901760
        %v826 = vsub.f32 %v745, %v825
        %v827 = vand.u32 %v826, 4294901760
        %v828 = vsub.f32 %v826, %v827
        %v829 = vand.u32 %v828, 4294901760
        %830 = vmatprep.subr.mxu0 %v829
        %v831 = vand.u32 %v742, 4294901760
        %v832 = vsub.f32 %v742, %v831
        %v833 = vand.u32 %v832, 4294901760
        %v834 = vsub.f32 %v832, %v833
        %v835 = vand.u32 %v834, 4294901760
        %836 = vmatpush1.msra.mxu0 %v835
        %837 = vmatprep.subr.mxu0 0.0
        %838 = vmatpush1.msra.mxu0 0.0
        %839 = vmatprep.subr.mxu0 0.0
        %840 = vmatpush1.msra.mxu0 0.0
        %841 = vmatprep.subr.mxu0 0.0
        %842 = vmatpush1.msra.mxu0 0.0
        %843 = vmatprep.subr.mxu0 0.0
        %844 = vmatpush1.msra.mxu0 0.0
        %845 = vmatprep.subr.mxu0 0.0
        %846 = vmatpush1.msra.mxu0 0.0
        %847 = vmatprep.subr.mxu0 0.0
        %848 = vmatpush1.msra.mxu0 0.0
        %849 = vmatprep.subr.mxu0 0.0
        %850 = vmatpush1.msra.mxu0 0.0
        %851 = vmatprep.subr.mxu0 0.0
        %852 = vmatpush1.msra.mxu0 0.0
        %853 = vmatprep.subr.mxu0 0.0
        %854 = vmatpush1.msra.mxu0 0.0
        %855 = vmatprep.subr.mxu0 0.0
        %856 = vmatpush1.msra.mxu0 0.0
        %857 = vmatprep.subr.mxu0 0.0
        %858 = vmatpush1.msra.mxu0 0.0
        %859 = vmatprep.subr.mxu0 0.0
        %860 = vmatpush1.msra.mxu0 0.0
        %861 = vmatprep.subr.mxu0 0.0
        %862 = vmatpush1.msra.mxu0 0.0
        %863 = vmatprep.subr.mxu0 0.0
        %864 = vmatpush1.msra.mxu0 0.0
        %865 = vmatprep.subr.mxu0 0.0
        %866 = vmatpush1.msra.mxu0 0.0
        %867 = vmatprep.subr.mxu0 0.0
        %868 = vmatpush1.msra.mxu0 0.0
        %869 = vmatprep.subr.mxu0 0.0
        %870 = vmatpush1.msra.mxu0 0.0
        %871 = vmatprep.subr.mxu0 0.0
        %872 = vmatpush1.msra.mxu0 0.0
        %873 = vmatprep.subr.mxu0 0.0
        %874 = vmatpush1.msra.mxu0 0.0
        %875 = vmatprep.subr.mxu0 0.0
        %876 = vmatpush1.msra.mxu0 0.0
        %877 = vmatprep.subr.mxu0 0.0
        %878 = vmatpush1.msra.mxu0 0.0
        %879 = vmatprep.subr.mxu0 0.0
        %880 = vmatpush1.msra.mxu0 0.0
        %881 = vmatprep.subr.mxu0 0.0
        %882 = vmatpush1.msra.mxu0 0.0
        %883 = vmatprep.subr.mxu0 0.0
        %884 = vmatpush1.msra.mxu0 0.0
        %885 = vmatprep.subr.mxu0 0.0
        %886 = vmatpush1.msra.mxu0 0.0
        %887 = vmatprep.subr.mxu0 0.0
        %888 = vmatpush1.msra.mxu0 0.0
        %889 = vmatprep.subr.mxu0 0.0
        %890 = vmatpush1.msra.mxu0 0.0
        %891 = vmatprep.subr.mxu0 0.0
        %892 = vmatpush1.msra.mxu0 0.0
        %893 = vmatprep.subr.mxu0 0.0
        %894 = vmatpush1.msra.mxu0 0.0
        %895 = vmatprep.subr.mxu0 0.0
        %896 = vmatpush1.msra.mxu0 0.0
        %897 = vmatprep.subr.mxu0 0.0
        %898 = vmatpush1.msra.mxu0 0.0
        %899 = vmatprep.mubr.f32.mxu0 0.0
        %v900 = vand.u32 %v739, 4294901760
        %901 = vmatmul.mubr.f32.gmra.mrb[0].mxu0 %v900
        %v902 = vpop.f32.mrb[0].mxu0
        %v903 = vadd.f32 %v821, %v902
        %v904 = vpop.f32.mrb[0].mxu0
        %v905 = vadd.f32 %v823, %v904
        %906 = vdwg.mxu0
        %v907 = vand.u32 %v745, 4294901760
        %v908 = vsub.f32 %v745, %v907
        %909 = vmatprep.subr.mxu0 %v908
        %v910 = vand.u32 %v742, 4294901760
        %v911 = vsub.f32 %v742, %v910
        %912 = vmatpush1.msra.mxu0 %v911
        %913 = vmatprep.subr.mxu0 0.0
        %914 = vmatpush1.msra.mxu0 0.0
        %915 = vmatprep.subr.mxu0 0.0
        %916 = vmatpush1.msra.mxu0 0.0
        %917 = vmatprep.subr.mxu0 0.0
        %918 = vmatpush1.msra.mxu0 0.0
        %919 = vmatprep.subr.mxu0 0.0
        %920 = vmatpush1.msra.mxu0 0.0
        %921 = vmatprep.subr.mxu0 0.0
        %922 = vmatpush1.msra.mxu0 0.0
        %923 = vmatprep.subr.mxu0 0.0
        %924 = vmatpush1.msra.mxu0 0.0
        %925 = vmatprep.subr.mxu0 0.0
        %926 = vmatpush1.msra.mxu0 0.0
        %927 = vmatprep.subr.mxu0 0.0
        %928 = vmatpush1.msra.mxu0 0.0
        %929 = vmatprep.subr.mxu0 0.0
        %930 = vmatpush1.msra.mxu0 0.0
        %931 = vmatprep.subr.mxu0 0.0
        %932 = vmatpush1.msra.mxu0 0.0
        %933 = vmatprep.subr.mxu0 0.0
        %934 = vmatpush1.msra.mxu0 0.0
        %935 = vmatprep.subr.mxu0 0.0
        %936 = vmatpush1.msra.mxu0 0.0
        %937 = vmatprep.subr.mxu0 0.0
        %938 = vmatpush1.msra.mxu0 0.0
        %939 = vmatprep.subr.mxu0 0.0
        %940 = vmatpush1.msra.mxu0 0.0
        %941 = vmatprep.subr.mxu0 0.0
        %942 = vmatpush1.msra.mxu0 0.0
        %943 = vmatprep.subr.mxu0 0.0
        %944 = vmatpush1.msra.mxu0 0.0
        %945 = vmatprep.subr.mxu0 0.0
        %946 = vmatpush1.msra.mxu0 0.0
        %947 = vmatprep.subr.mxu0 0.0
        %948 = vmatpush1.msra.mxu0 0.0
        %949 = vmatprep.subr.mxu0 0.0
        %950 = vmatpush1.msra.mxu0 0.0
        %951 = vmatprep.subr.mxu0 0.0
        %952 = vmatpush1.msra.mxu0 0.0
        %953 = vmatprep.subr.mxu0 0.0
        %954 = vmatpush1.msra.mxu0 0.0
        %955 = vmatprep.subr.mxu0 0.0
        %956 = vmatpush1.msra.mxu0 0.0
        %957 = vmatprep.subr.mxu0 0.0
        %958 = vmatpush1.msra.mxu0 0.0
        %959 = vmatprep.subr.mxu0 0.0
        %960 = vmatpush1.msra.mxu0 0.0
        %961 = vmatprep.subr.mxu0 0.0
        %962 = vmatpush1.msra.mxu0 0.0
        %963 = vmatprep.subr.mxu0 0.0
        %964 = vmatpush1.msra.mxu0 0.0
        %965 = vmatprep.subr.mxu0 0.0
        %966 = vmatpush1.msra.mxu0 0.0
        %967 = vmatprep.subr.mxu0 0.0
        %968 = vmatpush1.msra.mxu0 0.0
        %969 = vmatprep.subr.mxu0 0.0
        %970 = vmatpush1.msra.mxu0 0.0
        %971 = vmatprep.subr.mxu0 0.0
        %972 = vmatpush1.msra.mxu0 0.0
        %973 = vmatprep.subr.mxu0 0.0
        %974 = vmatpush1.msra.mxu0 0.0
        %975 = vmatprep.mubr.f32.mxu0 0.0
        %v976 = vand.u32 %v739, 4294901760
        %v977 = vsub.f32 %v739, %v976
        %978 = vmatmul.mubr.f32.gmra.mrb[0].mxu0 %v977
        %v979 = vpop.f32.mrb[0].mxu0
        %v980 = vadd.f32 %v903, %v979
        %v981 = vpop.f32.mrb[0].mxu0
        %v982 = vadd.f32 %v905, %v981
        %983 = vdwg.mxu0
        %v984 = vand.u32 %v745, 4294901760
        %985 = vmatprep.subr.mxu0 %v984
        %v986 = vand.u32 %v742, 4294901760
        %987 = vmatpush1.msra.mxu0 %v986
        %988 = vmatprep.subr.mxu0 0.0
        %989 = vmatpush1.msra.mxu0 0.0
        %990 = vmatprep.subr.mxu0 0.0
        %991 = vmatpush1.msra.mxu0 0.0
        %992 = vmatprep.subr.mxu0 0.0
        %993 = vmatpush1.msra.mxu0 0.0
        %994 = vmatprep.subr.mxu0 0.0
        %995 = vmatpush1.msra.mxu0 0.0
        %996 = vmatprep.subr.mxu0 0.0
        %997 = vmatpush1.msra.mxu0 0.0
        %998 = vmatprep.subr.mxu0 0.0
        %999 = vmatpush1.msra.mxu0 0.0
        %1000 = vmatprep.subr.mxu0 0.0
        %1001 = vmatpush1.msra.mxu0 0.0
        %1002 = vmatprep.subr.mxu0 0.0
        %1003 = vmatpush1.msra.mxu0 0.0
        %1004 = vmatprep.subr.mxu0 0.0
        %1005 = vmatpush1.msra.mxu0 0.0
        %1006 = vmatprep.subr.mxu0 0.0
        %1007 = vmatpush1.msra.mxu0 0.0
        %1008 = vmatprep.subr.mxu0 0.0
        %1009 = vmatpush1.msra.mxu0 0.0
        %1010 = vmatprep.subr.mxu0 0.0
        %1011 = vmatpush1.msra.mxu0 0.0
        %1012 = vmatprep.subr.mxu0 0.0
        %1013 = vmatpush1.msra.mxu0 0.0
        %1014 = vmatprep.subr.mxu0 0.0
        %1015 = vmatpush1.msra.mxu0 0.0
        %1016 = vmatprep.subr.mxu0 0.0
        %1017 = vmatpush1.msra.mxu0 0.0
        %1018 = vmatprep.subr.mxu0 0.0
        %1019 = vmatpush1.msra.mxu0 0.0
        %1020 = vmatprep.subr.mxu0 0.0
        %1021 = vmatpush1.msra.mxu0 0.0
        %1022 = vmatprep.subr.mxu0 0.0
        %1023 = vmatpush1.msra.mxu0 0.0
        %1024 = vmatprep.subr.mxu0 0.0
        %1025 = vmatpush1.msra.mxu0 0.0
        %1026 = vmatprep.subr.mxu0 0.0
        %1027 = vmatpush1.msra.mxu0 0.0
        %1028 = vmatprep.subr.mxu0 0.0
        %1029 = vmatpush1.msra.mxu0 0.0
        %1030 = vmatprep.subr.mxu0 0.0
        %1031 = vmatpush1.msra.mxu0 0.0
        %1032 = vmatprep.subr.mxu0 0.0
        %1033 = vmatpush1.msra.mxu0 0.0
        %1034 = vmatprep.subr.mxu0 0.0
        %1035 = vmatpush1.msra.mxu0 0.0
        %1036 = vmatprep.subr.mxu0 0.0
        %1037 = vmatpush1.msra.mxu0 0.0
        %1038 = vmatprep.subr.mxu0 0.0
        %1039 = vmatpush1.msra.mxu0 0.0
        %1040 = vmatprep.subr.mxu0 0.0
        %1041 = vmatpush1.msra.mxu0 0.0
        %1042 = vmatprep.subr.mxu0 0.0
        %1043 = vmatpush1.msra.mxu0 0.0
        %1044 = vmatprep.subr.mxu0 0.0
        %1045 = vmatpush1.msra.mxu0 0.0
        %1046 = vmatprep.subr.mxu0 0.0
        %1047 = vmatpush1.msra.mxu0 0.0
        %1048 = vmatprep.subr.mxu0 0.0
        %1049 = vmatpush1.msra.mxu0 0.0
        %1050 = vmatprep.mubr.f32.mxu0 0.0
        %v1051 = vand.u32 %v739, 4294901760
        %v1052 = vsub.f32 %v739, %v1051
        %v1053 = vand.u32 %v1052, 4294901760
        %1054 = vmatmul.mubr.f32.gmra.mrb[0].mxu0 %v1053
        %v1055 = vpop.f32.mrb[0].mxu0
        %v1056 = vadd.f32 %v980, %v1055
        %v1057 = vpop.f32.mrb[0].mxu0
        %v1058 = vadd.f32 %v982, %v1057
        %1059 = vdwg.mxu0
        %v1060 = vand.u32 %v745, 4294901760
        %v1061 = vsub.f32 %v745, %v1060
        %v1062 = vand.u32 %v1061, 4294901760
        %1063 = vmatprep.subr.mxu0 %v1062
        %v1064 = vand.u32 %v742, 4294901760
        %v1065 = vsub.f32 %v742, %v1064
        %v1066 = vand.u32 %v1065, 4294901760
        %1067 = vmatpush1.msra.mxu0 %v1066
        %1068 = vmatprep.subr.mxu0 0.0
        %1069 = vmatpush1.msra.mxu0 0.0
        %1070 = vmatprep.subr.mxu0 0.0
        %1071 = vmatpush1.msra.mxu0 0.0
        %1072 = vmatprep.subr.mxu0 0.0
        %1073 = vmatpush1.msra.mxu0 0.0
        %1074 = vmatprep.subr.mxu0 0.0
        %1075 = vmatpush1.msra.mxu0 0.0
        %1076 = vmatprep.subr.mxu0 0.0
        %1077 = vmatpush1.msra.mxu0 0.0
        %1078 = vmatprep.subr.mxu0 0.0
        %1079 = vmatpush1.msra.mxu0 0.0
        %1080 = vmatprep.subr.mxu0 0.0
        %1081 = vmatpush1.msra.mxu0 0.0
        %1082 = vmatprep.subr.mxu0 0.0
        %1083 = vmatpush1.msra.mxu0 0.0
        %1084 = vmatprep.subr.mxu0 0.0
        %1085 = vmatpush1.msra.mxu0 0.0
        %1086 = vmatprep.subr.mxu0 0.0
        %1087 = vmatpush1.msra.mxu0 0.0
        %1088 = vmatprep.subr.mxu0 0.0
        %1089 = vmatpush1.msra.mxu0 0.0
        %1090 = vmatprep.subr.mxu0 0.0
        %1091 = vmatpush1.msra.mxu0 0.0
        %1092 = vmatprep.subr.mxu0 0.0
        %1093 = vmatpush1.msra.mxu0 0.0
        %1094 = vmatprep.subr.mxu0 0.0
        %1095 = vmatpush1.msra.mxu0 0.0
        %1096 = vmatprep.subr.mxu0 0.0
        %1097 = vmatpush1.msra.mxu0 0.0
        %1098 = vmatprep.subr.mxu0 0.0
        %1099 = vmatpush1.msra.mxu0 0.0
        %1100 = vmatprep.subr.mxu0 0.0
        %1101 = vmatpush1.msra.mxu0 0.0
        %1102 = vmatprep.subr.mxu0 0.0
        %1103 = vmatpush1.msra.mxu0 0.0
        %1104 = vmatprep.subr.mxu0 0.0
        %1105 = vmatpush1.msra.mxu0 0.0
        %1106 = vmatprep.subr.mxu0 0.0
        %1107 = vmatpush1.msra.mxu0 0.0
        %1108 = vmatprep.subr.mxu0 0.0
        %1109 = vmatpush1.msra.mxu0 0.0
        %1110 = vmatprep.subr.mxu0 0.0
        %1111 = vmatpush1.msra.mxu0 0.0
        %1112 = vmatprep.subr.mxu0 0.0
        %1113 = vmatpush1.msra.mxu0 0.0
        %1114 = vmatprep.subr.mxu0 0.0
        %1115 = vmatpush1.msra.mxu0 0.0
        %1116 = vmatprep.subr.mxu0 0.0
        %1117 = vmatpush1.msra.mxu0 0.0
        %1118 = vmatprep.subr.mxu0 0.0
        %1119 = vmatpush1.msra.mxu0 0.0
        %1120 = vmatprep.subr.mxu0 0.0
        %1121 = vmatpush1.msra.mxu0 0.0
        %1122 = vmatprep.subr.mxu0 0.0
        %1123 = vmatpush1.msra.mxu0 0.0
        %1124 = vmatprep.subr.mxu0 0.0
        %1125 = vmatpush1.msra.mxu0 0.0
        %1126 = vmatprep.subr.mxu0 0.0
        %1127 = vmatpush1.msra.mxu0 0.0
        %1128 = vmatprep.subr.mxu0 0.0
        %1129 = vmatpush1.msra.mxu0 0.0
        %1130 = vmatprep.mubr.f32.mxu0 0.0
        %v1131 = vand.u32 %v739, 4294901760
        %1132 = vmatmul.mubr.f32.gmra.mrb[0].mxu0 %v1131
        %v1133 = vpop.f32.mrb[0].mxu0
        %v1134 = vadd.f32 %v1056, %v1133
        %v1135 = vpop.f32.mrb[0].mxu0
        %v1136 = vadd.f32 %v1058, %v1135
        %1137 = vdwg.mxu0
        %v1138 = vand.u32 %v745, 4294901760
        %1139 = vmatprep.subr.mxu0 %v1138
        %v1140 = vand.u32 %v742, 4294901760
        %1141 = vmatpush1.msra.mxu0 %v1140
        %1142 = vmatprep.subr.mxu0 0.0
        %1143 = vmatpush1.msra.mxu0 0.0
        %1144 = vmatprep.subr.mxu0 0.0
        %1145 = vmatpush1.msra.mxu0 0.0
        %1146 = vmatprep.subr.mxu0 0.0
        %1147 = vmatpush1.msra.mxu0 0.0
        %1148 = vmatprep.subr.mxu0 0.0
        %1149 = vmatpush1.msra.mxu0 0.0
        %1150 = vmatprep.subr.mxu0 0.0
        %1151 = vmatpush1.msra.mxu0 0.0
        %1152 = vmatprep.subr.mxu0 0.0
        %1153 = vmatpush1.msra.mxu0 0.0
        %1154 = vmatprep.subr.mxu0 0.0
        %1155 = vmatpush1.msra.mxu0 0.0
        %1156 = vmatprep.subr.mxu0 0.0
        %1157 = vmatpush1.msra.mxu0 0.0
        %1158 = vmatprep.subr.mxu0 0.0
        %1159 = vmatpush1.msra.mxu0 0.0
        %1160 = vmatprep.subr.mxu0 0.0
        %1161 = vmatpush1.msra.mxu0 0.0
        %1162 = vmatprep.subr.mxu0 0.0
        %1163 = vmatpush1.msra.mxu0 0.0
        %1164 = vmatprep.subr.mxu0 0.0
        %1165 = vmatpush1.msra.mxu0 0.0
        %1166 = vmatprep.subr.mxu0 0.0
        %1167 = vmatpush1.msra.mxu0 0.0
        %1168 = vmatprep.subr.mxu0 0.0
        %1169 = vmatpush1.msra.mxu0 0.0
        %1170 = vmatprep.subr.mxu0 0.0
        %1171 = vmatpush1.msra.mxu0 0.0
        %1172 = vmatprep.subr.mxu0 0.0
        %1173 = vmatpush1.msra.mxu0 0.0
        %1174 = vmatprep.subr.mxu0 0.0
        %1175 = vmatpush1.msra.mxu0 0.0
        %1176 = vmatprep.subr.mxu0 0.0
        %1177 = vmatpush1.msra.mxu0 0.0
        %1178 = vmatprep.subr.mxu0 0.0
        %1179 = vmatpush1.msra.mxu0 0.0
        %1180 = vmatprep.subr.mxu0 0.0
        %1181 = vmatpush1.msra.mxu0 0.0
        %1182 = vmatprep.subr.mxu0 0.0
        %1183 = vmatpush1.msra.mxu0 0.0
        %1184 = vmatprep.subr.mxu0 0.0
        %1185 = vmatpush1.msra.mxu0 0.0
        %1186 = vmatprep.subr.mxu0 0.0
        %1187 = vmatpush1.msra.mxu0 0.0
        %1188 = vmatprep.subr.mxu0 0.0
        %1189 = vmatpush1.msra.mxu0 0.0
        %1190 = vmatprep.subr.mxu0 0.0
        %1191 = vmatpush1.msra.mxu0 0.0
        %1192 = vmatprep.subr.mxu0 0.0
        %1193 = vmatpush1.msra.mxu0 0.0
        %1194 = vmatprep.subr.mxu0 0.0
        %1195 = vmatpush1.msra.mxu0 0.0
        %1196 = vmatprep.subr.mxu0 0.0
        %1197 = vmatpush1.msra.mxu0 0.0
        %1198 = vmatprep.subr.mxu0 0.0
        %1199 = vmatpush1.msra.mxu0 0.0
        %1200 = vmatprep.subr.mxu0 0.0
        %1201 = vmatpush1.msra.mxu0 0.0
        %1202 = vmatprep.subr.mxu0 0.0
        %1203 = vmatpush1.msra.mxu0 0.0
        %1204 = vmatprep.mubr.f32.mxu0 0.0
        %v1205 = vand.u32 %v739, 4294901760
        %1206 = vmatmul.mubr.f32.gmra.mrb[0].mxu0 %v1205
        %v1207 = vpop.f32.mrb[0].mxu0
        %v1208 = vadd.f32 %v1134, %v1207
        %v1209 = vpop.f32.mrb[0].mxu0
        %v1210 = vadd.f32 %v1136, %v1209
        %1211 = vdwg.mxu0
        %s1212 = scalar_lea.vmem %s1, 24
        %v1213 = vld [vmem:[%s1212] sm:$0xf]
        %v1215 = vsel %vm262, %v1213, 0
        %v1218 = vsel %vm266, %v257, 0
        %v1221 = vsel %vm266, %v258, 0
        %v1223 = vand.u32 %v1221, 4294901760
        %1224 = vmatprep.subr.mxu0 %v1223
        %v1225 = vand.u32 %v1218, 4294901760
        %1226 = vmatpush1.msra.mxu0 %v1225
        %1227 = vmatprep.subr.mxu0 0.0
        %1228 = vmatpush1.msra.mxu0 0.0
        %1229 = vmatprep.subr.mxu0 0.0
        %1230 = vmatpush1.msra.mxu0 0.0
        %1231 = vmatprep.subr.mxu0 0.0
        %1232 = vmatpush1.msra.mxu0 0.0
        %1233 = vmatprep.subr.mxu0 0.0
        %1234 = vmatpush1.msra.mxu0 0.0
        %1235 = vmatprep.subr.mxu0 0.0
        %1236 = vmatpush1.msra.mxu0 0.0
        %1237 = vmatprep.subr.mxu0 0.0
        %1238 = vmatpush1.msra.mxu0 0.0
        %1239 = vmatprep.subr.mxu0 0.0
        %1240 = vmatpush1.msra.mxu0 0.0
        %1241 = vmatprep.subr.mxu0 0.0
        %1242 = vmatpush1.msra.mxu0 0.0
        %1243 = vmatprep.subr.mxu0 0.0
        %1244 = vmatpush1.msra.mxu0 0.0
        %1245 = vmatprep.subr.mxu0 0.0
        %1246 = vmatpush1.msra.mxu0 0.0
        %1247 = vmatprep.subr.mxu0 0.0
        %1248 = vmatpush1.msra.mxu0 0.0
        %1249 = vmatprep.subr.mxu0 0.0
        %1250 = vmatpush1.msra.mxu0 0.0
        %1251 = vmatprep.subr.mxu0 0.0
        %1252 = vmatpush1.msra.mxu0 0.0
        %1253 = vmatprep.subr.mxu0 0.0
        %1254 = vmatpush1.msra.mxu0 0.0
        %1255 = vmatprep.subr.mxu0 0.0
        %1256 = vmatpush1.msra.mxu0 0.0
        %1257 = vmatprep.subr.mxu0 0.0
        %1258 = vmatpush1.msra.mxu0 0.0
        %1259 = vmatprep.subr.mxu0 0.0
        %1260 = vmatpush1.msra.mxu0 0.0
        %1261 = vmatprep.subr.mxu0 0.0
        %1262 = vmatpush1.msra.mxu0 0.0
        %1263 = vmatprep.subr.mxu0 0.0
        %1264 = vmatpush1.msra.mxu0 0.0
        %1265 = vmatprep.subr.mxu0 0.0
        %1266 = vmatpush1.msra.mxu0 0.0
        %1267 = vmatprep.subr.mxu0 0.0
        %1268 = vmatpush1.msra.mxu0 0.0
        %1269 = vmatprep.subr.mxu0 0.0
        %1270 = vmatpush1.msra.mxu0 0.0
        %1271 = vmatprep.subr.mxu0 0.0
        %1272 = vmatpush1.msra.mxu0 0.0
        %1273 = vmatprep.subr.mxu0 0.0
        %1274 = vmatpush1.msra.mxu0 0.0
        %1275 = vmatprep.subr.mxu0 0.0
        %1276 = vmatpush1.msra.mxu0 0.0
        %1277 = vmatprep.subr.mxu0 0.0
        %1278 = vmatpush1.msra.mxu0 0.0
        %1279 = vmatprep.subr.mxu0 0.0
        %1280 = vmatpush1.msra.mxu0 0.0
        %1281 = vmatprep.subr.mxu0 0.0
        %1282 = vmatpush1.msra.mxu0 0.0
        %1283 = vmatprep.subr.mxu0 0.0
        %1284 = vmatpush1.msra.mxu0 0.0
        %1285 = vmatprep.subr.mxu0 0.0
        %1286 = vmatpush1.msra.mxu0 0.0
        %1287 = vmatprep.subr.mxu0 0.0
        %1288 = vmatpush1.msra.mxu0 0.0
        %1289 = vmatprep.mubr.f32.mxu0 0.0
        %v1290 = vand.u32 %v1215, 4294901760
        %v1291 = vsub.f32 %v1215, %v1290
        %v1292 = vand.u32 %v1291, 4294901760
        %v1293 = vsub.f32 %v1291, %v1292
        %v1294 = vand.u32 %v1293, 4294901760
        %1295 = vmatmul.mubr.f32.gmra.mrb[0].mxu0 %v1294
        %v1296 = vpop.f32.mrb[0].mxu0
        %v1297 = vadd.f32 0.0, %v1296
        %v1298 = vpop.f32.mrb[0].mxu0
        %v1299 = vadd.f32 0.0, %v1298
        %1300 = vdwg.mxu0
        %v1301 = vand.u32 %v1221, 4294901760
        %v1302 = vsub.f32 %v1221, %v1301
        %v1303 = vand.u32 %v1302, 4294901760
        %v1304 = vsub.f32 %v1302, %v1303
        %v1305 = vand.u32 %v1304, 4294901760
        %1306 = vmatprep.subr.mxu0 %v1305
        %v1307 = vand.u32 %v1218, 4294901760
        %v1308 = vsub.f32 %v1218, %v1307
        %v1309 = vand.u32 %v1308, 4294901760
        %v1310 = vsub.f32 %v1308, %v1309
        %v1311 = vand.u32 %v1310, 4294901760
        %1312 = vmatpush1.msra.mxu0 %v1311
        %1313 = vmatprep.subr.mxu0 0.0
        %1314 = vmatpush1.msra.mxu0 0.0
        %1315 = vmatprep.subr.mxu0 0.0
        %1316 = vmatpush1.msra.mxu0 0.0
        %1317 = vmatprep.subr.mxu0 0.0
        %1318 = vmatpush1.msra.mxu0 0.0
        %1319 = vmatprep.subr.mxu0 0.0
        %1320 = vmatpush1.msra.mxu0 0.0
        %1321 = vmatprep.subr.mxu0 0.0
        %1322 = vmatpush1.msra.mxu0 0.0
        %1323 = vmatprep.subr.mxu0 0.0
        %1324 = vmatpush1.msra.mxu0 0.0
        %1325 = vmatprep.subr.mxu0 0.0
        %1326 = vmatpush1.msra.mxu0 0.0
        %1327 = vmatprep.subr.mxu0 0.0
        %1328 = vmatpush1.msra.mxu0 0.0
        %1329 = vmatprep.subr.mxu0 0.0
        %1330 = vmatpush1.msra.mxu0 0.0
        %1331 = vmatprep.subr.mxu0 0.0
        %1332 = vmatpush1.msra.mxu0 0.0
        %1333 = vmatprep.subr.mxu0 0.0
        %1334 = vmatpush1.msra.mxu0 0.0
        %1335 = vmatprep.subr.mxu0 0.0
        %1336 = vmatpush1.msra.mxu0 0.0
        %1337 = vmatprep.subr.mxu0 0.0
        %1338 = vmatpush1.msra.mxu0 0.0
        %1339 = vmatprep.subr.mxu0 0.0
        %1340 = vmatpush1.msra.mxu0 0.0
        %1341 = vmatprep.subr.mxu0 0.0
        %1342 = vmatpush1.msra.mxu0 0.0
        %1343 = vmatprep.subr.mxu0 0.0
        %1344 = vmatpush1.msra.mxu0 0.0
        %1345 = vmatprep.subr.mxu0 0.0
        %1346 = vmatpush1.msra.mxu0 0.0
        %1347 = vmatprep.subr.mxu0 0.0
        %1348 = vmatpush1.msra.mxu0 0.0
        %1349 = vmatprep.subr.mxu0 0.0
        %1350 = vmatpush1.msra.mxu0 0.0
        %1351 = vmatprep.subr.mxu0 0.0
        %1352 = vmatpush1.msra.mxu0 0.0
        %1353 = vmatprep.subr.mxu0 0.0
        %1354 = vmatpush1.msra.mxu0 0.0
        %1355 = vmatprep.subr.mxu0 0.0
        %1356 = vmatpush1.msra.mxu0 0.0
        %1357 = vmatprep.subr.mxu0 0.0
        %1358 = vmatpush1.msra.mxu0 0.0
        %1359 = vmatprep.subr.mxu0 0.0
        %1360 = vmatpush1.msra.mxu0 0.0
        %1361 = vmatprep.subr.mxu0 0.0
        %1362 = vmatpush1.msra.mxu0 0.0
        %1363 = vmatprep.subr.mxu0 0.0
        %1364 = vmatpush1.msra.mxu0 0.0
        %1365 = vmatprep.subr.mxu0 0.0
        %1366 = vmatpush1.msra.mxu0 0.0
        %1367 = vmatprep.subr.mxu0 0.0
        %1368 = vmatpush1.msra.mxu0 0.0
        %1369 = vmatprep.subr.mxu0 0.0
        %1370 = vmatpush1.msra.mxu0 0.0
        %1371 = vmatprep.subr.mxu0 0.0
        %1372 = vmatpush1.msra.mxu0 0.0
        %1373 = vmatprep.subr.mxu0 0.0
        %1374 = vmatpush1.msra.mxu0 0.0
        %1375 = vmatprep.mubr.f32.mxu0 0.0
        %v1376 = vand.u32 %v1215, 4294901760
        %1377 = vmatmul.mubr.f32.gmra.mrb[0].mxu0 %v1376
        %v1378 = vpop.f32.mrb[0].mxu0
        %v1379 = vadd.f32 %v1297, %v1378
        %v1380 = vpop.f32.mrb[0].mxu0
        %v1381 = vadd.f32 %v1299, %v1380
        %1382 = vdwg.mxu0
        %v1383 = vand.u32 %v1221, 4294901760
        %v1384 = vsub.f32 %v1221, %v1383
        %1385 = vmatprep.subr.mxu0 %v1384
        %v1386 = vand.u32 %v1218, 4294901760
        %v1387 = vsub.f32 %v1218, %v1386
        %1388 = vmatpush1.msra.mxu0 %v1387
        %1389 = vmatprep.subr.mxu0 0.0
        %1390 = vmatpush1.msra.mxu0 0.0
        %1391 = vmatprep.subr.mxu0 0.0
        %1392 = vmatpush1.msra.mxu0 0.0
        %1393 = vmatprep.subr.mxu0 0.0
        %1394 = vmatpush1.msra.mxu0 0.0
        %1395 = vmatprep.subr.mxu0 0.0
        %1396 = vmatpush1.msra.mxu0 0.0
        %1397 = vmatprep.subr.mxu0 0.0
        %1398 = vmatpush1.msra.mxu0 0.0
        %1399 = vmatprep.subr.mxu0 0.0
        %1400 = vmatpush1.msra.mxu0 0.0
        %1401 = vmatprep.subr.mxu0 0.0
        %1402 = vmatpush1.msra.mxu0 0.0
        %1403 = vmatprep.subr.mxu0 0.0
        %1404 = vmatpush1.msra.mxu0 0.0
        %1405 = vmatprep.subr.mxu0 0.0
        %1406 = vmatpush1.msra.mxu0 0.0
        %1407 = vmatprep.subr.mxu0 0.0
        %1408 = vmatpush1.msra.mxu0 0.0
        %1409 = vmatprep.subr.mxu0 0.0
        %1410 = vmatpush1.msra.mxu0 0.0
        %1411 = vmatprep.subr.mxu0 0.0
        %1412 = vmatpush1.msra.mxu0 0.0
        %1413 = vmatprep.subr.mxu0 0.0
        %1414 = vmatpush1.msra.mxu0 0.0
        %1415 = vmatprep.subr.mxu0 0.0
        %1416 = vmatpush1.msra.mxu0 0.0
        %1417 = vmatprep.subr.mxu0 0.0
        %1418 = vmatpush1.msra.mxu0 0.0
        %1419 = vmatprep.subr.mxu0 0.0
        %1420 = vmatpush1.msra.mxu0 0.0
        %1421 = vmatprep.subr.mxu0 0.0
        %1422 = vmatpush1.msra.mxu0 0.0
        %1423 = vmatprep.subr.mxu0 0.0
        %1424 = vmatpush1.msra.mxu0 0.0
        %1425 = vmatprep.subr.mxu0 0.0
        %1426 = vmatpush1.msra.mxu0 0.0
        %1427 = vmatprep.subr.mxu0 0.0
        %1428 = vmatpush1.msra.mxu0 0.0
        %1429 = vmatprep.subr.mxu0 0.0
        %1430 = vmatpush1.msra.mxu0 0.0
        %1431 = vmatprep.subr.mxu0 0.0
        %1432 = vmatpush1.msra.mxu0 0.0
        %1433 = vmatprep.subr.mxu0 0.0
        %1434 = vmatpush1.msra.mxu0 0.0
        %1435 = vmatprep.subr.mxu0 0.0
        %1436 = vmatpush1.msra.mxu0 0.0
        %1437 = vmatprep.subr.mxu0 0.0
        %1438 = vmatpush1.msra.mxu0 0.0
        %1439 = vmatprep.subr.mxu0 0.0
        %1440 = vmatpush1.msra.mxu0 0.0
        %1441 = vmatprep.subr.mxu0 0.0
        %1442 = vmatpush1.msra.mxu0 0.0
        %1443 = vmatprep.subr.mxu0 0.0
        %1444 = vmatpush1.msra.mxu0 0.0
        %1445 = vmatprep.subr.mxu0 0.0
        %1446 = vmatpush1.msra.mxu0 0.0
        %1447 = vmatprep.subr.mxu0 0.0
        %1448 = vmatpush1.msra.mxu0 0.0
        %1449 = vmatprep.subr.mxu0 0.0
        %1450 = vmatpush1.msra.mxu0 0.0
        %1451 = vmatprep.mubr.f32.mxu0 0.0
        %v1452 = vand.u32 %v1215, 4294901760
        %v1453 = vsub.f32 %v1215, %v1452
        %1454 = vmatmul.mubr.f32.gmra.mrb[0].mxu0 %v1453
        %v1455 = vpop.f32.mrb[0].mxu0
        %v1456 = vadd.f32 %v1379, %v1455
        %v1457 = vpop.f32.mrb[0].mxu0
        %v1458 = vadd.f32 %v1381, %v1457
        %1459 = vdwg.mxu0
        %v1460 = vand.u32 %v1221, 4294901760
        %1461 = vmatprep.subr.mxu0 %v1460
        %v1462 = vand.u32 %v1218, 4294901760
        %1463 = vmatpush1.msra.mxu0 %v1462
        %1464 = vmatprep.subr.mxu0 0.0
        %1465 = vmatpush1.msra.mxu0 0.0
        %1466 = vmatprep.subr.mxu0 0.0
        %1467 = vmatpush1.msra.mxu0 0.0
        %1468 = vmatprep.subr.mxu0 0.0
        %1469 = vmatpush1.msra.mxu0 0.0
        %1470 = vmatprep.subr.mxu0 0.0
        %1471 = vmatpush1.msra.mxu0 0.0
        %1472 = vmatprep.subr.mxu0 0.0
        %1473 = vmatpush1.msra.mxu0 0.0
        %1474 = vmatprep.subr.mxu0 0.0
        %1475 = vmatpush1.msra.mxu0 0.0
        %1476 = vmatprep.subr.mxu0 0.0
        %1477 = vmatpush1.msra.mxu0 0.0
        %1478 = vmatprep.subr.mxu0 0.0
        %1479 = vmatpush1.msra.mxu0 0.0
        %1480 = vmatprep.subr.mxu0 0.0
        %1481 = vmatpush1.msra.mxu0 0.0
        %1482 = vmatprep.subr.mxu0 0.0
        %1483 = vmatpush1.msra.mxu0 0.0
        %1484 = vmatprep.subr.mxu0 0.0
        %1485 = vmatpush1.msra.mxu0 0.0
        %1486 = vmatprep.subr.mxu0 0.0
        %1487 = vmatpush1.msra.mxu0 0.0
        %1488 = vmatprep.subr.mxu0 0.0
        %1489 = vmatpush1.msra.mxu0 0.0
        %1490 = vmatprep.subr.mxu0 0.0
        %1491 = vmatpush1.msra.mxu0 0.0
        %1492 = vmatprep.subr.mxu0 0.0
        %1493 = vmatpush1.msra.mxu0 0.0
        %1494 = vmatprep.subr.mxu0 0.0
        %1495 = vmatpush1.msra.mxu0 0.0
        %1496 = vmatprep.subr.mxu0 0.0
        %1497 = vmatpush1.msra.mxu0 0.0
        %1498 = vmatprep.subr.mxu0 0.0
        %1499 = vmatpush1.msra.mxu0 0.0
        %1500 = vmatprep.subr.mxu0 0.0
        %1501 = vmatpush1.msra.mxu0 0.0
        %1502 = vmatprep.subr.mxu0 0.0
        %1503 = vmatpush1.msra.mxu0 0.0
        %1504 = vmatprep.subr.mxu0 0.0
        %1505 = vmatpush1.msra.mxu0 0.0
        %1506 = vmatprep.subr.mxu0 0.0
        %1507 = vmatpush1.msra.mxu0 0.0
        %1508 = vmatprep.subr.mxu0 0.0
        %1509 = vmatpush1.msra.mxu0 0.0
        %1510 = vmatprep.subr.mxu0 0.0
        %1511 = vmatpush1.msra.mxu0 0.0
        %1512 = vmatprep.subr.mxu0 0.0
        %1513 = vmatpush1.msra.mxu0 0.0
        %1514 = vmatprep.subr.mxu0 0.0
        %1515 = vmatpush1.msra.mxu0 0.0
        %1516 = vmatprep.subr.mxu0 0.0
        %1517 = vmatpush1.msra.mxu0 0.0
        %1518 = vmatprep.subr.mxu0 0.0
        %1519 = vmatpush1.msra.mxu0 0.0
        %1520 = vmatprep.subr.mxu0 0.0
        %1521 = vmatpush1.msra.mxu0 0.0
        %1522 = vmatprep.subr.mxu0 0.0
        %1523 = vmatpush1.msra.mxu0 0.0
        %1524 = vmatprep.subr.mxu0 0.0
        %1525 = vmatpush1.msra.mxu0 0.0
        %1526 = vmatprep.mubr.f32.mxu0 0.0
        %v1527 = vand.u32 %v1215, 4294901760
        %v1528 = vsub.f32 %v1215, %v1527
        %v1529 = vand.u32 %v1528, 4294901760
        %1530 = vmatmul.mubr.f32.gmra.mrb[0].mxu0 %v1529
        %v1531 = vpop.f32.mrb[0].mxu0
        %v1532 = vadd.f32 %v1456, %v1531
        %v1533 = vpop.f32.mrb[0].mxu0
        %v1534 = vadd.f32 %v1458, %v1533
        %1535 = vdwg.mxu0
        %v1536 = vand.u32 %v1221, 4294901760
        %v1537 = vsub.f32 %v1221, %v1536
        %v1538 = vand.u32 %v1537, 4294901760
        %1539 = vmatprep.subr.mxu0 %v1538
        %v1540 = vand.u32 %v1218, 4294901760
        %v1541 = vsub.f32 %v1218, %v1540
        %v1542 = vand.u32 %v1541, 4294901760
        %1543 = vmatpush1.msra.mxu0 %v1542
        %1544 = vmatprep.subr.mxu0 0.0
        %1545 = vmatpush1.msra.mxu0 0.0
        %1546 = vmatprep.subr.mxu0 0.0
        %1547 = vmatpush1.msra.mxu0 0.0
        %1548 = vmatprep.subr.mxu0 0.0
        %1549 = vmatpush1.msra.mxu0 0.0
        %1550 = vmatprep.subr.mxu0 0.0
        %1551 = vmatpush1.msra.mxu0 0.0
        %1552 = vmatprep.subr.mxu0 0.0
        %1553 = vmatpush1.msra.mxu0 0.0
        %1554 = vmatprep.subr.mxu0 0.0
        %1555 = vmatpush1.msra.mxu0 0.0
        %1556 = vmatprep.subr.mxu0 0.0
        %1557 = vmatpush1.msra.mxu0 0.0
        %1558 = vmatprep.subr.mxu0 0.0
        %1559 = vmatpush1.msra.mxu0 0.0
        %1560 = vmatprep.subr.mxu0 0.0
        %1561 = vmatpush1.msra.mxu0 0.0
        %1562 = vmatprep.subr.mxu0 0.0
        %1563 = vmatpush1.msra.mxu0 0.0
        %1564 = vmatprep.subr.mxu0 0.0
        %1565 = vmatpush1.msra.mxu0 0.0
        %1566 = vmatprep.subr.mxu0 0.0
        %1567 = vmatpush1.msra.mxu0 0.0
        %1568 = vmatprep.subr.mxu0 0.0
        %1569 = vmatpush1.msra.mxu0 0.0
        %1570 = vmatprep.subr.mxu0 0.0
        %1571 = vmatpush1.msra.mxu0 0.0
        %1572 = vmatprep.subr.mxu0 0.0
        %1573 = vmatpush1.msra.mxu0 0.0
        %1574 = vmatprep.subr.mxu0 0.0
        %1575 = vmatpush1.msra.mxu0 0.0
        %1576 = vmatprep.subr.mxu0 0.0
        %1577 = vmatpush1.msra.mxu0 0.0
        %1578 = vmatprep.subr.mxu0 0.0
        %1579 = vmatpush1.msra.mxu0 0.0
        %1580 = vmatprep.subr.mxu0 0.0
        %1581 = vmatpush1.msra.mxu0 0.0
        %1582 = vmatprep.subr.mxu0 0.0
        %1583 = vmatpush1.msra.mxu0 0.0
        %1584 = vmatprep.subr.mxu0 0.0
        %1585 = vmatpush1.msra.mxu0 0.0
        %1586 = vmatprep.subr.mxu0 0.0
        %1587 = vmatpush1.msra.mxu0 0.0
        %1588 = vmatprep.subr.mxu0 0.0
        %1589 = vmatpush1.msra.mxu0 0.0
        %1590 = vmatprep.subr.mxu0 0.0
        %1591 = vmatpush1.msra.mxu0 0.0
        %1592 = vmatprep.subr.mxu0 0.0
        %1593 = vmatpush1.msra.mxu0 0.0
        %1594 = vmatprep.subr.mxu0 0.0
        %1595 = vmatpush1.msra.mxu0 0.0
        %1596 = vmatprep.subr.mxu0 0.0
        %1597 = vmatpush1.msra.mxu0 0.0
        %1598 = vmatprep.subr.mxu0 0.0
        %1599 = vmatpush1.msra.mxu0 0.0
        %1600 = vmatprep.subr.mxu0 0.0
        %1601 = vmatpush1.msra.mxu0 0.0
        %1602 = vmatprep.subr.mxu0 0.0
        %1603 = vmatpush1.msra.mxu0 0.0
        %1604 = vmatprep.subr.mxu0 0.0
        %1605 = vmatpush1.msra.mxu0 0.0
        %1606 = vmatprep.mubr.f32.mxu0 0.0
        %v1607 = vand.u32 %v1215, 4294901760
        %1608 = vmatmul.mubr.f32.gmra.mrb[0].mxu0 %v1607
        %v1609 = vpop.f32.mrb[0].mxu0
        %v1610 = vadd.f32 %v1532, %v1609
        %v1611 = vpop.f32.mrb[0].mxu0
        %v1612 = vadd.f32 %v1534, %v1611
        %1613 = vdwg.mxu0
        %v1614 = vand.u32 %v1221, 4294901760
        %1615 = vmatprep.subr.mxu0 %v1614
        %v1616 = vand.u32 %v1218, 4294901760
        %1617 = vmatpush1.msra.mxu0 %v1616
        %1618 = vmatprep.subr.mxu0 0.0
        %1619 = vmatpush1.msra.mxu0 0.0
        %1620 = vmatprep.subr.mxu0 0.0
        %1621 = vmatpush1.msra.mxu0 0.0
        %1622 = vmatprep.subr.mxu0 0.0
        %1623 = vmatpush1.msra.mxu0 0.0
        %1624 = vmatprep.subr.mxu0 0.0
        %1625 = vmatpush1.msra.mxu0 0.0
        %1626 = vmatprep.subr.mxu0 0.0
        %1627 = vmatpush1.msra.mxu0 0.0
        %1628 = vmatprep.subr.mxu0 0.0
        %1629 = vmatpush1.msra.mxu0 0.0
        %1630 = vmatprep.subr.mxu0 0.0
        %1631 = vmatpush1.msra.mxu0 0.0
        %1632 = vmatprep.subr.mxu0 0.0
        %1633 = vmatpush1.msra.mxu0 0.0
        %1634 = vmatprep.subr.mxu0 0.0
        %1635 = vmatpush1.msra.mxu0 0.0
        %1636 = vmatprep.subr.mxu0 0.0
        %1637 = vmatpush1.msra.mxu0 0.0
        %1638 = vmatprep.subr.mxu0 0.0
        %1639 = vmatpush1.msra.mxu0 0.0
        %1640 = vmatprep.subr.mxu0 0.0
        %1641 = vmatpush1.msra.mxu0 0.0
        %1642 = vmatprep.subr.mxu0 0.0
        %1643 = vmatpush1.msra.mxu0 0.0
        %1644 = vmatprep.subr.mxu0 0.0
        %1645 = vmatpush1.msra.mxu0 0.0
        %1646 = vmatprep.subr.mxu0 0.0
        %1647 = vmatpush1.msra.mxu0 0.0
        %1648 = vmatprep.subr.mxu0 0.0
        %1649 = vmatpush1.msra.mxu0 0.0
        %1650 = vmatprep.subr.mxu0 0.0
        %1651 = vmatpush1.msra.mxu0 0.0
        %1652 = vmatprep.subr.mxu0 0.0
        %1653 = vmatpush1.msra.mxu0 0.0
        %1654 = vmatprep.subr.mxu0 0.0
        %1655 = vmatpush1.msra.mxu0 0.0
        %1656 = vmatprep.subr.mxu0 0.0
        %1657 = vmatpush1.msra.mxu0 0.0
        %1658 = vmatprep.subr.mxu0 0.0
        %1659 = vmatpush1.msra.mxu0 0.0
        %1660 = vmatprep.subr.mxu0 0.0
        %1661 = vmatpush1.msra.mxu0 0.0
        %1662 = vmatprep.subr.mxu0 0.0
        %1663 = vmatpush1.msra.mxu0 0.0
        %1664 = vmatprep.subr.mxu0 0.0
        %1665 = vmatpush1.msra.mxu0 0.0
        %1666 = vmatprep.subr.mxu0 0.0
        %1667 = vmatpush1.msra.mxu0 0.0
        %1668 = vmatprep.subr.mxu0 0.0
        %1669 = vmatpush1.msra.mxu0 0.0
        %1670 = vmatprep.subr.mxu0 0.0
        %1671 = vmatpush1.msra.mxu0 0.0
        %1672 = vmatprep.subr.mxu0 0.0
        %1673 = vmatpush1.msra.mxu0 0.0
        %1674 = vmatprep.subr.mxu0 0.0
        %1675 = vmatpush1.msra.mxu0 0.0
        %1676 = vmatprep.subr.mxu0 0.0
        %1677 = vmatpush1.msra.mxu0 0.0
        %1678 = vmatprep.subr.mxu0 0.0
        %1679 = vmatpush1.msra.mxu0 0.0
        %1680 = vmatprep.mubr.f32.mxu0 0.0
        %v1681 = vand.u32 %v1215, 4294901760
        %1682 = vmatmul.mubr.f32.gmra.mrb[0].mxu0 %v1681
        %v1683 = vpop.f32.mrb[0].mxu0
        %v1684 = vadd.f32 %v1610, %v1683
        %v1685 = vpop.f32.mrb[0].mxu0
        %v1686 = vadd.f32 %v1612, %v1685
        %1687 = vdwg.mxu0
        %v1688 = vadd.f32 %v1208, %v1684
        %v1689 = vadd.f32 %v1210, %v1686
        %1690 = vrot.lane.b32.xlu0 %v204, 16
        %v1691 = vpop.permute.xlu0 %1690
        %1692 = vrot.lane.b32.xlu0 %v206, 16
        %v1693 = vpop.permute.xlu0 %1692
        %v1694 = vsel %vm200, %v1691, %v1693
        %v1695 = vsel %vm200, %v1693, %v1691
        %1696 = vrot.lane.b32.xlu0 %v204, 112
        %v1697 = vpop.permute.xlu0 %1696
        %1698 = vrot.lane.b32.xlu0 %v206, 112
        %v1699 = vpop.permute.xlu0 %1698
        %v1700 = vsel %vm244, %v1697, %v1699
        %v1701 = vsel %vm244, %v1699, %v1697
        %v1702 = vsel %vm249, %v1700, %v1695
        %v1703 = vsel %vm250, %v1701, %v1694
        %v1704 = vsel %vm255, %v1695, %v1700
        %v1705 = vsel %vm256, %v1694, %v1701
        %s1706 = scalar_lea.vmem %s1, 4
        %v1707 = vld [vmem:[%s1706] sm:$0xf]
        %v1709 = vsel %vm262, %v1707, 0
        %v1712 = vsel %vm266, %v1702, 0
        %v1715 = vsel %vm266, %v1703, 0
        %v1717 = vand.u32 %v1715, 4294901760
        %1718 = vmatprep.subr.mxu0 %v1717
        %v1719 = vand.u32 %v1712, 4294901760
        %1720 = vmatpush1.msra.mxu0 %v1719
        %1721 = vmatprep.subr.mxu0 0.0
        %1722 = vmatpush1.msra.mxu0 0.0
        %1723 = vmatprep.subr.mxu0 0.0
        %1724 = vmatpush1.msra.mxu0 0.0
        %1725 = vmatprep.subr.mxu0 0.0
        %1726 = vmatpush1.msra.mxu0 0.0
        %1727 = vmatprep.subr.mxu0 0.0
        %1728 = vmatpush1.msra.mxu0 0.0
        %1729 = vmatprep.subr.mxu0 0.0
        %1730 = vmatpush1.msra.mxu0 0.0
        %1731 = vmatprep.subr.mxu0 0.0
        %1732 = vmatpush1.msra.mxu0 0.0
        %1733 = vmatprep.subr.mxu0 0.0
        %1734 = vmatpush1.msra.mxu0 0.0
        %1735 = vmatprep.subr.mxu0 0.0
        %1736 = vmatpush1.msra.mxu0 0.0
        %1737 = vmatprep.subr.mxu0 0.0
        %1738 = vmatpush1.msra.mxu0 0.0
        %1739 = vmatprep.subr.mxu0 0.0
        %1740 = vmatpush1.msra.mxu0 0.0
        %1741 = vmatprep.subr.mxu0 0.0
        %1742 = vmatpush1.msra.mxu0 0.0
        %1743 = vmatprep.subr.mxu0 0.0
        %1744 = vmatpush1.msra.mxu0 0.0
        %1745 = vmatprep.subr.mxu0 0.0
        %1746 = vmatpush1.msra.mxu0 0.0
        %1747 = vmatprep.subr.mxu0 0.0
        %1748 = vmatpush1.msra.mxu0 0.0
        %1749 = vmatprep.subr.mxu0 0.0
        %1750 = vmatpush1.msra.mxu0 0.0
        %1751 = vmatprep.subr.mxu0 0.0
        %1752 = vmatpush1.msra.mxu0 0.0
        %1753 = vmatprep.subr.mxu0 0.0
        %1754 = vmatpush1.msra.mxu0 0.0
        %1755 = vmatprep.subr.mxu0 0.0
        %1756 = vmatpush1.msra.mxu0 0.0
        %1757 = vmatprep.subr.mxu0 0.0
        %1758 = vmatpush1.msra.mxu0 0.0
        %1759 = vmatprep.subr.mxu0 0.0
        %1760 = vmatpush1.msra.mxu0 0.0
        %1761 = vmatprep.subr.mxu0 0.0
        %1762 = vmatpush1.msra.mxu0 0.0
        %1763 = vmatprep.subr.mxu0 0.0
        %1764 = vmatpush1.msra.mxu0 0.0
        %1765 = vmatprep.subr.mxu0 0.0
        %1766 = vmatpush1.msra.mxu0 0.0
        %1767 = vmatprep.subr.mxu0 0.0
        %1768 = vmatpush1.msra.mxu0 0.0
        %1769 = vmatprep.subr.mxu0 0.0
        %1770 = vmatpush1.msra.mxu0 0.0
        %1771 = vmatprep.subr.mxu0 0.0
        %1772 = vmatpush1.msra.mxu0 0.0
        %1773 = vmatprep.subr.mxu0 0.0
        %1774 = vmatpush1.msra.mxu0 0.0
        %1775 = vmatprep.subr.mxu0 0.0
        %1776 = vmatpush1.msra.mxu0 0.0
        %1777 = vmatprep.subr.mxu0 0.0
        %1778 = vmatpush1.msra.mxu0 0.0
        %1779 = vmatprep.subr.mxu0 0.0
        %1780 = vmatpush1.msra.mxu0 0.0
        %1781 = vmatprep.subr.mxu0 0.0
        %1782 = vmatpush1.msra.mxu0 0.0
        %1783 = vmatprep.mubr.f32.mxu0 0.0
        %v1784 = vand.u32 %v1709, 4294901760
        %v1785 = vsub.f32 %v1709, %v1784
        %v1786 = vand.u32 %v1785, 4294901760
        %v1787 = vsub.f32 %v1785, %v1786
        %v1788 = vand.u32 %v1787, 4294901760
        %1789 = vmatmul.mubr.f32.gmra.mrb[0].mxu0 %v1788
        %v1790 = vpop.f32.mrb[0].mxu0
        %v1791 = vadd.f32 0.0, %v1790
        %v1792 = vpop.f32.mrb[0].mxu0
        %v1793 = vadd.f32 0.0, %v1792
        %1794 = vdwg.mxu0
        %v1795 = vand.u32 %v1715, 4294901760
        %v1796 = vsub.f32 %v1715, %v1795
        %v1797 = vand.u32 %v1796, 4294901760
        %v1798 = vsub.f32 %v1796, %v1797
        %v1799 = vand.u32 %v1798, 4294901760
        %1800 = vmatprep.subr.mxu0 %v1799
        %v1801 = vand.u32 %v1712, 4294901760
        %v1802 = vsub.f32 %v1712, %v1801
        %v1803 = vand.u32 %v1802, 4294901760
        %v1804 = vsub.f32 %v1802, %v1803
        %v1805 = vand.u32 %v1804, 4294901760
        %1806 = vmatpush1.msra.mxu0 %v1805
        %1807 = vmatprep.subr.mxu0 0.0
        %1808 = vmatpush1.msra.mxu0 0.0
        %1809 = vmatprep.subr.mxu0 0.0
        %1810 = vmatpush1.msra.mxu0 0.0
        %1811 = vmatprep.subr.mxu0 0.0
        %1812 = vmatpush1.msra.mxu0 0.0
        %1813 = vmatprep.subr.mxu0 0.0
        %1814 = vmatpush1.msra.mxu0 0.0
        %1815 = vmatprep.subr.mxu0 0.0
        %1816 = vmatpush1.msra.mxu0 0.0
        %1817 = vmatprep.subr.mxu0 0.0
        %1818 = vmatpush1.msra.mxu0 0.0
        %1819 = vmatprep.subr.mxu0 0.0
        %1820 = vmatpush1.msra.mxu0 0.0
        %1821 = vmatprep.subr.mxu0 0.0
        %1822 = vmatpush1.msra.mxu0 0.0
        %1823 = vmatprep.subr.mxu0 0.0
        %1824 = vmatpush1.msra.mxu0 0.0
        %1825 = vmatprep.subr.mxu0 0.0
        %1826 = vmatpush1.msra.mxu0 0.0
        %1827 = vmatprep.subr.mxu0 0.0
        %1828 = vmatpush1.msra.mxu0 0.0
        %1829 = vmatprep.subr.mxu0 0.0
        %1830 = vmatpush1.msra.mxu0 0.0
        %1831 = vmatprep.subr.mxu0 0.0
        %1832 = vmatpush1.msra.mxu0 0.0
        %1833 = vmatprep.subr.mxu0 0.0
        %1834 = vmatpush1.msra.mxu0 0.0
        %1835 = vmatprep.subr.mxu0 0.0
        %1836 = vmatpush1.msra.mxu0 0.0
        %1837 = vmatprep.subr.mxu0 0.0
        %1838 = vmatpush1.msra.mxu0 0.0
        %1839 = vmatprep.subr.mxu0 0.0
        %1840 = vmatpush1.msra.mxu0 0.0
        %1841 = vmatprep.subr.mxu0 0.0
        %1842 = vmatpush1.msra.mxu0 0.0
        %1843 = vmatprep.subr.mxu0 0.0
        %1844 = vmatpush1.msra.mxu0 0.0
        %1845 = vmatprep.subr.mxu0 0.0
        %1846 = vmatpush1.msra.mxu0 0.0
        %1847 = vmatprep.subr.mxu0 0.0
        %1848 = vmatpush1.msra.mxu0 0.0
        %1849 = vmatprep.subr.mxu0 0.0
        %1850 = vmatpush1.msra.mxu0 0.0
        %1851 = vmatprep.subr.mxu0 0.0
        %1852 = vmatpush1.msra.mxu0 0.0
        %1853 = vmatprep.subr.mxu0 0.0
        %1854 = vmatpush1.msra.mxu0 0.0
        %1855 = vmatprep.subr.mxu0 0.0
        %1856 = vmatpush1.msra.mxu0 0.0
        %1857 = vmatprep.subr.mxu0 0.0
        %1858 = vmatpush1.msra.mxu0 0.0
        %1859 = vmatprep.subr.mxu0 0.0
        %1860 = vmatpush1.msra.mxu0 0.0
        %1861 = vmatprep.subr.mxu0 0.0
        %1862 = vmatpush1.msra.mxu0 0.0
        %1863 = vmatprep.subr.mxu0 0.0
        %1864 = vmatpush1.msra.mxu0 0.0
        %1865 = vmatprep.subr.mxu0 0.0
        %1866 = vmatpush1.msra.mxu0 0.0
        %1867 = vmatprep.subr.mxu0 0.0
        %1868 = vmatpush1.msra.mxu0 0.0
        %1869 = vmatprep.mubr.f32.mxu0 0.0
        %v1870 = vand.u32 %v1709, 4294901760
        %1871 = vmatmul.mubr.f32.gmra.mrb[0].mxu0 %v1870
        %v1872 = vpop.f32.mrb[0].mxu0
        %v1873 = vadd.f32 %v1791, %v1872
        %v1874 = vpop.f32.mrb[0].mxu0
        %v1875 = vadd.f32 %v1793, %v1874
        %1876 = vdwg.mxu0
        %v1877 = vand.u32 %v1715, 4294901760
        %v1878 = vsub.f32 %v1715, %v1877
        %1879 = vmatprep.subr.mxu0 %v1878
        %v1880 = vand.u32 %v1712, 4294901760
        %v1881 = vsub.f32 %v1712, %v1880
        %1882 = vmatpush1.msra.mxu0 %v1881
        %1883 = vmatprep.subr.mxu0 0.0
        %1884 = vmatpush1.msra.mxu0 0.0
        %1885 = vmatprep.subr.mxu0 0.0
        %1886 = vmatpush1.msra.mxu0 0.0
        %1887 = vmatprep.subr.mxu0 0.0
        %1888 = vmatpush1.msra.mxu0 0.0
        %1889 = vmatprep.subr.mxu0 0.0
        %1890 = vmatpush1.msra.mxu0 0.0
        %1891 = vmatprep.subr.mxu0 0.0
        %1892 = vmatpush1.msra.mxu0 0.0
        %1893 = vmatprep.subr.mxu0 0.0
        %1894 = vmatpush1.msra.mxu0 0.0
        %1895 = vmatprep.subr.mxu0 0.0
        %1896 = vmatpush1.msra.mxu0 0.0
        %1897 = vmatprep.subr.mxu0 0.0
        %1898 = vmatpush1.msra.mxu0 0.0
        %1899 = vmatprep.subr.mxu0 0.0
        %1900 = vmatpush1.msra.mxu0 0.0
        %1901 = vmatprep.subr.mxu0 0.0
        %1902 = vmatpush1.msra.mxu0 0.0
        %1903 = vmatprep.subr.mxu0 0.0
        %1904 = vmatpush1.msra.mxu0 0.0
        %1905 = vmatprep.subr.mxu0 0.0
        %1906 = vmatpush1.msra.mxu0 0.0
        %1907 = vmatprep.subr.mxu0 0.0
        %1908 = vmatpush1.msra.mxu0 0.0
        %1909 = vmatprep.subr.mxu0 0.0
        %1910 = vmatpush1.msra.mxu0 0.0
        %1911 = vmatprep.subr.mxu0 0.0
        %1912 = vmatpush1.msra.mxu0 0.0
        %1913 = vmatprep.subr.mxu0 0.0
        %1914 = vmatpush1.msra.mxu0 0.0
        %1915 = vmatprep.subr.mxu0 0.0
        %1916 = vmatpush1.msra.mxu0 0.0
        %1917 = vmatprep.subr.mxu0 0.0
        %1918 = vmatpush1.msra.mxu0 0.0
        %1919 = vmatprep.subr.mxu0 0.0
        %1920 = vmatpush1.msra.mxu0 0.0
        %1921 = vmatprep.subr.mxu0 0.0
        %1922 = vmatpush1.msra.mxu0 0.0
        %1923 = vmatprep.subr.mxu0 0.0
        %1924 = vmatpush1.msra.mxu0 0.0
        %1925 = vmatprep.subr.mxu0 0.0
        %1926 = vmatpush1.msra.mxu0 0.0
        %1927 = vmatprep.subr.mxu0 0.0
        %1928 = vmatpush1.msra.mxu0 0.0
        %1929 = vmatprep.subr.mxu0 0.0
        %1930 = vmatpush1.msra.mxu0 0.0
        %1931 = vmatprep.subr.mxu0 0.0
        %1932 = vmatpush1.msra.mxu0 0.0
        %1933 = vmatprep.subr.mxu0 0.0
        %1934 = vmatpush1.msra.mxu0 0.0
        %1935 = vmatprep.subr.mxu0 0.0
        %1936 = vmatpush1.msra.mxu0 0.0
        %1937 = vmatprep.subr.mxu0 0.0
        %1938 = vmatpush1.msra.mxu0 0.0
        %1939 = vmatprep.subr.mxu0 0.0
        %1940 = vmatpush1.msra.mxu0 0.0
        %1941 = vmatprep.subr.mxu0 0.0
        %1942 = vmatpush1.msra.mxu0 0.0
        %1943 = vmatprep.subr.mxu0 0.0
        %1944 = vmatpush1.msra.mxu0 0.0
        %1945 = vmatprep.mubr.f32.mxu0 0.0
        %v1946 = vand.u32 %v1709, 4294901760
        %v1947 = vsub.f32 %v1709, %v1946
        %1948 = vmatmul.mubr.f32.gmra.mrb[0].mxu0 %v1947
        %v1949 = vpop.f32.mrb[0].mxu0
        %v1950 = vadd.f32 %v1873, %v1949
        %v1951 = vpop.f32.mrb[0].mxu0
        %v1952 = vadd.f32 %v1875, %v1951
        %1953 = vdwg.mxu0
        %v1954 = vand.u32 %v1715, 4294901760
        %1955 = vmatprep.subr.mxu0 %v1954
        %v1956 = vand.u32 %v1712, 4294901760
        %1957 = vmatpush1.msra.mxu0 %v1956
        %1958 = vmatprep.subr.mxu0 0.0
        %1959 = vmatpush1.msra.mxu0 0.0
        %1960 = vmatprep.subr.mxu0 0.0
        %1961 = vmatpush1.msra.mxu0 0.0
        %1962 = vmatprep.subr.mxu0 0.0
        %1963 = vmatpush1.msra.mxu0 0.0
        %1964 = vmatprep.subr.mxu0 0.0
        %1965 = vmatpush1.msra.mxu0 0.0
        %1966 = vmatprep.subr.mxu0 0.0
        %1967 = vmatpush1.msra.mxu0 0.0
        %1968 = vmatprep.subr.mxu0 0.0
        %1969 = vmatpush1.msra.mxu0 0.0
        %1970 = vmatprep.subr.mxu0 0.0
        %1971 = vmatpush1.msra.mxu0 0.0
        %1972 = vmatprep.subr.mxu0 0.0
        %1973 = vmatpush1.msra.mxu0 0.0
        %1974 = vmatprep.subr.mxu0 0.0
        %1975 = vmatpush1.msra.mxu0 0.0
        %1976 = vmatprep.subr.mxu0 0.0
        %1977 = vmatpush1.msra.mxu0 0.0
        %1978 = vmatprep.subr.mxu0 0.0
        %1979 = vmatpush1.msra.mxu0 0.0
        %1980 = vmatprep.subr.mxu0 0.0
        %1981 = vmatpush1.msra.mxu0 0.0
        %1982 = vmatprep.subr.mxu0 0.0
        %1983 = vmatpush1.msra.mxu0 0.0
        %1984 = vmatprep.subr.mxu0 0.0
        %1985 = vmatpush1.msra.mxu0 0.0
        %1986 = vmatprep.subr.mxu0 0.0
        %1987 = vmatpush1.msra.mxu0 0.0
        %1988 = vmatprep.subr.mxu0 0.0
        %1989 = vmatpush1.msra.mxu0 0.0
        %1990 = vmatprep.subr.mxu0 0.0
        %1991 = vmatpush1.msra.mxu0 0.0
        %1992 = vmatprep.subr.mxu0 0.0
        %1993 = vmatpush1.msra.mxu0 0.0
        %1994 = vmatprep.subr.mxu0 0.0
        %1995 = vmatpush1.msra.mxu0 0.0
        %1996 = vmatprep.subr.mxu0 0.0
        %1997 = vmatpush1.msra.mxu0 0.0
        %1998 = vmatprep.subr.mxu0 0.0
        %1999 = vmatpush1.msra.mxu0 0.0
        %2000 = vmatprep.subr.mxu0 0.0
        %2001 = vmatpush1.msra.mxu0 0.0
        %2002 = vmatprep.subr.mxu0 0.0
        %2003 = vmatpush1.msra.mxu0 0.0
        %2004 = vmatprep.subr.mxu0 0.0
        %2005 = vmatpush1.msra.mxu0 0.0
        %2006 = vmatprep.subr.mxu0 0.0
        %2007 = vmatpush1.msra.mxu0 0.0
        %2008 = vmatprep.subr.mxu0 0.0
        %2009 = vmatpush1.msra.mxu0 0.0
        %2010 = vmatprep.subr.mxu0 0.0
        %2011 = vmatpush1.msra.mxu0 0.0
        %2012 = vmatprep.subr.mxu0 0.0
        %2013 = vmatpush1.msra.mxu0 0.0
        %2014 = vmatprep.subr.mxu0 0.0
        %2015 = vmatpush1.msra.mxu0 0.0
        %2016 = vmatprep.subr.mxu0 0.0
        %2017 = vmatpush1.msra.mxu0 0.0
        %2018 = vmatprep.subr.mxu0 0.0
        %2019 = vmatpush1.msra.mxu0 0.0
        %2020 = vmatprep.mubr.f32.mxu0 0.0
        %v2021 = vand.u32 %v1709, 4294901760
        %v2022 = vsub.f32 %v1709, %v2021
        %v2023 = vand.u32 %v2022, 4294901760
        %2024 = vmatmul.mubr.f32.gmra.mrb[0].mxu0 %v2023
        %v2025 = vpop.f32.mrb[0].mxu0
        %v2026 = vadd.f32 %v1950, %v2025
        %v2027 = vpop.f32.mrb[0].mxu0
        %v2028 = vadd.f32 %v1952, %v2027
        %2029 = vdwg.mxu0
        %v2030 = vand.u32 %v1715, 4294901760
        %v2031 = vsub.f32 %v1715, %v2030
        %v2032 = vand.u32 %v2031, 4294901760
        %2033 = vmatprep.subr.mxu0 %v2032
        %v2034 = vand.u32 %v1712, 4294901760
        %v2035 = vsub.f32 %v1712, %v2034
        %v2036 = vand.u32 %v2035, 4294901760
        %2037 = vmatpush1.msra.mxu0 %v2036
        %2038 = vmatprep.subr.mxu0 0.0
        %2039 = vmatpush1.msra.mxu0 0.0
        %2040 = vmatprep.subr.mxu0 0.0
        %2041 = vmatpush1.msra.mxu0 0.0
        %2042 = vmatprep.subr.mxu0 0.0
        %2043 = vmatpush1.msra.mxu0 0.0
        %2044 = vmatprep.subr.mxu0 0.0
        %2045 = vmatpush1.msra.mxu0 0.0
        %2046 = vmatprep.subr.mxu0 0.0
        %2047 = vmatpush1.msra.mxu0 0.0
        %2048 = vmatprep.subr.mxu0 0.0
        %2049 = vmatpush1.msra.mxu0 0.0
        %2050 = vmatprep.subr.mxu0 0.0
        %2051 = vmatpush1.msra.mxu0 0.0
        %2052 = vmatprep.subr.mxu0 0.0
        %2053 = vmatpush1.msra.mxu0 0.0
        %2054 = vmatprep.subr.mxu0 0.0
        %2055 = vmatpush1.msra.mxu0 0.0
        %2056 = vmatprep.subr.mxu0 0.0
        %2057 = vmatpush1.msra.mxu0 0.0
        %2058 = vmatprep.subr.mxu0 0.0
        %2059 = vmatpush1.msra.mxu0 0.0
        %2060 = vmatprep.subr.mxu0 0.0
        %2061 = vmatpush1.msra.mxu0 0.0
        %2062 = vmatprep.subr.mxu0 0.0
        %2063 = vmatpush1.msra.mxu0 0.0
        %2064 = vmatprep.subr.mxu0 0.0
        %2065 = vmatpush1.msra.mxu0 0.0
        %2066 = vmatprep.subr.mxu0 0.0
        %2067 = vmatpush1.msra.mxu0 0.0
        %2068 = vmatprep.subr.mxu0 0.0
        %2069 = vmatpush1.msra.mxu0 0.0
        %2070 = vmatprep.subr.mxu0 0.0
        %2071 = vmatpush1.msra.mxu0 0.0
        %2072 = vmatprep.subr.mxu0 0.0
        %2073 = vmatpush1.msra.mxu0 0.0
        %2074 = vmatprep.subr.mxu0 0.0
        %2075 = vmatpush1.msra.mxu0 0.0
        %2076 = vmatprep.subr.mxu0 0.0
        %2077 = vmatpush1.msra.mxu0 0.0
        %2078 = vmatprep.subr.mxu0 0.0
        %2079 = vmatpush1.msra.mxu0 0.0
        %2080 = vmatprep.subr.mxu0 0.0
        %2081 = vmatpush1.msra.mxu0 0.0
        %2082 = vmatprep.subr.mxu0 0.0
        %2083 = vmatpush1.msra.mxu0 0.0
        %2084 = vmatprep.subr.mxu0 0.0
        %2085 = vmatpush1.msra.mxu0 0.0
        %2086 = vmatprep.subr.mxu0 0.0
        %2087 = vmatpush1.msra.mxu0 0.0
        %2088 = vmatprep.subr.mxu0 0.0
        %2089 = vmatpush1.msra.mxu0 0.0
        %2090 = vmatprep.subr.mxu0 0.0
        %2091 = vmatpush1.msra.mxu0 0.0
        %2092 = vmatprep.subr.mxu0 0.0
        %2093 = vmatpush1.msra.mxu0 0.0
        %2094 = vmatprep.subr.mxu0 0.0
        %2095 = vmatpush1.msra.mxu0 0.0
        %2096 = vmatprep.subr.mxu0 0.0
        %2097 = vmatpush1.msra.mxu0 0.0
        %2098 = vmatprep.subr.mxu0 0.0
        %2099 = vmatpush1.msra.mxu0 0.0
        %2100 = vmatprep.mubr.f32.mxu0 0.0
        %v2101 = vand.u32 %v1709, 4294901760
        %2102 = vmatmul.mubr.f32.gmra.mrb[0].mxu0 %v2101
        %v2103 = vpop.f32.mrb[0].mxu0
        %v2104 = vadd.f32 %v2026, %v2103
        %v2105 = vpop.f32.mrb[0].mxu0
        %v2106 = vadd.f32 %v2028, %v2105
        %2107 = vdwg.mxu0
        %v2108 = vand.u32 %v1715, 4294901760
        %2109 = vmatprep.subr.mxu0 %v2108
        %v2110 = vand.u32 %v1712, 4294901760
        %2111 = vmatpush1.msra.mxu0 %v2110
        %2112 = vmatprep.subr.mxu0 0.0
        %2113 = vmatpush1.msra.mxu0 0.0
        %2114 = vmatprep.subr.mxu0 0.0
        %2115 = vmatpush1.msra.mxu0 0.0
        %2116 = vmatprep.subr.mxu0 0.0
        %2117 = vmatpush1.msra.mxu0 0.0
        %2118 = vmatprep.subr.mxu0 0.0
        %2119 = vmatpush1.msra.mxu0 0.0
        %2120 = vmatprep.subr.mxu0 0.0
        %2121 = vmatpush1.msra.mxu0 0.0
        %2122 = vmatprep.subr.mxu0 0.0
        %2123 = vmatpush1.msra.mxu0 0.0
        %2124 = vmatprep.subr.mxu0 0.0
        %2125 = vmatpush1.msra.mxu0 0.0
        %2126 = vmatprep.subr.mxu0 0.0
        %2127 = vmatpush1.msra.mxu0 0.0
        %2128 = vmatprep.subr.mxu0 0.0
        %2129 = vmatpush1.msra.mxu0 0.0
        %2130 = vmatprep.subr.mxu0 0.0
        %2131 = vmatpush1.msra.mxu0 0.0
        %2132 = vmatprep.subr.mxu0 0.0
        %2133 = vmatpush1.msra.mxu0 0.0
        %2134 = vmatprep.subr.mxu0 0.0
        %2135 = vmatpush1.msra.mxu0 0.0
        %2136 = vmatprep.subr.mxu0 0.0
        %2137 = vmatpush1.msra.mxu0 0.0
        %2138 = vmatprep.subr.mxu0 0.0
        %2139 = vmatpush1.msra.mxu0 0.0
        %2140 = vmatprep.subr.mxu0 0.0
        %2141 = vmatpush1.msra.mxu0 0.0
        %2142 = vmatprep.subr.mxu0 0.0
        %2143 = vmatpush1.msra.mxu0 0.0
        %2144 = vmatprep.subr.mxu0 0.0
        %2145 = vmatpush1.msra.mxu0 0.0
        %2146 = vmatprep.subr.mxu0 0.0
        %2147 = vmatpush1.msra.mxu0 0.0
        %2148 = vmatprep.subr.mxu0 0.0
        %2149 = vmatpush1.msra.mxu0 0.0
        %2150 = vmatprep.subr.mxu0 0.0
        %2151 = vmatpush1.msra.mxu0 0.0
        %2152 = vmatprep.subr.mxu0 0.0
        %2153 = vmatpush1.msra.mxu0 0.0
        %2154 = vmatprep.subr.mxu0 0.0
        %2155 = vmatpush1.msra.mxu0 0.0
        %2156 = vmatprep.subr.mxu0 0.0
        %2157 = vmatpush1.msra.mxu0 0.0
        %2158 = vmatprep.subr.mxu0 0.0
        %2159 = vmatpush1.msra.mxu0 0.0
        %2160 = vmatprep.subr.mxu0 0.0
        %2161 = vmatpush1.msra.mxu0 0.0
        %2162 = vmatprep.subr.mxu0 0.0
        %2163 = vmatpush1.msra.mxu0 0.0
        %2164 = vmatprep.subr.mxu0 0.0
        %2165 = vmatpush1.msra.mxu0 0.0
        %2166 = vmatprep.subr.mxu0 0.0
        %2167 = vmatpush1.msra.mxu0 0.0
        %2168 = vmatprep.subr.mxu0 0.0
        %2169 = vmatpush1.msra.mxu0 0.0
        %2170 = vmatprep.subr.mxu0 0.0
        %2171 = vmatpush1.msra.mxu0 0.0
        %2172 = vmatprep.subr.mxu0 0.0
        %2173 = vmatpush1.msra.mxu0 0.0
        %2174 = vmatprep.mubr.f32.mxu0 0.0
        %v2175 = vand.u32 %v1709, 4294901760
        %2176 = vmatmul.mubr.f32.gmra.mrb[0].mxu0 %v2175
        %v2177 = vpop.f32.mrb[0].mxu0
        %v2178 = vadd.f32 %v2104, %v2177
        %v2179 = vpop.f32.mrb[0].mxu0
        %v2180 = vadd.f32 %v2106, %v2179
        %2181 = vdwg.mxu0
        %v2182 = vadd.f32 %v1688, %v2178
        %v2183 = vadd.f32 %v1689, %v2180
        %s2184 = scalar_lea.vmem %s1, 16
        %v2185 = vld [vmem:[%s2184] sm:$0xf]
        %v2187 = vsel %vm262, %v2185, 0
        %v2189 = vsel %vm266, %v204, 0
        %v2191 = vsel %vm266, %v206, 0
        %v2193 = vand.u32 %v2191, 4294901760
        %2194 = vmatprep.subr.mxu0 %v2193
        %v2195 = vand.u32 %v2189, 4294901760
        %2196 = vmatpush1.msra.mxu0 %v2195
        %2197 = vmatprep.subr.mxu0 0.0
        %2198 = vmatpush1.msra.mxu0 0.0
        %2199 = vmatprep.subr.mxu0 0.0
        %2200 = vmatpush1.msra.mxu0 0.0
        %2201 = vmatprep.subr.mxu0 0.0
        %2202 = vmatpush1.msra.mxu0 0.0
        %2203 = vmatprep.subr.mxu0 0.0
        %2204 = vmatpush1.msra.mxu0 0.0
        %2205 = vmatprep.subr.mxu0 0.0
        %2206 = vmatpush1.msra.mxu0 0.0
        %2207 = vmatprep.subr.mxu0 0.0
        %2208 = vmatpush1.msra.mxu0 0.0
        %2209 = vmatprep.subr.mxu0 0.0
        %2210 = vmatpush1.msra.mxu0 0.0
        %2211 = vmatprep.subr.mxu0 0.0
        %2212 = vmatpush1.msra.mxu0 0.0
        %2213 = vmatprep.subr.mxu0 0.0
        %2214 = vmatpush1.msra.mxu0 0.0
        %2215 = vmatprep.subr.mxu0 0.0
        %2216 = vmatpush1.msra.mxu0 0.0
        %2217 = vmatprep.subr.mxu0 0.0
        %2218 = vmatpush1.msra.mxu0 0.0
        %2219 = vmatprep.subr.mxu0 0.0
        %2220 = vmatpush1.msra.mxu0 0.0
        %2221 = vmatprep.subr.mxu0 0.0
        %2222 = vmatpush1.msra.mxu0 0.0
        %2223 = vmatprep.subr.mxu0 0.0
        %2224 = vmatpush1.msra.mxu0 0.0
        %2225 = vmatprep.subr.mxu0 0.0
        %2226 = vmatpush1.msra.mxu0 0.0
        %2227 = vmatprep.subr.mxu0 0.0
        %2228 = vmatpush1.msra.mxu0 0.0
        %2229 = vmatprep.subr.mxu0 0.0
        %2230 = vmatpush1.msra.mxu0 0.0
        %2231 = vmatprep.subr.mxu0 0.0
        %2232 = vmatpush1.msra.mxu0 0.0
        %2233 = vmatprep.subr.mxu0 0.0
        %2234 = vmatpush1.msra.mxu0 0.0
        %2235 = vmatprep.subr.mxu0 0.0
        %2236 = vmatpush1.msra.mxu0 0.0
        %2237 = vmatprep.subr.mxu0 0.0
        %2238 = vmatpush1.msra.mxu0 0.0
        %2239 = vmatprep.subr.mxu0 0.0
        %2240 = vmatpush1.msra.mxu0 0.0
        %2241 = vmatprep.subr.mxu0 0.0
        %2242 = vmatpush1.msra.mxu0 0.0
        %2243 = vmatprep.subr.mxu0 0.0
        %2244 = vmatpush1.msra.mxu0 0.0
        %2245 = vmatprep.subr.mxu0 0.0
        %2246 = vmatpush1.msra.mxu0 0.0
        %2247 = vmatprep.subr.mxu0 0.0
        %2248 = vmatpush1.msra.mxu0 0.0
        %2249 = vmatprep.subr.mxu0 0.0
        %2250 = vmatpush1.msra.mxu0 0.0
        %2251 = vmatprep.subr.mxu0 0.0
        %2252 = vmatpush1.msra.mxu0 0.0
        %2253 = vmatprep.subr.mxu0 0.0
        %2254 = vmatpush1.msra.mxu0 0.0
        %2255 = vmatprep.subr.mxu0 0.0
        %2256 = vmatpush1.msra.mxu0 0.0
        %2257 = vmatprep.subr.mxu0 0.0
        %2258 = vmatpush1.msra.mxu0 0.0
        %2259 = vmatprep.mubr.f32.mxu0 0.0
        %v2260 = vand.u32 %v2187, 4294901760
        %v2261 = vsub.f32 %v2187, %v2260
        %v2262 = vand.u32 %v2261, 4294901760
        %v2263 = vsub.f32 %v2261, %v2262
        %v2264 = vand.u32 %v2263, 4294901760
        %2265 = vmatmul.mubr.f32.gmra.mrb[0].mxu0 %v2264
        %v2266 = vpop.f32.mrb[0].mxu0
        %v2267 = vadd.f32 0.0, %v2266
        %v2268 = vpop.f32.mrb[0].mxu0
        %v2269 = vadd.f32 0.0, %v2268
        %2270 = vdwg.mxu0
        %v2271 = vand.u32 %v2191, 4294901760
        %v2272 = vsub.f32 %v2191, %v2271
        %v2273 = vand.u32 %v2272, 4294901760
        %v2274 = vsub.f32 %v2272, %v2273
        %v2275 = vand.u32 %v2274, 4294901760
        %2276 = vmatprep.subr.mxu0 %v2275
        %v2277 = vand.u32 %v2189, 4294901760
        %v2278 = vsub.f32 %v2189, %v2277
        %v2279 = vand.u32 %v2278, 4294901760
        %v2280 = vsub.f32 %v2278, %v2279
        %v2281 = vand.u32 %v2280, 4294901760
        %2282 = vmatpush1.msra.mxu0 %v2281
        %2283 = vmatprep.subr.mxu0 0.0
        %2284 = vmatpush1.msra.mxu0 0.0
        %2285 = vmatprep.subr.mxu0 0.0
        %2286 = vmatpush1.msra.mxu0 0.0
        %2287 = vmatprep.subr.mxu0 0.0
        %2288 = vmatpush1.msra.mxu0 0.0
        %2289 = vmatprep.subr.mxu0 0.0
        %2290 = vmatpush1.msra.mxu0 0.0
        %2291 = vmatprep.subr.mxu0 0.0
        %2292 = vmatpush1.msra.mxu0 0.0
        %2293 = vmatprep.subr.mxu0 0.0
        %2294 = vmatpush1.msra.mxu0 0.0
        %2295 = vmatprep.subr.mxu0 0.0
        %2296 = vmatpush1.msra.mxu0 0.0
        %2297 = vmatprep.subr.mxu0 0.0
        %2298 = vmatpush1.msra.mxu0 0.0
        %2299 = vmatprep.subr.mxu0 0.0
        %2300 = vmatpush1.msra.mxu0 0.0
        %2301 = vmatprep.subr.mxu0 0.0
        %2302 = vmatpush1.msra.mxu0 0.0
        %2303 = vmatprep.subr.mxu0 0.0
        %2304 = vmatpush1.msra.mxu0 0.0
        %2305 = vmatprep.subr.mxu0 0.0
        %2306 = vmatpush1.msra.mxu0 0.0
        %2307 = vmatprep.subr.mxu0 0.0
        %2308 = vmatpush1.msra.mxu0 0.0
        %2309 = vmatprep.subr.mxu0 0.0
        %2310 = vmatpush1.msra.mxu0 0.0
        %2311 = vmatprep.subr.mxu0 0.0
        %2312 = vmatpush1.msra.mxu0 0.0
        %2313 = vmatprep.subr.mxu0 0.0
        %2314 = vmatpush1.msra.mxu0 0.0
        %2315 = vmatprep.subr.mxu0 0.0
        %2316 = vmatpush1.msra.mxu0 0.0
        %2317 = vmatprep.subr.mxu0 0.0
        %2318 = vmatpush1.msra.mxu0 0.0
        %2319 = vmatprep.subr.mxu0 0.0
        %2320 = vmatpush1.msra.mxu0 0.0
        %2321 = vmatprep.subr.mxu0 0.0
        %2322 = vmatpush1.msra.mxu0 0.0
        %2323 = vmatprep.subr.mxu0 0.0
        %2324 = vmatpush1.msra.mxu0 0.0
        %2325 = vmatprep.subr.mxu0 0.0
        %2326 = vmatpush1.msra.mxu0 0.0
        %2327 = vmatprep.subr.mxu0 0.0
        %2328 = vmatpush1.msra.mxu0 0.0
        %2329 = vmatprep.subr.mxu0 0.0
        %2330 = vmatpush1.msra.mxu0 0.0
        %2331 = vmatprep.subr.mxu0 0.0
        %2332 = vmatpush1.msra.mxu0 0.0
        %2333 = vmatprep.subr.mxu0 0.0
        %2334 = vmatpush1.msra.mxu0 0.0
        %2335 = vmatprep.subr.mxu0 0.0
        %2336 = vmatpush1.msra.mxu0 0.0
        %2337 = vmatprep.subr.mxu0 0.0
        %2338 = vmatpush1.msra.mxu0 0.0
        %2339 = vmatprep.subr.mxu0 0.0
        %2340 = vmatpush1.msra.mxu0 0.0
        %2341 = vmatprep.subr.mxu0 0.0
        %2342 = vmatpush1.msra.mxu0 0.0
        %2343 = vmatprep.subr.mxu0 0.0
        %2344 = vmatpush1.msra.mxu0 0.0
        %2345 = vmatprep.mubr.f32.mxu0 0.0
        %v2346 = vand.u32 %v2187, 4294901760
        %2347 = vmatmul.mubr.f32.gmra.mrb[0].mxu0 %v2346
        %v2348 = vpop.f32.mrb[0].mxu0
        %v2349 = vadd.f32 %v2267, %v2348
        %v2350 = vpop.f32.mrb[0].mxu0
        %v2351 = vadd.f32 %v2269, %v2350
        %2352 = vdwg.mxu0
        %v2353 = vand.u32 %v2191, 4294901760
        %v2354 = vsub.f32 %v2191, %v2353
        %2355 = vmatprep.subr.mxu0 %v2354
        %v2356 = vand.u32 %v2189, 4294901760
        %v2357 = vsub.f32 %v2189, %v2356
        %2358 = vmatpush1.msra.mxu0 %v2357
        %2359 = vmatprep.subr.mxu0 0.0
        %2360 = vmatpush1.msra.mxu0 0.0
        %2361 = vmatprep.subr.mxu0 0.0
        %2362 = vmatpush1.msra.mxu0 0.0
        %2363 = vmatprep.subr.mxu0 0.0
        %2364 = vmatpush1.msra.mxu0 0.0
        %2365 = vmatprep.subr.mxu0 0.0
        %2366 = vmatpush1.msra.mxu0 0.0
        %2367 = vmatprep.subr.mxu0 0.0
        %2368 = vmatpush1.msra.mxu0 0.0
        %2369 = vmatprep.subr.mxu0 0.0
        %2370 = vmatpush1.msra.mxu0 0.0
        %2371 = vmatprep.subr.mxu0 0.0
        %2372 = vmatpush1.msra.mxu0 0.0
        %2373 = vmatprep.subr.mxu0 0.0
        %2374 = vmatpush1.msra.mxu0 0.0
        %2375 = vmatprep.subr.mxu0 0.0
        %2376 = vmatpush1.msra.mxu0 0.0
        %2377 = vmatprep.subr.mxu0 0.0
        %2378 = vmatpush1.msra.mxu0 0.0
        %2379 = vmatprep.subr.mxu0 0.0
        %2380 = vmatpush1.msra.mxu0 0.0
        %2381 = vmatprep.subr.mxu0 0.0
        %2382 = vmatpush1.msra.mxu0 0.0
        %2383 = vmatprep.subr.mxu0 0.0
        %2384 = vmatpush1.msra.mxu0 0.0
        %2385 = vmatprep.subr.mxu0 0.0
        %2386 = vmatpush1.msra.mxu0 0.0
        %2387 = vmatprep.subr.mxu0 0.0
        %2388 = vmatpush1.msra.mxu0 0.0
        %2389 = vmatprep.subr.mxu0 0.0
        %2390 = vmatpush1.msra.mxu0 0.0
        %2391 = vmatprep.subr.mxu0 0.0
        %2392 = vmatpush1.msra.mxu0 0.0
        %2393 = vmatprep.subr.mxu0 0.0
        %2394 = vmatpush1.msra.mxu0 0.0
        %2395 = vmatprep.subr.mxu0 0.0
        %2396 = vmatpush1.msra.mxu0 0.0
        %2397 = vmatprep.subr.mxu0 0.0
        %2398 = vmatpush1.msra.mxu0 0.0
        %2399 = vmatprep.subr.mxu0 0.0
        %2400 = vmatpush1.msra.mxu0 0.0
        %2401 = vmatprep.subr.mxu0 0.0
        %2402 = vmatpush1.msra.mxu0 0.0
        %2403 = vmatprep.subr.mxu0 0.0
        %2404 = vmatpush1.msra.mxu0 0.0
        %2405 = vmatprep.subr.mxu0 0.0
        %2406 = vmatpush1.msra.mxu0 0.0
        %2407 = vmatprep.subr.mxu0 0.0
        %2408 = vmatpush1.msra.mxu0 0.0
        %2409 = vmatprep.subr.mxu0 0.0
        %2410 = vmatpush1.msra.mxu0 0.0
        %2411 = vmatprep.subr.mxu0 0.0
        %2412 = vmatpush1.msra.mxu0 0.0
        %2413 = vmatprep.subr.mxu0 0.0
        %2414 = vmatpush1.msra.mxu0 0.0
        %2415 = vmatprep.subr.mxu0 0.0
        %2416 = vmatpush1.msra.mxu0 0.0
        %2417 = vmatprep.subr.mxu0 0.0
        %2418 = vmatpush1.msra.mxu0 0.0
        %2419 = vmatprep.subr.mxu0 0.0
        %2420 = vmatpush1.msra.mxu0 0.0
        %2421 = vmatprep.mubr.f32.mxu0 0.0
        %v2422 = vand.u32 %v2187, 4294901760
        %v2423 = vsub.f32 %v2187, %v2422
        %2424 = vmatmul.mubr.f32.gmra.mrb[0].mxu0 %v2423
        %v2425 = vpop.f32.mrb[0].mxu0
        %v2426 = vadd.f32 %v2349, %v2425
        %v2427 = vpop.f32.mrb[0].mxu0
        %v2428 = vadd.f32 %v2351, %v2427
        %2429 = vdwg.mxu0
        %v2430 = vand.u32 %v2191, 4294901760
        %2431 = vmatprep.subr.mxu0 %v2430
        %v2432 = vand.u32 %v2189, 4294901760
        %2433 = vmatpush1.msra.mxu0 %v2432
        %2434 = vmatprep.subr.mxu0 0.0
        %2435 = vmatpush1.msra.mxu0 0.0
        %2436 = vmatprep.subr.mxu0 0.0
        %2437 = vmatpush1.msra.mxu0 0.0
        %2438 = vmatprep.subr.mxu0 0.0
        %2439 = vmatpush1.msra.mxu0 0.0
        %2440 = vmatprep.subr.mxu0 0.0
        %2441 = vmatpush1.msra.mxu0 0.0
        %2442 = vmatprep.subr.mxu0 0.0
        %2443 = vmatpush1.msra.mxu0 0.0
        %2444 = vmatprep.subr.mxu0 0.0
        %2445 = vmatpush1.msra.mxu0 0.0
        %2446 = vmatprep.subr.mxu0 0.0
        %2447 = vmatpush1.msra.mxu0 0.0
        %2448 = vmatprep.subr.mxu0 0.0
        %2449 = vmatpush1.msra.mxu0 0.0
        %2450 = vmatprep.subr.mxu0 0.0
        %2451 = vmatpush1.msra.mxu0 0.0
        %2452 = vmatprep.subr.mxu0 0.0
        %2453 = vmatpush1.msra.mxu0 0.0
        %2454 = vmatprep.subr.mxu0 0.0
        %2455 = vmatpush1.msra.mxu0 0.0
        %2456 = vmatprep.subr.mxu0 0.0
        %2457 = vmatpush1.msra.mxu0 0.0
        %2458 = vmatprep.subr.mxu0 0.0
        %2459 = vmatpush1.msra.mxu0 0.0
        %2460 = vmatprep.subr.mxu0 0.0
        %2461 = vmatpush1.msra.mxu0 0.0
        %2462 = vmatprep.subr.mxu0 0.0
        %2463 = vmatpush1.msra.mxu0 0.0
        %2464 = vmatprep.subr.mxu0 0.0
        %2465 = vmatpush1.msra.mxu0 0.0
        %2466 = vmatprep.subr.mxu0 0.0
        %2467 = vmatpush1.msra.mxu0 0.0
        %2468 = vmatprep.subr.mxu0 0.0
        %2469 = vmatpush1.msra.mxu0 0.0
        %2470 = vmatprep.subr.mxu0 0.0
        %2471 = vmatpush1.msra.mxu0 0.0
        %2472 = vmatprep.subr.mxu0 0.0
        %2473 = vmatpush1.msra.mxu0 0.0
        %2474 = vmatprep.subr.mxu0 0.0
        %2475 = vmatpush1.msra.mxu0 0.0
        %2476 = vmatprep.subr.mxu0 0.0
        %2477 = vmatpush1.msra.mxu0 0.0
        %2478 = vmatprep.subr.mxu0 0.0
        %2479 = vmatpush1.msra.mxu0 0.0
        %2480 = vmatprep.subr.mxu0 0.0
        %2481 = vmatpush1.msra.mxu0 0.0
        %2482 = vmatprep.subr.mxu0 0.0
        %2483 = vmatpush1.msra.mxu0 0.0
        %2484 = vmatprep.subr.mxu0 0.0
        %2485 = vmatpush1.msra.mxu0 0.0
        %2486 = vmatprep.subr.mxu0 0.0
        %2487 = vmatpush1.msra.mxu0 0.0
        %2488 = vmatprep.subr.mxu0 0.0
        %2489 = vmatpush1.msra.mxu0 0.0
        %2490 = vmatprep.subr.mxu0 0.0
        %2491 = vmatpush1.msra.mxu0 0.0
        %2492 = vmatprep.subr.mxu0 0.0
        %2493 = vmatpush1.msra.mxu0 0.0
        %2494 = vmatprep.subr.mxu0 0.0
        %2495 = vmatpush1.msra.mxu0 0.0
        %2496 = vmatprep.mubr.f32.mxu0 0.0
        %v2497 = vand.u32 %v2187, 4294901760
        %v2498 = vsub.f32 %v2187, %v2497
        %v2499 = vand.u32 %v2498, 4294901760
        %2500 = vmatmul.mubr.f32.gmra.mrb[0].mxu0 %v2499
        %v2501 = vpop.f32.mrb[0].mxu0
        %v2502 = vadd.f32 %v2426, %v2501
        %v2503 = vpop.f32.mrb[0].mxu0
        %v2504 = vadd.f32 %v2428, %v2503
        %2505 = vdwg.mxu0
        %v2506 = vand.u32 %v2191, 4294901760
        %v2507 = vsub.f32 %v2191, %v2506
        %v2508 = vand.u32 %v2507, 4294901760
        %2509 = vmatprep.subr.mxu0 %v2508
        %v2510 = vand.u32 %v2189, 4294901760
        %v2511 = vsub.f32 %v2189, %v2510
        %v2512 = vand.u32 %v2511, 4294901760
        %2513 = vmatpush1.msra.mxu0 %v2512
        %2514 = vmatprep.subr.mxu0 0.0
        %2515 = vmatpush1.msra.mxu0 0.0
        %2516 = vmatprep.subr.mxu0 0.0
        %2517 = vmatpush1.msra.mxu0 0.0
        %2518 = vmatprep.subr.mxu0 0.0
        %2519 = vmatpush1.msra.mxu0 0.0
        %2520 = vmatprep.subr.mxu0 0.0
        %2521 = vmatpush1.msra.mxu0 0.0
        %2522 = vmatprep.subr.mxu0 0.0
        %2523 = vmatpush1.msra.mxu0 0.0
        %2524 = vmatprep.subr.mxu0 0.0
        %2525 = vmatpush1.msra.mxu0 0.0
        %2526 = vmatprep.subr.mxu0 0.0
        %2527 = vmatpush1.msra.mxu0 0.0
        %2528 = vmatprep.subr.mxu0 0.0
        %2529 = vmatpush1.msra.mxu0 0.0
        %2530 = vmatprep.subr.mxu0 0.0
        %2531 = vmatpush1.msra.mxu0 0.0
        %2532 = vmatprep.subr.mxu0 0.0
        %2533 = vmatpush1.msra.mxu0 0.0
        %2534 = vmatprep.subr.mxu0 0.0
        %2535 = vmatpush1.msra.mxu0 0.0
        %2536 = vmatprep.subr.mxu0 0.0
        %2537 = vmatpush1.msra.mxu0 0.0
        %2538 = vmatprep.subr.mxu0 0.0
        %2539 = vmatpush1.msra.mxu0 0.0
        %2540 = vmatprep.subr.mxu0 0.0
        %2541 = vmatpush1.msra.mxu0 0.0
        %2542 = vmatprep.subr.mxu0 0.0
        %2543 = vmatpush1.msra.mxu0 0.0
        %2544 = vmatprep.subr.mxu0 0.0
        %2545 = vmatpush1.msra.mxu0 0.0
        %2546 = vmatprep.subr.mxu0 0.0
        %2547 = vmatpush1.msra.mxu0 0.0
        %2548 = vmatprep.subr.mxu0 0.0
        %2549 = vmatpush1.msra.mxu0 0.0
        %2550 = vmatprep.subr.mxu0 0.0
        %2551 = vmatpush1.msra.mxu0 0.0
        %2552 = vmatprep.subr.mxu0 0.0
        %2553 = vmatpush1.msra.mxu0 0.0
        %2554 = vmatprep.subr.mxu0 0.0
        %2555 = vmatpush1.msra.mxu0 0.0
        %2556 = vmatprep.subr.mxu0 0.0
        %2557 = vmatpush1.msra.mxu0 0.0
        %2558 = vmatprep.subr.mxu0 0.0
        %2559 = vmatpush1.msra.mxu0 0.0
        %2560 = vmatprep.subr.mxu0 0.0
        %2561 = vmatpush1.msra.mxu0 0.0
        %2562 = vmatprep.subr.mxu0 0.0
        %2563 = vmatpush1.msra.mxu0 0.0
        %2564 = vmatprep.subr.mxu0 0.0
        %2565 = vmatpush1.msra.mxu0 0.0
        %2566 = vmatprep.subr.mxu0 0.0
        %2567 = vmatpush1.msra.mxu0 0.0
        %2568 = vmatprep.subr.mxu0 0.0
        %2569 = vmatpush1.msra.mxu0 0.0
        %2570 = vmatprep.subr.mxu0 0.0
        %2571 = vmatpush1.msra.mxu0 0.0
        %2572 = vmatprep.subr.mxu0 0.0
        %2573 = vmatpush1.msra.mxu0 0.0
        %2574 = vmatprep.subr.mxu0 0.0
        %2575 = vmatpush1.msra.mxu0 0.0
        %2576 = vmatprep.mubr.f32.mxu0 0.0
        %v2577 = vand.u32 %v2187, 4294901760
        %2578 = vmatmul.mubr.f32.gmra.mrb[0].mxu0 %v2577
        %v2579 = vpop.f32.mrb[0].mxu0
        %v2580 = vadd.f32 %v2502, %v2579
        %v2581 = vpop.f32.mrb[0].mxu0
        %v2582 = vadd.f32 %v2504, %v2581
        %2583 = vdwg.mxu0
        %v2584 = vand.u32 %v2191, 4294901760
        %2585 = vmatprep.subr.mxu0 %v2584
        %v2586 = vand.u32 %v2189, 4294901760
        %2587 = vmatpush1.msra.mxu0 %v2586
        %2588 = vmatprep.subr.mxu0 0.0
        %2589 = vmatpush1.msra.mxu0 0.0
        %2590 = vmatprep.subr.mxu0 0.0
        %2591 = vmatpush1.msra.mxu0 0.0
        %2592 = vmatprep.subr.mxu0 0.0
        %2593 = vmatpush1.msra.mxu0 0.0
        %2594 = vmatprep.subr.mxu0 0.0
        %2595 = vmatpush1.msra.mxu0 0.0
        %2596 = vmatprep.subr.mxu0 0.0
        %2597 = vmatpush1.msra.mxu0 0.0
        %2598 = vmatprep.subr.mxu0 0.0
        %2599 = vmatpush1.msra.mxu0 0.0
        %2600 = vmatprep.subr.mxu0 0.0
        %2601 = vmatpush1.msra.mxu0 0.0
        %2602 = vmatprep.subr.mxu0 0.0
        %2603 = vmatpush1.msra.mxu0 0.0
        %2604 = vmatprep.subr.mxu0 0.0
        %2605 = vmatpush1.msra.mxu0 0.0
        %2606 = vmatprep.subr.mxu0 0.0
        %2607 = vmatpush1.msra.mxu0 0.0
        %2608 = vmatprep.subr.mxu0 0.0
        %2609 = vmatpush1.msra.mxu0 0.0
        %2610 = vmatprep.subr.mxu0 0.0
        %2611 = vmatpush1.msra.mxu0 0.0
        %2612 = vmatprep.subr.mxu0 0.0
        %2613 = vmatpush1.msra.mxu0 0.0
        %2614 = vmatprep.subr.mxu0 0.0
        %2615 = vmatpush1.msra.mxu0 0.0
        %2616 = vmatprep.subr.mxu0 0.0
        %2617 = vmatpush1.msra.mxu0 0.0
        %2618 = vmatprep.subr.mxu0 0.0
        %2619 = vmatpush1.msra.mxu0 0.0
        %2620 = vmatprep.subr.mxu0 0.0
        %2621 = vmatpush1.msra.mxu0 0.0
        %2622 = vmatprep.subr.mxu0 0.0
        %2623 = vmatpush1.msra.mxu0 0.0
        %2624 = vmatprep.subr.mxu0 0.0
        %2625 = vmatpush1.msra.mxu0 0.0
        %2626 = vmatprep.subr.mxu0 0.0
        %2627 = vmatpush1.msra.mxu0 0.0
        %2628 = vmatprep.subr.mxu0 0.0
        %2629 = vmatpush1.msra.mxu0 0.0
        %2630 = vmatprep.subr.mxu0 0.0
        %2631 = vmatpush1.msra.mxu0 0.0
        %2632 = vmatprep.subr.mxu0 0.0
        %2633 = vmatpush1.msra.mxu0 0.0
        %2634 = vmatprep.subr.mxu0 0.0
        %2635 = vmatpush1.msra.mxu0 0.0
        %2636 = vmatprep.subr.mxu0 0.0
        %2637 = vmatpush1.msra.mxu0 0.0
        %2638 = vmatprep.subr.mxu0 0.0
        %2639 = vmatpush1.msra.mxu0 0.0
        %2640 = vmatprep.subr.mxu0 0.0
        %2641 = vmatpush1.msra.mxu0 0.0
        %2642 = vmatprep.subr.mxu0 0.0
        %2643 = vmatpush1.msra.mxu0 0.0
        %2644 = vmatprep.subr.mxu0 0.0
        %2645 = vmatpush1.msra.mxu0 0.0
        %2646 = vmatprep.subr.mxu0 0.0
        %2647 = vmatpush1.msra.mxu0 0.0
        %2648 = vmatprep.subr.mxu0 0.0
        %2649 = vmatpush1.msra.mxu0 0.0
        %2650 = vmatprep.mubr.f32.mxu0 0.0
        %v2651 = vand.u32 %v2187, 4294901760
        %2652 = vmatmul.mubr.f32.gmra.mrb[0].mxu0 %v2651
        %v2653 = vpop.f32.mrb[0].mxu0
        %v2654 = vadd.f32 %v2580, %v2653
        %v2655 = vpop.f32.mrb[0].mxu0
        %v2656 = vadd.f32 %v2582, %v2655
        %2657 = vdwg.mxu0
        %v2658 = vadd.f32 %v2182, %v2654
        %v2659 = vadd.f32 %v2183, %v2656
        %s2660 = scalar_lea.vmem %s1, 28
        %v2661 = vld [vmem:[%s2660] sm:$0xf]
        %v2663 = vsel %vm262, %v2661, 0
        %v2666 = vsel %vm266, %v1704, 0
        %v2669 = vsel %vm266, %v1705, 0
        %v2671 = vand.u32 %v2669, 4294901760
        %2672 = vmatprep.subr.mxu0 %v2671
        %v2673 = vand.u32 %v2666, 4294901760
        %2674 = vmatpush1.msra.mxu0 %v2673
        %2675 = vmatprep.subr.mxu0 0.0
        %2676 = vmatpush1.msra.mxu0 0.0
        %2677 = vmatprep.subr.mxu0 0.0
        %2678 = vmatpush1.msra.mxu0 0.0
        %2679 = vmatprep.subr.mxu0 0.0
        %2680 = vmatpush1.msra.mxu0 0.0
        %2681 = vmatprep.subr.mxu0 0.0
        %2682 = vmatpush1.msra.mxu0 0.0
        %2683 = vmatprep.subr.mxu0 0.0
        %2684 = vmatpush1.msra.mxu0 0.0
        %2685 = vmatprep.subr.mxu0 0.0
        %2686 = vmatpush1.msra.mxu0 0.0
        %2687 = vmatprep.subr.mxu0 0.0
        %2688 = vmatpush1.msra.mxu0 0.0
        %2689 = vmatprep.subr.mxu0 0.0
        %2690 = vmatpush1.msra.mxu0 0.0
        %2691 = vmatprep.subr.mxu0 0.0
        %2692 = vmatpush1.msra.mxu0 0.0
        %2693 = vmatprep.subr.mxu0 0.0
        %2694 = vmatpush1.msra.mxu0 0.0
        %2695 = vmatprep.subr.mxu0 0.0
        %2696 = vmatpush1.msra.mxu0 0.0
        %2697 = vmatprep.subr.mxu0 0.0
        %2698 = vmatpush1.msra.mxu0 0.0
        %2699 = vmatprep.subr.mxu0 0.0
        %2700 = vmatpush1.msra.mxu0 0.0
        %2701 = vmatprep.subr.mxu0 0.0
        %2702 = vmatpush1.msra.mxu0 0.0
        %2703 = vmatprep.subr.mxu0 0.0
        %2704 = vmatpush1.msra.mxu0 0.0
        %2705 = vmatprep.subr.mxu0 0.0
        %2706 = vmatpush1.msra.mxu0 0.0
        %2707 = vmatprep.subr.mxu0 0.0
        %2708 = vmatpush1.msra.mxu0 0.0
        %2709 = vmatprep.subr.mxu0 0.0
        %2710 = vmatpush1.msra.mxu0 0.0
        %2711 = vmatprep.subr.mxu0 0.0
        %2712 = vmatpush1.msra.mxu0 0.0
        %2713 = vmatprep.subr.mxu0 0.0
        %2714 = vmatpush1.msra.mxu0 0.0
        %2715 = vmatprep.subr.mxu0 0.0
        %2716 = vmatpush1.msra.mxu0 0.0
        %2717 = vmatprep.subr.mxu0 0.0
        %2718 = vmatpush1.msra.mxu0 0.0
        %2719 = vmatprep.subr.mxu0 0.0
        %2720 = vmatpush1.msra.mxu0 0.0
        %2721 = vmatprep.subr.mxu0 0.0
        %2722 = vmatpush1.msra.mxu0 0.0
        %2723 = vmatprep.subr.mxu0 0.0
        %2724 = vmatpush1.msra.mxu0 0.0
        %2725 = vmatprep.subr.mxu0 0.0
        %2726 = vmatpush1.msra.mxu0 0.0
        %2727 = vmatprep.subr.mxu0 0.0
        %2728 = vmatpush1.msra.mxu0 0.0
        %2729 = vmatprep.subr.mxu0 0.0
        %2730 = vmatpush1.msra.mxu0 0.0
        %2731 = vmatprep.subr.mxu0 0.0
        %2732 = vmatpush1.msra.mxu0 0.0
        %2733 = vmatprep.subr.mxu0 0.0
        %2734 = vmatpush1.msra.mxu0 0.0
        %2735 = vmatprep.subr.mxu0 0.0
        %2736 = vmatpush1.msra.mxu0 0.0
        %2737 = vmatprep.mubr.f32.mxu0 0.0
        %v2738 = vand.u32 %v2663, 4294901760
        %v2739 = vsub.f32 %v2663, %v2738
        %v2740 = vand.u32 %v2739, 4294901760
        %v2741 = vsub.f32 %v2739, %v2740
        %v2742 = vand.u32 %v2741, 4294901760
        %2743 = vmatmul.mubr.f32.gmra.mrb[0].mxu0 %v2742
        %v2744 = vpop.f32.mrb[0].mxu0
        %v2745 = vadd.f32 0.0, %v2744
        %v2746 = vpop.f32.mrb[0].mxu0
        %v2747 = vadd.f32 0.0, %v2746
        %2748 = vdwg.mxu0
        %v2749 = vand.u32 %v2669, 4294901760
        %v2750 = vsub.f32 %v2669, %v2749
        %v2751 = vand.u32 %v2750, 4294901760
        %v2752 = vsub.f32 %v2750, %v2751
        %v2753 = vand.u32 %v2752, 4294901760
        %2754 = vmatprep.subr.mxu0 %v2753
        %v2755 = vand.u32 %v2666, 4294901760
        %v2756 = vsub.f32 %v2666, %v2755
        %v2757 = vand.u32 %v2756, 4294901760
        %v2758 = vsub.f32 %v2756, %v2757
        %v2759 = vand.u32 %v2758, 4294901760
        %2760 = vmatpush1.msra.mxu0 %v2759
        %2761 = vmatprep.subr.mxu0 0.0
        %2762 = vmatpush1.msra.mxu0 0.0
        %2763 = vmatprep.subr.mxu0 0.0
        %2764 = vmatpush1.msra.mxu0 0.0
        %2765 = vmatprep.subr.mxu0 0.0
        %2766 = vmatpush1.msra.mxu0 0.0
        %2767 = vmatprep.subr.mxu0 0.0
        %2768 = vmatpush1.msra.mxu0 0.0
        %2769 = vmatprep.subr.mxu0 0.0
        %2770 = vmatpush1.msra.mxu0 0.0
        %2771 = vmatprep.subr.mxu0 0.0
        %2772 = vmatpush1.msra.mxu0 0.0
        %2773 = vmatprep.subr.mxu0 0.0
        %2774 = vmatpush1.msra.mxu0 0.0
        %2775 = vmatprep.subr.mxu0 0.0
        %2776 = vmatpush1.msra.mxu0 0.0
        %2777 = vmatprep.subr.mxu0 0.0
        %2778 = vmatpush1.msra.mxu0 0.0
        %2779 = vmatprep.subr.mxu0 0.0
        %2780 = vmatpush1.msra.mxu0 0.0
        %2781 = vmatprep.subr.mxu0 0.0
        %2782 = vmatpush1.msra.mxu0 0.0
        %2783 = vmatprep.subr.mxu0 0.0
        %2784 = vmatpush1.msra.mxu0 0.0
        %2785 = vmatprep.subr.mxu0 0.0
        %2786 = vmatpush1.msra.mxu0 0.0
        %2787 = vmatprep.subr.mxu0 0.0
        %2788 = vmatpush1.msra.mxu0 0.0
        %2789 = vmatprep.subr.mxu0 0.0
        %2790 = vmatpush1.msra.mxu0 0.0
        %2791 = vmatprep.subr.mxu0 0.0
        %2792 = vmatpush1.msra.mxu0 0.0
        %2793 = vmatprep.subr.mxu0 0.0
        %2794 = vmatpush1.msra.mxu0 0.0
        %2795 = vmatprep.subr.mxu0 0.0
        %2796 = vmatpush1.msra.mxu0 0.0
        %2797 = vmatprep.subr.mxu0 0.0
        %2798 = vmatpush1.msra.mxu0 0.0
        %2799 = vmatprep.subr.mxu0 0.0
        %2800 = vmatpush1.msra.mxu0 0.0
        %2801 = vmatprep.subr.mxu0 0.0
        %2802 = vmatpush1.msra.mxu0 0.0
        %2803 = vmatprep.subr.mxu0 0.0
        %2804 = vmatpush1.msra.mxu0 0.0
        %2805 = vmatprep.subr.mxu0 0.0
        %2806 = vmatpush1.msra.mxu0 0.0
        %2807 = vmatprep.subr.mxu0 0.0
        %2808 = vmatpush1.msra.mxu0 0.0
        %2809 = vmatprep.subr.mxu0 0.0
        %2810 = vmatpush1.msra.mxu0 0.0
        %2811 = vmatprep.subr.mxu0 0.0
        %2812 = vmatpush1.msra.mxu0 0.0
        %2813 = vmatprep.subr.mxu0 0.0
        %2814 = vmatpush1.msra.mxu0 0.0
        %2815 = vmatprep.subr.mxu0 0.0
        %2816 = vmatpush1.msra.mxu0 0.0
        %2817 = vmatprep.subr.mxu0 0.0
        %2818 = vmatpush1.msra.mxu0 0.0
        %2819 = vmatprep.subr.mxu0 0.0
        %2820 = vmatpush1.msra.mxu0 0.0
        %2821 = vmatprep.subr.mxu0 0.0
        %2822 = vmatpush1.msra.mxu0 0.0
        %2823 = vmatprep.mubr.f32.mxu0 0.0
        %v2824 = vand.u32 %v2663, 4294901760
        %2825 = vmatmul.mubr.f32.gmra.mrb[0].mxu0 %v2824
        %v2826 = vpop.f32.mrb[0].mxu0
        %v2827 = vadd.f32 %v2745, %v2826
        %v2828 = vpop.f32.mrb[0].mxu0
        %v2829 = vadd.f32 %v2747, %v2828
        %2830 = vdwg.mxu0
        %v2831 = vand.u32 %v2669, 4294901760
        %v2832 = vsub.f32 %v2669, %v2831
        %2833 = vmatprep.subr.mxu0 %v2832
        %v2834 = vand.u32 %v2666, 4294901760
        %v2835 = vsub.f32 %v2666, %v2834
        %2836 = vmatpush1.msra.mxu0 %v2835
        %2837 = vmatprep.subr.mxu0 0.0
        %2838 = vmatpush1.msra.mxu0 0.0
        %2839 = vmatprep.subr.mxu0 0.0
        %2840 = vmatpush1.msra.mxu0 0.0
        %2841 = vmatprep.subr.mxu0 0.0
        %2842 = vmatpush1.msra.mxu0 0.0
        %2843 = vmatprep.subr.mxu0 0.0
        %2844 = vmatpush1.msra.mxu0 0.0
        %2845 = vmatprep.subr.mxu0 0.0
        %2846 = vmatpush1.msra.mxu0 0.0
        %2847 = vmatprep.subr.mxu0 0.0
        %2848 = vmatpush1.msra.mxu0 0.0
        %2849 = vmatprep.subr.mxu0 0.0
        %2850 = vmatpush1.msra.mxu0 0.0
        %2851 = vmatprep.subr.mxu0 0.0
        %2852 = vmatpush1.msra.mxu0 0.0
        %2853 = vmatprep.subr.mxu0 0.0
        %2854 = vmatpush1.msra.mxu0 0.0
        %2855 = vmatprep.subr.mxu0 0.0
        %2856 = vmatpush1.msra.mxu0 0.0
        %2857 = vmatprep.subr.mxu0 0.0
        %2858 = vmatpush1.msra.mxu0 0.0
        %2859 = vmatprep.subr.mxu0 0.0
        %2860 = vmatpush1.msra.mxu0 0.0
        %2861 = vmatprep.subr.mxu0 0.0
        %2862 = vmatpush1.msra.mxu0 0.0
        %2863 = vmatprep.subr.mxu0 0.0
        %2864 = vmatpush1.msra.mxu0 0.0
        %2865 = vmatprep.subr.mxu0 0.0
        %2866 = vmatpush1.msra.mxu0 0.0
        %2867 = vmatprep.subr.mxu0 0.0
        %2868 = vmatpush1.msra.mxu0 0.0
        %2869 = vmatprep.subr.mxu0 0.0
        %2870 = vmatpush1.msra.mxu0 0.0
        %2871 = vmatprep.subr.mxu0 0.0
        %2872 = vmatpush1.msra.mxu0 0.0
        %2873 = vmatprep.subr.mxu0 0.0
        %2874 = vmatpush1.msra.mxu0 0.0
        %2875 = vmatprep.subr.mxu0 0.0
        %2876 = vmatpush1.msra.mxu0 0.0
        %2877 = vmatprep.subr.mxu0 0.0
        %2878 = vmatpush1.msra.mxu0 0.0
        %2879 = vmatprep.subr.mxu0 0.0
        %2880 = vmatpush1.msra.mxu0 0.0
        %2881 = vmatprep.subr.mxu0 0.0
        %2882 = vmatpush1.msra.mxu0 0.0
        %2883 = vmatprep.subr.mxu0 0.0
        %2884 = vmatpush1.msra.mxu0 0.0
        %2885 = vmatprep.subr.mxu0 0.0
        %2886 = vmatpush1.msra.mxu0 0.0
        %2887 = vmatprep.subr.mxu0 0.0
        %2888 = vmatpush1.msra.mxu0 0.0
        %2889 = vmatprep.subr.mxu0 0.0
        %2890 = vmatpush1.msra.mxu0 0.0
        %2891 = vmatprep.subr.mxu0 0.0
        %2892 = vmatpush1.msra.mxu0 0.0
        %2893 = vmatprep.subr.mxu0 0.0
        %2894 = vmatpush1.msra.mxu0 0.0
        %2895 = vmatprep.subr.mxu0 0.0
        %2896 = vmatpush1.msra.mxu0 0.0
        %2897 = vmatprep.subr.mxu0 0.0
        %2898 = vmatpush1.msra.mxu0 0.0
        %2899 = vmatprep.mubr.f32.mxu0 0.0
        %v2900 = vand.u32 %v2663, 4294901760
        %v2901 = vsub.f32 %v2663, %v2900
        %2902 = vmatmul.mubr.f32.gmra.mrb[0].mxu0 %v2901
        %v2903 = vpop.f32.mrb[0].mxu0
        %v2904 = vadd.f32 %v2827, %v2903
        %v2905 = vpop.f32.mrb[0].mxu0
        %v2906 = vadd.f32 %v2829, %v2905
        %2907 = vdwg.mxu0
        %v2908 = vand.u32 %v2669, 4294901760
        %2909 = vmatprep.subr.mxu0 %v2908
        %v2910 = vand.u32 %v2666, 4294901760
        %2911 = vmatpush1.msra.mxu0 %v2910
        %2912 = vmatprep.subr.mxu0 0.0
        %2913 = vmatpush1.msra.mxu0 0.0
        %2914 = vmatprep.subr.mxu0 0.0
        %2915 = vmatpush1.msra.mxu0 0.0
        %2916 = vmatprep.subr.mxu0 0.0
        %2917 = vmatpush1.msra.mxu0 0.0
        %2918 = vmatprep.subr.mxu0 0.0
        %2919 = vmatpush1.msra.mxu0 0.0
        %2920 = vmatprep.subr.mxu0 0.0
        %2921 = vmatpush1.msra.mxu0 0.0
        %2922 = vmatprep.subr.mxu0 0.0
        %2923 = vmatpush1.msra.mxu0 0.0
        %2924 = vmatprep.subr.mxu0 0.0
        %2925 = vmatpush1.msra.mxu0 0.0
        %2926 = vmatprep.subr.mxu0 0.0
        %2927 = vmatpush1.msra.mxu0 0.0
        %2928 = vmatprep.subr.mxu0 0.0
        %2929 = vmatpush1.msra.mxu0 0.0
        %2930 = vmatprep.subr.mxu0 0.0
        %2931 = vmatpush1.msra.mxu0 0.0
        %2932 = vmatprep.subr.mxu0 0.0
        %2933 = vmatpush1.msra.mxu0 0.0
        %2934 = vmatprep.subr.mxu0 0.0
        %2935 = vmatpush1.msra.mxu0 0.0
        %2936 = vmatprep.subr.mxu0 0.0
        %2937 = vmatpush1.msra.mxu0 0.0
        %2938 = vmatprep.subr.mxu0 0.0
        %2939 = vmatpush1.msra.mxu0 0.0
        %2940 = vmatprep.subr.mxu0 0.0
        %2941 = vmatpush1.msra.mxu0 0.0
        %2942 = vmatprep.subr.mxu0 0.0
        %2943 = vmatpush1.msra.mxu0 0.0
        %2944 = vmatprep.subr.mxu0 0.0
        %2945 = vmatpush1.msra.mxu0 0.0
        %2946 = vmatprep.subr.mxu0 0.0
        %2947 = vmatpush1.msra.mxu0 0.0
        %2948 = vmatprep.subr.mxu0 0.0
        %2949 = vmatpush1.msra.mxu0 0.0
        %2950 = vmatprep.subr.mxu0 0.0
        %2951 = vmatpush1.msra.mxu0 0.0
        %2952 = vmatprep.subr.mxu0 0.0
        %2953 = vmatpush1.msra.mxu0 0.0
        %2954 = vmatprep.subr.mxu0 0.0
        %2955 = vmatpush1.msra.mxu0 0.0
        %2956 = vmatprep.subr.mxu0 0.0
        %2957 = vmatpush1.msra.mxu0 0.0
        %2958 = vmatprep.subr.mxu0 0.0
        %2959 = vmatpush1.msra.mxu0 0.0
        %2960 = vmatprep.subr.mxu0 0.0
        %2961 = vmatpush1.msra.mxu0 0.0
        %2962 = vmatprep.subr.mxu0 0.0
        %2963 = vmatpush1.msra.mxu0 0.0
        %2964 = vmatprep.subr.mxu0 0.0
        %2965 = vmatpush1.msra.mxu0 0.0
        %2966 = vmatprep.subr.mxu0 0.0
        %2967 = vmatpush1.msra.mxu0 0.0
        %2968 = vmatprep.subr.mxu0 0.0
        %2969 = vmatpush1.msra.mxu0 0.0
        %2970 = vmatprep.subr.mxu0 0.0
        %2971 = vmatpush1.msra.mxu0 0.0
        %2972 = vmatprep.subr.mxu0 0.0
        %2973 = vmatpush1.msra.mxu0 0.0
        %2974 = vmatprep.mubr.f32.mxu0 0.0
        %v2975 = vand.u32 %v2663, 4294901760
        %v2976 = vsub.f32 %v2663, %v2975
        %v2977 = vand.u32 %v2976, 4294901760
        %2978 = vmatmul.mubr.f32.gmra.mrb[0].mxu0 %v2977
        %v2979 = vpop.f32.mrb[0].mxu0
        %v2980 = vadd.f32 %v2904, %v2979
        %v2981 = vpop.f32.mrb[0].mxu0
        %v2982 = vadd.f32 %v2906, %v2981
        %2983 = vdwg.mxu0
        %v2984 = vand.u32 %v2669, 4294901760
        %v2985 = vsub.f32 %v2669, %v2984
        %v2986 = vand.u32 %v2985, 4294901760
        %2987 = vmatprep.subr.mxu0 %v2986
        %v2988 = vand.u32 %v2666, 4294901760
        %v2989 = vsub.f32 %v2666, %v2988
        %v2990 = vand.u32 %v2989, 4294901760
        %2991 = vmatpush1.msra.mxu0 %v2990
        %2992 = vmatprep.subr.mxu0 0.0
        %2993 = vmatpush1.msra.mxu0 0.0
        %2994 = vmatprep.subr.mxu0 0.0
        %2995 = vmatpush1.msra.mxu0 0.0
        %2996 = vmatprep.subr.mxu0 0.0
        %2997 = vmatpush1.msra.mxu0 0.0
        %2998 = vmatprep.subr.mxu0 0.0
        %2999 = vmatpush1.msra.mxu0 0.0
        %3000 = vmatprep.subr.mxu0 0.0
        %3001 = vmatpush1.msra.mxu0 0.0
        %3002 = vmatprep.subr.mxu0 0.0
        %3003 = vmatpush1.msra.mxu0 0.0
        %3004 = vmatprep.subr.mxu0 0.0
        %3005 = vmatpush1.msra.mxu0 0.0
        %3006 = vmatprep.subr.mxu0 0.0
        %3007 = vmatpush1.msra.mxu0 0.0
        %3008 = vmatprep.subr.mxu0 0.0
        %3009 = vmatpush1.msra.mxu0 0.0
        %3010 = vmatprep.subr.mxu0 0.0
        %3011 = vmatpush1.msra.mxu0 0.0
        %3012 = vmatprep.subr.mxu0 0.0
        %3013 = vmatpush1.msra.mxu0 0.0
        %3014 = vmatprep.subr.mxu0 0.0
        %3015 = vmatpush1.msra.mxu0 0.0
        %3016 = vmatprep.subr.mxu0 0.0
        %3017 = vmatpush1.msra.mxu0 0.0
        %3018 = vmatprep.subr.mxu0 0.0
        %3019 = vmatpush1.msra.mxu0 0.0
        %3020 = vmatprep.subr.mxu0 0.0
        %3021 = vmatpush1.msra.mxu0 0.0
        %3022 = vmatprep.subr.mxu0 0.0
        %3023 = vmatpush1.msra.mxu0 0.0
        %3024 = vmatprep.subr.mxu0 0.0
        %3025 = vmatpush1.msra.mxu0 0.0
        %3026 = vmatprep.subr.mxu0 0.0
        %3027 = vmatpush1.msra.mxu0 0.0
        %3028 = vmatprep.subr.mxu0 0.0
        %3029 = vmatpush1.msra.mxu0 0.0
        %3030 = vmatprep.subr.mxu0 0.0
        %3031 = vmatpush1.msra.mxu0 0.0
        %3032 = vmatprep.subr.mxu0 0.0
        %3033 = vmatpush1.msra.mxu0 0.0
        %3034 = vmatprep.subr.mxu0 0.0
        %3035 = vmatpush1.msra.mxu0 0.0
        %3036 = vmatprep.subr.mxu0 0.0
        %3037 = vmatpush1.msra.mxu0 0.0
        %3038 = vmatprep.subr.mxu0 0.0
        %3039 = vmatpush1.msra.mxu0 0.0
        %3040 = vmatprep.subr.mxu0 0.0
        %3041 = vmatpush1.msra.mxu0 0.0
        %3042 = vmatprep.subr.mxu0 0.0
        %3043 = vmatpush1.msra.mxu0 0.0
        %3044 = vmatprep.subr.mxu0 0.0
        %3045 = vmatpush1.msra.mxu0 0.0
        %3046 = vmatprep.subr.mxu0 0.0
        %3047 = vmatpush1.msra.mxu0 0.0
        %3048 = vmatprep.subr.mxu0 0.0
        %3049 = vmatpush1.msra.mxu0 0.0
        %3050 = vmatprep.subr.mxu0 0.0
        %3051 = vmatpush1.msra.mxu0 0.0
        %3052 = vmatprep.subr.mxu0 0.0
        %3053 = vmatpush1.msra.mxu0 0.0
        %3054 = vmatprep.mubr.f32.mxu0 0.0
        %v3055 = vand.u32 %v2663, 4294901760
        %3056 = vmatmul.mubr.f32.gmra.mrb[0].mxu0 %v3055
        %v3057 = vpop.f32.mrb[0].mxu0
        %v3058 = vadd.f32 %v2980, %v3057
        %v3059 = vpop.f32.mrb[0].mxu0
        %v3060 = vadd.f32 %v2982, %v3059
        %3061 = vdwg.mxu0
        %v3062 = vand.u32 %v2669, 4294901760
        %3063 = vmatprep.subr.mxu0 %v3062
        %v3064 = vand.u32 %v2666, 4294901760
        %3065 = vmatpush1.msra.mxu0 %v3064
        %3066 = vmatprep.subr.mxu0 0.0
        %3067 = vmatpush1.msra.mxu0 0.0
        %3068 = vmatprep.subr.mxu0 0.0
        %3069 = vmatpush1.msra.mxu0 0.0
        %3070 = vmatprep.subr.mxu0 0.0
        %3071 = vmatpush1.msra.mxu0 0.0
        %3072 = vmatprep.subr.mxu0 0.0
        %3073 = vmatpush1.msra.mxu0 0.0
        %3074 = vmatprep.subr.mxu0 0.0
        %3075 = vmatpush1.msra.mxu0 0.0
        %3076 = vmatprep.subr.mxu0 0.0
        %3077 = vmatpush1.msra.mxu0 0.0
        %3078 = vmatprep.subr.mxu0 0.0
        %3079 = vmatpush1.msra.mxu0 0.0
        %3080 = vmatprep.subr.mxu0 0.0
        %3081 = vmatpush1.msra.mxu0 0.0
        %3082 = vmatprep.subr.mxu0 0.0
        %3083 = vmatpush1.msra.mxu0 0.0
        %3084 = vmatprep.subr.mxu0 0.0
        %3085 = vmatpush1.msra.mxu0 0.0
        %3086 = vmatprep.subr.mxu0 0.0
        %3087 = vmatpush1.msra.mxu0 0.0
        %3088 = vmatprep.subr.mxu0 0.0
        %3089 = vmatpush1.msra.mxu0 0.0
        %3090 = vmatprep.subr.mxu0 0.0
        %3091 = vmatpush1.msra.mxu0 0.0
        %3092 = vmatprep.subr.mxu0 0.0
        %3093 = vmatpush1.msra.mxu0 0.0
        %3094 = vmatprep.subr.mxu0 0.0
        %3095 = vmatpush1.msra.mxu0 0.0
        %3096 = vmatprep.subr.mxu0 0.0
        %3097 = vmatpush1.msra.mxu0 0.0
        %3098 = vmatprep.subr.mxu0 0.0
        %3099 = vmatpush1.msra.mxu0 0.0
        %3100 = vmatprep.subr.mxu0 0.0
        %3101 = vmatpush1.msra.mxu0 0.0
        %3102 = vmatprep.subr.mxu0 0.0
        %3103 = vmatpush1.msra.mxu0 0.0
        %3104 = vmatprep.subr.mxu0 0.0
        %3105 = vmatpush1.msra.mxu0 0.0
        %3106 = vmatprep.subr.mxu0 0.0
        %3107 = vmatpush1.msra.mxu0 0.0
        %3108 = vmatprep.subr.mxu0 0.0
        %3109 = vmatpush1.msra.mxu0 0.0
        %3110 = vmatprep.subr.mxu0 0.0
        %3111 = vmatpush1.msra.mxu0 0.0
        %3112 = vmatprep.subr.mxu0 0.0
        %3113 = vmatpush1.msra.mxu0 0.0
        %3114 = vmatprep.subr.mxu0 0.0
        %3115 = vmatpush1.msra.mxu0 0.0
        %3116 = vmatprep.subr.mxu0 0.0
        %3117 = vmatpush1.msra.mxu0 0.0
        %3118 = vmatprep.subr.mxu0 0.0
        %3119 = vmatpush1.msra.mxu0 0.0
        %3120 = vmatprep.subr.mxu0 0.0
        %3121 = vmatpush1.msra.mxu0 0.0
        %3122 = vmatprep.subr.mxu0 0.0
        %3123 = vmatpush1.msra.mxu0 0.0
        %3124 = vmatprep.subr.mxu0 0.0
        %3125 = vmatpush1.msra.mxu0 0.0
        %3126 = vmatprep.subr.mxu0 0.0
        %3127 = vmatpush1.msra.mxu0 0.0
        %3128 = vmatprep.mubr.f32.mxu0 0.0
        %v3129 = vand.u32 %v2663, 4294901760
        %3130 = vmatmul.mubr.f32.gmra.mrb[0].mxu0 %v3129
        %v3131 = vpop.f32.mrb[0].mxu0
        %v3132 = vadd.f32 %v3058, %v3131
        %v3133 = vpop.f32.mrb[0].mxu0
        %v3134 = vadd.f32 %v3060, %v3133
        %3135 = vdwg.mxu0
        %v3136 = vadd.f32 %v2658, %v3132
        %v3137 = vadd.f32 %v2659, %v3134
        %3138 = vrot.lane.b32.xlu0 %v232, 16
        %v3139 = vpop.permute.xlu0 %3138
        %3140 = vrot.lane.b32.xlu0 %v233, 16
        %v3141 = vpop.permute.xlu0 %3140
        %v3142 = vsel %vm200, %v3139, %v3141
        %v3143 = vsel %vm200, %v3141, %v3139
        %3144 = vrot.lane.b32.xlu0 %v232, 112
        %v3145 = vpop.permute.xlu0 %3144
        %3146 = vrot.lane.b32.xlu0 %v233, 112
        %v3147 = vpop.permute.xlu0 %3146
        %v3148 = vsel %vm244, %v3145, %v3147
        %v3149 = vsel %vm244, %v3147, %v3145
        %v3150 = vsel %vm249, %v3148, %v3143
        %v3151 = vsel %vm250, %v3149, %v3142
        %v3152 = vsel %vm255, %v3143, %v3148
        %v3153 = vsel %vm256, %v3142, %v3149
        %s3154 = scalar_lea.vmem %s1, 8
        %v3155 = vld [vmem:[%s3154] sm:$0xf]
        %v3157 = vsel %vm262, %v3155, 0
        %v3160 = vsel %vm266, %v3150, 0
        %v3163 = vsel %vm266, %v3151, 0
        %v3165 = vand.u32 %v3163, 4294901760
        %3166 = vmatprep.subr.mxu0 %v3165
        %v3167 = vand.u32 %v3160, 4294901760
        %3168 = vmatpush1.msra.mxu0 %v3167
        %3169 = vmatprep.subr.mxu0 0.0
        %3170 = vmatpush1.msra.mxu0 0.0
        %3171 = vmatprep.subr.mxu0 0.0
        %3172 = vmatpush1.msra.mxu0 0.0
        %3173 = vmatprep.subr.mxu0 0.0
        %3174 = vmatpush1.msra.mxu0 0.0
        %3175 = vmatprep.subr.mxu0 0.0
        %3176 = vmatpush1.msra.mxu0 0.0
        %3177 = vmatprep.subr.mxu0 0.0
        %3178 = vmatpush1.msra.mxu0 0.0
        %3179 = vmatprep.subr.mxu0 0.0
        %3180 = vmatpush1.msra.mxu0 0.0
        %3181 = vmatprep.subr.mxu0 0.0
        %3182 = vmatpush1.msra.mxu0 0.0
        %3183 = vmatprep.subr.mxu0 0.0
        %3184 = vmatpush1.msra.mxu0 0.0
        %3185 = vmatprep.subr.mxu0 0.0
        %3186 = vmatpush1.msra.mxu0 0.0
        %3187 = vmatprep.subr.mxu0 0.0
        %3188 = vmatpush1.msra.mxu0 0.0
        %3189 = vmatprep.subr.mxu0 0.0
        %3190 = vmatpush1.msra.mxu0 0.0
        %3191 = vmatprep.subr.mxu0 0.0
        %3192 = vmatpush1.msra.mxu0 0.0
        %3193 = vmatprep.subr.mxu0 0.0
        %3194 = vmatpush1.msra.mxu0 0.0
        %3195 = vmatprep.subr.mxu0 0.0
        %3196 = vmatpush1.msra.mxu0 0.0
        %3197 = vmatprep.subr.mxu0 0.0
        %3198 = vmatpush1.msra.mxu0 0.0
        %3199 = vmatprep.subr.mxu0 0.0
        %3200 = vmatpush1.msra.mxu0 0.0
        %3201 = vmatprep.subr.mxu0 0.0
        %3202 = vmatpush1.msra.mxu0 0.0
        %3203 = vmatprep.subr.mxu0 0.0
        %3204 = vmatpush1.msra.mxu0 0.0
        %3205 = vmatprep.subr.mxu0 0.0
        %3206 = vmatpush1.msra.mxu0 0.0
        %3207 = vmatprep.subr.mxu0 0.0
        %3208 = vmatpush1.msra.mxu0 0.0
        %3209 = vmatprep.subr.mxu0 0.0
        %3210 = vmatpush1.msra.mxu0 0.0
        %3211 = vmatprep.subr.mxu0 0.0
        %3212 = vmatpush1.msra.mxu0 0.0
        %3213 = vmatprep.subr.mxu0 0.0
        %3214 = vmatpush1.msra.mxu0 0.0
        %3215 = vmatprep.subr.mxu0 0.0
        %3216 = vmatpush1.msra.mxu0 0.0
        %3217 = vmatprep.subr.mxu0 0.0
        %3218 = vmatpush1.msra.mxu0 0.0
        %3219 = vmatprep.subr.mxu0 0.0
        %3220 = vmatpush1.msra.mxu0 0.0
        %3221 = vmatprep.subr.mxu0 0.0
        %3222 = vmatpush1.msra.mxu0 0.0
        %3223 = vmatprep.subr.mxu0 0.0
        %3224 = vmatpush1.msra.mxu0 0.0
        %3225 = vmatprep.subr.mxu0 0.0
        %3226 = vmatpush1.msra.mxu0 0.0
        %3227 = vmatprep.subr.mxu0 0.0
        %3228 = vmatpush1.msra.mxu0 0.0
        %3229 = vmatprep.subr.mxu0 0.0
        %3230 = vmatpush1.msra.mxu0 0.0
        %3231 = vmatprep.mubr.f32.mxu0 0.0
        %v3232 = vand.u32 %v3157, 4294901760
        %v3233 = vsub.f32 %v3157, %v3232
        %v3234 = vand.u32 %v3233, 4294901760
        %v3235 = vsub.f32 %v3233, %v3234
        %v3236 = vand.u32 %v3235, 4294901760
        %3237 = vmatmul.mubr.f32.gmra.mrb[0].mxu0 %v3236
        %v3238 = vpop.f32.mrb[0].mxu0
        %v3239 = vadd.f32 0.0, %v3238
        %v3240 = vpop.f32.mrb[0].mxu0
        %v3241 = vadd.f32 0.0, %v3240
        %3242 = vdwg.mxu0
        %v3243 = vand.u32 %v3163, 4294901760
        %v3244 = vsub.f32 %v3163, %v3243
        %v3245 = vand.u32 %v3244, 4294901760
        %v3246 = vsub.f32 %v3244, %v3245
        %v3247 = vand.u32 %v3246, 4294901760
        %3248 = vmatprep.subr.mxu0 %v3247
        %v3249 = vand.u32 %v3160, 4294901760
        %v3250 = vsub.f32 %v3160, %v3249
        %v3251 = vand.u32 %v3250, 4294901760
        %v3252 = vsub.f32 %v3250, %v3251
        %v3253 = vand.u32 %v3252, 4294901760
        %3254 = vmatpush1.msra.mxu0 %v3253
        %3255 = vmatprep.subr.mxu0 0.0
        %3256 = vmatpush1.msra.mxu0 0.0
        %3257 = vmatprep.subr.mxu0 0.0
        %3258 = vmatpush1.msra.mxu0 0.0
        %3259 = vmatprep.subr.mxu0 0.0
        %3260 = vmatpush1.msra.mxu0 0.0
        %3261 = vmatprep.subr.mxu0 0.0
        %3262 = vmatpush1.msra.mxu0 0.0
        %3263 = vmatprep.subr.mxu0 0.0
        %3264 = vmatpush1.msra.mxu0 0.0
        %3265 = vmatprep.subr.mxu0 0.0
        %3266 = vmatpush1.msra.mxu0 0.0
        %3267 = vmatprep.subr.mxu0 0.0
        %3268 = vmatpush1.msra.mxu0 0.0
        %3269 = vmatprep.subr.mxu0 0.0
        %3270 = vmatpush1.msra.mxu0 0.0
        %3271 = vmatprep.subr.mxu0 0.0
        %3272 = vmatpush1.msra.mxu0 0.0
        %3273 = vmatprep.subr.mxu0 0.0
        %3274 = vmatpush1.msra.mxu0 0.0
        %3275 = vmatprep.subr.mxu0 0.0
        %3276 = vmatpush1.msra.mxu0 0.0
        %3277 = vmatprep.subr.mxu0 0.0
        %3278 = vmatpush1.msra.mxu0 0.0
        %3279 = vmatprep.subr.mxu0 0.0
        %3280 = vmatpush1.msra.mxu0 0.0
        %3281 = vmatprep.subr.mxu0 0.0
        %3282 = vmatpush1.msra.mxu0 0.0
        %3283 = vmatprep.subr.mxu0 0.0
        %3284 = vmatpush1.msra.mxu0 0.0
        %3285 = vmatprep.subr.mxu0 0.0
        %3286 = vmatpush1.msra.mxu0 0.0
        %3287 = vmatprep.subr.mxu0 0.0
        %3288 = vmatpush1.msra.mxu0 0.0
        %3289 = vmatprep.subr.mxu0 0.0
        %3290 = vmatpush1.msra.mxu0 0.0
        %3291 = vmatprep.subr.mxu0 0.0
        %3292 = vmatpush1.msra.mxu0 0.0
        %3293 = vmatprep.subr.mxu0 0.0
        %3294 = vmatpush1.msra.mxu0 0.0
        %3295 = vmatprep.subr.mxu0 0.0
        %3296 = vmatpush1.msra.mxu0 0.0
        %3297 = vmatprep.subr.mxu0 0.0
        %3298 = vmatpush1.msra.mxu0 0.0
        %3299 = vmatprep.subr.mxu0 0.0
        %3300 = vmatpush1.msra.mxu0 0.0
        %3301 = vmatprep.subr.mxu0 0.0
        %3302 = vmatpush1.msra.mxu0 0.0
        %3303 = vmatprep.subr.mxu0 0.0
        %3304 = vmatpush1.msra.mxu0 0.0
        %3305 = vmatprep.subr.mxu0 0.0
        %3306 = vmatpush1.msra.mxu0 0.0
        %3307 = vmatprep.subr.mxu0 0.0
        %3308 = vmatpush1.msra.mxu0 0.0
        %3309 = vmatprep.subr.mxu0 0.0
        %3310 = vmatpush1.msra.mxu0 0.0
        %3311 = vmatprep.subr.mxu0 0.0
        %3312 = vmatpush1.msra.mxu0 0.0
        %3313 = vmatprep.subr.mxu0 0.0
        %3314 = vmatpush1.msra.mxu0 0.0
        %3315 = vmatprep.subr.mxu0 0.0
        %3316 = vmatpush1.msra.mxu0 0.0
        %3317 = vmatprep.mubr.f32.mxu0 0.0
        %v3318 = vand.u32 %v3157, 4294901760
        %3319 = vmatmul.mubr.f32.gmra.mrb[0].mxu0 %v3318
        %v3320 = vpop.f32.mrb[0].mxu0
        %v3321 = vadd.f32 %v3239, %v3320
        %v3322 = vpop.f32.mrb[0].mxu0
        %v3323 = vadd.f32 %v3241, %v3322
        %3324 = vdwg.mxu0
        %v3325 = vand.u32 %v3163, 4294901760
        %v3326 = vsub.f32 %v3163, %v3325
        %3327 = vmatprep.subr.mxu0 %v3326
        %v3328 = vand.u32 %v3160, 4294901760
        %v3329 = vsub.f32 %v3160, %v3328
        %3330 = vmatpush1.msra.mxu0 %v3329
        %3331 = vmatprep.subr.mxu0 0.0
        %3332 = vmatpush1.msra.mxu0 0.0
        %3333 = vmatprep.subr.mxu0 0.0
        %3334 = vmatpush1.msra.mxu0 0.0
        %3335 = vmatprep.subr.mxu0 0.0
        %3336 = vmatpush1.msra.mxu0 0.0
        %3337 = vmatprep.subr.mxu0 0.0
        %3338 = vmatpush1.msra.mxu0 0.0
        %3339 = vmatprep.subr.mxu0 0.0
        %3340 = vmatpush1.msra.mxu0 0.0
        %3341 = vmatprep.subr.mxu0 0.0
        %3342 = vmatpush1.msra.mxu0 0.0
        %3343 = vmatprep.subr.mxu0 0.0
        %3344 = vmatpush1.msra.mxu0 0.0
        %3345 = vmatprep.subr.mxu0 0.0
        %3346 = vmatpush1.msra.mxu0 0.0
        %3347 = vmatprep.subr.mxu0 0.0
        %3348 = vmatpush1.msra.mxu0 0.0
        %3349 = vmatprep.subr.mxu0 0.0
        %3350 = vmatpush1.msra.mxu0 0.0
        %3351 = vmatprep.subr.mxu0 0.0
        %3352 = vmatpush1.msra.mxu0 0.0
        %3353 = vmatprep.subr.mxu0 0.0
        %3354 = vmatpush1.msra.mxu0 0.0
        %3355 = vmatprep.subr.mxu0 0.0
        %3356 = vmatpush1.msra.mxu0 0.0
        %3357 = vmatprep.subr.mxu0 0.0
        %3358 = vmatpush1.msra.mxu0 0.0
        %3359 = vmatprep.subr.mxu0 0.0
        %3360 = vmatpush1.msra.mxu0 0.0
        %3361 = vmatprep.subr.mxu0 0.0
        %3362 = vmatpush1.msra.mxu0 0.0
        %3363 = vmatprep.subr.mxu0 0.0
        %3364 = vmatpush1.msra.mxu0 0.0
        %3365 = vmatprep.subr.mxu0 0.0
        %3366 = vmatpush1.msra.mxu0 0.0
        %3367 = vmatprep.subr.mxu0 0.0
        %3368 = vmatpush1.msra.mxu0 0.0
        %3369 = vmatprep.subr.mxu0 0.0
        %3370 = vmatpush1.msra.mxu0 0.0
        %3371 = vmatprep.subr.mxu0 0.0
        %3372 = vmatpush1.msra.mxu0 0.0
        %3373 = vmatprep.subr.mxu0 0.0
        %3374 = vmatpush1.msra.mxu0 0.0
        %3375 = vmatprep.subr.mxu0 0.0
        %3376 = vmatpush1.msra.mxu0 0.0
        %3377 = vmatprep.subr.mxu0 0.0
        %3378 = vmatpush1.msra.mxu0 0.0
        %3379 = vmatprep.subr.mxu0 0.0
        %3380 = vmatpush1.msra.mxu0 0.0
        %3381 = vmatprep.subr.mxu0 0.0
        %3382 = vmatpush1.msra.mxu0 0.0
        %3383 = vmatprep.subr.mxu0 0.0
        %3384 = vmatpush1.msra.mxu0 0.0
        %3385 = vmatprep.subr.mxu0 0.0
        %3386 = vmatpush1.msra.mxu0 0.0
        %3387 = vmatprep.subr.mxu0 0.0
        %3388 = vmatpush1.msra.mxu0 0.0
        %3389 = vmatprep.subr.mxu0 0.0
        %3390 = vmatpush1.msra.mxu0 0.0
        %3391 = vmatprep.subr.mxu0 0.0
        %3392 = vmatpush1.msra.mxu0 0.0
        %3393 = vmatprep.mubr.f32.mxu0 0.0
        %v3394 = vand.u32 %v3157, 4294901760
        %v3395 = vsub.f32 %v3157, %v3394
        %3396 = vmatmul.mubr.f32.gmra.mrb[0].mxu0 %v3395
        %v3397 = vpop.f32.mrb[0].mxu0
        %v3398 = vadd.f32 %v3321, %v3397
        %v3399 = vpop.f32.mrb[0].mxu0
        %v3400 = vadd.f32 %v3323, %v3399
        %3401 = vdwg.mxu0
        %v3402 = vand.u32 %v3163, 4294901760
        %3403 = vmatprep.subr.mxu0 %v3402
        %v3404 = vand.u32 %v3160, 4294901760
        %3405 = vmatpush1.msra.mxu0 %v3404
        %3406 = vmatprep.subr.mxu0 0.0
        %3407 = vmatpush1.msra.mxu0 0.0
        %3408 = vmatprep.subr.mxu0 0.0
        %3409 = vmatpush1.msra.mxu0 0.0
        %3410 = vmatprep.subr.mxu0 0.0
        %3411 = vmatpush1.msra.mxu0 0.0
        %3412 = vmatprep.subr.mxu0 0.0
        %3413 = vmatpush1.msra.mxu0 0.0
        %3414 = vmatprep.subr.mxu0 0.0
        %3415 = vmatpush1.msra.mxu0 0.0
        %3416 = vmatprep.subr.mxu0 0.0
        %3417 = vmatpush1.msra.mxu0 0.0
        %3418 = vmatprep.subr.mxu0 0.0
        %3419 = vmatpush1.msra.mxu0 0.0
        %3420 = vmatprep.subr.mxu0 0.0
        %3421 = vmatpush1.msra.mxu0 0.0
        %3422 = vmatprep.subr.mxu0 0.0
        %3423 = vmatpush1.msra.mxu0 0.0
        %3424 = vmatprep.subr.mxu0 0.0
        %3425 = vmatpush1.msra.mxu0 0.0
        %3426 = vmatprep.subr.mxu0 0.0
        %3427 = vmatpush1.msra.mxu0 0.0
        %3428 = vmatprep.subr.mxu0 0.0
        %3429 = vmatpush1.msra.mxu0 0.0
        %3430 = vmatprep.subr.mxu0 0.0
        %3431 = vmatpush1.msra.mxu0 0.0
        %3432 = vmatprep.subr.mxu0 0.0
        %3433 = vmatpush1.msra.mxu0 0.0
        %3434 = vmatprep.subr.mxu0 0.0
        %3435 = vmatpush1.msra.mxu0 0.0
        %3436 = vmatprep.subr.mxu0 0.0
        %3437 = vmatpush1.msra.mxu0 0.0
        %3438 = vmatprep.subr.mxu0 0.0
        %3439 = vmatpush1.msra.mxu0 0.0
        %3440 = vmatprep.subr.mxu0 0.0
        %3441 = vmatpush1.msra.mxu0 0.0
        %3442 = vmatprep.subr.mxu0 0.0
        %3443 = vmatpush1.msra.mxu0 0.0
        %3444 = vmatprep.subr.mxu0 0.0
        %3445 = vmatpush1.msra.mxu0 0.0
        %3446 = vmatprep.subr.mxu0 0.0
        %3447 = vmatpush1.msra.mxu0 0.0
        %3448 = vmatprep.subr.mxu0 0.0
        %3449 = vmatpush1.msra.mxu0 0.0
        %3450 = vmatprep.subr.mxu0 0.0
        %3451 = vmatpush1.msra.mxu0 0.0
        %3452 = vmatprep.subr.mxu0 0.0
        %3453 = vmatpush1.msra.mxu0 0.0
        %3454 = vmatprep.subr.mxu0 0.0
        %3455 = vmatpush1.msra.mxu0 0.0
        %3456 = vmatprep.subr.mxu0 0.0
        %3457 = vmatpush1.msra.mxu0 0.0
        %3458 = vmatprep.subr.mxu0 0.0
        %3459 = vmatpush1.msra.mxu0 0.0
        %3460 = vmatprep.subr.mxu0 0.0
        %3461 = vmatpush1.msra.mxu0 0.0
        %3462 = vmatprep.subr.mxu0 0.0
        %3463 = vmatpush1.msra.mxu0 0.0
        %3464 = vmatprep.subr.mxu0 0.0
        %3465 = vmatpush1.msra.mxu0 0.0
        %3466 = vmatprep.subr.mxu0 0.0
        %3467 = vmatpush1.msra.mxu0 0.0
        %3468 = vmatprep.mubr.f32.mxu0 0.0
        %v3469 = vand.u32 %v3157, 4294901760
        %v3470 = vsub.f32 %v3157, %v3469
        %v3471 = vand.u32 %v3470, 4294901760
        %3472 = vmatmul.mubr.f32.gmra.mrb[0].mxu0 %v3471
        %v3473 = vpop.f32.mrb[0].mxu0
        %v3474 = vadd.f32 %v3398, %v3473
        %v3475 = vpop.f32.mrb[0].mxu0
        %v3476 = vadd.f32 %v3400, %v3475
        %3477 = vdwg.mxu0
        %v3478 = vand.u32 %v3163, 4294901760
        %v3479 = vsub.f32 %v3163, %v3478
        %v3480 = vand.u32 %v3479, 4294901760
        %3481 = vmatprep.subr.mxu0 %v3480
        %v3482 = vand.u32 %v3160, 4294901760
        %v3483 = vsub.f32 %v3160, %v3482
        %v3484 = vand.u32 %v3483, 4294901760
        %3485 = vmatpush1.msra.mxu0 %v3484
        %3486 = vmatprep.subr.mxu0 0.0
        %3487 = vmatpush1.msra.mxu0 0.0
        %3488 = vmatprep.subr.mxu0 0.0
        %3489 = vmatpush1.msra.mxu0 0.0
        %3490 = vmatprep.subr.mxu0 0.0
        %3491 = vmatpush1.msra.mxu0 0.0
        %3492 = vmatprep.subr.mxu0 0.0
        %3493 = vmatpush1.msra.mxu0 0.0
        %3494 = vmatprep.subr.mxu0 0.0
        %3495 = vmatpush1.msra.mxu0 0.0
        %3496 = vmatprep.subr.mxu0 0.0
        %3497 = vmatpush1.msra.mxu0 0.0
        %3498 = vmatprep.subr.mxu0 0.0
        %3499 = vmatpush1.msra.mxu0 0.0
        %3500 = vmatprep.subr.mxu0 0.0
        %3501 = vmatpush1.msra.mxu0 0.0
        %3502 = vmatprep.subr.mxu0 0.0
        %3503 = vmatpush1.msra.mxu0 0.0
        %3504 = vmatprep.subr.mxu0 0.0
        %3505 = vmatpush1.msra.mxu0 0.0
        %3506 = vmatprep.subr.mxu0 0.0
        %3507 = vmatpush1.msra.mxu0 0.0
        %3508 = vmatprep.subr.mxu0 0.0
        %3509 = vmatpush1.msra.mxu0 0.0
        %3510 = vmatprep.subr.mxu0 0.0
        %3511 = vmatpush1.msra.mxu0 0.0
        %3512 = vmatprep.subr.mxu0 0.0
        %3513 = vmatpush1.msra.mxu0 0.0
        %3514 = vmatprep.subr.mxu0 0.0
        %3515 = vmatpush1.msra.mxu0 0.0
        %3516 = vmatprep.subr.mxu0 0.0
        %3517 = vmatpush1.msra.mxu0 0.0
        %3518 = vmatprep.subr.mxu0 0.0
        %3519 = vmatpush1.msra.mxu0 0.0
        %3520 = vmatprep.subr.mxu0 0.0
        %3521 = vmatpush1.msra.mxu0 0.0
        %3522 = vmatprep.subr.mxu0 0.0
        %3523 = vmatpush1.msra.mxu0 0.0
        %3524 = vmatprep.subr.mxu0 0.0
        %3525 = vmatpush1.msra.mxu0 0.0
        %3526 = vmatprep.subr.mxu0 0.0
        %3527 = vmatpush1.msra.mxu0 0.0
        %3528 = vmatprep.subr.mxu0 0.0
        %3529 = vmatpush1.msra.mxu0 0.0
        %3530 = vmatprep.subr.mxu0 0.0
        %3531 = vmatpush1.msra.mxu0 0.0
        %3532 = vmatprep.subr.mxu0 0.0
        %3533 = vmatpush1.msra.mxu0 0.0
        %3534 = vmatprep.subr.mxu0 0.0
        %3535 = vmatpush1.msra.mxu0 0.0
        %3536 = vmatprep.subr.mxu0 0.0
        %3537 = vmatpush1.msra.mxu0 0.0
        %3538 = vmatprep.subr.mxu0 0.0
        %3539 = vmatpush1.msra.mxu0 0.0
        %3540 = vmatprep.subr.mxu0 0.0
        %3541 = vmatpush1.msra.mxu0 0.0
        %3542 = vmatprep.subr.mxu0 0.0
        %3543 = vmatpush1.msra.mxu0 0.0
        %3544 = vmatprep.subr.mxu0 0.0
        %3545 = vmatpush1.msra.mxu0 0.0
        %3546 = vmatprep.subr.mxu0 0.0
        %3547 = vmatpush1.msra.mxu0 0.0
        %3548 = vmatprep.mubr.f32.mxu0 0.0
        %v3549 = vand.u32 %v3157, 4294901760
        %3550 = vmatmul.mubr.f32.gmra.mrb[0].mxu0 %v3549
        %v3551 = vpop.f32.mrb[0].mxu0
        %v3552 = vadd.f32 %v3474, %v3551
        %v3553 = vpop.f32.mrb[0].mxu0
        %v3554 = vadd.f32 %v3476, %v3553
        %3555 = vdwg.mxu0
        %v3556 = vand.u32 %v3163, 4294901760
        %3557 = vmatprep.subr.mxu0 %v3556
        %v3558 = vand.u32 %v3160, 4294901760
        %3559 = vmatpush1.msra.mxu0 %v3558
        %3560 = vmatprep.subr.mxu0 0.0
        %3561 = vmatpush1.msra.mxu0 0.0
        %3562 = vmatprep.subr.mxu0 0.0
        %3563 = vmatpush1.msra.mxu0 0.0
        %3564 = vmatprep.subr.mxu0 0.0
        %3565 = vmatpush1.msra.mxu0 0.0
        %3566 = vmatprep.subr.mxu0 0.0
        %3567 = vmatpush1.msra.mxu0 0.0
        %3568 = vmatprep.subr.mxu0 0.0
        %3569 = vmatpush1.msra.mxu0 0.0
        %3570 = vmatprep.subr.mxu0 0.0
        %3571 = vmatpush1.msra.mxu0 0.0
        %3572 = vmatprep.subr.mxu0 0.0
        %3573 = vmatpush1.msra.mxu0 0.0
        %3574 = vmatprep.subr.mxu0 0.0
        %3575 = vmatpush1.msra.mxu0 0.0
        %3576 = vmatprep.subr.mxu0 0.0
        %3577 = vmatpush1.msra.mxu0 0.0
        %3578 = vmatprep.subr.mxu0 0.0
        %3579 = vmatpush1.msra.mxu0 0.0
        %3580 = vmatprep.subr.mxu0 0.0
        %3581 = vmatpush1.msra.mxu0 0.0
        %3582 = vmatprep.subr.mxu0 0.0
        %3583 = vmatpush1.msra.mxu0 0.0
        %3584 = vmatprep.subr.mxu0 0.0
        %3585 = vmatpush1.msra.mxu0 0.0
        %3586 = vmatprep.subr.mxu0 0.0
        %3587 = vmatpush1.msra.mxu0 0.0
        %3588 = vmatprep.subr.mxu0 0.0
        %3589 = vmatpush1.msra.mxu0 0.0
        %3590 = vmatprep.subr.mxu0 0.0
        %3591 = vmatpush1.msra.mxu0 0.0
        %3592 = vmatprep.subr.mxu0 0.0
        %3593 = vmatpush1.msra.mxu0 0.0
        %3594 = vmatprep.subr.mxu0 0.0
        %3595 = vmatpush1.msra.mxu0 0.0
        %3596 = vmatprep.subr.mxu0 0.0
        %3597 = vmatpush1.msra.mxu0 0.0
        %3598 = vmatprep.subr.mxu0 0.0
        %3599 = vmatpush1.msra.mxu0 0.0
        %3600 = vmatprep.subr.mxu0 0.0
        %3601 = vmatpush1.msra.mxu0 0.0
        %3602 = vmatprep.subr.mxu0 0.0
        %3603 = vmatpush1.msra.mxu0 0.0
        %3604 = vmatprep.subr.mxu0 0.0
        %3605 = vmatpush1.msra.mxu0 0.0
        %3606 = vmatprep.subr.mxu0 0.0
        %3607 = vmatpush1.msra.mxu0 0.0
        %3608 = vmatprep.subr.mxu0 0.0
        %3609 = vmatpush1.msra.mxu0 0.0
        %3610 = vmatprep.subr.mxu0 0.0
        %3611 = vmatpush1.msra.mxu0 0.0
        %3612 = vmatprep.subr.mxu0 0.0
        %3613 = vmatpush1.msra.mxu0 0.0
        %3614 = vmatprep.subr.mxu0 0.0
        %3615 = vmatpush1.msra.mxu0 0.0
        %3616 = vmatprep.subr.mxu0 0.0
        %3617 = vmatpush1.msra.mxu0 0.0
        %3618 = vmatprep.subr.mxu0 0.0
        %3619 = vmatpush1.msra.mxu0 0.0
        %3620 = vmatprep.subr.mxu0 0.0
        %3621 = vmatpush1.msra.mxu0 0.0
        %3622 = vmatprep.mubr.f32.mxu0 0.0
        %v3623 = vand.u32 %v3157, 4294901760
        %3624 = vmatmul.mubr.f32.gmra.mrb[0].mxu0 %v3623
        %v3625 = vpop.f32.mrb[0].mxu0
        %v3626 = vadd.f32 %v3552, %v3625
        %v3627 = vpop.f32.mrb[0].mxu0
        %v3628 = vadd.f32 %v3554, %v3627
        %3629 = vdwg.mxu0
        %v3630 = vadd.f32 %v3136, %v3626
        %v3631 = vadd.f32 %v3137, %v3628
        %s3632 = scalar_lea.vmem %s1, 20
        %v3633 = vld [vmem:[%s3632] sm:$0xf]
        %v3635 = vsel %vm262, %v3633, 0
        %v3638 = vsel %vm266, %v232, 0
        %v3641 = vsel %vm266, %v233, 0
        %v3643 = vand.u32 %v3641, 4294901760
        %3644 = vmatprep.subr.mxu0 %v3643
        %v3645 = vand.u32 %v3638, 4294901760
        %3646 = vmatpush1.msra.mxu0 %v3645
        %3647 = vmatprep.subr.mxu0 0.0
        %3648 = vmatpush1.msra.mxu0 0.0
        %3649 = vmatprep.subr.mxu0 0.0
        %3650 = vmatpush1.msra.mxu0 0.0
        %3651 = vmatprep.subr.mxu0 0.0
        %3652 = vmatpush1.msra.mxu0 0.0
        %3653 = vmatprep.subr.mxu0 0.0
        %3654 = vmatpush1.msra.mxu0 0.0
        %3655 = vmatprep.subr.mxu0 0.0
        %3656 = vmatpush1.msra.mxu0 0.0
        %3657 = vmatprep.subr.mxu0 0.0
        %3658 = vmatpush1.msra.mxu0 0.0
        %3659 = vmatprep.subr.mxu0 0.0
        %3660 = vmatpush1.msra.mxu0 0.0
        %3661 = vmatprep.subr.mxu0 0.0
        %3662 = vmatpush1.msra.mxu0 0.0
        %3663 = vmatprep.subr.mxu0 0.0
        %3664 = vmatpush1.msra.mxu0 0.0
        %3665 = vmatprep.subr.mxu0 0.0
        %3666 = vmatpush1.msra.mxu0 0.0
        %3667 = vmatprep.subr.mxu0 0.0
        %3668 = vmatpush1.msra.mxu0 0.0
        %3669 = vmatprep.subr.mxu0 0.0
        %3670 = vmatpush1.msra.mxu0 0.0
        %3671 = vmatprep.subr.mxu0 0.0
        %3672 = vmatpush1.msra.mxu0 0.0
        %3673 = vmatprep.subr.mxu0 0.0
        %3674 = vmatpush1.msra.mxu0 0.0
        %3675 = vmatprep.subr.mxu0 0.0
        %3676 = vmatpush1.msra.mxu0 0.0
        %3677 = vmatprep.subr.mxu0 0.0
        %3678 = vmatpush1.msra.mxu0 0.0
        %3679 = vmatprep.subr.mxu0 0.0
        %3680 = vmatpush1.msra.mxu0 0.0
        %3681 = vmatprep.subr.mxu0 0.0
        %3682 = vmatpush1.msra.mxu0 0.0
        %3683 = vmatprep.subr.mxu0 0.0
        %3684 = vmatpush1.msra.mxu0 0.0
        %3685 = vmatprep.subr.mxu0 0.0
        %3686 = vmatpush1.msra.mxu0 0.0
        %3687 = vmatprep.subr.mxu0 0.0
        %3688 = vmatpush1.msra.mxu0 0.0
        %3689 = vmatprep.subr.mxu0 0.0
        %3690 = vmatpush1.msra.mxu0 0.0
        %3691 = vmatprep.subr.mxu0 0.0
        %3692 = vmatpush1.msra.mxu0 0.0
        %3693 = vmatprep.subr.mxu0 0.0
        %3694 = vmatpush1.msra.mxu0 0.0
        %3695 = vmatprep.subr.mxu0 0.0
        %3696 = vmatpush1.msra.mxu0 0.0
        %3697 = vmatprep.subr.mxu0 0.0
        %3698 = vmatpush1.msra.mxu0 0.0
        %3699 = vmatprep.subr.mxu0 0.0
        %3700 = vmatpush1.msra.mxu0 0.0
        %3701 = vmatprep.subr.mxu0 0.0
        %3702 = vmatpush1.msra.mxu0 0.0
        %3703 = vmatprep.subr.mxu0 0.0
        %3704 = vmatpush1.msra.mxu0 0.0
        %3705 = vmatprep.subr.mxu0 0.0
        %3706 = vmatpush1.msra.mxu0 0.0
        %3707 = vmatprep.subr.mxu0 0.0
        %3708 = vmatpush1.msra.mxu0 0.0
        %3709 = vmatprep.mubr.f32.mxu0 0.0
        %v3710 = vand.u32 %v3635, 4294901760
        %v3711 = vsub.f32 %v3635, %v3710
        %v3712 = vand.u32 %v3711, 4294901760
        %v3713 = vsub.f32 %v3711, %v3712
        %v3714 = vand.u32 %v3713, 4294901760
        %3715 = vmatmul.mubr.f32.gmra.mrb[0].mxu0 %v3714
        %v3716 = vpop.f32.mrb[0].mxu0
        %v3717 = vadd.f32 0.0, %v3716
        %v3718 = vpop.f32.mrb[0].mxu0
        %v3719 = vadd.f32 0.0, %v3718
        %3720 = vdwg.mxu0
        %v3721 = vand.u32 %v3641, 4294901760
        %v3722 = vsub.f32 %v3641, %v3721
        %v3723 = vand.u32 %v3722, 4294901760
        %v3724 = vsub.f32 %v3722, %v3723
        %v3725 = vand.u32 %v3724, 4294901760
        %3726 = vmatprep.subr.mxu0 %v3725
        %v3727 = vand.u32 %v3638, 4294901760
        %v3728 = vsub.f32 %v3638, %v3727
        %v3729 = vand.u32 %v3728, 4294901760
        %v3730 = vsub.f32 %v3728, %v3729
        %v3731 = vand.u32 %v3730, 4294901760
        %3732 = vmatpush1.msra.mxu0 %v3731
        %3733 = vmatprep.subr.mxu0 0.0
        %3734 = vmatpush1.msra.mxu0 0.0
        %3735 = vmatprep.subr.mxu0 0.0
        %3736 = vmatpush1.msra.mxu0 0.0
        %3737 = vmatprep.subr.mxu0 0.0
        %3738 = vmatpush1.msra.mxu0 0.0
        %3739 = vmatprep.subr.mxu0 0.0
        %3740 = vmatpush1.msra.mxu0 0.0
        %3741 = vmatprep.subr.mxu0 0.0
        %3742 = vmatpush1.msra.mxu0 0.0
        %3743 = vmatprep.subr.mxu0 0.0
        %3744 = vmatpush1.msra.mxu0 0.0
        %3745 = vmatprep.subr.mxu0 0.0
        %3746 = vmatpush1.msra.mxu0 0.0
        %3747 = vmatprep.subr.mxu0 0.0
        %3748 = vmatpush1.msra.mxu0 0.0
        %3749 = vmatprep.subr.mxu0 0.0
        %3750 = vmatpush1.msra.mxu0 0.0
        %3751 = vmatprep.subr.mxu0 0.0
        %3752 = vmatpush1.msra.mxu0 0.0
        %3753 = vmatprep.subr.mxu0 0.0
        %3754 = vmatpush1.msra.mxu0 0.0
        %3755 = vmatprep.subr.mxu0 0.0
        %3756 = vmatpush1.msra.mxu0 0.0
        %3757 = vmatprep.subr.mxu0 0.0
        %3758 = vmatpush1.msra.mxu0 0.0
        %3759 = vmatprep.subr.mxu0 0.0
        %3760 = vmatpush1.msra.mxu0 0.0
        %3761 = vmatprep.subr.mxu0 0.0
        %3762 = vmatpush1.msra.mxu0 0.0
        %3763 = vmatprep.subr.mxu0 0.0
        %3764 = vmatpush1.msra.mxu0 0.0
        %3765 = vmatprep.subr.mxu0 0.0
        %3766 = vmatpush1.msra.mxu0 0.0
        %3767 = vmatprep.subr.mxu0 0.0
        %3768 = vmatpush1.msra.mxu0 0.0
        %3769 = vmatprep.subr.mxu0 0.0
        %3770 = vmatpush1.msra.mxu0 0.0
        %3771 = vmatprep.subr.mxu0 0.0
        %3772 = vmatpush1.msra.mxu0 0.0
        %3773 = vmatprep.subr.mxu0 0.0
        %3774 = vmatpush1.msra.mxu0 0.0
        %3775 = vmatprep.subr.mxu0 0.0
        %3776 = vmatpush1.msra.mxu0 0.0
        %3777 = vmatprep.subr.mxu0 0.0
        %3778 = vmatpush1.msra.mxu0 0.0
        %3779 = vmatprep.subr.mxu0 0.0
        %3780 = vmatpush1.msra.mxu0 0.0
        %3781 = vmatprep.subr.mxu0 0.0
        %3782 = vmatpush1.msra.mxu0 0.0
        %3783 = vmatprep.subr.mxu0 0.0
        %3784 = vmatpush1.msra.mxu0 0.0
        %3785 = vmatprep.subr.mxu0 0.0
        %3786 = vmatpush1.msra.mxu0 0.0
        %3787 = vmatprep.subr.mxu0 0.0
        %3788 = vmatpush1.msra.mxu0 0.0
        %3789 = vmatprep.subr.mxu0 0.0
        %3790 = vmatpush1.msra.mxu0 0.0
        %3791 = vmatprep.subr.mxu0 0.0
        %3792 = vmatpush1.msra.mxu0 0.0
        %3793 = vmatprep.subr.mxu0 0.0
        %3794 = vmatpush1.msra.mxu0 0.0
        %3795 = vmatprep.mubr.f32.mxu0 0.0
        %v3796 = vand.u32 %v3635, 4294901760
        %3797 = vmatmul.mubr.f32.gmra.mrb[0].mxu0 %v3796
        %v3798 = vpop.f32.mrb[0].mxu0
        %v3799 = vadd.f32 %v3717, %v3798
        %v3800 = vpop.f32.mrb[0].mxu0
        %v3801 = vadd.f32 %v3719, %v3800
        %3802 = vdwg.mxu0
        %v3803 = vand.u32 %v3641, 4294901760
        %v3804 = vsub.f32 %v3641, %v3803
        %3805 = vmatprep.subr.mxu0 %v3804
        %v3806 = vand.u32 %v3638, 4294901760
        %v3807 = vsub.f32 %v3638, %v3806
        %3808 = vmatpush1.msra.mxu0 %v3807
        %3809 = vmatprep.subr.mxu0 0.0
        %3810 = vmatpush1.msra.mxu0 0.0
        %3811 = vmatprep.subr.mxu0 0.0
        %3812 = vmatpush1.msra.mxu0 0.0
        %3813 = vmatprep.subr.mxu0 0.0
        %3814 = vmatpush1.msra.mxu0 0.0
        %3815 = vmatprep.subr.mxu0 0.0
        %3816 = vmatpush1.msra.mxu0 0.0
        %3817 = vmatprep.subr.mxu0 0.0
        %3818 = vmatpush1.msra.mxu0 0.0
        %3819 = vmatprep.subr.mxu0 0.0
        %3820 = vmatpush1.msra.mxu0 0.0
        %3821 = vmatprep.subr.mxu0 0.0
        %3822 = vmatpush1.msra.mxu0 0.0
        %3823 = vmatprep.subr.mxu0 0.0
        %3824 = vmatpush1.msra.mxu0 0.0
        %3825 = vmatprep.subr.mxu0 0.0
        %3826 = vmatpush1.msra.mxu0 0.0
        %3827 = vmatprep.subr.mxu0 0.0
        %3828 = vmatpush1.msra.mxu0 0.0
        %3829 = vmatprep.subr.mxu0 0.0
        %3830 = vmatpush1.msra.mxu0 0.0
        %3831 = vmatprep.subr.mxu0 0.0
        %3832 = vmatpush1.msra.mxu0 0.0
        %3833 = vmatprep.subr.mxu0 0.0
        %3834 = vmatpush1.msra.mxu0 0.0
        %3835 = vmatprep.subr.mxu0 0.0
        %3836 = vmatpush1.msra.mxu0 0.0
        %3837 = vmatprep.subr.mxu0 0.0
        %3838 = vmatpush1.msra.mxu0 0.0
        %3839 = vmatprep.subr.mxu0 0.0
        %3840 = vmatpush1.msra.mxu0 0.0
        %3841 = vmatprep.subr.mxu0 0.0
        %3842 = vmatpush1.msra.mxu0 0.0
        %3843 = vmatprep.subr.mxu0 0.0
        %3844 = vmatpush1.msra.mxu0 0.0
        %3845 = vmatprep.subr.mxu0 0.0
        %3846 = vmatpush1.msra.mxu0 0.0
        %3847 = vmatprep.subr.mxu0 0.0
        %3848 = vmatpush1.msra.mxu0 0.0
        %3849 = vmatprep.subr.mxu0 0.0
        %3850 = vmatpush1.msra.mxu0 0.0
        %3851 = vmatprep.subr.mxu0 0.0
        %3852 = vmatpush1.msra.mxu0 0.0
        %3853 = vmatprep.subr.mxu0 0.0
        %3854 = vmatpush1.msra.mxu0 0.0
        %3855 = vmatprep.subr.mxu0 0.0
        %3856 = vmatpush1.msra.mxu0 0.0
        %3857 = vmatprep.subr.mxu0 0.0
        %3858 = vmatpush1.msra.mxu0 0.0
        %3859 = vmatprep.subr.mxu0 0.0
        %3860 = vmatpush1.msra.mxu0 0.0
        %3861 = vmatprep.subr.mxu0 0.0
        %3862 = vmatpush1.msra.mxu0 0.0
        %3863 = vmatprep.subr.mxu0 0.0
        %3864 = vmatpush1.msra.mxu0 0.0
        %3865 = vmatprep.subr.mxu0 0.0
        %3866 = vmatpush1.msra.mxu0 0.0
        %3867 = vmatprep.subr.mxu0 0.0
        %3868 = vmatpush1.msra.mxu0 0.0
        %3869 = vmatprep.subr.mxu0 0.0
        %3870 = vmatpush1.msra.mxu0 0.0
        %3871 = vmatprep.mubr.f32.mxu0 0.0
        %v3872 = vand.u32 %v3635, 4294901760
        %v3873 = vsub.f32 %v3635, %v3872
        %3874 = vmatmul.mubr.f32.gmra.mrb[0].mxu0 %v3873
        %v3875 = vpop.f32.mrb[0].mxu0
        %v3876 = vadd.f32 %v3799, %v3875
        %v3877 = vpop.f32.mrb[0].mxu0
        %v3878 = vadd.f32 %v3801, %v3877
        %3879 = vdwg.mxu0
        %v3880 = vand.u32 %v3641, 4294901760
        %3881 = vmatprep.subr.mxu0 %v3880
        %v3882 = vand.u32 %v3638, 4294901760
        %3883 = vmatpush1.msra.mxu0 %v3882
        %3884 = vmatprep.subr.mxu0 0.0
        %3885 = vmatpush1.msra.mxu0 0.0
        %3886 = vmatprep.subr.mxu0 0.0
        %3887 = vmatpush1.msra.mxu0 0.0
        %3888 = vmatprep.subr.mxu0 0.0
        %3889 = vmatpush1.msra.mxu0 0.0
        %3890 = vmatprep.subr.mxu0 0.0
        %3891 = vmatpush1.msra.mxu0 0.0
        %3892 = vmatprep.subr.mxu0 0.0
        %3893 = vmatpush1.msra.mxu0 0.0
        %3894 = vmatprep.subr.mxu0 0.0
        %3895 = vmatpush1.msra.mxu0 0.0
        %3896 = vmatprep.subr.mxu0 0.0
        %3897 = vmatpush1.msra.mxu0 0.0
        %3898 = vmatprep.subr.mxu0 0.0
        %3899 = vmatpush1.msra.mxu0 0.0
        %3900 = vmatprep.subr.mxu0 0.0
        %3901 = vmatpush1.msra.mxu0 0.0
        %3902 = vmatprep.subr.mxu0 0.0
        %3903 = vmatpush1.msra.mxu0 0.0
        %3904 = vmatprep.subr.mxu0 0.0
        %3905 = vmatpush1.msra.mxu0 0.0
        %3906 = vmatprep.subr.mxu0 0.0
        %3907 = vmatpush1.msra.mxu0 0.0
        %3908 = vmatprep.subr.mxu0 0.0
        %3909 = vmatpush1.msra.mxu0 0.0
        %3910 = vmatprep.subr.mxu0 0.0
        %3911 = vmatpush1.msra.mxu0 0.0
        %3912 = vmatprep.subr.mxu0 0.0
        %3913 = vmatpush1.msra.mxu0 0.0
        %3914 = vmatprep.subr.mxu0 0.0
        %3915 = vmatpush1.msra.mxu0 0.0
        %3916 = vmatprep.subr.mxu0 0.0
        %3917 = vmatpush1.msra.mxu0 0.0
        %3918 = vmatprep.subr.mxu0 0.0
        %3919 = vmatpush1.msra.mxu0 0.0
        %3920 = vmatprep.subr.mxu0 0.0
        %3921 = vmatpush1.msra.mxu0 0.0
        %3922 = vmatprep.subr.mxu0 0.0
        %3923 = vmatpush1.msra.mxu0 0.0
        %3924 = vmatprep.subr.mxu0 0.0
        %3925 = vmatpush1.msra.mxu0 0.0
        %3926 = vmatprep.subr.mxu0 0.0
        %3927 = vmatpush1.msra.mxu0 0.0
        %3928 = vmatprep.subr.mxu0 0.0
        %3929 = vmatpush1.msra.mxu0 0.0
        %3930 = vmatprep.subr.mxu0 0.0
        %3931 = vmatpush1.msra.mxu0 0.0
        %3932 = vmatprep.subr.mxu0 0.0
        %3933 = vmatpush1.msra.mxu0 0.0
        %3934 = vmatprep.subr.mxu0 0.0
        %3935 = vmatpush1.msra.mxu0 0.0
        %3936 = vmatprep.subr.mxu0 0.0
        %3937 = vmatpush1.msra.mxu0 0.0
        %3938 = vmatprep.subr.mxu0 0.0
        %3939 = vmatpush1.msra.mxu0 0.0
        %3940 = vmatprep.subr.mxu0 0.0
        %3941 = vmatpush1.msra.mxu0 0.0
        %3942 = vmatprep.subr.mxu0 0.0
        %3943 = vmatpush1.msra.mxu0 0.0
        %3944 = vmatprep.subr.mxu0 0.0
        %3945 = vmatpush1.msra.mxu0 0.0
        %3946 = vmatprep.mubr.f32.mxu0 0.0
        %v3947 = vand.u32 %v3635, 4294901760
        %v3948 = vsub.f32 %v3635, %v3947
        %v3949 = vand.u32 %v3948, 4294901760
        %3950 = vmatmul.mubr.f32.gmra.mrb[0].mxu0 %v3949
        %v3951 = vpop.f32.mrb[0].mxu0
        %v3952 = vadd.f32 %v3876, %v3951
        %v3953 = vpop.f32.mrb[0].mxu0
        %v3954 = vadd.f32 %v3878, %v3953
        %3955 = vdwg.mxu0
        %v3956 = vand.u32 %v3641, 4294901760
        %v3957 = vsub.f32 %v3641, %v3956
        %v3958 = vand.u32 %v3957, 4294901760
        %3959 = vmatprep.subr.mxu0 %v3958
        %v3960 = vand.u32 %v3638, 4294901760
        %v3961 = vsub.f32 %v3638, %v3960
        %v3962 = vand.u32 %v3961, 4294901760
        %3963 = vmatpush1.msra.mxu0 %v3962
        %3964 = vmatprep.subr.mxu0 0.0
        %3965 = vmatpush1.msra.mxu0 0.0
        %3966 = vmatprep.subr.mxu0 0.0
        %3967 = vmatpush1.msra.mxu0 0.0
        %3968 = vmatprep.subr.mxu0 0.0
        %3969 = vmatpush1.msra.mxu0 0.0
        %3970 = vmatprep.subr.mxu0 0.0
        %3971 = vmatpush1.msra.mxu0 0.0
        %3972 = vmatprep.subr.mxu0 0.0
        %3973 = vmatpush1.msra.mxu0 0.0
        %3974 = vmatprep.subr.mxu0 0.0
        %3975 = vmatpush1.msra.mxu0 0.0
        %3976 = vmatprep.subr.mxu0 0.0
        %3977 = vmatpush1.msra.mxu0 0.0
        %3978 = vmatprep.subr.mxu0 0.0
        %3979 = vmatpush1.msra.mxu0 0.0
        %3980 = vmatprep.subr.mxu0 0.0
        %3981 = vmatpush1.msra.mxu0 0.0
        %3982 = vmatprep.subr.mxu0 0.0
        %3983 = vmatpush1.msra.mxu0 0.0
        %3984 = vmatprep.subr.mxu0 0.0
        %3985 = vmatpush1.msra.mxu0 0.0
        %3986 = vmatprep.subr.mxu0 0.0
        %3987 = vmatpush1.msra.mxu0 0.0
        %3988 = vmatprep.subr.mxu0 0.0
        %3989 = vmatpush1.msra.mxu0 0.0
        %3990 = vmatprep.subr.mxu0 0.0
        %3991 = vmatpush1.msra.mxu0 0.0
        %3992 = vmatprep.subr.mxu0 0.0
        %3993 = vmatpush1.msra.mxu0 0.0
        %3994 = vmatprep.subr.mxu0 0.0
        %3995 = vmatpush1.msra.mxu0 0.0
        %3996 = vmatprep.subr.mxu0 0.0
        %3997 = vmatpush1.msra.mxu0 0.0
        %3998 = vmatprep.subr.mxu0 0.0
        %3999 = vmatpush1.msra.mxu0 0.0
        %4000 = vmatprep.subr.mxu0 0.0
        %4001 = vmatpush1.msra.mxu0 0.0
        %4002 = vmatprep.subr.mxu0 0.0
        %4003 = vmatpush1.msra.mxu0 0.0
        %4004 = vmatprep.subr.mxu0 0.0
        %4005 = vmatpush1.msra.mxu0 0.0
        %4006 = vmatprep.subr.mxu0 0.0
        %4007 = vmatpush1.msra.mxu0 0.0
        %4008 = vmatprep.subr.mxu0 0.0
        %4009 = vmatpush1.msra.mxu0 0.0
        %4010 = vmatprep.subr.mxu0 0.0
        %4011 = vmatpush1.msra.mxu0 0.0
        %4012 = vmatprep.subr.mxu0 0.0
        %4013 = vmatpush1.msra.mxu0 0.0
        %4014 = vmatprep.subr.mxu0 0.0
        %4015 = vmatpush1.msra.mxu0 0.0
        %4016 = vmatprep.subr.mxu0 0.0
        %4017 = vmatpush1.msra.mxu0 0.0
        %4018 = vmatprep.subr.mxu0 0.0
        %4019 = vmatpush1.msra.mxu0 0.0
        %4020 = vmatprep.subr.mxu0 0.0
        %4021 = vmatpush1.msra.mxu0 0.0
        %4022 = vmatprep.subr.mxu0 0.0
        %4023 = vmatpush1.msra.mxu0 0.0
        %4024 = vmatprep.subr.mxu0 0.0
        %4025 = vmatpush1.msra.mxu0 0.0
        %4026 = vmatprep.mubr.f32.mxu0 0.0
        %v4027 = vand.u32 %v3635, 4294901760
        %4028 = vmatmul.mubr.f32.gmra.mrb[0].mxu0 %v4027
        %v4029 = vpop.f32.mrb[0].mxu0
        %v4030 = vadd.f32 %v3952, %v4029
        %v4031 = vpop.f32.mrb[0].mxu0
        %v4032 = vadd.f32 %v3954, %v4031
        %4033 = vdwg.mxu0
        %v4034 = vand.u32 %v3641, 4294901760
        %4035 = vmatprep.subr.mxu0 %v4034
        %v4036 = vand.u32 %v3638, 4294901760
        %4037 = vmatpush1.msra.mxu0 %v4036
        %4038 = vmatprep.subr.mxu0 0.0
        %4039 = vmatpush1.msra.mxu0 0.0
        %4040 = vmatprep.subr.mxu0 0.0
        %4041 = vmatpush1.msra.mxu0 0.0
        %4042 = vmatprep.subr.mxu0 0.0
        %4043 = vmatpush1.msra.mxu0 0.0
        %4044 = vmatprep.subr.mxu0 0.0
        %4045 = vmatpush1.msra.mxu0 0.0
        %4046 = vmatprep.subr.mxu0 0.0
        %4047 = vmatpush1.msra.mxu0 0.0
        %4048 = vmatprep.subr.mxu0 0.0
        %4049 = vmatpush1.msra.mxu0 0.0
        %4050 = vmatprep.subr.mxu0 0.0
        %4051 = vmatpush1.msra.mxu0 0.0
        %4052 = vmatprep.subr.mxu0 0.0
        %4053 = vmatpush1.msra.mxu0 0.0
        %4054 = vmatprep.subr.mxu0 0.0
        %4055 = vmatpush1.msra.mxu0 0.0
        %4056 = vmatprep.subr.mxu0 0.0
        %4057 = vmatpush1.msra.mxu0 0.0
        %4058 = vmatprep.subr.mxu0 0.0
        %4059 = vmatpush1.msra.mxu0 0.0
        %4060 = vmatprep.subr.mxu0 0.0
        %4061 = vmatpush1.msra.mxu0 0.0
        %4062 = vmatprep.subr.mxu0 0.0
        %4063 = vmatpush1.msra.mxu0 0.0
        %4064 = vmatprep.subr.mxu0 0.0
        %4065 = vmatpush1.msra.mxu0 0.0
        %4066 = vmatprep.subr.mxu0 0.0
        %4067 = vmatpush1.msra.mxu0 0.0
        %4068 = vmatprep.subr.mxu0 0.0
        %4069 = vmatpush1.msra.mxu0 0.0
        %4070 = vmatprep.subr.mxu0 0.0
        %4071 = vmatpush1.msra.mxu0 0.0
        %4072 = vmatprep.subr.mxu0 0.0
        %4073 = vmatpush1.msra.mxu0 0.0
        %4074 = vmatprep.subr.mxu0 0.0
        %4075 = vmatpush1.msra.mxu0 0.0
        %4076 = vmatprep.subr.mxu0 0.0
        %4077 = vmatpush1.msra.mxu0 0.0
        %4078 = vmatprep.subr.mxu0 0.0
        %4079 = vmatpush1.msra.mxu0 0.0
        %4080 = vmatprep.subr.mxu0 0.0
        %4081 = vmatpush1.msra.mxu0 0.0
        %4082 = vmatprep.subr.mxu0 0.0
        %4083 = vmatpush1.msra.mxu0 0.0
        %4084 = vmatprep.subr.mxu0 0.0
        %4085 = vmatpush1.msra.mxu0 0.0
        %4086 = vmatprep.subr.mxu0 0.0
        %4087 = vmatpush1.msra.mxu0 0.0
        %4088 = vmatprep.subr.mxu0 0.0
        %4089 = vmatpush1.msra.mxu0 0.0
        %4090 = vmatprep.subr.mxu0 0.0
        %4091 = vmatpush1.msra.mxu0 0.0
        %4092 = vmatprep.subr.mxu0 0.0
        %4093 = vmatpush1.msra.mxu0 0.0
        %4094 = vmatprep.subr.mxu0 0.0
        %4095 = vmatpush1.msra.mxu0 0.0
        %4096 = vmatprep.subr.mxu0 0.0
        %4097 = vmatpush1.msra.mxu0 0.0
        %4098 = vmatprep.subr.mxu0 0.0
        %4099 = vmatpush1.msra.mxu0 0.0
        %4100 = vmatprep.mubr.f32.mxu0 0.0
        %v4101 = vand.u32 %v3635, 4294901760
        %4102 = vmatmul.mubr.f32.gmra.mrb[0].mxu0 %v4101
        %v4103 = vpop.f32.mrb[0].mxu0
        %v4104 = vadd.f32 %v4030, %v4103
        %v4105 = vpop.f32.mrb[0].mxu0
        %v4106 = vadd.f32 %v4032, %v4105
        %4107 = vdwg.mxu0
        %v4108 = vadd.f32 %v3630, %v4104
        %v4109 = vadd.f32 %v3631, %v4106
        %s4110 = scalar_lea.vmem %s1, 32
        %v4111 = vld [vmem:[%s4110] sm:$0xf]
        %v4113 = vsel %vm262, %v4111, 0
        %v4116 = vsel %vm266, %v3152, 0
        %v4119 = vsel %vm266, %v3153, 0
        %v4121 = vand.u32 %v4119, 4294901760
        %4122 = vmatprep.subr.mxu0 %v4121
        %v4123 = vand.u32 %v4116, 4294901760
        %4124 = vmatpush1.msra.mxu0 %v4123
        %4125 = vmatprep.subr.mxu0 0.0
        %4126 = vmatpush1.msra.mxu0 0.0
        %4127 = vmatprep.subr.mxu0 0.0
        %4128 = vmatpush1.msra.mxu0 0.0
        %4129 = vmatprep.subr.mxu0 0.0
        %4130 = vmatpush1.msra.mxu0 0.0
        %4131 = vmatprep.subr.mxu0 0.0
        %4132 = vmatpush1.msra.mxu0 0.0
        %4133 = vmatprep.subr.mxu0 0.0
        %4134 = vmatpush1.msra.mxu0 0.0
        %4135 = vmatprep.subr.mxu0 0.0
        %4136 = vmatpush1.msra.mxu0 0.0
        %4137 = vmatprep.subr.mxu0 0.0
        %4138 = vmatpush1.msra.mxu0 0.0
        %4139 = vmatprep.subr.mxu0 0.0
        %4140 = vmatpush1.msra.mxu0 0.0
        %4141 = vmatprep.subr.mxu0 0.0
        %4142 = vmatpush1.msra.mxu0 0.0
        %4143 = vmatprep.subr.mxu0 0.0
        %4144 = vmatpush1.msra.mxu0 0.0
        %4145 = vmatprep.subr.mxu0 0.0
        %4146 = vmatpush1.msra.mxu0 0.0
        %4147 = vmatprep.subr.mxu0 0.0
        %4148 = vmatpush1.msra.mxu0 0.0
        %4149 = vmatprep.subr.mxu0 0.0
        %4150 = vmatpush1.msra.mxu0 0.0
        %4151 = vmatprep.subr.mxu0 0.0
        %4152 = vmatpush1.msra.mxu0 0.0
        %4153 = vmatprep.subr.mxu0 0.0
        %4154 = vmatpush1.msra.mxu0 0.0
        %4155 = vmatprep.subr.mxu0 0.0
        %4156 = vmatpush1.msra.mxu0 0.0
        %4157 = vmatprep.subr.mxu0 0.0
        %4158 = vmatpush1.msra.mxu0 0.0
        %4159 = vmatprep.subr.mxu0 0.0
        %4160 = vmatpush1.msra.mxu0 0.0
        %4161 = vmatprep.subr.mxu0 0.0
        %4162 = vmatpush1.msra.mxu0 0.0
        %4163 = vmatprep.subr.mxu0 0.0
        %4164 = vmatpush1.msra.mxu0 0.0
        %4165 = vmatprep.subr.mxu0 0.0
        %4166 = vmatpush1.msra.mxu0 0.0
        %4167 = vmatprep.subr.mxu0 0.0
        %4168 = vmatpush1.msra.mxu0 0.0
        %4169 = vmatprep.subr.mxu0 0.0
        %4170 = vmatpush1.msra.mxu0 0.0
        %4171 = vmatprep.subr.mxu0 0.0
        %4172 = vmatpush1.msra.mxu0 0.0
        %4173 = vmatprep.subr.mxu0 0.0
        %4174 = vmatpush1.msra.mxu0 0.0
        %4175 = vmatprep.subr.mxu0 0.0
        %4176 = vmatpush1.msra.mxu0 0.0
        %4177 = vmatprep.subr.mxu0 0.0
        %4178 = vmatpush1.msra.mxu0 0.0
        %4179 = vmatprep.subr.mxu0 0.0
        %4180 = vmatpush1.msra.mxu0 0.0
        %4181 = vmatprep.subr.mxu0 0.0
        %4182 = vmatpush1.msra.mxu0 0.0
        %4183 = vmatprep.subr.mxu0 0.0
        %4184 = vmatpush1.msra.mxu0 0.0
        %4185 = vmatprep.subr.mxu0 0.0
        %4186 = vmatpush1.msra.mxu0 0.0
        %4187 = vmatprep.mubr.f32.mxu0 0.0
        %v4188 = vand.u32 %v4113, 4294901760
        %v4189 = vsub.f32 %v4113, %v4188
        %v4190 = vand.u32 %v4189, 4294901760
        %v4191 = vsub.f32 %v4189, %v4190
        %v4192 = vand.u32 %v4191, 4294901760
        %4193 = vmatmul.mubr.f32.gmra.mrb[0].mxu0 %v4192
        %v4194 = vpop.f32.mrb[0].mxu0
        %v4195 = vadd.f32 0.0, %v4194
        %v4196 = vpop.f32.mrb[0].mxu0
        %v4197 = vadd.f32 0.0, %v4196
        %4198 = vdwg.mxu0
        %v4199 = vand.u32 %v4119, 4294901760
        %v4200 = vsub.f32 %v4119, %v4199
        %v4201 = vand.u32 %v4200, 4294901760
        %v4202 = vsub.f32 %v4200, %v4201
        %v4203 = vand.u32 %v4202, 4294901760
        %4204 = vmatprep.subr.mxu0 %v4203
        %v4205 = vand.u32 %v4116, 4294901760
        %v4206 = vsub.f32 %v4116, %v4205
        %v4207 = vand.u32 %v4206, 4294901760
        %v4208 = vsub.f32 %v4206, %v4207
        %v4209 = vand.u32 %v4208, 4294901760
        %4210 = vmatpush1.msra.mxu0 %v4209
        %4211 = vmatprep.subr.mxu0 0.0
        %4212 = vmatpush1.msra.mxu0 0.0
        %4213 = vmatprep.subr.mxu0 0.0
        %4214 = vmatpush1.msra.mxu0 0.0
        %4215 = vmatprep.subr.mxu0 0.0
        %4216 = vmatpush1.msra.mxu0 0.0
        %4217 = vmatprep.subr.mxu0 0.0
        %4218 = vmatpush1.msra.mxu0 0.0
        %4219 = vmatprep.subr.mxu0 0.0
        %4220 = vmatpush1.msra.mxu0 0.0
        %4221 = vmatprep.subr.mxu0 0.0
        %4222 = vmatpush1.msra.mxu0 0.0
        %4223 = vmatprep.subr.mxu0 0.0
        %4224 = vmatpush1.msra.mxu0 0.0
        %4225 = vmatprep.subr.mxu0 0.0
        %4226 = vmatpush1.msra.mxu0 0.0
        %4227 = vmatprep.subr.mxu0 0.0
        %4228 = vmatpush1.msra.mxu0 0.0
        %4229 = vmatprep.subr.mxu0 0.0
        %4230 = vmatpush1.msra.mxu0 0.0
        %4231 = vmatprep.subr.mxu0 0.0
        %4232 = vmatpush1.msra.mxu0 0.0
        %4233 = vmatprep.subr.mxu0 0.0
        %4234 = vmatpush1.msra.mxu0 0.0
        %4235 = vmatprep.subr.mxu0 0.0
        %4236 = vmatpush1.msra.mxu0 0.0
        %4237 = vmatprep.subr.mxu0 0.0
        %4238 = vmatpush1.msra.mxu0 0.0
        %4239 = vmatprep.subr.mxu0 0.0
        %4240 = vmatpush1.msra.mxu0 0.0
        %4241 = vmatprep.subr.mxu0 0.0
        %4242 = vmatpush1.msra.mxu0 0.0
        %4243 = vmatprep.subr.mxu0 0.0
        %4244 = vmatpush1.msra.mxu0 0.0
        %4245 = vmatprep.subr.mxu0 0.0
        %4246 = vmatpush1.msra.mxu0 0.0
        %4247 = vmatprep.subr.mxu0 0.0
        %4248 = vmatpush1.msra.mxu0 0.0
        %4249 = vmatprep.subr.mxu0 0.0
        %4250 = vmatpush1.msra.mxu0 0.0
        %4251 = vmatprep.subr.mxu0 0.0
        %4252 = vmatpush1.msra.mxu0 0.0
        %4253 = vmatprep.subr.mxu0 0.0
        %4254 = vmatpush1.msra.mxu0 0.0
        %4255 = vmatprep.subr.mxu0 0.0
        %4256 = vmatpush1.msra.mxu0 0.0
        %4257 = vmatprep.subr.mxu0 0.0
        %4258 = vmatpush1.msra.mxu0 0.0
        %4259 = vmatprep.subr.mxu0 0.0
        %4260 = vmatpush1.msra.mxu0 0.0
        %4261 = vmatprep.subr.mxu0 0.0
        %4262 = vmatpush1.msra.mxu0 0.0
        %4263 = vmatprep.subr.mxu0 0.0
        %4264 = vmatpush1.msra.mxu0 0.0
        %4265 = vmatprep.subr.mxu0 0.0
        %4266 = vmatpush1.msra.mxu0 0.0
        %4267 = vmatprep.subr.mxu0 0.0
        %4268 = vmatpush1.msra.mxu0 0.0
        %4269 = vmatprep.subr.mxu0 0.0
        %4270 = vmatpush1.msra.mxu0 0.0
        %4271 = vmatprep.subr.mxu0 0.0
        %4272 = vmatpush1.msra.mxu0 0.0
        %4273 = vmatprep.mubr.f32.mxu0 0.0
        %v4274 = vand.u32 %v4113, 4294901760
        %4275 = vmatmul.mubr.f32.gmra.mrb[0].mxu0 %v4274
        %v4276 = vpop.f32.mrb[0].mxu0
        %v4277 = vadd.f32 %v4195, %v4276
        %v4278 = vpop.f32.mrb[0].mxu0
        %v4279 = vadd.f32 %v4197, %v4278
        %4280 = vdwg.mxu0
        %v4281 = vand.u32 %v4119, 4294901760
        %v4282 = vsub.f32 %v4119, %v4281
        %4283 = vmatprep.subr.mxu0 %v4282
        %v4284 = vand.u32 %v4116, 4294901760
        %v4285 = vsub.f32 %v4116, %v4284
        %4286 = vmatpush1.msra.mxu0 %v4285
        %4287 = vmatprep.subr.mxu0 0.0
        %4288 = vmatpush1.msra.mxu0 0.0
        %4289 = vmatprep.subr.mxu0 0.0
        %4290 = vmatpush1.msra.mxu0 0.0
        %4291 = vmatprep.subr.mxu0 0.0
        %4292 = vmatpush1.msra.mxu0 0.0
        %4293 = vmatprep.subr.mxu0 0.0
        %4294 = vmatpush1.msra.mxu0 0.0
        %4295 = vmatprep.subr.mxu0 0.0
        %4296 = vmatpush1.msra.mxu0 0.0
        %4297 = vmatprep.subr.mxu0 0.0
        %4298 = vmatpush1.msra.mxu0 0.0
        %4299 = vmatprep.subr.mxu0 0.0
        %4300 = vmatpush1.msra.mxu0 0.0
        %4301 = vmatprep.subr.mxu0 0.0
        %4302 = vmatpush1.msra.mxu0 0.0
        %4303 = vmatprep.subr.mxu0 0.0
        %4304 = vmatpush1.msra.mxu0 0.0
        %4305 = vmatprep.subr.mxu0 0.0
        %4306 = vmatpush1.msra.mxu0 0.0
        %4307 = vmatprep.subr.mxu0 0.0
        %4308 = vmatpush1.msra.mxu0 0.0
        %4309 = vmatprep.subr.mxu0 0.0
        %4310 = vmatpush1.msra.mxu0 0.0
        %4311 = vmatprep.subr.mxu0 0.0
        %4312 = vmatpush1.msra.mxu0 0.0
        %4313 = vmatprep.subr.mxu0 0.0
        %4314 = vmatpush1.msra.mxu0 0.0
        %4315 = vmatprep.subr.mxu0 0.0
        %4316 = vmatpush1.msra.mxu0 0.0
        %4317 = vmatprep.subr.mxu0 0.0
        %4318 = vmatpush1.msra.mxu0 0.0
        %4319 = vmatprep.subr.mxu0 0.0
        %4320 = vmatpush1.msra.mxu0 0.0
        %4321 = vmatprep.subr.mxu0 0.0
        %4322 = vmatpush1.msra.mxu0 0.0
        %4323 = vmatprep.subr.mxu0 0.0
        %4324 = vmatpush1.msra.mxu0 0.0
        %4325 = vmatprep.subr.mxu0 0.0
        %4326 = vmatpush1.msra.mxu0 0.0
        %4327 = vmatprep.subr.mxu0 0.0
        %4328 = vmatpush1.msra.mxu0 0.0
        %4329 = vmatprep.subr.mxu0 0.0
        %4330 = vmatpush1.msra.mxu0 0.0
        %4331 = vmatprep.subr.mxu0 0.0
        %4332 = vmatpush1.msra.mxu0 0.0
        %4333 = vmatprep.subr.mxu0 0.0
        %4334 = vmatpush1.msra.mxu0 0.0
        %4335 = vmatprep.subr.mxu0 0.0
        %4336 = vmatpush1.msra.mxu0 0.0
        %4337 = vmatprep.subr.mxu0 0.0
        %4338 = vmatpush1.msra.mxu0 0.0
        %4339 = vmatprep.subr.mxu0 0.0
        %4340 = vmatpush1.msra.mxu0 0.0
        %4341 = vmatprep.subr.mxu0 0.0
        %4342 = vmatpush1.msra.mxu0 0.0
        %4343 = vmatprep.subr.mxu0 0.0
        %4344 = vmatpush1.msra.mxu0 0.0
        %4345 = vmatprep.subr.mxu0 0.0
        %4346 = vmatpush1.msra.mxu0 0.0
        %4347 = vmatprep.subr.mxu0 0.0
        %4348 = vmatpush1.msra.mxu0 0.0
        %4349 = vmatprep.mubr.f32.mxu0 0.0
        %v4350 = vand.u32 %v4113, 4294901760
        %v4351 = vsub.f32 %v4113, %v4350
        %4352 = vmatmul.mubr.f32.gmra.mrb[0].mxu0 %v4351
        %v4353 = vpop.f32.mrb[0].mxu0
        %v4354 = vadd.f32 %v4277, %v4353
        %v4355 = vpop.f32.mrb[0].mxu0
        %v4356 = vadd.f32 %v4279, %v4355
        %4357 = vdwg.mxu0
        %v4358 = vand.u32 %v4119, 4294901760
        %4359 = vmatprep.subr.mxu0 %v4358
        %v4360 = vand.u32 %v4116, 4294901760
        %4361 = vmatpush1.msra.mxu0 %v4360
        %4362 = vmatprep.subr.mxu0 0.0
        %4363 = vmatpush1.msra.mxu0 0.0
        %4364 = vmatprep.subr.mxu0 0.0
        %4365 = vmatpush1.msra.mxu0 0.0
        %4366 = vmatprep.subr.mxu0 0.0
        %4367 = vmatpush1.msra.mxu0 0.0
        %4368 = vmatprep.subr.mxu0 0.0
        %4369 = vmatpush1.msra.mxu0 0.0
        %4370 = vmatprep.subr.mxu0 0.0
        %4371 = vmatpush1.msra.mxu0 0.0
        %4372 = vmatprep.subr.mxu0 0.0
        %4373 = vmatpush1.msra.mxu0 0.0
        %4374 = vmatprep.subr.mxu0 0.0
        %4375 = vmatpush1.msra.mxu0 0.0
        %4376 = vmatprep.subr.mxu0 0.0
        %4377 = vmatpush1.msra.mxu0 0.0
        %4378 = vmatprep.subr.mxu0 0.0
        %4379 = vmatpush1.msra.mxu0 0.0
        %4380 = vmatprep.subr.mxu0 0.0
        %4381 = vmatpush1.msra.mxu0 0.0
        %4382 = vmatprep.subr.mxu0 0.0
        %4383 = vmatpush1.msra.mxu0 0.0
        %4384 = vmatprep.subr.mxu0 0.0
        %4385 = vmatpush1.msra.mxu0 0.0
        %4386 = vmatprep.subr.mxu0 0.0
        %4387 = vmatpush1.msra.mxu0 0.0
        %4388 = vmatprep.subr.mxu0 0.0
        %4389 = vmatpush1.msra.mxu0 0.0
        %4390 = vmatprep.subr.mxu0 0.0
        %4391 = vmatpush1.msra.mxu0 0.0
        %4392 = vmatprep.subr.mxu0 0.0
        %4393 = vmatpush1.msra.mxu0 0.0
        %4394 = vmatprep.subr.mxu0 0.0
        %4395 = vmatpush1.msra.mxu0 0.0
        %4396 = vmatprep.subr.mxu0 0.0
        %4397 = vmatpush1.msra.mxu0 0.0
        %4398 = vmatprep.subr.mxu0 0.0
        %4399 = vmatpush1.msra.mxu0 0.0
        %4400 = vmatprep.subr.mxu0 0.0
        %4401 = vmatpush1.msra.mxu0 0.0
        %4402 = vmatprep.subr.mxu0 0.0
        %4403 = vmatpush1.msra.mxu0 0.0
        %4404 = vmatprep.subr.mxu0 0.0
        %4405 = vmatpush1.msra.mxu0 0.0
        %4406 = vmatprep.subr.mxu0 0.0
        %4407 = vmatpush1.msra.mxu0 0.0
        %4408 = vmatprep.subr.mxu0 0.0
        %4409 = vmatpush1.msra.mxu0 0.0
        %4410 = vmatprep.subr.mxu0 0.0
        %4411 = vmatpush1.msra.mxu0 0.0
        %4412 = vmatprep.subr.mxu0 0.0
        %4413 = vmatpush1.msra.mxu0 0.0
        %4414 = vmatprep.subr.mxu0 0.0
        %4415 = vmatpush1.msra.mxu0 0.0
        %4416 = vmatprep.subr.mxu0 0.0
        %4417 = vmatpush1.msra.mxu0 0.0
        %4418 = vmatprep.subr.mxu0 0.0
        %4419 = vmatpush1.msra.mxu0 0.0
        %4420 = vmatprep.subr.mxu0 0.0
        %4421 = vmatpush1.msra.mxu0 0.0
        %4422 = vmatprep.subr.mxu0 0.0
        %4423 = vmatpush1.msra.mxu0 0.0
        %4424 = vmatprep.mubr.f32.mxu0 0.0
        %v4425 = vand.u32 %v4113, 4294901760
        %v4426 = vsub.f32 %v4113, %v4425
        %v4427 = vand.u32 %v4426, 4294901760
        %4428 = vmatmul.mubr.f32.gmra.mrb[0].mxu0 %v4427
        %v4429 = vpop.f32.mrb[0].mxu0
        %v4430 = vadd.f32 %v4354, %v4429
        %v4431 = vpop.f32.mrb[0].mxu0
        %v4432 = vadd.f32 %v4356, %v4431
        %4433 = vdwg.mxu0
        %v4434 = vand.u32 %v4119, 4294901760
        %v4435 = vsub.f32 %v4119, %v4434
        %v4436 = vand.u32 %v4435, 4294901760
        %4437 = vmatprep.subr.mxu0 %v4436
        %v4438 = vand.u32 %v4116, 4294901760
        %v4439 = vsub.f32 %v4116, %v4438
        %v4440 = vand.u32 %v4439, 4294901760
        %4441 = vmatpush1.msra.mxu0 %v4440
        %4442 = vmatprep.subr.mxu0 0.0
        %4443 = vmatpush1.msra.mxu0 0.0
        %4444 = vmatprep.subr.mxu0 0.0
        %4445 = vmatpush1.msra.mxu0 0.0
        %4446 = vmatprep.subr.mxu0 0.0
        %4447 = vmatpush1.msra.mxu0 0.0
        %4448 = vmatprep.subr.mxu0 0.0
        %4449 = vmatpush1.msra.mxu0 0.0
        %4450 = vmatprep.subr.mxu0 0.0
        %4451 = vmatpush1.msra.mxu0 0.0
        %4452 = vmatprep.subr.mxu0 0.0
        %4453 = vmatpush1.msra.mxu0 0.0
        %4454 = vmatprep.subr.mxu0 0.0
        %4455 = vmatpush1.msra.mxu0 0.0
        %4456 = vmatprep.subr.mxu0 0.0
        %4457 = vmatpush1.msra.mxu0 0.0
        %4458 = vmatprep.subr.mxu0 0.0
        %4459 = vmatpush1.msra.mxu0 0.0
        %4460 = vmatprep.subr.mxu0 0.0
        %4461 = vmatpush1.msra.mxu0 0.0
        %4462 = vmatprep.subr.mxu0 0.0
        %4463 = vmatpush1.msra.mxu0 0.0
        %4464 = vmatprep.subr.mxu0 0.0
        %4465 = vmatpush1.msra.mxu0 0.0
        %4466 = vmatprep.subr.mxu0 0.0
        %4467 = vmatpush1.msra.mxu0 0.0
        %4468 = vmatprep.subr.mxu0 0.0
        %4469 = vmatpush1.msra.mxu0 0.0
        %4470 = vmatprep.subr.mxu0 0.0
        %4471 = vmatpush1.msra.mxu0 0.0
        %4472 = vmatprep.subr.mxu0 0.0
        %4473 = vmatpush1.msra.mxu0 0.0
        %4474 = vmatprep.subr.mxu0 0.0
        %4475 = vmatpush1.msra.mxu0 0.0
        %4476 = vmatprep.subr.mxu0 0.0
        %4477 = vmatpush1.msra.mxu0 0.0
        %4478 = vmatprep.subr.mxu0 0.0
        %4479 = vmatpush1.msra.mxu0 0.0
        %4480 = vmatprep.subr.mxu0 0.0
        %4481 = vmatpush1.msra.mxu0 0.0
        %4482 = vmatprep.subr.mxu0 0.0
        %4483 = vmatpush1.msra.mxu0 0.0
        %4484 = vmatprep.subr.mxu0 0.0
        %4485 = vmatpush1.msra.mxu0 0.0
        %4486 = vmatprep.subr.mxu0 0.0
        %4487 = vmatpush1.msra.mxu0 0.0
        %4488 = vmatprep.subr.mxu0 0.0
        %4489 = vmatpush1.msra.mxu0 0.0
        %4490 = vmatprep.subr.mxu0 0.0
        %4491 = vmatpush1.msra.mxu0 0.0
        %4492 = vmatprep.subr.mxu0 0.0
        %4493 = vmatpush1.msra.mxu0 0.0
        %4494 = vmatprep.subr.mxu0 0.0
        %4495 = vmatpush1.msra.mxu0 0.0
        %4496 = vmatprep.subr.mxu0 0.0
        %4497 = vmatpush1.msra.mxu0 0.0
        %4498 = vmatprep.subr.mxu0 0.0
        %4499 = vmatpush1.msra.mxu0 0.0
        %4500 = vmatprep.subr.mxu0 0.0
        %4501 = vmatpush1.msra.mxu0 0.0
        %4502 = vmatprep.subr.mxu0 0.0
        %4503 = vmatpush1.msra.mxu0 0.0
        %4504 = vmatprep.mubr.f32.mxu0 0.0
        %v4505 = vand.u32 %v4113, 4294901760
        %4506 = vmatmul.mubr.f32.gmra.mrb[0].mxu0 %v4505
        %v4507 = vpop.f32.mrb[0].mxu0
        %v4508 = vadd.f32 %v4430, %v4507
        %v4509 = vpop.f32.mrb[0].mxu0
        %v4510 = vadd.f32 %v4432, %v4509
        %4511 = vdwg.mxu0
        %v4512 = vand.u32 %v4119, 4294901760
        %4513 = vmatprep.subr.mxu0 %v4512
        %v4514 = vand.u32 %v4116, 4294901760
        %4515 = vmatpush1.msra.mxu0 %v4514
        %4516 = vmatprep.subr.mxu0 0.0
        %4517 = vmatpush1.msra.mxu0 0.0
        %4518 = vmatprep.subr.mxu0 0.0
        %4519 = vmatpush1.msra.mxu0 0.0
        %4520 = vmatprep.subr.mxu0 0.0
        %4521 = vmatpush1.msra.mxu0 0.0
        %4522 = vmatprep.subr.mxu0 0.0
        %4523 = vmatpush1.msra.mxu0 0.0
        %4524 = vmatprep.subr.mxu0 0.0
        %4525 = vmatpush1.msra.mxu0 0.0
        %4526 = vmatprep.subr.mxu0 0.0
        %4527 = vmatpush1.msra.mxu0 0.0
        %4528 = vmatprep.subr.mxu0 0.0
        %4529 = vmatpush1.msra.mxu0 0.0
        %4530 = vmatprep.subr.mxu0 0.0
        %4531 = vmatpush1.msra.mxu0 0.0
        %4532 = vmatprep.subr.mxu0 0.0
        %4533 = vmatpush1.msra.mxu0 0.0
        %4534 = vmatprep.subr.mxu0 0.0
        %4535 = vmatpush1.msra.mxu0 0.0
        %4536 = vmatprep.subr.mxu0 0.0
        %4537 = vmatpush1.msra.mxu0 0.0
        %4538 = vmatprep.subr.mxu0 0.0
        %4539 = vmatpush1.msra.mxu0 0.0
        %4540 = vmatprep.subr.mxu0 0.0
        %4541 = vmatpush1.msra.mxu0 0.0
        %4542 = vmatprep.subr.mxu0 0.0
        %4543 = vmatpush1.msra.mxu0 0.0
        %4544 = vmatprep.subr.mxu0 0.0
        %4545 = vmatpush1.msra.mxu0 0.0
        %4546 = vmatprep.subr.mxu0 0.0
        %4547 = vmatpush1.msra.mxu0 0.0
        %4548 = vmatprep.subr.mxu0 0.0
        %4549 = vmatpush1.msra.mxu0 0.0
        %4550 = vmatprep.subr.mxu0 0.0
        %4551 = vmatpush1.msra.mxu0 0.0
        %4552 = vmatprep.subr.mxu0 0.0
        %4553 = vmatpush1.msra.mxu0 0.0
        %4554 = vmatprep.subr.mxu0 0.0
        %4555 = vmatpush1.msra.mxu0 0.0
        %4556 = vmatprep.subr.mxu0 0.0
        %4557 = vmatpush1.msra.mxu0 0.0
        %4558 = vmatprep.subr.mxu0 0.0
        %4559 = vmatpush1.msra.mxu0 0.0
        %4560 = vmatprep.subr.mxu0 0.0
        %4561 = vmatpush1.msra.mxu0 0.0
        %4562 = vmatprep.subr.mxu0 0.0
        %4563 = vmatpush1.msra.mxu0 0.0
        %4564 = vmatprep.subr.mxu0 0.0
        %4565 = vmatpush1.msra.mxu0 0.0
        %4566 = vmatprep.subr.mxu0 0.0
        %4567 = vmatpush1.msra.mxu0 0.0
        %4568 = vmatprep.subr.mxu0 0.0
        %4569 = vmatpush1.msra.mxu0 0.0
        %4570 = vmatprep.subr.mxu0 0.0
        %4571 = vmatpush1.msra.mxu0 0.0
        %4572 = vmatprep.subr.mxu0 0.0
        %4573 = vmatpush1.msra.mxu0 0.0
        %4574 = vmatprep.subr.mxu0 0.0
        %4575 = vmatpush1.msra.mxu0 0.0
        %4576 = vmatprep.subr.mxu0 0.0
        %4577 = vmatpush1.msra.mxu0 0.0
        %4578 = vmatprep.mubr.f32.mxu0 0.0
        %v4579 = vand.u32 %v4113, 4294901760
        %4580 = vmatmul.mubr.f32.gmra.mrb[0].mxu0 %v4579
        %v4581 = vpop.f32.mrb[0].mxu0
        %v4582 = vadd.f32 %v4508, %v4581
        %v4583 = vpop.f32.mrb[0].mxu0
        %v4584 = vadd.f32 %v4510, %v4583
        %4585 = vdwg.mxu0
        %v4586 = vadd.f32 %v4108, %v4582
        %v4587 = vadd.f32 %v4109, %v4584
        %v4588 = vsel %vm266, %v4586, 0.0
        %v4589 = vsel %vm266, %v4587, 0.0
        %v4590 = vadd.f32 %v4588, %v4589
        %4591 = vadd.xlane.f32.xlu0 %v4590
        %v4592 = vpop.xlane.xlu0 %4591
        %v4593 = vmul.f32 %v4592, 0.00390625
        %v4594 = vmul.f32 %v4586, %v4586
        %v4595 = vmul.f32 %v4587, %v4587
        %v4596 = vsel %vm266, %v4594, 0.0
        %v4597 = vsel %vm266, %v4595, 0.0
        %v4598 = vadd.f32 %v4596, %v4597
        %4599 = vadd.xlane.f32.xlu0 %v4598
        %v4600 = vpop.xlane.xlu0 %4599
        %v4601 = vmul.f32 %v4600, 0.00390625
        %v4602 = vmul.f32 %v4593, %v4593
        %v4603 = vsub.f32 %v4601, %v4602
        %v4604 = vmax.f32 %v4603, 0.0
        %v4605 = vsub.f32 %v4586, %v4593
        %v4606 = vsub.f32 %v4587, %v4593
        %v4607 = vadd.f32 %v4604, 1e-05
        %v4608 = vrsqrt.pop %v4607
        %v4609 = vmul.f32 %v4605, %v4608
        %v4610 = vmul.f32 %v4606, %v4608
        %vm4611 = vcmp.gt.f32.partialorder %v4609, 0.0
        %vm4612 = vcmp.gt.f32.partialorder %v4610, 0.0
        %v4613 = vmul.f32 %v4609, 0.2
        %v4614 = vmul.f32 %v4610, 0.2
        %v4615 = vsel %vm4611, %v4609, %v4613
        %v4616 = vsel %vm4612, %v4610, %v4614
        %4617 = vrot.lane.b32.xlu0 %v4615, 1
        %v4618 = vpop.permute.xlu0 %4617
        %4619 = vrot.lane.b32.xlu0 %v4616, 1
        %v4620 = vpop.permute.xlu0 %4619
        %v4621 = vsel %vm212, %v4618, %v4620
        %v4622 = vsel %vm212, %v4620, %v4618
        %4623 = vrot.lane.b32.xlu0 %v4615, 127
        %v4624 = vpop.permute.xlu0 %4623
        %4625 = vrot.lane.b32.xlu0 %v4616, 127
        %v4626 = vpop.permute.xlu0 %4625
        %v4627 = vsel %vm219, %v4624, %v4626
        %v4628 = vsel %vm219, %v4626, %v4624
        %v4629 = vsel %vm224, %v4627, %v4622
        %v4630 = vsel %vm225, %v4628, %v4621
        %v4631 = vsel %vm230, %v4622, %v4627
        %v4632 = vsel %vm231, %v4621, %v4628
        %4633 = vrot.lane.b32.xlu0 %v4629, 16
        %v4634 = vpop.permute.xlu0 %4633
        %4635 = vrot.lane.b32.xlu0 %v4630, 16
        %v4636 = vpop.permute.xlu0 %4635
        %v4637 = vsel %vm200, %v4634, %v4636
        %v4638 = vsel %vm200, %v4636, %v4634
        %4639 = vrot.lane.b32.xlu0 %v4629, 112
        %v4640 = vpop.permute.xlu0 %4639
        %4641 = vrot.lane.b32.xlu0 %v4630, 112
        %v4642 = vpop.permute.xlu0 %4641
        %v4643 = vsel %vm244, %v4640, %v4642
        %v4644 = vsel %vm244, %v4642, %v4640
        %v4645 = vsel %vm249, %v4643, %v4638
        %v4646 = vsel %vm250, %v4644, %v4637
        %v4647 = vsel %vm255, %v4638, %v4643
        %v4648 = vsel %vm256, %v4637, %v4644
        %v4649 = vld [vmem:[%s2] sm:$0xf]
        %s4650 = scalar_lea.vmem %s2, 12
        %v4651 = vld [vmem:[%s4650] sm:$0xf]
        %v4653 = vsel %vm262, %v4651, 0
        %v4656 = vsel %vm266, %v4629, 0
        %v4659 = vsel %vm266, %v4630, 0
        %v4661 = vand.u32 %v4659, 4294901760
        %4662 = vmatprep.subr.mxu0 %v4661
        %v4663 = vand.u32 %v4656, 4294901760
        %4664 = vmatpush1.msra.mxu0 %v4663
        %4665 = vmatprep.subr.mxu0 0.0
        %4666 = vmatpush1.msra.mxu0 0.0
        %4667 = vmatprep.subr.mxu0 0.0
        %4668 = vmatpush1.msra.mxu0 0.0
        %4669 = vmatprep.subr.mxu0 0.0
        %4670 = vmatpush1.msra.mxu0 0.0
        %4671 = vmatprep.subr.mxu0 0.0
        %4672 = vmatpush1.msra.mxu0 0.0
        %4673 = vmatprep.subr.mxu0 0.0
        %4674 = vmatpush1.msra.mxu0 0.0
        %4675 = vmatprep.subr.mxu0 0.0
        %4676 = vmatpush1.msra.mxu0 0.0
        %4677 = vmatprep.subr.mxu0 0.0
        %4678 = vmatpush1.msra.mxu0 0.0
        %4679 = vmatprep.subr.mxu0 0.0
        %4680 = vmatpush1.msra.mxu0 0.0
        %4681 = vmatprep.subr.mxu0 0.0
        %4682 = vmatpush1.msra.mxu0 0.0
        %4683 = vmatprep.subr.mxu0 0.0
        %4684 = vmatpush1.msra.mxu0 0.0
        %4685 = vmatprep.subr.mxu0 0.0
        %4686 = vmatpush1.msra.mxu0 0.0
        %4687 = vmatprep.subr.mxu0 0.0
        %4688 = vmatpush1.msra.mxu0 0.0
        %4689 = vmatprep.subr.mxu0 0.0
        %4690 = vmatpush1.msra.mxu0 0.0
        %4691 = vmatprep.subr.mxu0 0.0
        %4692 = vmatpush1.msra.mxu0 0.0
        %4693 = vmatprep.subr.mxu0 0.0
        %4694 = vmatpush1.msra.mxu0 0.0
        %4695 = vmatprep.subr.mxu0 0.0
        %4696 = vmatpush1.msra.mxu0 0.0
        %4697 = vmatprep.subr.mxu0 0.0
        %4698 = vmatpush1.msra.mxu0 0.0
        %4699 = vmatprep.subr.mxu0 0.0
        %4700 = vmatpush1.msra.mxu0 0.0
        %4701 = vmatprep.subr.mxu0 0.0
        %4702 = vmatpush1.msra.mxu0 0.0
        %4703 = vmatprep.subr.mxu0 0.0
        %4704 = vmatpush1.msra.mxu0 0.0
        %4705 = vmatprep.subr.mxu0 0.0
        %4706 = vmatpush1.msra.mxu0 0.0
        %4707 = vmatprep.subr.mxu0 0.0
        %4708 = vmatpush1.msra.mxu0 0.0
        %4709 = vmatprep.subr.mxu0 0.0
        %4710 = vmatpush1.msra.mxu0 0.0
        %4711 = vmatprep.subr.mxu0 0.0
        %4712 = vmatpush1.msra.mxu0 0.0
        %4713 = vmatprep.subr.mxu0 0.0
        %4714 = vmatpush1.msra.mxu0 0.0
        %4715 = vmatprep.subr.mxu0 0.0
        %4716 = vmatpush1.msra.mxu0 0.0
        %4717 = vmatprep.subr.mxu0 0.0
        %4718 = vmatpush1.msra.mxu0 0.0
        %4719 = vmatprep.subr.mxu0 0.0
        %4720 = vmatpush1.msra.mxu0 0.0
        %4721 = vmatprep.subr.mxu0 0.0
        %4722 = vmatpush1.msra.mxu0 0.0
        %4723 = vmatprep.subr.mxu0 0.0
        %4724 = vmatpush1.msra.mxu0 0.0
        %4725 = vmatprep.subr.mxu0 0.0
        %4726 = vmatpush1.msra.mxu0 0.0
        %4727 = vmatprep.mubr.f32.mxu0 0.0
        %v4728 = vand.u32 %v4653, 4294901760
        %v4729 = vsub.f32 %v4653, %v4728
        %v4730 = vand.u32 %v4729, 4294901760
        %v4731 = vsub.f32 %v4729, %v4730
        %v4732 = vand.u32 %v4731, 4294901760
        %4733 = vmatmul.mubr.f32.gmra.mrb[0].mxu0 %v4732
        %v4734 = vpop.f32.mrb[0].mxu0
        %v4735 = vadd.f32 0.0, %v4734
        %v4736 = vpop.f32.mrb[0].mxu0
        %v4737 = vadd.f32 0.0, %v4736
        %4738 = vdwg.mxu0
        %v4739 = vand.u32 %v4659, 4294901760
        %v4740 = vsub.f32 %v4659, %v4739
        %v4741 = vand.u32 %v4740, 4294901760
        %v4742 = vsub.f32 %v4740, %v4741
        %v4743 = vand.u32 %v4742, 4294901760
        %4744 = vmatprep.subr.mxu0 %v4743
        %v4745 = vand.u32 %v4656, 4294901760
        %v4746 = vsub.f32 %v4656, %v4745
        %v4747 = vand.u32 %v4746, 4294901760
        %v4748 = vsub.f32 %v4746, %v4747
        %v4749 = vand.u32 %v4748, 4294901760
        %4750 = vmatpush1.msra.mxu0 %v4749
        %4751 = vmatprep.subr.mxu0 0.0
        %4752 = vmatpush1.msra.mxu0 0.0
        %4753 = vmatprep.subr.mxu0 0.0
        %4754 = vmatpush1.msra.mxu0 0.0
        %4755 = vmatprep.subr.mxu0 0.0
        %4756 = vmatpush1.msra.mxu0 0.0
        %4757 = vmatprep.subr.mxu0 0.0
        %4758 = vmatpush1.msra.mxu0 0.0
        %4759 = vmatprep.subr.mxu0 0.0
        %4760 = vmatpush1.msra.mxu0 0.0
        %4761 = vmatprep.subr.mxu0 0.0
        %4762 = vmatpush1.msra.mxu0 0.0
        %4763 = vmatprep.subr.mxu0 0.0
        %4764 = vmatpush1.msra.mxu0 0.0
        %4765 = vmatprep.subr.mxu0 0.0
        %4766 = vmatpush1.msra.mxu0 0.0
        %4767 = vmatprep.subr.mxu0 0.0
        %4768 = vmatpush1.msra.mxu0 0.0
        %4769 = vmatprep.subr.mxu0 0.0
        %4770 = vmatpush1.msra.mxu0 0.0
        %4771 = vmatprep.subr.mxu0 0.0
        %4772 = vmatpush1.msra.mxu0 0.0
        %4773 = vmatprep.subr.mxu0 0.0
        %4774 = vmatpush1.msra.mxu0 0.0
        %4775 = vmatprep.subr.mxu0 0.0
        %4776 = vmatpush1.msra.mxu0 0.0
        %4777 = vmatprep.subr.mxu0 0.0
        %4778 = vmatpush1.msra.mxu0 0.0
        %4779 = vmatprep.subr.mxu0 0.0
        %4780 = vmatpush1.msra.mxu0 0.0
        %4781 = vmatprep.subr.mxu0 0.0
        %4782 = vmatpush1.msra.mxu0 0.0
        %4783 = vmatprep.subr.mxu0 0.0
        %4784 = vmatpush1.msra.mxu0 0.0
        %4785 = vmatprep.subr.mxu0 0.0
        %4786 = vmatpush1.msra.mxu0 0.0
        %4787 = vmatprep.subr.mxu0 0.0
        %4788 = vmatpush1.msra.mxu0 0.0
        %4789 = vmatprep.subr.mxu0 0.0
        %4790 = vmatpush1.msra.mxu0 0.0
        %4791 = vmatprep.subr.mxu0 0.0
        %4792 = vmatpush1.msra.mxu0 0.0
        %4793 = vmatprep.subr.mxu0 0.0
        %4794 = vmatpush1.msra.mxu0 0.0
        %4795 = vmatprep.subr.mxu0 0.0
        %4796 = vmatpush1.msra.mxu0 0.0
        %4797 = vmatprep.subr.mxu0 0.0
        %4798 = vmatpush1.msra.mxu0 0.0
        %4799 = vmatprep.subr.mxu0 0.0
        %4800 = vmatpush1.msra.mxu0 0.0
        %4801 = vmatprep.subr.mxu0 0.0
        %4802 = vmatpush1.msra.mxu0 0.0
        %4803 = vmatprep.subr.mxu0 0.0
        %4804 = vmatpush1.msra.mxu0 0.0
        %4805 = vmatprep.subr.mxu0 0.0
        %4806 = vmatpush1.msra.mxu0 0.0
        %4807 = vmatprep.subr.mxu0 0.0
        %4808 = vmatpush1.msra.mxu0 0.0
        %4809 = vmatprep.subr.mxu0 0.0
        %4810 = vmatpush1.msra.mxu0 0.0
        %4811 = vmatprep.subr.mxu0 0.0
        %4812 = vmatpush1.msra.mxu0 0.0
        %4813 = vmatprep.mubr.f32.mxu0 0.0
        %v4814 = vand.u32 %v4653, 4294901760
        %4815 = vmatmul.mubr.f32.gmra.mrb[0].mxu0 %v4814
        %v4816 = vpop.f32.mrb[0].mxu0
        %v4817 = vadd.f32 %v4735, %v4816
        %v4818 = vpop.f32.mrb[0].mxu0
        %v4819 = vadd.f32 %v4737, %v4818
        %4820 = vdwg.mxu0
        %v4821 = vand.u32 %v4659, 4294901760
        %v4822 = vsub.f32 %v4659, %v4821
        %4823 = vmatprep.subr.mxu0 %v4822
        %v4824 = vand.u32 %v4656, 4294901760
        %v4825 = vsub.f32 %v4656, %v4824
        %4826 = vmatpush1.msra.mxu0 %v4825
        %4827 = vmatprep.subr.mxu0 0.0
        %4828 = vmatpush1.msra.mxu0 0.0
        %4829 = vmatprep.subr.mxu0 0.0
        %4830 = vmatpush1.msra.mxu0 0.0
        %4831 = vmatprep.subr.mxu0 0.0
        %4832 = vmatpush1.msra.mxu0 0.0
        %4833 = vmatprep.subr.mxu0 0.0
        %4834 = vmatpush1.msra.mxu0 0.0
        %4835 = vmatprep.subr.mxu0 0.0
        %4836 = vmatpush1.msra.mxu0 0.0
        %4837 = vmatprep.subr.mxu0 0.0
        %4838 = vmatpush1.msra.mxu0 0.0
        %4839 = vmatprep.subr.mxu0 0.0
        %4840 = vmatpush1.msra.mxu0 0.0
        %4841 = vmatprep.subr.mxu0 0.0
        %4842 = vmatpush1.msra.mxu0 0.0
        %4843 = vmatprep.subr.mxu0 0.0
        %4844 = vmatpush1.msra.mxu0 0.0
        %4845 = vmatprep.subr.mxu0 0.0
        %4846 = vmatpush1.msra.mxu0 0.0
        %4847 = vmatprep.subr.mxu0 0.0
        %4848 = vmatpush1.msra.mxu0 0.0
        %4849 = vmatprep.subr.mxu0 0.0
        %4850 = vmatpush1.msra.mxu0 0.0
        %4851 = vmatprep.subr.mxu0 0.0
        %4852 = vmatpush1.msra.mxu0 0.0
        %4853 = vmatprep.subr.mxu0 0.0
        %4854 = vmatpush1.msra.mxu0 0.0
        %4855 = vmatprep.subr.mxu0 0.0
        %4856 = vmatpush1.msra.mxu0 0.0
        %4857 = vmatprep.subr.mxu0 0.0
        %4858 = vmatpush1.msra.mxu0 0.0
        %4859 = vmatprep.subr.mxu0 0.0
        %4860 = vmatpush1.msra.mxu0 0.0
        %4861 = vmatprep.subr.mxu0 0.0
        %4862 = vmatpush1.msra.mxu0 0.0
        %4863 = vmatprep.subr.mxu0 0.0
        %4864 = vmatpush1.msra.mxu0 0.0
        %4865 = vmatprep.subr.mxu0 0.0
        %4866 = vmatpush1.msra.mxu0 0.0
        %4867 = vmatprep.subr.mxu0 0.0
        %4868 = vmatpush1.msra.mxu0 0.0
        %4869 = vmatprep.subr.mxu0 0.0
        %4870 = vmatpush1.msra.mxu0 0.0
        %4871 = vmatprep.subr.mxu0 0.0
        %4872 = vmatpush1.msra.mxu0 0.0
        %4873 = vmatprep.subr.mxu0 0.0
        %4874 = vmatpush1.msra.mxu0 0.0
        %4875 = vmatprep.subr.mxu0 0.0
        %4876 = vmatpush1.msra.mxu0 0.0
        %4877 = vmatprep.subr.mxu0 0.0
        %4878 = vmatpush1.msra.mxu0 0.0
        %4879 = vmatprep.subr.mxu0 0.0
        %4880 = vmatpush1.msra.mxu0 0.0
        %4881 = vmatprep.subr.mxu0 0.0
        %4882 = vmatpush1.msra.mxu0 0.0
        %4883 = vmatprep.subr.mxu0 0.0
        %4884 = vmatpush1.msra.mxu0 0.0
        %4885 = vmatprep.subr.mxu0 0.0
        %4886 = vmatpush1.msra.mxu0 0.0
        %4887 = vmatprep.subr.mxu0 0.0
        %4888 = vmatpush1.msra.mxu0 0.0
        %4889 = vmatprep.mubr.f32.mxu0 0.0
        %v4890 = vand.u32 %v4653, 4294901760
        %v4891 = vsub.f32 %v4653, %v4890
        %4892 = vmatmul.mubr.f32.gmra.mrb[0].mxu0 %v4891
        %v4893 = vpop.f32.mrb[0].mxu0
        %v4894 = vadd.f32 %v4817, %v4893
        %v4895 = vpop.f32.mrb[0].mxu0
        %v4896 = vadd.f32 %v4819, %v4895
        %4897 = vdwg.mxu0
        %v4898 = vand.u32 %v4659, 4294901760
        %4899 = vmatprep.subr.mxu0 %v4898
        %v4900 = vand.u32 %v4656, 4294901760
        %4901 = vmatpush1.msra.mxu0 %v4900
        %4902 = vmatprep.subr.mxu0 0.0
        %4903 = vmatpush1.msra.mxu0 0.0
        %4904 = vmatprep.subr.mxu0 0.0
        %4905 = vmatpush1.msra.mxu0 0.0
        %4906 = vmatprep.subr.mxu0 0.0
        %4907 = vmatpush1.msra.mxu0 0.0
        %4908 = vmatprep.subr.mxu0 0.0
        %4909 = vmatpush1.msra.mxu0 0.0
        %4910 = vmatprep.subr.mxu0 0.0
        %4911 = vmatpush1.msra.mxu0 0.0
        %4912 = vmatprep.subr.mxu0 0.0
        %4913 = vmatpush1.msra.mxu0 0.0
        %4914 = vmatprep.subr.mxu0 0.0
        %4915 = vmatpush1.msra.mxu0 0.0
        %4916 = vmatprep.subr.mxu0 0.0
        %4917 = vmatpush1.msra.mxu0 0.0
        %4918 = vmatprep.subr.mxu0 0.0
        %4919 = vmatpush1.msra.mxu0 0.0
        %4920 = vmatprep.subr.mxu0 0.0
        %4921 = vmatpush1.msra.mxu0 0.0
        %4922 = vmatprep.subr.mxu0 0.0
        %4923 = vmatpush1.msra.mxu0 0.0
        %4924 = vmatprep.subr.mxu0 0.0
        %4925 = vmatpush1.msra.mxu0 0.0
        %4926 = vmatprep.subr.mxu0 0.0
        %4927 = vmatpush1.msra.mxu0 0.0
        %4928 = vmatprep.subr.mxu0 0.0
        %4929 = vmatpush1.msra.mxu0 0.0
        %4930 = vmatprep.subr.mxu0 0.0
        %4931 = vmatpush1.msra.mxu0 0.0
        %4932 = vmatprep.subr.mxu0 0.0
        %4933 = vmatpush1.msra.mxu0 0.0
        %4934 = vmatprep.subr.mxu0 0.0
        %4935 = vmatpush1.msra.mxu0 0.0
        %4936 = vmatprep.subr.mxu0 0.0
        %4937 = vmatpush1.msra.mxu0 0.0
        %4938 = vmatprep.subr.mxu0 0.0
        %4939 = vmatpush1.msra.mxu0 0.0
        %4940 = vmatprep.subr.mxu0 0.0
        %4941 = vmatpush1.msra.mxu0 0.0
        %4942 = vmatprep.subr.mxu0 0.0
        %4943 = vmatpush1.msra.mxu0 0.0
        %4944 = vmatprep.subr.mxu0 0.0
        %4945 = vmatpush1.msra.mxu0 0.0
        %4946 = vmatprep.subr.mxu0 0.0
        %4947 = vmatpush1.msra.mxu0 0.0
        %4948 = vmatprep.subr.mxu0 0.0
        %4949 = vmatpush1.msra.mxu0 0.0
        %4950 = vmatprep.subr.mxu0 0.0
        %4951 = vmatpush1.msra.mxu0 0.0
        %4952 = vmatprep.subr.mxu0 0.0
        %4953 = vmatpush1.msra.mxu0 0.0
        %4954 = vmatprep.subr.mxu0 0.0
        %4955 = vmatpush1.msra.mxu0 0.0
        %4956 = vmatprep.subr.mxu0 0.0
        %4957 = vmatpush1.msra.mxu0 0.0
        %4958 = vmatprep.subr.mxu0 0.0
        %4959 = vmatpush1.msra.mxu0 0.0
        %4960 = vmatprep.subr.mxu0 0.0
        %4961 = vmatpush1.msra.mxu0 0.0
        %4962 = vmatprep.subr.mxu0 0.0
        %4963 = vmatpush1.msra.mxu0 0.0
        %4964 = vmatprep.mubr.f32.mxu0 0.0
        %v4965 = vand.u32 %v4653, 4294901760
        %v4966 = vsub.f32 %v4653, %v4965
        %v4967 = vand.u32 %v4966, 4294901760
        %4968 = vmatmul.mubr.f32.gmra.mrb[0].mxu0 %v4967
        %v4969 = vpop.f32.mrb[0].mxu0
        %v4970 = vadd.f32 %v4894, %v4969
        %v4971 = vpop.f32.mrb[0].mxu0
        %v4972 = vadd.f32 %v4896, %v4971
        %4973 = vdwg.mxu0
        %v4974 = vand.u32 %v4659, 4294901760
        %v4975 = vsub.f32 %v4659, %v4974
        %v4976 = vand.u32 %v4975, 4294901760
        %4977 = vmatprep.subr.mxu0 %v4976
        %v4978 = vand.u32 %v4656, 4294901760
        %v4979 = vsub.f32 %v4656, %v4978
        %v4980 = vand.u32 %v4979, 4294901760
        %4981 = vmatpush1.msra.mxu0 %v4980
        %4982 = vmatprep.subr.mxu0 0.0
        %4983 = vmatpush1.msra.mxu0 0.0
        %4984 = vmatprep.subr.mxu0 0.0
        %4985 = vmatpush1.msra.mxu0 0.0
        %4986 = vmatprep.subr.mxu0 0.0
        %4987 = vmatpush1.msra.mxu0 0.0
        %4988 = vmatprep.subr.mxu0 0.0
        %4989 = vmatpush1.msra.mxu0 0.0
        %4990 = vmatprep.subr.mxu0 0.0
        %4991 = vmatpush1.msra.mxu0 0.0
        %4992 = vmatprep.subr.mxu0 0.0
        %4993 = vmatpush1.msra.mxu0 0.0
        %4994 = vmatprep.subr.mxu0 0.0
        %4995 = vmatpush1.msra.mxu0 0.0
        %4996 = vmatprep.subr.mxu0 0.0
        %4997 = vmatpush1.msra.mxu0 0.0
        %4998 = vmatprep.subr.mxu0 0.0
        %4999 = vmatpush1.msra.mxu0 0.0
        %5000 = vmatprep.subr.mxu0 0.0
        %5001 = vmatpush1.msra.mxu0 0.0
        %5002 = vmatprep.subr.mxu0 0.0
        %5003 = vmatpush1.msra.mxu0 0.0
        %5004 = vmatprep.subr.mxu0 0.0
        %5005 = vmatpush1.msra.mxu0 0.0
        %5006 = vmatprep.subr.mxu0 0.0
        %5007 = vmatpush1.msra.mxu0 0.0
        %5008 = vmatprep.subr.mxu0 0.0
        %5009 = vmatpush1.msra.mxu0 0.0
        %5010 = vmatprep.subr.mxu0 0.0
        %5011 = vmatpush1.msra.mxu0 0.0
        %5012 = vmatprep.subr.mxu0 0.0
        %5013 = vmatpush1.msra.mxu0 0.0
        %5014 = vmatprep.subr.mxu0 0.0
        %5015 = vmatpush1.msra.mxu0 0.0
        %5016 = vmatprep.subr.mxu0 0.0
        %5017 = vmatpush1.msra.mxu0 0.0
        %5018 = vmatprep.subr.mxu0 0.0
        %5019 = vmatpush1.msra.mxu0 0.0
        %5020 = vmatprep.subr.mxu0 0.0
        %5021 = vmatpush1.msra.mxu0 0.0
        %5022 = vmatprep.subr.mxu0 0.0
        %5023 = vmatpush1.msra.mxu0 0.0
        %5024 = vmatprep.subr.mxu0 0.0
        %5025 = vmatpush1.msra.mxu0 0.0
        %5026 = vmatprep.subr.mxu0 0.0
        %5027 = vmatpush1.msra.mxu0 0.0
        %5028 = vmatprep.subr.mxu0 0.0
        %5029 = vmatpush1.msra.mxu0 0.0
        %5030 = vmatprep.subr.mxu0 0.0
        %5031 = vmatpush1.msra.mxu0 0.0
        %5032 = vmatprep.subr.mxu0 0.0
        %5033 = vmatpush1.msra.mxu0 0.0
        %5034 = vmatprep.subr.mxu0 0.0
        %5035 = vmatpush1.msra.mxu0 0.0
        %5036 = vmatprep.subr.mxu0 0.0
        %5037 = vmatpush1.msra.mxu0 0.0
        %5038 = vmatprep.subr.mxu0 0.0
        %5039 = vmatpush1.msra.mxu0 0.0
        %5040 = vmatprep.subr.mxu0 0.0
        %5041 = vmatpush1.msra.mxu0 0.0
        %5042 = vmatprep.subr.mxu0 0.0
        %5043 = vmatpush1.msra.mxu0 0.0
        %5044 = vmatprep.mubr.f32.mxu0 0.0
        %v5045 = vand.u32 %v4653, 4294901760
        %5046 = vmatmul.mubr.f32.gmra.mrb[0].mxu0 %v5045
        %v5047 = vpop.f32.mrb[0].mxu0
        %v5048 = vadd.f32 %v4970, %v5047
        %v5049 = vpop.f32.mrb[0].mxu0
        %v5050 = vadd.f32 %v4972, %v5049
        %5051 = vdwg.mxu0
        %v5052 = vand.u32 %v4659, 4294901760
        %5053 = vmatprep.subr.mxu0 %v5052
        %v5054 = vand.u32 %v4656, 4294901760
        %5055 = vmatpush1.msra.mxu0 %v5054
        %5056 = vmatprep.subr.mxu0 0.0
        %5057 = vmatpush1.msra.mxu0 0.0
        %5058 = vmatprep.subr.mxu0 0.0
        %5059 = vmatpush1.msra.mxu0 0.0
        %5060 = vmatprep.subr.mxu0 0.0
        %5061 = vmatpush1.msra.mxu0 0.0
        %5062 = vmatprep.subr.mxu0 0.0
        %5063 = vmatpush1.msra.mxu0 0.0
        %5064 = vmatprep.subr.mxu0 0.0
        %5065 = vmatpush1.msra.mxu0 0.0
        %5066 = vmatprep.subr.mxu0 0.0
        %5067 = vmatpush1.msra.mxu0 0.0
        %5068 = vmatprep.subr.mxu0 0.0
        %5069 = vmatpush1.msra.mxu0 0.0
        %5070 = vmatprep.subr.mxu0 0.0
        %5071 = vmatpush1.msra.mxu0 0.0
        %5072 = vmatprep.subr.mxu0 0.0
        %5073 = vmatpush1.msra.mxu0 0.0
        %5074 = vmatprep.subr.mxu0 0.0
        %5075 = vmatpush1.msra.mxu0 0.0
        %5076 = vmatprep.subr.mxu0 0.0
        %5077 = vmatpush1.msra.mxu0 0.0
        %5078 = vmatprep.subr.mxu0 0.0
        %5079 = vmatpush1.msra.mxu0 0.0
        %5080 = vmatprep.subr.mxu0 0.0
        %5081 = vmatpush1.msra.mxu0 0.0
        %5082 = vmatprep.subr.mxu0 0.0
        %5083 = vmatpush1.msra.mxu0 0.0
        %5084 = vmatprep.subr.mxu0 0.0
        %5085 = vmatpush1.msra.mxu0 0.0
        %5086 = vmatprep.subr.mxu0 0.0
        %5087 = vmatpush1.msra.mxu0 0.0
        %5088 = vmatprep.subr.mxu0 0.0
        %5089 = vmatpush1.msra.mxu0 0.0
        %5090 = vmatprep.subr.mxu0 0.0
        %5091 = vmatpush1.msra.mxu0 0.0
        %5092 = vmatprep.subr.mxu0 0.0
        %5093 = vmatpush1.msra.mxu0 0.0
        %5094 = vmatprep.subr.mxu0 0.0
        %5095 = vmatpush1.msra.mxu0 0.0
        %5096 = vmatprep.subr.mxu0 0.0
        %5097 = vmatpush1.msra.mxu0 0.0
        %5098 = vmatprep.subr.mxu0 0.0
        %5099 = vmatpush1.msra.mxu0 0.0
        %5100 = vmatprep.subr.mxu0 0.0
        %5101 = vmatpush1.msra.mxu0 0.0
        %5102 = vmatprep.subr.mxu0 0.0
        %5103 = vmatpush1.msra.mxu0 0.0
        %5104 = vmatprep.subr.mxu0 0.0
        %5105 = vmatpush1.msra.mxu0 0.0
        %5106 = vmatprep.subr.mxu0 0.0
        %5107 = vmatpush1.msra.mxu0 0.0
        %5108 = vmatprep.subr.mxu0 0.0
        %5109 = vmatpush1.msra.mxu0 0.0
        %5110 = vmatprep.subr.mxu0 0.0
        %5111 = vmatpush1.msra.mxu0 0.0
        %5112 = vmatprep.subr.mxu0 0.0
        %5113 = vmatpush1.msra.mxu0 0.0
        %5114 = vmatprep.subr.mxu0 0.0
        %5115 = vmatpush1.msra.mxu0 0.0
        %5116 = vmatprep.subr.mxu0 0.0
        %5117 = vmatpush1.msra.mxu0 0.0
        %5118 = vmatprep.mubr.f32.mxu0 0.0
        %v5119 = vand.u32 %v4653, 4294901760
        %5120 = vmatmul.mubr.f32.gmra.mrb[0].mxu0 %v5119
        %v5121 = vpop.f32.mrb[0].mxu0
        %v5122 = vadd.f32 %v5048, %v5121
        %v5123 = vpop.f32.mrb[0].mxu0
        %v5124 = vadd.f32 %v5050, %v5123
        %5125 = vdwg.mxu0
        %v5127 = vsel %vm262, %v4649, 0
        %v5130 = vsel %vm266, %v4645, 0
        %v5133 = vsel %vm266, %v4646, 0
        %v5135 = vand.u32 %v5133, 4294901760
        %5136 = vmatprep.subr.mxu0 %v5135
        %v5137 = vand.u32 %v5130, 4294901760
        %5138 = vmatpush1.msra.mxu0 %v5137
        %5139 = vmatprep.subr.mxu0 0.0
        %5140 = vmatpush1.msra.mxu0 0.0
        %5141 = vmatprep.subr.mxu0 0.0
        %5142 = vmatpush1.msra.mxu0 0.0
        %5143 = vmatprep.subr.mxu0 0.0
        %5144 = vmatpush1.msra.mxu0 0.0
        %5145 = vmatprep.subr.mxu0 0.0
        %5146 = vmatpush1.msra.mxu0 0.0
        %5147 = vmatprep.subr.mxu0 0.0
        %5148 = vmatpush1.msra.mxu0 0.0
        %5149 = vmatprep.subr.mxu0 0.0
        %5150 = vmatpush1.msra.mxu0 0.0
        %5151 = vmatprep.subr.mxu0 0.0
        %5152 = vmatpush1.msra.mxu0 0.0
        %5153 = vmatprep.subr.mxu0 0.0
        %5154 = vmatpush1.msra.mxu0 0.0
        %5155 = vmatprep.subr.mxu0 0.0
        %5156 = vmatpush1.msra.mxu0 0.0
        %5157 = vmatprep.subr.mxu0 0.0
        %5158 = vmatpush1.msra.mxu0 0.0
        %5159 = vmatprep.subr.mxu0 0.0
        %5160 = vmatpush1.msra.mxu0 0.0
        %5161 = vmatprep.subr.mxu0 0.0
        %5162 = vmatpush1.msra.mxu0 0.0
        %5163 = vmatprep.subr.mxu0 0.0
        %5164 = vmatpush1.msra.mxu0 0.0
        %5165 = vmatprep.subr.mxu0 0.0
        %5166 = vmatpush1.msra.mxu0 0.0
        %5167 = vmatprep.subr.mxu0 0.0
        %5168 = vmatpush1.msra.mxu0 0.0
        %5169 = vmatprep.subr.mxu0 0.0
        %5170 = vmatpush1.msra.mxu0 0.0
        %5171 = vmatprep.subr.mxu0 0.0
        %5172 = vmatpush1.msra.mxu0 0.0
        %5173 = vmatprep.subr.mxu0 0.0
        %5174 = vmatpush1.msra.mxu0 0.0
        %5175 = vmatprep.subr.mxu0 0.0
        %5176 = vmatpush1.msra.mxu0 0.0
        %5177 = vmatprep.subr.mxu0 0.0
        %5178 = vmatpush1.msra.mxu0 0.0
        %5179 = vmatprep.subr.mxu0 0.0
        %5180 = vmatpush1.msra.mxu0 0.0
        %5181 = vmatprep.subr.mxu0 0.0
        %5182 = vmatpush1.msra.mxu0 0.0
        %5183 = vmatprep.subr.mxu0 0.0
        %5184 = vmatpush1.msra.mxu0 0.0
        %5185 = vmatprep.subr.mxu0 0.0
        %5186 = vmatpush1.msra.mxu0 0.0
        %5187 = vmatprep.subr.mxu0 0.0
        %5188 = vmatpush1.msra.mxu0 0.0
        %5189 = vmatprep.subr.mxu0 0.0
        %5190 = vmatpush1.msra.mxu0 0.0
        %5191 = vmatprep.subr.mxu0 0.0
        %5192 = vmatpush1.msra.mxu0 0.0
        %5193 = vmatprep.subr.mxu0 0.0
        %5194 = vmatpush1.msra.mxu0 0.0
        %5195 = vmatprep.subr.mxu0 0.0
        %5196 = vmatpush1.msra.mxu0 0.0
        %5197 = vmatprep.subr.mxu0 0.0
        %5198 = vmatpush1.msra.mxu0 0.0
        %5199 = vmatprep.subr.mxu0 0.0
        %5200 = vmatpush1.msra.mxu0 0.0
        %5201 = vmatprep.mubr.f32.mxu0 0.0
        %v5202 = vand.u32 %v5127, 4294901760
        %v5203 = vsub.f32 %v5127, %v5202
        %v5204 = vand.u32 %v5203, 4294901760
        %v5205 = vsub.f32 %v5203, %v5204
        %v5206 = vand.u32 %v5205, 4294901760
        %5207 = vmatmul.mubr.f32.gmra.mrb[0].mxu0 %v5206
        %v5208 = vpop.f32.mrb[0].mxu0
        %v5209 = vadd.f32 %v5122, %v5208
        %v5210 = vpop.f32.mrb[0].mxu0
        %v5211 = vadd.f32 %v5124, %v5210
        %5212 = vdwg.mxu0
        %v5213 = vand.u32 %v5133, 4294901760
        %v5214 = vsub.f32 %v5133, %v5213
        %v5215 = vand.u32 %v5214, 4294901760
        %v5216 = vsub.f32 %v5214, %v5215
        %v5217 = vand.u32 %v5216, 4294901760
        %5218 = vmatprep.subr.mxu0 %v5217
        %v5219 = vand.u32 %v5130, 4294901760
        %v5220 = vsub.f32 %v5130, %v5219
        %v5221 = vand.u32 %v5220, 4294901760
        %v5222 = vsub.f32 %v5220, %v5221
        %v5223 = vand.u32 %v5222, 4294901760
        %5224 = vmatpush1.msra.mxu0 %v5223
        %5225 = vmatprep.subr.mxu0 0.0
        %5226 = vmatpush1.msra.mxu0 0.0
        %5227 = vmatprep.subr.mxu0 0.0
        %5228 = vmatpush1.msra.mxu0 0.0
        %5229 = vmatprep.subr.mxu0 0.0
        %5230 = vmatpush1.msra.mxu0 0.0
        %5231 = vmatprep.subr.mxu0 0.0
        %5232 = vmatpush1.msra.mxu0 0.0
        %5233 = vmatprep.subr.mxu0 0.0
        %5234 = vmatpush1.msra.mxu0 0.0
        %5235 = vmatprep.subr.mxu0 0.0
        %5236 = vmatpush1.msra.mxu0 0.0
        %5237 = vmatprep.subr.mxu0 0.0
        %5238 = vmatpush1.msra.mxu0 0.0
        %5239 = vmatprep.subr.mxu0 0.0
        %5240 = vmatpush1.msra.mxu0 0.0
        %5241 = vmatprep.subr.mxu0 0.0
        %5242 = vmatpush1.msra.mxu0 0.0
        %5243 = vmatprep.subr.mxu0 0.0
        %5244 = vmatpush1.msra.mxu0 0.0
        %5245 = vmatprep.subr.mxu0 0.0
        %5246 = vmatpush1.msra.mxu0 0.0
        %5247 = vmatprep.subr.mxu0 0.0
        %5248 = vmatpush1.msra.mxu0 0.0
        %5249 = vmatprep.subr.mxu0 0.0
        %5250 = vmatpush1.msra.mxu0 0.0
        %5251 = vmatprep.subr.mxu0 0.0
        %5252 = vmatpush1.msra.mxu0 0.0
        %5253 = vmatprep.subr.mxu0 0.0
        %5254 = vmatpush1.msra.mxu0 0.0
        %5255 = vmatprep.subr.mxu0 0.0
        %5256 = vmatpush1.msra.mxu0 0.0
        %5257 = vmatprep.subr.mxu0 0.0
        %5258 = vmatpush1.msra.mxu0 0.0
        %5259 = vmatprep.subr.mxu0 0.0
        %5260 = vmatpush1.msra.mxu0 0.0
        %5261 = vmatprep.subr.mxu0 0.0
        %5262 = vmatpush1.msra.mxu0 0.0
        %5263 = vmatprep.subr.mxu0 0.0
        %5264 = vmatpush1.msra.mxu0 0.0
        %5265 = vmatprep.subr.mxu0 0.0
        %5266 = vmatpush1.msra.mxu0 0.0
        %5267 = vmatprep.subr.mxu0 0.0
        %5268 = vmatpush1.msra.mxu0 0.0
        %5269 = vmatprep.subr.mxu0 0.0
        %5270 = vmatpush1.msra.mxu0 0.0
        %5271 = vmatprep.subr.mxu0 0.0
        %5272 = vmatpush1.msra.mxu0 0.0
        %5273 = vmatprep.subr.mxu0 0.0
        %5274 = vmatpush1.msra.mxu0 0.0
        %5275 = vmatprep.subr.mxu0 0.0
        %5276 = vmatpush1.msra.mxu0 0.0
        %5277 = vmatprep.subr.mxu0 0.0
        %5278 = vmatpush1.msra.mxu0 0.0
        %5279 = vmatprep.subr.mxu0 0.0
        %5280 = vmatpush1.msra.mxu0 0.0
        %5281 = vmatprep.subr.mxu0 0.0
        %5282 = vmatpush1.msra.mxu0 0.0
        %5283 = vmatprep.subr.mxu0 0.0
        %5284 = vmatpush1.msra.mxu0 0.0
        %5285 = vmatprep.subr.mxu0 0.0
        %5286 = vmatpush1.msra.mxu0 0.0
        %5287 = vmatprep.mubr.f32.mxu0 0.0
        %v5288 = vand.u32 %v5127, 4294901760
        %5289 = vmatmul.mubr.f32.gmra.mrb[0].mxu0 %v5288
        %v5290 = vpop.f32.mrb[0].mxu0
        %v5291 = vadd.f32 %v5209, %v5290
        %v5292 = vpop.f32.mrb[0].mxu0
        %v5293 = vadd.f32 %v5211, %v5292
        %5294 = vdwg.mxu0
        %v5295 = vand.u32 %v5133, 4294901760
        %v5296 = vsub.f32 %v5133, %v5295
        %5297 = vmatprep.subr.mxu0 %v5296
        %v5298 = vand.u32 %v5130, 4294901760
        %v5299 = vsub.f32 %v5130, %v5298
        %5300 = vmatpush1.msra.mxu0 %v5299
        %5301 = vmatprep.subr.mxu0 0.0
        %5302 = vmatpush1.msra.mxu0 0.0
        %5303 = vmatprep.subr.mxu0 0.0
        %5304 = vmatpush1.msra.mxu0 0.0
        %5305 = vmatprep.subr.mxu0 0.0
        %5306 = vmatpush1.msra.mxu0 0.0
        %5307 = vmatprep.subr.mxu0 0.0
        %5308 = vmatpush1.msra.mxu0 0.0
        %5309 = vmatprep.subr.mxu0 0.0
        %5310 = vmatpush1.msra.mxu0 0.0
        %5311 = vmatprep.subr.mxu0 0.0
        %5312 = vmatpush1.msra.mxu0 0.0
        %5313 = vmatprep.subr.mxu0 0.0
        %5314 = vmatpush1.msra.mxu0 0.0
        %5315 = vmatprep.subr.mxu0 0.0
        %5316 = vmatpush1.msra.mxu0 0.0
        %5317 = vmatprep.subr.mxu0 0.0
        %5318 = vmatpush1.msra.mxu0 0.0
        %5319 = vmatprep.subr.mxu0 0.0
        %5320 = vmatpush1.msra.mxu0 0.0
        %5321 = vmatprep.subr.mxu0 0.0
        %5322 = vmatpush1.msra.mxu0 0.0
        %5323 = vmatprep.subr.mxu0 0.0
        %5324 = vmatpush1.msra.mxu0 0.0
        %5325 = vmatprep.subr.mxu0 0.0
        %5326 = vmatpush1.msra.mxu0 0.0
        %5327 = vmatprep.subr.mxu0 0.0
        %5328 = vmatpush1.msra.mxu0 0.0
        %5329 = vmatprep.subr.mxu0 0.0
        %5330 = vmatpush1.msra.mxu0 0.0
        %5331 = vmatprep.subr.mxu0 0.0
        %5332 = vmatpush1.msra.mxu0 0.0
        %5333 = vmatprep.subr.mxu0 0.0
        %5334 = vmatpush1.msra.mxu0 0.0
        %5335 = vmatprep.subr.mxu0 0.0
        %5336 = vmatpush1.msra.mxu0 0.0
        %5337 = vmatprep.subr.mxu0 0.0
        %5338 = vmatpush1.msra.mxu0 0.0
        %5339 = vmatprep.subr.mxu0 0.0
        %5340 = vmatpush1.msra.mxu0 0.0
        %5341 = vmatprep.subr.mxu0 0.0
        %5342 = vmatpush1.msra.mxu0 0.0
        %5343 = vmatprep.subr.mxu0 0.0
        %5344 = vmatpush1.msra.mxu0 0.0
        %5345 = vmatprep.subr.mxu0 0.0
        %5346 = vmatpush1.msra.mxu0 0.0
        %5347 = vmatprep.subr.mxu0 0.0
        %5348 = vmatpush1.msra.mxu0 0.0
        %5349 = vmatprep.subr.mxu0 0.0
        %5350 = vmatpush1.msra.mxu0 0.0
        %5351 = vmatprep.subr.mxu0 0.0
        %5352 = vmatpush1.msra.mxu0 0.0
        %5353 = vmatprep.subr.mxu0 0.0
        %5354 = vmatpush1.msra.mxu0 0.0
        %5355 = vmatprep.subr.mxu0 0.0
        %5356 = vmatpush1.msra.mxu0 0.0
        %5357 = vmatprep.subr.mxu0 0.0
        %5358 = vmatpush1.msra.mxu0 0.0
        %5359 = vmatprep.subr.mxu0 0.0
        %5360 = vmatpush1.msra.mxu0 0.0
        %5361 = vmatprep.subr.mxu0 0.0
        %5362 = vmatpush1.msra.mxu0 0.0
        %5363 = vmatprep.mubr.f32.mxu0 0.0
        %v5364 = vand.u32 %v5127, 4294901760
        %v5365 = vsub.f32 %v5127, %v5364
        %5366 = vmatmul.mubr.f32.gmra.mrb[0].mxu0 %v5365
        %v5367 = vpop.f32.mrb[0].mxu0
        %v5368 = vadd.f32 %v5291, %v5367
        %v5369 = vpop.f32.mrb[0].mxu0
        %v5370 = vadd.f32 %v5293, %v5369
        %5371 = vdwg.mxu0
        %v5372 = vand.u32 %v5133, 4294901760
        %5373 = vmatprep.subr.mxu0 %v5372
        %v5374 = vand.u32 %v5130, 4294901760
        %5375 = vmatpush1.msra.mxu0 %v5374
        %5376 = vmatprep.subr.mxu0 0.0
        %5377 = vmatpush1.msra.mxu0 0.0
        %5378 = vmatprep.subr.mxu0 0.0
        %5379 = vmatpush1.msra.mxu0 0.0
        %5380 = vmatprep.subr.mxu0 0.0
        %5381 = vmatpush1.msra.mxu0 0.0
        %5382 = vmatprep.subr.mxu0 0.0
        %5383 = vmatpush1.msra.mxu0 0.0
        %5384 = vmatprep.subr.mxu0 0.0
        %5385 = vmatpush1.msra.mxu0 0.0
        %5386 = vmatprep.subr.mxu0 0.0
        %5387 = vmatpush1.msra.mxu0 0.0
        %5388 = vmatprep.subr.mxu0 0.0
        %5389 = vmatpush1.msra.mxu0 0.0
        %5390 = vmatprep.subr.mxu0 0.0
        %5391 = vmatpush1.msra.mxu0 0.0
        %5392 = vmatprep.subr.mxu0 0.0
        %5393 = vmatpush1.msra.mxu0 0.0
        %5394 = vmatprep.subr.mxu0 0.0
        %5395 = vmatpush1.msra.mxu0 0.0
        %5396 = vmatprep.subr.mxu0 0.0
        %5397 = vmatpush1.msra.mxu0 0.0
        %5398 = vmatprep.subr.mxu0 0.0
        %5399 = vmatpush1.msra.mxu0 0.0
        %5400 = vmatprep.subr.mxu0 0.0
        %5401 = vmatpush1.msra.mxu0 0.0
        %5402 = vmatprep.subr.mxu0 0.0
        %5403 = vmatpush1.msra.mxu0 0.0
        %5404 = vmatprep.subr.mxu0 0.0
        %5405 = vmatpush1.msra.mxu0 0.0
        %5406 = vmatprep.subr.mxu0 0.0
        %5407 = vmatpush1.msra.mxu0 0.0
        %5408 = vmatprep.subr.mxu0 0.0
        %5409 = vmatpush1.msra.mxu0 0.0
        %5410 = vmatprep.subr.mxu0 0.0
        %5411 = vmatpush1.msra.mxu0 0.0
        %5412 = vmatprep.subr.mxu0 0.0
        %5413 = vmatpush1.msra.mxu0 0.0
        %5414 = vmatprep.subr.mxu0 0.0
        %5415 = vmatpush1.msra.mxu0 0.0
        %5416 = vmatprep.subr.mxu0 0.0
        %5417 = vmatpush1.msra.mxu0 0.0
        %5418 = vmatprep.subr.mxu0 0.0
        %5419 = vmatpush1.msra.mxu0 0.0
        %5420 = vmatprep.subr.mxu0 0.0
        %5421 = vmatpush1.msra.mxu0 0.0
        %5422 = vmatprep.subr.mxu0 0.0
        %5423 = vmatpush1.msra.mxu0 0.0
        %5424 = vmatprep.subr.mxu0 0.0
        %5425 = vmatpush1.msra.mxu0 0.0
        %5426 = vmatprep.subr.mxu0 0.0
        %5427 = vmatpush1.msra.mxu0 0.0
        %5428 = vmatprep.subr.mxu0 0.0
        %5429 = vmatpush1.msra.mxu0 0.0
        %5430 = vmatprep.subr.mxu0 0.0
        %5431 = vmatpush1.msra.mxu0 0.0
        %5432 = vmatprep.subr.mxu0 0.0
        %5433 = vmatpush1.msra.mxu0 0.0
        %5434 = vmatprep.subr.mxu0 0.0
        %5435 = vmatpush1.msra.mxu0 0.0
        %5436 = vmatprep.subr.mxu0 0.0
        %5437 = vmatpush1.msra.mxu0 0.0
        %5438 = vmatprep.mubr.f32.mxu0 0.0
        %v5439 = vand.u32 %v5127, 4294901760
        %v5440 = vsub.f32 %v5127, %v5439
        %v5441 = vand.u32 %v5440, 4294901760
        %5442 = vmatmul.mubr.f32.gmra.mrb[0].mxu0 %v5441
        %v5443 = vpop.f32.mrb[0].mxu0
        %v5444 = vadd.f32 %v5368, %v5443
        %v5445 = vpop.f32.mrb[0].mxu0
        %v5446 = vadd.f32 %v5370, %v5445
        %5447 = vdwg.mxu0
        %v5448 = vand.u32 %v5133, 4294901760
        %v5449 = vsub.f32 %v5133, %v5448
        %v5450 = vand.u32 %v5449, 4294901760
        %5451 = vmatprep.subr.mxu0 %v5450
        %v5452 = vand.u32 %v5130, 4294901760
        %v5453 = vsub.f32 %v5130, %v5452
        %v5454 = vand.u32 %v5453, 4294901760
        %5455 = vmatpush1.msra.mxu0 %v5454
        %5456 = vmatprep.subr.mxu0 0.0
        %5457 = vmatpush1.msra.mxu0 0.0
        %5458 = vmatprep.subr.mxu0 0.0
        %5459 = vmatpush1.msra.mxu0 0.0
        %5460 = vmatprep.subr.mxu0 0.0
        %5461 = vmatpush1.msra.mxu0 0.0
        %5462 = vmatprep.subr.mxu0 0.0
        %5463 = vmatpush1.msra.mxu0 0.0
        %5464 = vmatprep.subr.mxu0 0.0
        %5465 = vmatpush1.msra.mxu0 0.0
        %5466 = vmatprep.subr.mxu0 0.0
        %5467 = vmatpush1.msra.mxu0 0.0
        %5468 = vmatprep.subr.mxu0 0.0
        %5469 = vmatpush1.msra.mxu0 0.0
        %5470 = vmatprep.subr.mxu0 0.0
        %5471 = vmatpush1.msra.mxu0 0.0
        %5472 = vmatprep.subr.mxu0 0.0
        %5473 = vmatpush1.msra.mxu0 0.0
        %5474 = vmatprep.subr.mxu0 0.0
        %5475 = vmatpush1.msra.mxu0 0.0
        %5476 = vmatprep.subr.mxu0 0.0
        %5477 = vmatpush1.msra.mxu0 0.0
        %5478 = vmatprep.subr.mxu0 0.0
        %5479 = vmatpush1.msra.mxu0 0.0
        %5480 = vmatprep.subr.mxu0 0.0
        %5481 = vmatpush1.msra.mxu0 0.0
        %5482 = vmatprep.subr.mxu0 0.0
        %5483 = vmatpush1.msra.mxu0 0.0
        %5484 = vmatprep.subr.mxu0 0.0
        %5485 = vmatpush1.msra.mxu0 0.0
        %5486 = vmatprep.subr.mxu0 0.0
        %5487 = vmatpush1.msra.mxu0 0.0
        %5488 = vmatprep.subr.mxu0 0.0
        %5489 = vmatpush1.msra.mxu0 0.0
        %5490 = vmatprep.subr.mxu0 0.0
        %5491 = vmatpush1.msra.mxu0 0.0
        %5492 = vmatprep.subr.mxu0 0.0
        %5493 = vmatpush1.msra.mxu0 0.0
        %5494 = vmatprep.subr.mxu0 0.0
        %5495 = vmatpush1.msra.mxu0 0.0
        %5496 = vmatprep.subr.mxu0 0.0
        %5497 = vmatpush1.msra.mxu0 0.0
        %5498 = vmatprep.subr.mxu0 0.0
        %5499 = vmatpush1.msra.mxu0 0.0
        %5500 = vmatprep.subr.mxu0 0.0
        %5501 = vmatpush1.msra.mxu0 0.0
        %5502 = vmatprep.subr.mxu0 0.0
        %5503 = vmatpush1.msra.mxu0 0.0
        %5504 = vmatprep.subr.mxu0 0.0
        %5505 = vmatpush1.msra.mxu0 0.0
        %5506 = vmatprep.subr.mxu0 0.0
        %5507 = vmatpush1.msra.mxu0 0.0
        %5508 = vmatprep.subr.mxu0 0.0
        %5509 = vmatpush1.msra.mxu0 0.0
        %5510 = vmatprep.subr.mxu0 0.0
        %5511 = vmatpush1.msra.mxu0 0.0
        %5512 = vmatprep.subr.mxu0 0.0
        %5513 = vmatpush1.msra.mxu0 0.0
        %5514 = vmatprep.subr.mxu0 0.0
        %5515 = vmatpush1.msra.mxu0 0.0
        %5516 = vmatprep.subr.mxu0 0.0
        %5517 = vmatpush1.msra.mxu0 0.0
        %5518 = vmatprep.mubr.f32.mxu0 0.0
        %v5519 = vand.u32 %v5127, 4294901760
        %5520 = vmatmul.mubr.f32.gmra.mrb[0].mxu0 %v5519
        %v5521 = vpop.f32.mrb[0].mxu0
        %v5522 = vadd.f32 %v5444, %v5521
        %v5523 = vpop.f32.mrb[0].mxu0
        %v5524 = vadd.f32 %v5446, %v5523
        %5525 = vdwg.mxu0
        %v5526 = vand.u32 %v5133, 4294901760
        %5527 = vmatprep.subr.mxu0 %v5526
        %v5528 = vand.u32 %v5130, 4294901760
        %5529 = vmatpush1.msra.mxu0 %v5528
        %5530 = vmatprep.subr.mxu0 0.0
        %5531 = vmatpush1.msra.mxu0 0.0
        %5532 = vmatprep.subr.mxu0 0.0
        %5533 = vmatpush1.msra.mxu0 0.0
        %5534 = vmatprep.subr.mxu0 0.0
        %5535 = vmatpush1.msra.mxu0 0.0
        %5536 = vmatprep.subr.mxu0 0.0
        %5537 = vmatpush1.msra.mxu0 0.0
        %5538 = vmatprep.subr.mxu0 0.0
        %5539 = vmatpush1.msra.mxu0 0.0
        %5540 = vmatprep.subr.mxu0 0.0
        %5541 = vmatpush1.msra.mxu0 0.0
        %5542 = vmatprep.subr.mxu0 0.0
        %5543 = vmatpush1.msra.mxu0 0.0
        %5544 = vmatprep.subr.mxu0 0.0
        %5545 = vmatpush1.msra.mxu0 0.0
        %5546 = vmatprep.subr.mxu0 0.0
        %5547 = vmatpush1.msra.mxu0 0.0
        %5548 = vmatprep.subr.mxu0 0.0
        %5549 = vmatpush1.msra.mxu0 0.0
        %5550 = vmatprep.subr.mxu0 0.0
        %5551 = vmatpush1.msra.mxu0 0.0
        %5552 = vmatprep.subr.mxu0 0.0
        %5553 = vmatpush1.msra.mxu0 0.0
        %5554 = vmatprep.subr.mxu0 0.0
        %5555 = vmatpush1.msra.mxu0 0.0
        %5556 = vmatprep.subr.mxu0 0.0
        %5557 = vmatpush1.msra.mxu0 0.0
        %5558 = vmatprep.subr.mxu0 0.0
        %5559 = vmatpush1.msra.mxu0 0.0
        %5560 = vmatprep.subr.mxu0 0.0
        %5561 = vmatpush1.msra.mxu0 0.0
        %5562 = vmatprep.subr.mxu0 0.0
        %5563 = vmatpush1.msra.mxu0 0.0
        %5564 = vmatprep.subr.mxu0 0.0
        %5565 = vmatpush1.msra.mxu0 0.0
        %5566 = vmatprep.subr.mxu0 0.0
        %5567 = vmatpush1.msra.mxu0 0.0
        %5568 = vmatprep.subr.mxu0 0.0
        %5569 = vmatpush1.msra.mxu0 0.0
        %5570 = vmatprep.subr.mxu0 0.0
        %5571 = vmatpush1.msra.mxu0 0.0
        %5572 = vmatprep.subr.mxu0 0.0
        %5573 = vmatpush1.msra.mxu0 0.0
        %5574 = vmatprep.subr.mxu0 0.0
        %5575 = vmatpush1.msra.mxu0 0.0
        %5576 = vmatprep.subr.mxu0 0.0
        %5577 = vmatpush1.msra.mxu0 0.0
        %5578 = vmatprep.subr.mxu0 0.0
        %5579 = vmatpush1.msra.mxu0 0.0
        %5580 = vmatprep.subr.mxu0 0.0
        %5581 = vmatpush1.msra.mxu0 0.0
        %5582 = vmatprep.subr.mxu0 0.0
        %5583 = vmatpush1.msra.mxu0 0.0
        %5584 = vmatprep.subr.mxu0 0.0
        %5585 = vmatpush1.msra.mxu0 0.0
        %5586 = vmatprep.subr.mxu0 0.0
        %5587 = vmatpush1.msra.mxu0 0.0
        %5588 = vmatprep.subr.mxu0 0.0
        %5589 = vmatpush1.msra.mxu0 0.0
        %5590 = vmatprep.subr.mxu0 0.0
        %5591 = vmatpush1.msra.mxu0 0.0
        %5592 = vmatprep.mubr.f32.mxu0 0.0
        %v5593 = vand.u32 %v5127, 4294901760
        %5594 = vmatmul.mubr.f32.gmra.mrb[0].mxu0 %v5593
        %v5595 = vpop.f32.mrb[0].mxu0
        %v5596 = vadd.f32 %v5522, %v5595
        %v5597 = vpop.f32.mrb[0].mxu0
        %v5598 = vadd.f32 %v5524, %v5597
        %5599 = vdwg.mxu0
        %s5600 = scalar_lea.vmem %s2, 24
        %v5601 = vld [vmem:[%s5600] sm:$0xf]
        %v5603 = vsel %vm262, %v5601, 0
        %v5606 = vsel %vm266, %v4647, 0
        %v5609 = vsel %vm266, %v4648, 0
        %v5611 = vand.u32 %v5609, 4294901760
        %5612 = vmatprep.subr.mxu0 %v5611
        %v5613 = vand.u32 %v5606, 4294901760
        %5614 = vmatpush1.msra.mxu0 %v5613
        %5615 = vmatprep.subr.mxu0 0.0
        %5616 = vmatpush1.msra.mxu0 0.0
        %5617 = vmatprep.subr.mxu0 0.0
        %5618 = vmatpush1.msra.mxu0 0.0
        %5619 = vmatprep.subr.mxu0 0.0
        %5620 = vmatpush1.msra.mxu0 0.0
        %5621 = vmatprep.subr.mxu0 0.0
        %5622 = vmatpush1.msra.mxu0 0.0
        %5623 = vmatprep.subr.mxu0 0.0
        %5624 = vmatpush1.msra.mxu0 0.0
        %5625 = vmatprep.subr.mxu0 0.0
        %5626 = vmatpush1.msra.mxu0 0.0
        %5627 = vmatprep.subr.mxu0 0.0
        %5628 = vmatpush1.msra.mxu0 0.0
        %5629 = vmatprep.subr.mxu0 0.0
        %5630 = vmatpush1.msra.mxu0 0.0
        %5631 = vmatprep.subr.mxu0 0.0
        %5632 = vmatpush1.msra.mxu0 0.0
        %5633 = vmatprep.subr.mxu0 0.0
        %5634 = vmatpush1.msra.mxu0 0.0
        %5635 = vmatprep.subr.mxu0 0.0
        %5636 = vmatpush1.msra.mxu0 0.0
        %5637 = vmatprep.subr.mxu0 0.0
        %5638 = vmatpush1.msra.mxu0 0.0
        %5639 = vmatprep.subr.mxu0 0.0
        %5640 = vmatpush1.msra.mxu0 0.0
        %5641 = vmatprep.subr.mxu0 0.0
        %5642 = vmatpush1.msra.mxu0 0.0
        %5643 = vmatprep.subr.mxu0 0.0
        %5644 = vmatpush1.msra.mxu0 0.0
        %5645 = vmatprep.subr.mxu0 0.0
        %5646 = vmatpush1.msra.mxu0 0.0
        %5647 = vmatprep.subr.mxu0 0.0
        %5648 = vmatpush1.msra.mxu0 0.0
        %5649 = vmatprep.subr.mxu0 0.0
        %5650 = vmatpush1.msra.mxu0 0.0
        %5651 = vmatprep.subr.mxu0 0.0
        %5652 = vmatpush1.msra.mxu0 0.0
        %5653 = vmatprep.subr.mxu0 0.0
        %5654 = vmatpush1.msra.mxu0 0.0
        %5655 = vmatprep.subr.mxu0 0.0
        %5656 = vmatpush1.msra.mxu0 0.0
        %5657 = vmatprep.subr.mxu0 0.0
        %5658 = vmatpush1.msra.mxu0 0.0
        %5659 = vmatprep.subr.mxu0 0.0
        %5660 = vmatpush1.msra.mxu0 0.0
        %5661 = vmatprep.subr.mxu0 0.0
        %5662 = vmatpush1.msra.mxu0 0.0
        %5663 = vmatprep.subr.mxu0 0.0
        %5664 = vmatpush1.msra.mxu0 0.0
        %5665 = vmatprep.subr.mxu0 0.0
        %5666 = vmatpush1.msra.mxu0 0.0
        %5667 = vmatprep.subr.mxu0 0.0
        %5668 = vmatpush1.msra.mxu0 0.0
        %5669 = vmatprep.subr.mxu0 0.0
        %5670 = vmatpush1.msra.mxu0 0.0
        %5671 = vmatprep.subr.mxu0 0.0
        %5672 = vmatpush1.msra.mxu0 0.0
        %5673 = vmatprep.subr.mxu0 0.0
        %5674 = vmatpush1.msra.mxu0 0.0
        %5675 = vmatprep.subr.mxu0 0.0
        %5676 = vmatpush1.msra.mxu0 0.0
        %5677 = vmatprep.mubr.f32.mxu0 0.0
        %v5678 = vand.u32 %v5603, 4294901760
        %v5679 = vsub.f32 %v5603, %v5678
        %v5680 = vand.u32 %v5679, 4294901760
        %v5681 = vsub.f32 %v5679, %v5680
        %v5682 = vand.u32 %v5681, 4294901760
        %5683 = vmatmul.mubr.f32.gmra.mrb[0].mxu0 %v5682
        %v5684 = vpop.f32.mrb[0].mxu0
        %v5685 = vadd.f32 0.0, %v5684
        %v5686 = vpop.f32.mrb[0].mxu0
        %v5687 = vadd.f32 0.0, %v5686
        %5688 = vdwg.mxu0
        %v5689 = vand.u32 %v5609, 4294901760
        %v5690 = vsub.f32 %v5609, %v5689
        %v5691 = vand.u32 %v5690, 4294901760
        %v5692 = vsub.f32 %v5690, %v5691
        %v5693 = vand.u32 %v5692, 4294901760
        %5694 = vmatprep.subr.mxu0 %v5693
        %v5695 = vand.u32 %v5606, 4294901760
        %v5696 = vsub.f32 %v5606, %v5695
        %v5697 = vand.u32 %v5696, 4294901760
        %v5698 = vsub.f32 %v5696, %v5697
        %v5699 = vand.u32 %v5698, 4294901760
        %5700 = vmatpush1.msra.mxu0 %v5699
        %5701 = vmatprep.subr.mxu0 0.0
        %5702 = vmatpush1.msra.mxu0 0.0
        %5703 = vmatprep.subr.mxu0 0.0
        %5704 = vmatpush1.msra.mxu0 0.0
        %5705 = vmatprep.subr.mxu0 0.0
        %5706 = vmatpush1.msra.mxu0 0.0
        %5707 = vmatprep.subr.mxu0 0.0
        %5708 = vmatpush1.msra.mxu0 0.0
        %5709 = vmatprep.subr.mxu0 0.0
        %5710 = vmatpush1.msra.mxu0 0.0
        %5711 = vmatprep.subr.mxu0 0.0
        %5712 = vmatpush1.msra.mxu0 0.0
        %5713 = vmatprep.subr.mxu0 0.0
        %5714 = vmatpush1.msra.mxu0 0.0
        %5715 = vmatprep.subr.mxu0 0.0
        %5716 = vmatpush1.msra.mxu0 0.0
        %5717 = vmatprep.subr.mxu0 0.0
        %5718 = vmatpush1.msra.mxu0 0.0
        %5719 = vmatprep.subr.mxu0 0.0
        %5720 = vmatpush1.msra.mxu0 0.0
        %5721 = vmatprep.subr.mxu0 0.0
        %5722 = vmatpush1.msra.mxu0 0.0
        %5723 = vmatprep.subr.mxu0 0.0
        %5724 = vmatpush1.msra.mxu0 0.0
        %5725 = vmatprep.subr.mxu0 0.0
        %5726 = vmatpush1.msra.mxu0 0.0
        %5727 = vmatprep.subr.mxu0 0.0
        %5728 = vmatpush1.msra.mxu0 0.0
        %5729 = vmatprep.subr.mxu0 0.0
        %5730 = vmatpush1.msra.mxu0 0.0
        %5731 = vmatprep.subr.mxu0 0.0
        %5732 = vmatpush1.msra.mxu0 0.0
        %5733 = vmatprep.subr.mxu0 0.0
        %5734 = vmatpush1.msra.mxu0 0.0
        %5735 = vmatprep.subr.mxu0 0.0
        %5736 = vmatpush1.msra.mxu0 0.0
        %5737 = vmatprep.subr.mxu0 0.0
        %5738 = vmatpush1.msra.mxu0 0.0
        %5739 = vmatprep.subr.mxu0 0.0
        %5740 = vmatpush1.msra.mxu0 0.0
        %5741 = vmatprep.subr.mxu0 0.0
        %5742 = vmatpush1.msra.mxu0 0.0
        %5743 = vmatprep.subr.mxu0 0.0
        %5744 = vmatpush1.msra.mxu0 0.0
        %5745 = vmatprep.subr.mxu0 0.0
        %5746 = vmatpush1.msra.mxu0 0.0
        %5747 = vmatprep.subr.mxu0 0.0
        %5748 = vmatpush1.msra.mxu0 0.0
        %5749 = vmatprep.subr.mxu0 0.0
        %5750 = vmatpush1.msra.mxu0 0.0
        %5751 = vmatprep.subr.mxu0 0.0
        %5752 = vmatpush1.msra.mxu0 0.0
        %5753 = vmatprep.subr.mxu0 0.0
        %5754 = vmatpush1.msra.mxu0 0.0
        %5755 = vmatprep.subr.mxu0 0.0
        %5756 = vmatpush1.msra.mxu0 0.0
        %5757 = vmatprep.subr.mxu0 0.0
        %5758 = vmatpush1.msra.mxu0 0.0
        %5759 = vmatprep.subr.mxu0 0.0
        %5760 = vmatpush1.msra.mxu0 0.0
        %5761 = vmatprep.subr.mxu0 0.0
        %5762 = vmatpush1.msra.mxu0 0.0
        %5763 = vmatprep.mubr.f32.mxu0 0.0
        %v5764 = vand.u32 %v5603, 4294901760
        %5765 = vmatmul.mubr.f32.gmra.mrb[0].mxu0 %v5764
        %v5766 = vpop.f32.mrb[0].mxu0
        %v5767 = vadd.f32 %v5685, %v5766
        %v5768 = vpop.f32.mrb[0].mxu0
        %v5769 = vadd.f32 %v5687, %v5768
        %5770 = vdwg.mxu0
        %v5771 = vand.u32 %v5609, 4294901760
        %v5772 = vsub.f32 %v5609, %v5771
        %5773 = vmatprep.subr.mxu0 %v5772
        %v5774 = vand.u32 %v5606, 4294901760
        %v5775 = vsub.f32 %v5606, %v5774
        %5776 = vmatpush1.msra.mxu0 %v5775
        %5777 = vmatprep.subr.mxu0 0.0
        %5778 = vmatpush1.msra.mxu0 0.0
        %5779 = vmatprep.subr.mxu0 0.0
        %5780 = vmatpush1.msra.mxu0 0.0
        %5781 = vmatprep.subr.mxu0 0.0
        %5782 = vmatpush1.msra.mxu0 0.0
        %5783 = vmatprep.subr.mxu0 0.0
        %5784 = vmatpush1.msra.mxu0 0.0
        %5785 = vmatprep.subr.mxu0 0.0
        %5786 = vmatpush1.msra.mxu0 0.0
        %5787 = vmatprep.subr.mxu0 0.0
        %5788 = vmatpush1.msra.mxu0 0.0
        %5789 = vmatprep.subr.mxu0 0.0
        %5790 = vmatpush1.msra.mxu0 0.0
        %5791 = vmatprep.subr.mxu0 0.0
        %5792 = vmatpush1.msra.mxu0 0.0
        %5793 = vmatprep.subr.mxu0 0.0
        %5794 = vmatpush1.msra.mxu0 0.0
        %5795 = vmatprep.subr.mxu0 0.0
        %5796 = vmatpush1.msra.mxu0 0.0
        %5797 = vmatprep.subr.mxu0 0.0
        %5798 = vmatpush1.msra.mxu0 0.0
        %5799 = vmatprep.subr.mxu0 0.0
        %5800 = vmatpush1.msra.mxu0 0.0
        %5801 = vmatprep.subr.mxu0 0.0
        %5802 = vmatpush1.msra.mxu0 0.0
        %5803 = vmatprep.subr.mxu0 0.0
        %5804 = vmatpush1.msra.mxu0 0.0
        %5805 = vmatprep.subr.mxu0 0.0
        %5806 = vmatpush1.msra.mxu0 0.0
        %5807 = vmatprep.subr.mxu0 0.0
        %5808 = vmatpush1.msra.mxu0 0.0
        %5809 = vmatprep.subr.mxu0 0.0
        %5810 = vmatpush1.msra.mxu0 0.0
        %5811 = vmatprep.subr.mxu0 0.0
        %5812 = vmatpush1.msra.mxu0 0.0
        %5813 = vmatprep.subr.mxu0 0.0
        %5814 = vmatpush1.msra.mxu0 0.0
        %5815 = vmatprep.subr.mxu0 0.0
        %5816 = vmatpush1.msra.mxu0 0.0
        %5817 = vmatprep.subr.mxu0 0.0
        %5818 = vmatpush1.msra.mxu0 0.0
        %5819 = vmatprep.subr.mxu0 0.0
        %5820 = vmatpush1.msra.mxu0 0.0
        %5821 = vmatprep.subr.mxu0 0.0
        %5822 = vmatpush1.msra.mxu0 0.0
        %5823 = vmatprep.subr.mxu0 0.0
        %5824 = vmatpush1.msra.mxu0 0.0
        %5825 = vmatprep.subr.mxu0 0.0
        %5826 = vmatpush1.msra.mxu0 0.0
        %5827 = vmatprep.subr.mxu0 0.0
        %5828 = vmatpush1.msra.mxu0 0.0
        %5829 = vmatprep.subr.mxu0 0.0
        %5830 = vmatpush1.msra.mxu0 0.0
        %5831 = vmatprep.subr.mxu0 0.0
        %5832 = vmatpush1.msra.mxu0 0.0
        %5833 = vmatprep.subr.mxu0 0.0
        %5834 = vmatpush1.msra.mxu0 0.0
        %5835 = vmatprep.subr.mxu0 0.0
        %5836 = vmatpush1.msra.mxu0 0.0
        %5837 = vmatprep.subr.mxu0 0.0
        %5838 = vmatpush1.msra.mxu0 0.0
        %5839 = vmatprep.mubr.f32.mxu0 0.0
        %v5840 = vand.u32 %v5603, 4294901760
        %v5841 = vsub.f32 %v5603, %v5840
        %5842 = vmatmul.mubr.f32.gmra.mrb[0].mxu0 %v5841
        %v5843 = vpop.f32.mrb[0].mxu0
        %v5844 = vadd.f32 %v5767, %v5843
        %v5845 = vpop.f32.mrb[0].mxu0
        %v5846 = vadd.f32 %v5769, %v5845
        %5847 = vdwg.mxu0
        %v5848 = vand.u32 %v5609, 4294901760
        %5849 = vmatprep.subr.mxu0 %v5848
        %v5850 = vand.u32 %v5606, 4294901760
        %5851 = vmatpush1.msra.mxu0 %v5850
        %5852 = vmatprep.subr.mxu0 0.0
        %5853 = vmatpush1.msra.mxu0 0.0
        %5854 = vmatprep.subr.mxu0 0.0
        %5855 = vmatpush1.msra.mxu0 0.0
        %5856 = vmatprep.subr.mxu0 0.0
        %5857 = vmatpush1.msra.mxu0 0.0
        %5858 = vmatprep.subr.mxu0 0.0
        %5859 = vmatpush1.msra.mxu0 0.0
        %5860 = vmatprep.subr.mxu0 0.0
        %5861 = vmatpush1.msra.mxu0 0.0
        %5862 = vmatprep.subr.mxu0 0.0
        %5863 = vmatpush1.msra.mxu0 0.0
        %5864 = vmatprep.subr.mxu0 0.0
        %5865 = vmatpush1.msra.mxu0 0.0
        %5866 = vmatprep.subr.mxu0 0.0
        %5867 = vmatpush1.msra.mxu0 0.0
        %5868 = vmatprep.subr.mxu0 0.0
        %5869 = vmatpush1.msra.mxu0 0.0
        %5870 = vmatprep.subr.mxu0 0.0
        %5871 = vmatpush1.msra.mxu0 0.0
        %5872 = vmatprep.subr.mxu0 0.0
        %5873 = vmatpush1.msra.mxu0 0.0
        %5874 = vmatprep.subr.mxu0 0.0
        %5875 = vmatpush1.msra.mxu0 0.0
        %5876 = vmatprep.subr.mxu0 0.0
        %5877 = vmatpush1.msra.mxu0 0.0
        %5878 = vmatprep.subr.mxu0 0.0
        %5879 = vmatpush1.msra.mxu0 0.0
        %5880 = vmatprep.subr.mxu0 0.0
        %5881 = vmatpush1.msra.mxu0 0.0
        %5882 = vmatprep.subr.mxu0 0.0
        %5883 = vmatpush1.msra.mxu0 0.0
        %5884 = vmatprep.subr.mxu0 0.0
        %5885 = vmatpush1.msra.mxu0 0.0
        %5886 = vmatprep.subr.mxu0 0.0
        %5887 = vmatpush1.msra.mxu0 0.0
        %5888 = vmatprep.subr.mxu0 0.0
        %5889 = vmatpush1.msra.mxu0 0.0
        %5890 = vmatprep.subr.mxu0 0.0
        %5891 = vmatpush1.msra.mxu0 0.0
        %5892 = vmatprep.subr.mxu0 0.0
        %5893 = vmatpush1.msra.mxu0 0.0
        %5894 = vmatprep.subr.mxu0 0.0
        %5895 = vmatpush1.msra.mxu0 0.0
        %5896 = vmatprep.subr.mxu0 0.0
        %5897 = vmatpush1.msra.mxu0 0.0
        %5898 = vmatprep.subr.mxu0 0.0
        %5899 = vmatpush1.msra.mxu0 0.0
        %5900 = vmatprep.subr.mxu0 0.0
        %5901 = vmatpush1.msra.mxu0 0.0
        %5902 = vmatprep.subr.mxu0 0.0
        %5903 = vmatpush1.msra.mxu0 0.0
        %5904 = vmatprep.subr.mxu0 0.0
        %5905 = vmatpush1.msra.mxu0 0.0
        %5906 = vmatprep.subr.mxu0 0.0
        %5907 = vmatpush1.msra.mxu0 0.0
        %5908 = vmatprep.subr.mxu0 0.0
        %5909 = vmatpush1.msra.mxu0 0.0
        %5910 = vmatprep.subr.mxu0 0.0
        %5911 = vmatpush1.msra.mxu0 0.0
        %5912 = vmatprep.subr.mxu0 0.0
        %5913 = vmatpush1.msra.mxu0 0.0
        %5914 = vmatprep.mubr.f32.mxu0 0.0
        %v5915 = vand.u32 %v5603, 4294901760
        %v5916 = vsub.f32 %v5603, %v5915
        %v5917 = vand.u32 %v5916, 4294901760
        %5918 = vmatmul.mubr.f32.gmra.mrb[0].mxu0 %v5917
        %v5919 = vpop.f32.mrb[0].mxu0
        %v5920 = vadd.f32 %v5844, %v5919
        %v5921 = vpop.f32.mrb[0].mxu0
        %v5922 = vadd.f32 %v5846, %v5921
        %5923 = vdwg.mxu0
        %v5924 = vand.u32 %v5609, 4294901760
        %v5925 = vsub.f32 %v5609, %v5924
        %v5926 = vand.u32 %v5925, 4294901760
        %5927 = vmatprep.subr.mxu0 %v5926
        %v5928 = vand.u32 %v5606, 4294901760
        %v5929 = vsub.f32 %v5606, %v5928
        %v5930 = vand.u32 %v5929, 4294901760
        %5931 = vmatpush1.msra.mxu0 %v5930
        %5932 = vmatprep.subr.mxu0 0.0
        %5933 = vmatpush1.msra.mxu0 0.0
        %5934 = vmatprep.subr.mxu0 0.0
        %5935 = vmatpush1.msra.mxu0 0.0
        %5936 = vmatprep.subr.mxu0 0.0
        %5937 = vmatpush1.msra.mxu0 0.0
        %5938 = vmatprep.subr.mxu0 0.0
        %5939 = vmatpush1.msra.mxu0 0.0
        %5940 = vmatprep.subr.mxu0 0.0
        %5941 = vmatpush1.msra.mxu0 0.0
        %5942 = vmatprep.subr.mxu0 0.0
        %5943 = vmatpush1.msra.mxu0 0.0
        %5944 = vmatprep.subr.mxu0 0.0
        %5945 = vmatpush1.msra.mxu0 0.0
        %5946 = vmatprep.subr.mxu0 0.0
        %5947 = vmatpush1.msra.mxu0 0.0
        %5948 = vmatprep.subr.mxu0 0.0
        %5949 = vmatpush1.msra.mxu0 0.0
        %5950 = vmatprep.subr.mxu0 0.0
        %5951 = vmatpush1.msra.mxu0 0.0
        %5952 = vmatprep.subr.mxu0 0.0
        %5953 = vmatpush1.msra.mxu0 0.0
        %5954 = vmatprep.subr.mxu0 0.0
        %5955 = vmatpush1.msra.mxu0 0.0
        %5956 = vmatprep.subr.mxu0 0.0
        %5957 = vmatpush1.msra.mxu0 0.0
        %5958 = vmatprep.subr.mxu0 0.0
        %5959 = vmatpush1.msra.mxu0 0.0
        %5960 = vmatprep.subr.mxu0 0.0
        %5961 = vmatpush1.msra.mxu0 0.0
        %5962 = vmatprep.subr.mxu0 0.0
        %5963 = vmatpush1.msra.mxu0 0.0
        %5964 = vmatprep.subr.mxu0 0.0
        %5965 = vmatpush1.msra.mxu0 0.0
        %5966 = vmatprep.subr.mxu0 0.0
        %5967 = vmatpush1.msra.mxu0 0.0
        %5968 = vmatprep.subr.mxu0 0.0
        %5969 = vmatpush1.msra.mxu0 0.0
        %5970 = vmatprep.subr.mxu0 0.0
        %5971 = vmatpush1.msra.mxu0 0.0
        %5972 = vmatprep.subr.mxu0 0.0
        %5973 = vmatpush1.msra.mxu0 0.0
        %5974 = vmatprep.subr.mxu0 0.0
        %5975 = vmatpush1.msra.mxu0 0.0
        %5976 = vmatprep.subr.mxu0 0.0
        %5977 = vmatpush1.msra.mxu0 0.0
        %5978 = vmatprep.subr.mxu0 0.0
        %5979 = vmatpush1.msra.mxu0 0.0
        %5980 = vmatprep.subr.mxu0 0.0
        %5981 = vmatpush1.msra.mxu0 0.0
        %5982 = vmatprep.subr.mxu0 0.0
        %5983 = vmatpush1.msra.mxu0 0.0
        %5984 = vmatprep.subr.mxu0 0.0
        %5985 = vmatpush1.msra.mxu0 0.0
        %5986 = vmatprep.subr.mxu0 0.0
        %5987 = vmatpush1.msra.mxu0 0.0
        %5988 = vmatprep.subr.mxu0 0.0
        %5989 = vmatpush1.msra.mxu0 0.0
        %5990 = vmatprep.subr.mxu0 0.0
        %5991 = vmatpush1.msra.mxu0 0.0
        %5992 = vmatprep.subr.mxu0 0.0
        %5993 = vmatpush1.msra.mxu0 0.0
        %5994 = vmatprep.mubr.f32.mxu0 0.0
        %v5995 = vand.u32 %v5603, 4294901760
        %5996 = vmatmul.mubr.f32.gmra.mrb[0].mxu0 %v5995
        %v5997 = vpop.f32.mrb[0].mxu0
        %v5998 = vadd.f32 %v5920, %v5997
        %v5999 = vpop.f32.mrb[0].mxu0
        %v6000 = vadd.f32 %v5922, %v5999
        %6001 = vdwg.mxu0
        %v6002 = vand.u32 %v5609, 4294901760
        %6003 = vmatprep.subr.mxu0 %v6002
        %v6004 = vand.u32 %v5606, 4294901760
        %6005 = vmatpush1.msra.mxu0 %v6004
        %6006 = vmatprep.subr.mxu0 0.0
        %6007 = vmatpush1.msra.mxu0 0.0
        %6008 = vmatprep.subr.mxu0 0.0
        %6009 = vmatpush1.msra.mxu0 0.0
        %6010 = vmatprep.subr.mxu0 0.0
        %6011 = vmatpush1.msra.mxu0 0.0
        %6012 = vmatprep.subr.mxu0 0.0
        %6013 = vmatpush1.msra.mxu0 0.0
        %6014 = vmatprep.subr.mxu0 0.0
        %6015 = vmatpush1.msra.mxu0 0.0
        %6016 = vmatprep.subr.mxu0 0.0
        %6017 = vmatpush1.msra.mxu0 0.0
        %6018 = vmatprep.subr.mxu0 0.0
        %6019 = vmatpush1.msra.mxu0 0.0
        %6020 = vmatprep.subr.mxu0 0.0
        %6021 = vmatpush1.msra.mxu0 0.0
        %6022 = vmatprep.subr.mxu0 0.0
        %6023 = vmatpush1.msra.mxu0 0.0
        %6024 = vmatprep.subr.mxu0 0.0
        %6025 = vmatpush1.msra.mxu0 0.0
        %6026 = vmatprep.subr.mxu0 0.0
        %6027 = vmatpush1.msra.mxu0 0.0
        %6028 = vmatprep.subr.mxu0 0.0
        %6029 = vmatpush1.msra.mxu0 0.0
        %6030 = vmatprep.subr.mxu0 0.0
        %6031 = vmatpush1.msra.mxu0 0.0
        %6032 = vmatprep.subr.mxu0 0.0
        %6033 = vmatpush1.msra.mxu0 0.0
        %6034 = vmatprep.subr.mxu0 0.0
        %6035 = vmatpush1.msra.mxu0 0.0
        %6036 = vmatprep.subr.mxu0 0.0
        %6037 = vmatpush1.msra.mxu0 0.0
        %6038 = vmatprep.subr.mxu0 0.0
        %6039 = vmatpush1.msra.mxu0 0.0
        %6040 = vmatprep.subr.mxu0 0.0
        %6041 = vmatpush1.msra.mxu0 0.0
        %6042 = vmatprep.subr.mxu0 0.0
        %6043 = vmatpush1.msra.mxu0 0.0
        %6044 = vmatprep.subr.mxu0 0.0
        %6045 = vmatpush1.msra.mxu0 0.0
        %6046 = vmatprep.subr.mxu0 0.0
        %6047 = vmatpush1.msra.mxu0 0.0
        %6048 = vmatprep.subr.mxu0 0.0
        %6049 = vmatpush1.msra.mxu0 0.0
        %6050 = vmatprep.subr.mxu0 0.0
        %6051 = vmatpush1.msra.mxu0 0.0
        %6052 = vmatprep.subr.mxu0 0.0
        %6053 = vmatpush1.msra.mxu0 0.0
        %6054 = vmatprep.subr.mxu0 0.0
        %6055 = vmatpush1.msra.mxu0 0.0
        %6056 = vmatprep.subr.mxu0 0.0
        %6057 = vmatpush1.msra.mxu0 0.0
        %6058 = vmatprep.subr.mxu0 0.0
        %6059 = vmatpush1.msra.mxu0 0.0
        %6060 = vmatprep.subr.mxu0 0.0
        %6061 = vmatpush1.msra.mxu0 0.0
        %6062 = vmatprep.subr.mxu0 0.0
        %6063 = vmatpush1.msra.mxu0 0.0
        %6064 = vmatprep.subr.mxu0 0.0
        %6065 = vmatpush1.msra.mxu0 0.0
        %6066 = vmatprep.subr.mxu0 0.0
        %6067 = vmatpush1.msra.mxu0 0.0
        %6068 = vmatprep.mubr.f32.mxu0 0.0
        %v6069 = vand.u32 %v5603, 4294901760
        %6070 = vmatmul.mubr.f32.gmra.mrb[0].mxu0 %v6069
        %v6071 = vpop.f32.mrb[0].mxu0
        %v6072 = vadd.f32 %v5998, %v6071
        %v6073 = vpop.f32.mrb[0].mxu0
        %v6074 = vadd.f32 %v6000, %v6073
        %6075 = vdwg.mxu0
        %v6076 = vadd.f32 %v5596, %v6072
        %v6077 = vadd.f32 %v5598, %v6074
        %6078 = vrot.lane.b32.xlu0 %v4615, 16
        %v6079 = vpop.permute.xlu0 %6078
        %6080 = vrot.lane.b32.xlu0 %v4616, 16
        %v6081 = vpop.permute.xlu0 %6080
        %v6082 = vsel %vm200, %v6079, %v6081
        %v6083 = vsel %vm200, %v6081, %v6079
        %6084 = vrot.lane.b32.xlu0 %v4615, 112
        %v6085 = vpop.permute.xlu0 %6084
        %6086 = vrot.lane.b32.xlu0 %v4616, 112
        %v6087 = vpop.permute.xlu0 %6086
        %v6088 = vsel %vm244, %v6085, %v6087
        %v6089 = vsel %vm244, %v6087, %v6085
        %v6090 = vsel %vm249, %v6088, %v6083
        %v6091 = vsel %vm250, %v6089, %v6082
        %v6092 = vsel %vm255, %v6083, %v6088
        %v6093 = vsel %vm256, %v6082, %v6089
        %s6094 = scalar_lea.vmem %s2, 4
        %v6095 = vld [vmem:[%s6094] sm:$0xf]
        %v6097 = vsel %vm262, %v6095, 0
        %v6100 = vsel %vm266, %v6090, 0
        %v6103 = vsel %vm266, %v6091, 0
        %v6105 = vand.u32 %v6103, 4294901760
        %6106 = vmatprep.subr.mxu0 %v6105
        %v6107 = vand.u32 %v6100, 4294901760
        %6108 = vmatpush1.msra.mxu0 %v6107
        %6109 = vmatprep.subr.mxu0 0.0
        %6110 = vmatpush1.msra.mxu0 0.0
        %6111 = vmatprep.subr.mxu0 0.0
        %6112 = vmatpush1.msra.mxu0 0.0
        %6113 = vmatprep.subr.mxu0 0.0
        %6114 = vmatpush1.msra.mxu0 0.0
        %6115 = vmatprep.subr.mxu0 0.0
        %6116 = vmatpush1.msra.mxu0 0.0
        %6117 = vmatprep.subr.mxu0 0.0
        %6118 = vmatpush1.msra.mxu0 0.0
        %6119 = vmatprep.subr.mxu0 0.0
        %6120 = vmatpush1.msra.mxu0 0.0
        %6121 = vmatprep.subr.mxu0 0.0
        %6122 = vmatpush1.msra.mxu0 0.0
        %6123 = vmatprep.subr.mxu0 0.0
        %6124 = vmatpush1.msra.mxu0 0.0
        %6125 = vmatprep.subr.mxu0 0.0
        %6126 = vmatpush1.msra.mxu0 0.0
        %6127 = vmatprep.subr.mxu0 0.0
        %6128 = vmatpush1.msra.mxu0 0.0
        %6129 = vmatprep.subr.mxu0 0.0
        %6130 = vmatpush1.msra.mxu0 0.0
        %6131 = vmatprep.subr.mxu0 0.0
        %6132 = vmatpush1.msra.mxu0 0.0
        %6133 = vmatprep.subr.mxu0 0.0
        %6134 = vmatpush1.msra.mxu0 0.0
        %6135 = vmatprep.subr.mxu0 0.0
        %6136 = vmatpush1.msra.mxu0 0.0
        %6137 = vmatprep.subr.mxu0 0.0
        %6138 = vmatpush1.msra.mxu0 0.0
        %6139 = vmatprep.subr.mxu0 0.0
        %6140 = vmatpush1.msra.mxu0 0.0
        %6141 = vmatprep.subr.mxu0 0.0
        %6142 = vmatpush1.msra.mxu0 0.0
        %6143 = vmatprep.subr.mxu0 0.0
        %6144 = vmatpush1.msra.mxu0 0.0
        %6145 = vmatprep.subr.mxu0 0.0
        %6146 = vmatpush1.msra.mxu0 0.0
        %6147 = vmatprep.subr.mxu0 0.0
        %6148 = vmatpush1.msra.mxu0 0.0
        %6149 = vmatprep.subr.mxu0 0.0
        %6150 = vmatpush1.msra.mxu0 0.0
        %6151 = vmatprep.subr.mxu0 0.0
        %6152 = vmatpush1.msra.mxu0 0.0
        %6153 = vmatprep.subr.mxu0 0.0
        %6154 = vmatpush1.msra.mxu0 0.0
        %6155 = vmatprep.subr.mxu0 0.0
        %6156 = vmatpush1.msra.mxu0 0.0
        %6157 = vmatprep.subr.mxu0 0.0
        %6158 = vmatpush1.msra.mxu0 0.0
        %6159 = vmatprep.subr.mxu0 0.0
        %6160 = vmatpush1.msra.mxu0 0.0
        %6161 = vmatprep.subr.mxu0 0.0
        %6162 = vmatpush1.msra.mxu0 0.0
        %6163 = vmatprep.subr.mxu0 0.0
        %6164 = vmatpush1.msra.mxu0 0.0
        %6165 = vmatprep.subr.mxu0 0.0
        %6166 = vmatpush1.msra.mxu0 0.0
        %6167 = vmatprep.subr.mxu0 0.0
        %6168 = vmatpush1.msra.mxu0 0.0
        %6169 = vmatprep.subr.mxu0 0.0
        %6170 = vmatpush1.msra.mxu0 0.0
        %6171 = vmatprep.mubr.f32.mxu0 0.0
        %v6172 = vand.u32 %v6097, 4294901760
        %v6173 = vsub.f32 %v6097, %v6172
        %v6174 = vand.u32 %v6173, 4294901760
        %v6175 = vsub.f32 %v6173, %v6174
        %v6176 = vand.u32 %v6175, 4294901760
        %6177 = vmatmul.mubr.f32.gmra.mrb[0].mxu0 %v6176
        %v6178 = vpop.f32.mrb[0].mxu0
        %v6179 = vadd.f32 0.0, %v6178
        %v6180 = vpop.f32.mrb[0].mxu0
        %v6181 = vadd.f32 0.0, %v6180
        %6182 = vdwg.mxu0
        %v6183 = vand.u32 %v6103, 4294901760
        %v6184 = vsub.f32 %v6103, %v6183
        %v6185 = vand.u32 %v6184, 4294901760
        %v6186 = vsub.f32 %v6184, %v6185
        %v6187 = vand.u32 %v6186, 4294901760
        %6188 = vmatprep.subr.mxu0 %v6187
        %v6189 = vand.u32 %v6100, 4294901760
        %v6190 = vsub.f32 %v6100, %v6189
        %v6191 = vand.u32 %v6190, 4294901760
        %v6192 = vsub.f32 %v6190, %v6191
        %v6193 = vand.u32 %v6192, 4294901760
        %6194 = vmatpush1.msra.mxu0 %v6193
        %6195 = vmatprep.subr.mxu0 0.0
        %6196 = vmatpush1.msra.mxu0 0.0
        %6197 = vmatprep.subr.mxu0 0.0
        %6198 = vmatpush1.msra.mxu0 0.0
        %6199 = vmatprep.subr.mxu0 0.0
        %6200 = vmatpush1.msra.mxu0 0.0
        %6201 = vmatprep.subr.mxu0 0.0
        %6202 = vmatpush1.msra.mxu0 0.0
        %6203 = vmatprep.subr.mxu0 0.0
        %6204 = vmatpush1.msra.mxu0 0.0
        %6205 = vmatprep.subr.mxu0 0.0
        %6206 = vmatpush1.msra.mxu0 0.0
        %6207 = vmatprep.subr.mxu0 0.0
        %6208 = vmatpush1.msra.mxu0 0.0
        %6209 = vmatprep.subr.mxu0 0.0
        %6210 = vmatpush1.msra.mxu0 0.0
        %6211 = vmatprep.subr.mxu0 0.0
        %6212 = vmatpush1.msra.mxu0 0.0
        %6213 = vmatprep.subr.mxu0 0.0
        %6214 = vmatpush1.msra.mxu0 0.0
        %6215 = vmatprep.subr.mxu0 0.0
        %6216 = vmatpush1.msra.mxu0 0.0
        %6217 = vmatprep.subr.mxu0 0.0
        %6218 = vmatpush1.msra.mxu0 0.0
        %6219 = vmatprep.subr.mxu0 0.0
        %6220 = vmatpush1.msra.mxu0 0.0
        %6221 = vmatprep.subr.mxu0 0.0
        %6222 = vmatpush1.msra.mxu0 0.0
        %6223 = vmatprep.subr.mxu0 0.0
        %6224 = vmatpush1.msra.mxu0 0.0
        %6225 = vmatprep.subr.mxu0 0.0
        %6226 = vmatpush1.msra.mxu0 0.0
        %6227 = vmatprep.subr.mxu0 0.0
        %6228 = vmatpush1.msra.mxu0 0.0
        %6229 = vmatprep.subr.mxu0 0.0
        %6230 = vmatpush1.msra.mxu0 0.0
        %6231 = vmatprep.subr.mxu0 0.0
        %6232 = vmatpush1.msra.mxu0 0.0
        %6233 = vmatprep.subr.mxu0 0.0
        %6234 = vmatpush1.msra.mxu0 0.0
        %6235 = vmatprep.subr.mxu0 0.0
        %6236 = vmatpush1.msra.mxu0 0.0
        %6237 = vmatprep.subr.mxu0 0.0
        %6238 = vmatpush1.msra.mxu0 0.0
        %6239 = vmatprep.subr.mxu0 0.0
        %6240 = vmatpush1.msra.mxu0 0.0
        %6241 = vmatprep.subr.mxu0 0.0
        %6242 = vmatpush1.msra.mxu0 0.0
        %6243 = vmatprep.subr.mxu0 0.0
        %6244 = vmatpush1.msra.mxu0 0.0
        %6245 = vmatprep.subr.mxu0 0.0
        %6246 = vmatpush1.msra.mxu0 0.0
        %6247 = vmatprep.subr.mxu0 0.0
        %6248 = vmatpush1.msra.mxu0 0.0
        %6249 = vmatprep.subr.mxu0 0.0
        %6250 = vmatpush1.msra.mxu0 0.0
        %6251 = vmatprep.subr.mxu0 0.0
        %6252 = vmatpush1.msra.mxu0 0.0
        %6253 = vmatprep.subr.mxu0 0.0
        %6254 = vmatpush1.msra.mxu0 0.0
        %6255 = vmatprep.subr.mxu0 0.0
        %6256 = vmatpush1.msra.mxu0 0.0
        %6257 = vmatprep.mubr.f32.mxu0 0.0
        %v6258 = vand.u32 %v6097, 4294901760
        %6259 = vmatmul.mubr.f32.gmra.mrb[0].mxu0 %v6258
        %v6260 = vpop.f32.mrb[0].mxu0
        %v6261 = vadd.f32 %v6179, %v6260
        %v6262 = vpop.f32.mrb[0].mxu0
        %v6263 = vadd.f32 %v6181, %v6262
        %6264 = vdwg.mxu0
        %v6265 = vand.u32 %v6103, 4294901760
        %v6266 = vsub.f32 %v6103, %v6265
        %6267 = vmatprep.subr.mxu0 %v6266
        %v6268 = vand.u32 %v6100, 4294901760
        %v6269 = vsub.f32 %v6100, %v6268
        %6270 = vmatpush1.msra.mxu0 %v6269
        %6271 = vmatprep.subr.mxu0 0.0
        %6272 = vmatpush1.msra.mxu0 0.0
        %6273 = vmatprep.subr.mxu0 0.0
        %6274 = vmatpush1.msra.mxu0 0.0
        %6275 = vmatprep.subr.mxu0 0.0
        %6276 = vmatpush1.msra.mxu0 0.0
        %6277 = vmatprep.subr.mxu0 0.0
        %6278 = vmatpush1.msra.mxu0 0.0
        %6279 = vmatprep.subr.mxu0 0.0
        %6280 = vmatpush1.msra.mxu0 0.0
        %6281 = vmatprep.subr.mxu0 0.0
        %6282 = vmatpush1.msra.mxu0 0.0
        %6283 = vmatprep.subr.mxu0 0.0
        %6284 = vmatpush1.msra.mxu0 0.0
        %6285 = vmatprep.subr.mxu0 0.0
        %6286 = vmatpush1.msra.mxu0 0.0
        %6287 = vmatprep.subr.mxu0 0.0
        %6288 = vmatpush1.msra.mxu0 0.0
        %6289 = vmatprep.subr.mxu0 0.0
        %6290 = vmatpush1.msra.mxu0 0.0
        %6291 = vmatprep.subr.mxu0 0.0
        %6292 = vmatpush1.msra.mxu0 0.0
        %6293 = vmatprep.subr.mxu0 0.0
        %6294 = vmatpush1.msra.mxu0 0.0
        %6295 = vmatprep.subr.mxu0 0.0
        %6296 = vmatpush1.msra.mxu0 0.0
        %6297 = vmatprep.subr.mxu0 0.0
        %6298 = vmatpush1.msra.mxu0 0.0
        %6299 = vmatprep.subr.mxu0 0.0
        %6300 = vmatpush1.msra.mxu0 0.0
        %6301 = vmatprep.subr.mxu0 0.0
        %6302 = vmatpush1.msra.mxu0 0.0
        %6303 = vmatprep.subr.mxu0 0.0
        %6304 = vmatpush1.msra.mxu0 0.0
        %6305 = vmatprep.subr.mxu0 0.0
        %6306 = vmatpush1.msra.mxu0 0.0
        %6307 = vmatprep.subr.mxu0 0.0
        %6308 = vmatpush1.msra.mxu0 0.0
        %6309 = vmatprep.subr.mxu0 0.0
        %6310 = vmatpush1.msra.mxu0 0.0
        %6311 = vmatprep.subr.mxu0 0.0
        %6312 = vmatpush1.msra.mxu0 0.0
        %6313 = vmatprep.subr.mxu0 0.0
        %6314 = vmatpush1.msra.mxu0 0.0
        %6315 = vmatprep.subr.mxu0 0.0
        %6316 = vmatpush1.msra.mxu0 0.0
        %6317 = vmatprep.subr.mxu0 0.0
        %6318 = vmatpush1.msra.mxu0 0.0
        %6319 = vmatprep.subr.mxu0 0.0
        %6320 = vmatpush1.msra.mxu0 0.0
        %6321 = vmatprep.subr.mxu0 0.0
        %6322 = vmatpush1.msra.mxu0 0.0
        %6323 = vmatprep.subr.mxu0 0.0
        %6324 = vmatpush1.msra.mxu0 0.0
        %6325 = vmatprep.subr.mxu0 0.0
        %6326 = vmatpush1.msra.mxu0 0.0
        %6327 = vmatprep.subr.mxu0 0.0
        %6328 = vmatpush1.msra.mxu0 0.0
        %6329 = vmatprep.subr.mxu0 0.0
        %6330 = vmatpush1.msra.mxu0 0.0
        %6331 = vmatprep.subr.mxu0 0.0
        %6332 = vmatpush1.msra.mxu0 0.0
        %6333 = vmatprep.mubr.f32.mxu0 0.0
        %v6334 = vand.u32 %v6097, 4294901760
        %v6335 = vsub.f32 %v6097, %v6334
        %6336 = vmatmul.mubr.f32.gmra.mrb[0].mxu0 %v6335
        %v6337 = vpop.f32.mrb[0].mxu0
        %v6338 = vadd.f32 %v6261, %v6337
        %v6339 = vpop.f32.mrb[0].mxu0
        %v6340 = vadd.f32 %v6263, %v6339
        %6341 = vdwg.mxu0
        %v6342 = vand.u32 %v6103, 4294901760
        %6343 = vmatprep.subr.mxu0 %v6342
        %v6344 = vand.u32 %v6100, 4294901760
        %6345 = vmatpush1.msra.mxu0 %v6344
        %6346 = vmatprep.subr.mxu0 0.0
        %6347 = vmatpush1.msra.mxu0 0.0
        %6348 = vmatprep.subr.mxu0 0.0
        %6349 = vmatpush1.msra.mxu0 0.0
        %6350 = vmatprep.subr.mxu0 0.0
        %6351 = vmatpush1.msra.mxu0 0.0
        %6352 = vmatprep.subr.mxu0 0.0
        %6353 = vmatpush1.msra.mxu0 0.0
        %6354 = vmatprep.subr.mxu0 0.0
        %6355 = vmatpush1.msra.mxu0 0.0
        %6356 = vmatprep.subr.mxu0 0.0
        %6357 = vmatpush1.msra.mxu0 0.0
        %6358 = vmatprep.subr.mxu0 0.0
        %6359 = vmatpush1.msra.mxu0 0.0
        %6360 = vmatprep.subr.mxu0 0.0
        %6361 = vmatpush1.msra.mxu0 0.0
        %6362 = vmatprep.subr.mxu0 0.0
        %6363 = vmatpush1.msra.mxu0 0.0
        %6364 = vmatprep.subr.mxu0 0.0
        %6365 = vmatpush1.msra.mxu0 0.0
        %6366 = vmatprep.subr.mxu0 0.0
        %6367 = vmatpush1.msra.mxu0 0.0
        %6368 = vmatprep.subr.mxu0 0.0
        %6369 = vmatpush1.msra.mxu0 0.0
        %6370 = vmatprep.subr.mxu0 0.0
        %6371 = vmatpush1.msra.mxu0 0.0
        %6372 = vmatprep.subr.mxu0 0.0
        %6373 = vmatpush1.msra.mxu0 0.0
        %6374 = vmatprep.subr.mxu0 0.0
        %6375 = vmatpush1.msra.mxu0 0.0
        %6376 = vmatprep.subr.mxu0 0.0
        %6377 = vmatpush1.msra.mxu0 0.0
        %6378 = vmatprep.subr.mxu0 0.0
        %6379 = vmatpush1.msra.mxu0 0.0
        %6380 = vmatprep.subr.mxu0 0.0
        %6381 = vmatpush1.msra.mxu0 0.0
        %6382 = vmatprep.subr.mxu0 0.0
        %6383 = vmatpush1.msra.mxu0 0.0
        %6384 = vmatprep.subr.mxu0 0.0
        %6385 = vmatpush1.msra.mxu0 0.0
        %6386 = vmatprep.subr.mxu0 0.0
        %6387 = vmatpush1.msra.mxu0 0.0
        %6388 = vmatprep.subr.mxu0 0.0
        %6389 = vmatpush1.msra.mxu0 0.0
        %6390 = vmatprep.subr.mxu0 0.0
        %6391 = vmatpush1.msra.mxu0 0.0
        %6392 = vmatprep.subr.mxu0 0.0
        %6393 = vmatpush1.msra.mxu0 0.0
        %6394 = vmatprep.subr.mxu0 0.0
        %6395 = vmatpush1.msra.mxu0 0.0
        %6396 = vmatprep.subr.mxu0 0.0
        %6397 = vmatpush1.msra.mxu0 0.0
        %6398 = vmatprep.subr.mxu0 0.0
        %6399 = vmatpush1.msra.mxu0 0.0
        %6400 = vmatprep.subr.mxu0 0.0
        %6401 = vmatpush1.msra.mxu0 0.0
        %6402 = vmatprep.subr.mxu0 0.0
        %6403 = vmatpush1.msra.mxu0 0.0
        %6404 = vmatprep.subr.mxu0 0.0
        %6405 = vmatpush1.msra.mxu0 0.0
        %6406 = vmatprep.subr.mxu0 0.0
        %6407 = vmatpush1.msra.mxu0 0.0
        %6408 = vmatprep.mubr.f32.mxu0 0.0
        %v6409 = vand.u32 %v6097, 4294901760
        %v6410 = vsub.f32 %v6097, %v6409
        %v6411 = vand.u32 %v6410, 4294901760
        %6412 = vmatmul.mubr.f32.gmra.mrb[0].mxu0 %v6411
        %v6413 = vpop.f32.mrb[0].mxu0
        %v6414 = vadd.f32 %v6338, %v6413
        %v6415 = vpop.f32.mrb[0].mxu0
        %v6416 = vadd.f32 %v6340, %v6415
        %6417 = vdwg.mxu0
        %v6418 = vand.u32 %v6103, 4294901760
        %v6419 = vsub.f32 %v6103, %v6418
        %v6420 = vand.u32 %v6419, 4294901760
        %6421 = vmatprep.subr.mxu0 %v6420
        %v6422 = vand.u32 %v6100, 4294901760
        %v6423 = vsub.f32 %v6100, %v6422
        %v6424 = vand.u32 %v6423, 4294901760
        %6425 = vmatpush1.msra.mxu0 %v6424
        %6426 = vmatprep.subr.mxu0 0.0
        %6427 = vmatpush1.msra.mxu0 0.0
        %6428 = vmatprep.subr.mxu0 0.0
        %6429 = vmatpush1.msra.mxu0 0.0
        %6430 = vmatprep.subr.mxu0 0.0
        %6431 = vmatpush1.msra.mxu0 0.0
        %6432 = vmatprep.subr.mxu0 0.0
        %6433 = vmatpush1.msra.mxu0 0.0
        %6434 = vmatprep.subr.mxu0 0.0
        %6435 = vmatpush1.msra.mxu0 0.0
        %6436 = vmatprep.subr.mxu0 0.0
        %6437 = vmatpush1.msra.mxu0 0.0
        %6438 = vmatprep.subr.mxu0 0.0
        %6439 = vmatpush1.msra.mxu0 0.0
        %6440 = vmatprep.subr.mxu0 0.0
        %6441 = vmatpush1.msra.mxu0 0.0
        %6442 = vmatprep.subr.mxu0 0.0
        %6443 = vmatpush1.msra.mxu0 0.0
        %6444 = vmatprep.subr.mxu0 0.0
        %6445 = vmatpush1.msra.mxu0 0.0
        %6446 = vmatprep.subr.mxu0 0.0
        %6447 = vmatpush1.msra.mxu0 0.0
        %6448 = vmatprep.subr.mxu0 0.0
        %6449 = vmatpush1.msra.mxu0 0.0
        %6450 = vmatprep.subr.mxu0 0.0
        %6451 = vmatpush1.msra.mxu0 0.0
        %6452 = vmatprep.subr.mxu0 0.0
        %6453 = vmatpush1.msra.mxu0 0.0
        %6454 = vmatprep.subr.mxu0 0.0
        %6455 = vmatpush1.msra.mxu0 0.0
        %6456 = vmatprep.subr.mxu0 0.0
        %6457 = vmatpush1.msra.mxu0 0.0
        %6458 = vmatprep.subr.mxu0 0.0
        %6459 = vmatpush1.msra.mxu0 0.0
        %6460 = vmatprep.subr.mxu0 0.0
        %6461 = vmatpush1.msra.mxu0 0.0
        %6462 = vmatprep.subr.mxu0 0.0
        %6463 = vmatpush1.msra.mxu0 0.0
        %6464 = vmatprep.subr.mxu0 0.0
        %6465 = vmatpush1.msra.mxu0 0.0
        %6466 = vmatprep.subr.mxu0 0.0
        %6467 = vmatpush1.msra.mxu0 0.0
        %6468 = vmatprep.subr.mxu0 0.0
        %6469 = vmatpush1.msra.mxu0 0.0
        %6470 = vmatprep.subr.mxu0 0.0
        %6471 = vmatpush1.msra.mxu0 0.0
        %6472 = vmatprep.subr.mxu0 0.0
        %6473 = vmatpush1.msra.mxu0 0.0
        %6474 = vmatprep.subr.mxu0 0.0
        %6475 = vmatpush1.msra.mxu0 0.0
        %6476 = vmatprep.subr.mxu0 0.0
        %6477 = vmatpush1.msra.mxu0 0.0
        %6478 = vmatprep.subr.mxu0 0.0
        %6479 = vmatpush1.msra.mxu0 0.0
        %6480 = vmatprep.subr.mxu0 0.0
        %6481 = vmatpush1.msra.mxu0 0.0
        %6482 = vmatprep.subr.mxu0 0.0
        %6483 = vmatpush1.msra.mxu0 0.0
        %6484 = vmatprep.subr.mxu0 0.0
        %6485 = vmatpush1.msra.mxu0 0.0
        %6486 = vmatprep.subr.mxu0 0.0
        %6487 = vmatpush1.msra.mxu0 0.0
        %6488 = vmatprep.mubr.f32.mxu0 0.0
        %v6489 = vand.u32 %v6097, 4294901760
        %6490 = vmatmul.mubr.f32.gmra.mrb[0].mxu0 %v6489
        %v6491 = vpop.f32.mrb[0].mxu0
        %v6492 = vadd.f32 %v6414, %v6491
        %v6493 = vpop.f32.mrb[0].mxu0
        %v6494 = vadd.f32 %v6416, %v6493
        %6495 = vdwg.mxu0
        %v6496 = vand.u32 %v6103, 4294901760
        %6497 = vmatprep.subr.mxu0 %v6496
        %v6498 = vand.u32 %v6100, 4294901760
        %6499 = vmatpush1.msra.mxu0 %v6498
        %6500 = vmatprep.subr.mxu0 0.0
        %6501 = vmatpush1.msra.mxu0 0.0
        %6502 = vmatprep.subr.mxu0 0.0
        %6503 = vmatpush1.msra.mxu0 0.0
        %6504 = vmatprep.subr.mxu0 0.0
        %6505 = vmatpush1.msra.mxu0 0.0
        %6506 = vmatprep.subr.mxu0 0.0
        %6507 = vmatpush1.msra.mxu0 0.0
        %6508 = vmatprep.subr.mxu0 0.0
        %6509 = vmatpush1.msra.mxu0 0.0
        %6510 = vmatprep.subr.mxu0 0.0
        %6511 = vmatpush1.msra.mxu0 0.0
        %6512 = vmatprep.subr.mxu0 0.0
        %6513 = vmatpush1.msra.mxu0 0.0
        %6514 = vmatprep.subr.mxu0 0.0
        %6515 = vmatpush1.msra.mxu0 0.0
        %6516 = vmatprep.subr.mxu0 0.0
        %6517 = vmatpush1.msra.mxu0 0.0
        %6518 = vmatprep.subr.mxu0 0.0
        %6519 = vmatpush1.msra.mxu0 0.0
        %6520 = vmatprep.subr.mxu0 0.0
        %6521 = vmatpush1.msra.mxu0 0.0
        %6522 = vmatprep.subr.mxu0 0.0
        %6523 = vmatpush1.msra.mxu0 0.0
        %6524 = vmatprep.subr.mxu0 0.0
        %6525 = vmatpush1.msra.mxu0 0.0
        %6526 = vmatprep.subr.mxu0 0.0
        %6527 = vmatpush1.msra.mxu0 0.0
        %6528 = vmatprep.subr.mxu0 0.0
        %6529 = vmatpush1.msra.mxu0 0.0
        %6530 = vmatprep.subr.mxu0 0.0
        %6531 = vmatpush1.msra.mxu0 0.0
        %6532 = vmatprep.subr.mxu0 0.0
        %6533 = vmatpush1.msra.mxu0 0.0
        %6534 = vmatprep.subr.mxu0 0.0
        %6535 = vmatpush1.msra.mxu0 0.0
        %6536 = vmatprep.subr.mxu0 0.0
        %6537 = vmatpush1.msra.mxu0 0.0
        %6538 = vmatprep.subr.mxu0 0.0
        %6539 = vmatpush1.msra.mxu0 0.0
        %6540 = vmatprep.subr.mxu0 0.0
        %6541 = vmatpush1.msra.mxu0 0.0
        %6542 = vmatprep.subr.mxu0 0.0
        %6543 = vmatpush1.msra.mxu0 0.0
        %6544 = vmatprep.subr.mxu0 0.0
        %6545 = vmatpush1.msra.mxu0 0.0
        %6546 = vmatprep.subr.mxu0 0.0
        %6547 = vmatpush1.msra.mxu0 0.0
        %6548 = vmatprep.subr.mxu0 0.0
        %6549 = vmatpush1.msra.mxu0 0.0
        %6550 = vmatprep.subr.mxu0 0.0
        %6551 = vmatpush1.msra.mxu0 0.0
        %6552 = vmatprep.subr.mxu0 0.0
        %6553 = vmatpush1.msra.mxu0 0.0
        %6554 = vmatprep.subr.mxu0 0.0
        %6555 = vmatpush1.msra.mxu0 0.0
        %6556 = vmatprep.subr.mxu0 0.0
        %6557 = vmatpush1.msra.mxu0 0.0
        %6558 = vmatprep.subr.mxu0 0.0
        %6559 = vmatpush1.msra.mxu0 0.0
        %6560 = vmatprep.subr.mxu0 0.0
        %6561 = vmatpush1.msra.mxu0 0.0
        %6562 = vmatprep.mubr.f32.mxu0 0.0
        %v6563 = vand.u32 %v6097, 4294901760
        %6564 = vmatmul.mubr.f32.gmra.mrb[0].mxu0 %v6563
        %v6565 = vpop.f32.mrb[0].mxu0
        %v6566 = vadd.f32 %v6492, %v6565
        %v6567 = vpop.f32.mrb[0].mxu0
        %v6568 = vadd.f32 %v6494, %v6567
        %6569 = vdwg.mxu0
        %v6570 = vadd.f32 %v6076, %v6566
        %v6571 = vadd.f32 %v6077, %v6568
        %s6572 = scalar_lea.vmem %s2, 16
        %v6573 = vld [vmem:[%s6572] sm:$0xf]
        %v6575 = vsel %vm262, %v6573, 0
        %v6578 = vsel %vm266, %v4615, 0
        %v6581 = vsel %vm266, %v4616, 0
        %v6583 = vand.u32 %v6581, 4294901760
        %6584 = vmatprep.subr.mxu0 %v6583
        %v6585 = vand.u32 %v6578, 4294901760
        %6586 = vmatpush1.msra.mxu0 %v6585
        %6587 = vmatprep.subr.mxu0 0.0
        %6588 = vmatpush1.msra.mxu0 0.0
        %6589 = vmatprep.subr.mxu0 0.0
        %6590 = vmatpush1.msra.mxu0 0.0
        %6591 = vmatprep.subr.mxu0 0.0
        %6592 = vmatpush1.msra.mxu0 0.0
        %6593 = vmatprep.subr.mxu0 0.0
        %6594 = vmatpush1.msra.mxu0 0.0
        %6595 = vmatprep.subr.mxu0 0.0
        %6596 = vmatpush1.msra.mxu0 0.0
        %6597 = vmatprep.subr.mxu0 0.0
        %6598 = vmatpush1.msra.mxu0 0.0
        %6599 = vmatprep.subr.mxu0 0.0
        %6600 = vmatpush1.msra.mxu0 0.0
        %6601 = vmatprep.subr.mxu0 0.0
        %6602 = vmatpush1.msra.mxu0 0.0
        %6603 = vmatprep.subr.mxu0 0.0
        %6604 = vmatpush1.msra.mxu0 0.0
        %6605 = vmatprep.subr.mxu0 0.0
        %6606 = vmatpush1.msra.mxu0 0.0
        %6607 = vmatprep.subr.mxu0 0.0
        %6608 = vmatpush1.msra.mxu0 0.0
        %6609 = vmatprep.subr.mxu0 0.0
        %6610 = vmatpush1.msra.mxu0 0.0
        %6611 = vmatprep.subr.mxu0 0.0
        %6612 = vmatpush1.msra.mxu0 0.0
        %6613 = vmatprep.subr.mxu0 0.0
        %6614 = vmatpush1.msra.mxu0 0.0
        %6615 = vmatprep.subr.mxu0 0.0
        %6616 = vmatpush1.msra.mxu0 0.0
        %6617 = vmatprep.subr.mxu0 0.0
        %6618 = vmatpush1.msra.mxu0 0.0
        %6619 = vmatprep.subr.mxu0 0.0
        %6620 = vmatpush1.msra.mxu0 0.0
        %6621 = vmatprep.subr.mxu0 0.0
        %6622 = vmatpush1.msra.mxu0 0.0
        %6623 = vmatprep.subr.mxu0 0.0
        %6624 = vmatpush1.msra.mxu0 0.0
        %6625 = vmatprep.subr.mxu0 0.0
        %6626 = vmatpush1.msra.mxu0 0.0
        %6627 = vmatprep.subr.mxu0 0.0
        %6628 = vmatpush1.msra.mxu0 0.0
        %6629 = vmatprep.subr.mxu0 0.0
        %6630 = vmatpush1.msra.mxu0 0.0
        %6631 = vmatprep.subr.mxu0 0.0
        %6632 = vmatpush1.msra.mxu0 0.0
        %6633 = vmatprep.subr.mxu0 0.0
        %6634 = vmatpush1.msra.mxu0 0.0
        %6635 = vmatprep.subr.mxu0 0.0
        %6636 = vmatpush1.msra.mxu0 0.0
        %6637 = vmatprep.subr.mxu0 0.0
        %6638 = vmatpush1.msra.mxu0 0.0
        %6639 = vmatprep.subr.mxu0 0.0
        %6640 = vmatpush1.msra.mxu0 0.0
        %6641 = vmatprep.subr.mxu0 0.0
        %6642 = vmatpush1.msra.mxu0 0.0
        %6643 = vmatprep.subr.mxu0 0.0
        %6644 = vmatpush1.msra.mxu0 0.0
        %6645 = vmatprep.subr.mxu0 0.0
        %6646 = vmatpush1.msra.mxu0 0.0
        %6647 = vmatprep.subr.mxu0 0.0
        %6648 = vmatpush1.msra.mxu0 0.0
        %6649 = vmatprep.mubr.f32.mxu0 0.0
        %v6650 = vand.u32 %v6575, 4294901760
        %v6651 = vsub.f32 %v6575, %v6650
        %v6652 = vand.u32 %v6651, 4294901760
        %v6653 = vsub.f32 %v6651, %v6652
        %v6654 = vand.u32 %v6653, 4294901760
        %6655 = vmatmul.mubr.f32.gmra.mrb[0].mxu0 %v6654
        %v6656 = vpop.f32.mrb[0].mxu0
        %v6657 = vadd.f32 0.0, %v6656
        %v6658 = vpop.f32.mrb[0].mxu0
        %v6659 = vadd.f32 0.0, %v6658
        %6660 = vdwg.mxu0
        %v6661 = vand.u32 %v6581, 4294901760
        %v6662 = vsub.f32 %v6581, %v6661
        %v6663 = vand.u32 %v6662, 4294901760
        %v6664 = vsub.f32 %v6662, %v6663
        %v6665 = vand.u32 %v6664, 4294901760
        %6666 = vmatprep.subr.mxu0 %v6665
        %v6667 = vand.u32 %v6578, 4294901760
        %v6668 = vsub.f32 %v6578, %v6667
        %v6669 = vand.u32 %v6668, 4294901760
        %v6670 = vsub.f32 %v6668, %v6669
        %v6671 = vand.u32 %v6670, 4294901760
        %6672 = vmatpush1.msra.mxu0 %v6671
        %6673 = vmatprep.subr.mxu0 0.0
        %6674 = vmatpush1.msra.mxu0 0.0
        %6675 = vmatprep.subr.mxu0 0.0
        %6676 = vmatpush1.msra.mxu0 0.0
        %6677 = vmatprep.subr.mxu0 0.0
        %6678 = vmatpush1.msra.mxu0 0.0
        %6679 = vmatprep.subr.mxu0 0.0
        %6680 = vmatpush1.msra.mxu0 0.0
        %6681 = vmatprep.subr.mxu0 0.0
        %6682 = vmatpush1.msra.mxu0 0.0
        %6683 = vmatprep.subr.mxu0 0.0
        %6684 = vmatpush1.msra.mxu0 0.0
        %6685 = vmatprep.subr.mxu0 0.0
        %6686 = vmatpush1.msra.mxu0 0.0
        %6687 = vmatprep.subr.mxu0 0.0
        %6688 = vmatpush1.msra.mxu0 0.0
        %6689 = vmatprep.subr.mxu0 0.0
        %6690 = vmatpush1.msra.mxu0 0.0
        %6691 = vmatprep.subr.mxu0 0.0
        %6692 = vmatpush1.msra.mxu0 0.0
        %6693 = vmatprep.subr.mxu0 0.0
        %6694 = vmatpush1.msra.mxu0 0.0
        %6695 = vmatprep.subr.mxu0 0.0
        %6696 = vmatpush1.msra.mxu0 0.0
        %6697 = vmatprep.subr.mxu0 0.0
        %6698 = vmatpush1.msra.mxu0 0.0
        %6699 = vmatprep.subr.mxu0 0.0
        %6700 = vmatpush1.msra.mxu0 0.0
        %6701 = vmatprep.subr.mxu0 0.0
        %6702 = vmatpush1.msra.mxu0 0.0
        %6703 = vmatprep.subr.mxu0 0.0
        %6704 = vmatpush1.msra.mxu0 0.0
        %6705 = vmatprep.subr.mxu0 0.0
        %6706 = vmatpush1.msra.mxu0 0.0
        %6707 = vmatprep.subr.mxu0 0.0
        %6708 = vmatpush1.msra.mxu0 0.0
        %6709 = vmatprep.subr.mxu0 0.0
        %6710 = vmatpush1.msra.mxu0 0.0
        %6711 = vmatprep.subr.mxu0 0.0
        %6712 = vmatpush1.msra.mxu0 0.0
        %6713 = vmatprep.subr.mxu0 0.0
        %6714 = vmatpush1.msra.mxu0 0.0
        %6715 = vmatprep.subr.mxu0 0.0
        %6716 = vmatpush1.msra.mxu0 0.0
        %6717 = vmatprep.subr.mxu0 0.0
        %6718 = vmatpush1.msra.mxu0 0.0
        %6719 = vmatprep.subr.mxu0 0.0
        %6720 = vmatpush1.msra.mxu0 0.0
        %6721 = vmatprep.subr.mxu0 0.0
        %6722 = vmatpush1.msra.mxu0 0.0
        %6723 = vmatprep.subr.mxu0 0.0
        %6724 = vmatpush1.msra.mxu0 0.0
        %6725 = vmatprep.subr.mxu0 0.0
        %6726 = vmatpush1.msra.mxu0 0.0
        %6727 = vmatprep.subr.mxu0 0.0
        %6728 = vmatpush1.msra.mxu0 0.0
        %6729 = vmatprep.subr.mxu0 0.0
        %6730 = vmatpush1.msra.mxu0 0.0
        %6731 = vmatprep.subr.mxu0 0.0
        %6732 = vmatpush1.msra.mxu0 0.0
        %6733 = vmatprep.subr.mxu0 0.0
        %6734 = vmatpush1.msra.mxu0 0.0
        %6735 = vmatprep.mubr.f32.mxu0 0.0
        %v6736 = vand.u32 %v6575, 4294901760
        %6737 = vmatmul.mubr.f32.gmra.mrb[0].mxu0 %v6736
        %v6738 = vpop.f32.mrb[0].mxu0
        %v6739 = vadd.f32 %v6657, %v6738
        %v6740 = vpop.f32.mrb[0].mxu0
        %v6741 = vadd.f32 %v6659, %v6740
        %6742 = vdwg.mxu0
        %v6743 = vand.u32 %v6581, 4294901760
        %v6744 = vsub.f32 %v6581, %v6743
        %6745 = vmatprep.subr.mxu0 %v6744
        %v6746 = vand.u32 %v6578, 4294901760
        %v6747 = vsub.f32 %v6578, %v6746
        %6748 = vmatpush1.msra.mxu0 %v6747
        %6749 = vmatprep.subr.mxu0 0.0
        %6750 = vmatpush1.msra.mxu0 0.0
        %6751 = vmatprep.subr.mxu0 0.0
        %6752 = vmatpush1.msra.mxu0 0.0
        %6753 = vmatprep.subr.mxu0 0.0
        %6754 = vmatpush1.msra.mxu0 0.0
        %6755 = vmatprep.subr.mxu0 0.0
        %6756 = vmatpush1.msra.mxu0 0.0
        %6757 = vmatprep.subr.mxu0 0.0
        %6758 = vmatpush1.msra.mxu0 0.0
        %6759 = vmatprep.subr.mxu0 0.0
        %6760 = vmatpush1.msra.mxu0 0.0
        %6761 = vmatprep.subr.mxu0 0.0
        %6762 = vmatpush1.msra.mxu0 0.0
        %6763 = vmatprep.subr.mxu0 0.0
        %6764 = vmatpush1.msra.mxu0 0.0
        %6765 = vmatprep.subr.mxu0 0.0
        %6766 = vmatpush1.msra.mxu0 0.0
        %6767 = vmatprep.subr.mxu0 0.0
        %6768 = vmatpush1.msra.mxu0 0.0
        %6769 = vmatprep.subr.mxu0 0.0
        %6770 = vmatpush1.msra.mxu0 0.0
        %6771 = vmatprep.subr.mxu0 0.0
        %6772 = vmatpush1.msra.mxu0 0.0
        %6773 = vmatprep.subr.mxu0 0.0
        %6774 = vmatpush1.msra.mxu0 0.0
        %6775 = vmatprep.subr.mxu0 0.0
        %6776 = vmatpush1.msra.mxu0 0.0
        %6777 = vmatprep.subr.mxu0 0.0
        %6778 = vmatpush1.msra.mxu0 0.0
        %6779 = vmatprep.subr.mxu0 0.0
        %6780 = vmatpush1.msra.mxu0 0.0
        %6781 = vmatprep.subr.mxu0 0.0
        %6782 = vmatpush1.msra.mxu0 0.0
        %6783 = vmatprep.subr.mxu0 0.0
        %6784 = vmatpush1.msra.mxu0 0.0
        %6785 = vmatprep.subr.mxu0 0.0
        %6786 = vmatpush1.msra.mxu0 0.0
        %6787 = vmatprep.subr.mxu0 0.0
        %6788 = vmatpush1.msra.mxu0 0.0
        %6789 = vmatprep.subr.mxu0 0.0
        %6790 = vmatpush1.msra.mxu0 0.0
        %6791 = vmatprep.subr.mxu0 0.0
        %6792 = vmatpush1.msra.mxu0 0.0
        %6793 = vmatprep.subr.mxu0 0.0
        %6794 = vmatpush1.msra.mxu0 0.0
        %6795 = vmatprep.subr.mxu0 0.0
        %6796 = vmatpush1.msra.mxu0 0.0
        %6797 = vmatprep.subr.mxu0 0.0
        %6798 = vmatpush1.msra.mxu0 0.0
        %6799 = vmatprep.subr.mxu0 0.0
        %6800 = vmatpush1.msra.mxu0 0.0
        %6801 = vmatprep.subr.mxu0 0.0
        %6802 = vmatpush1.msra.mxu0 0.0
        %6803 = vmatprep.subr.mxu0 0.0
        %6804 = vmatpush1.msra.mxu0 0.0
        %6805 = vmatprep.subr.mxu0 0.0
        %6806 = vmatpush1.msra.mxu0 0.0
        %6807 = vmatprep.subr.mxu0 0.0
        %6808 = vmatpush1.msra.mxu0 0.0
        %6809 = vmatprep.subr.mxu0 0.0
        %6810 = vmatpush1.msra.mxu0 0.0
        %6811 = vmatprep.mubr.f32.mxu0 0.0
        %v6812 = vand.u32 %v6575, 4294901760
        %v6813 = vsub.f32 %v6575, %v6812
        %6814 = vmatmul.mubr.f32.gmra.mrb[0].mxu0 %v6813
        %v6815 = vpop.f32.mrb[0].mxu0
        %v6816 = vadd.f32 %v6739, %v6815
        %v6817 = vpop.f32.mrb[0].mxu0
        %v6818 = vadd.f32 %v6741, %v6817
        %6819 = vdwg.mxu0
        %v6820 = vand.u32 %v6581, 4294901760
        %6821 = vmatprep.subr.mxu0 %v6820
        %v6822 = vand.u32 %v6578, 4294901760
        %6823 = vmatpush1.msra.mxu0 %v6822
        %6824 = vmatprep.subr.mxu0 0.0
        %6825 = vmatpush1.msra.mxu0 0.0
        %6826 = vmatprep.subr.mxu0 0.0
        %6827 = vmatpush1.msra.mxu0 0.0
        %6828 = vmatprep.subr.mxu0 0.0
        %6829 = vmatpush1.msra.mxu0 0.0
        %6830 = vmatprep.subr.mxu0 0.0
        %6831 = vmatpush1.msra.mxu0 0.0
        %6832 = vmatprep.subr.mxu0 0.0
        %6833 = vmatpush1.msra.mxu0 0.0
        %6834 = vmatprep.subr.mxu0 0.0
        %6835 = vmatpush1.msra.mxu0 0.0
        %6836 = vmatprep.subr.mxu0 0.0
        %6837 = vmatpush1.msra.mxu0 0.0
        %6838 = vmatprep.subr.mxu0 0.0
        %6839 = vmatpush1.msra.mxu0 0.0
        %6840 = vmatprep.subr.mxu0 0.0
        %6841 = vmatpush1.msra.mxu0 0.0
        %6842 = vmatprep.subr.mxu0 0.0
        %6843 = vmatpush1.msra.mxu0 0.0
        %6844 = vmatprep.subr.mxu0 0.0
        %6845 = vmatpush1.msra.mxu0 0.0
        %6846 = vmatprep.subr.mxu0 0.0
        %6847 = vmatpush1.msra.mxu0 0.0
        %6848 = vmatprep.subr.mxu0 0.0
        %6849 = vmatpush1.msra.mxu0 0.0
        %6850 = vmatprep.subr.mxu0 0.0
        %6851 = vmatpush1.msra.mxu0 0.0
        %6852 = vmatprep.subr.mxu0 0.0
        %6853 = vmatpush1.msra.mxu0 0.0
        %6854 = vmatprep.subr.mxu0 0.0
        %6855 = vmatpush1.msra.mxu0 0.0
        %6856 = vmatprep.subr.mxu0 0.0
        %6857 = vmatpush1.msra.mxu0 0.0
        %6858 = vmatprep.subr.mxu0 0.0
        %6859 = vmatpush1.msra.mxu0 0.0
        %6860 = vmatprep.subr.mxu0 0.0
        %6861 = vmatpush1.msra.mxu0 0.0
        %6862 = vmatprep.subr.mxu0 0.0
        %6863 = vmatpush1.msra.mxu0 0.0
        %6864 = vmatprep.subr.mxu0 0.0
        %6865 = vmatpush1.msra.mxu0 0.0
        %6866 = vmatprep.subr.mxu0 0.0
        %6867 = vmatpush1.msra.mxu0 0.0
        %6868 = vmatprep.subr.mxu0 0.0
        %6869 = vmatpush1.msra.mxu0 0.0
        %6870 = vmatprep.subr.mxu0 0.0
        %6871 = vmatpush1.msra.mxu0 0.0
        %6872 = vmatprep.subr.mxu0 0.0
        %6873 = vmatpush1.msra.mxu0 0.0
        %6874 = vmatprep.subr.mxu0 0.0
        %6875 = vmatpush1.msra.mxu0 0.0
        %6876 = vmatprep.subr.mxu0 0.0
        %6877 = vmatpush1.msra.mxu0 0.0
        %6878 = vmatprep.subr.mxu0 0.0
        %6879 = vmatpush1.msra.mxu0 0.0
        %6880 = vmatprep.subr.mxu0 0.0
        %6881 = vmatpush1.msra.mxu0 0.0
        %6882 = vmatprep.subr.mxu0 0.0
        %6883 = vmatpush1.msra.mxu0 0.0
        %6884 = vmatprep.subr.mxu0 0.0
        %6885 = vmatpush1.msra.mxu0 0.0
        %6886 = vmatprep.mubr.f32.mxu0 0.0
        %v6887 = vand.u32 %v6575, 4294901760
        %v6888 = vsub.f32 %v6575, %v6887
        %v6889 = vand.u32 %v6888, 4294901760
        %6890 = vmatmul.mubr.f32.gmra.mrb[0].mxu0 %v6889
        %v6891 = vpop.f32.mrb[0].mxu0
        %v6892 = vadd.f32 %v6816, %v6891
        %v6893 = vpop.f32.mrb[0].mxu0
        %v6894 = vadd.f32 %v6818, %v6893
        %6895 = vdwg.mxu0
        %v6896 = vand.u32 %v6581, 4294901760
        %v6897 = vsub.f32 %v6581, %v6896
        %v6898 = vand.u32 %v6897, 4294901760
        %6899 = vmatprep.subr.mxu0 %v6898
        %v6900 = vand.u32 %v6578, 4294901760
        %v6901 = vsub.f32 %v6578, %v6900
        %v6902 = vand.u32 %v6901, 4294901760
        %6903 = vmatpush1.msra.mxu0 %v6902
        %6904 = vmatprep.subr.mxu0 0.0
        %6905 = vmatpush1.msra.mxu0 0.0
        %6906 = vmatprep.subr.mxu0 0.0
        %6907 = vmatpush1.msra.mxu0 0.0
        %6908 = vmatprep.subr.mxu0 0.0
        %6909 = vmatpush1.msra.mxu0 0.0
        %6910 = vmatprep.subr.mxu0 0.0
        %6911 = vmatpush1.msra.mxu0 0.0
        %6912 = vmatprep.subr.mxu0 0.0
        %6913 = vmatpush1.msra.mxu0 0.0
        %6914 = vmatprep.subr.mxu0 0.0
        %6915 = vmatpush1.msra.mxu0 0.0
        %6916 = vmatprep.subr.mxu0 0.0
        %6917 = vmatpush1.msra.mxu0 0.0
        %6918 = vmatprep.subr.mxu0 0.0
        %6919 = vmatpush1.msra.mxu0 0.0
        %6920 = vmatprep.subr.mxu0 0.0
        %6921 = vmatpush1.msra.mxu0 0.0
        %6922 = vmatprep.subr.mxu0 0.0
        %6923 = vmatpush1.msra.mxu0 0.0
        %6924 = vmatprep.subr.mxu0 0.0
        %6925 = vmatpush1.msra.mxu0 0.0
        %6926 = vmatprep.subr.mxu0 0.0
        %6927 = vmatpush1.msra.mxu0 0.0
        %6928 = vmatprep.subr.mxu0 0.0
        %6929 = vmatpush1.msra.mxu0 0.0
        %6930 = vmatprep.subr.mxu0 0.0
        %6931 = vmatpush1.msra.mxu0 0.0
        %6932 = vmatprep.subr.mxu0 0.0
        %6933 = vmatpush1.msra.mxu0 0.0
        %6934 = vmatprep.subr.mxu0 0.0
        %6935 = vmatpush1.msra.mxu0 0.0
        %6936 = vmatprep.subr.mxu0 0.0
        %6937 = vmatpush1.msra.mxu0 0.0
        %6938 = vmatprep.subr.mxu0 0.0
        %6939 = vmatpush1.msra.mxu0 0.0
        %6940 = vmatprep.subr.mxu0 0.0
        %6941 = vmatpush1.msra.mxu0 0.0
        %6942 = vmatprep.subr.mxu0 0.0
        %6943 = vmatpush1.msra.mxu0 0.0
        %6944 = vmatprep.subr.mxu0 0.0
        %6945 = vmatpush1.msra.mxu0 0.0
        %6946 = vmatprep.subr.mxu0 0.0
        %6947 = vmatpush1.msra.mxu0 0.0
        %6948 = vmatprep.subr.mxu0 0.0
        %6949 = vmatpush1.msra.mxu0 0.0
        %6950 = vmatprep.subr.mxu0 0.0
        %6951 = vmatpush1.msra.mxu0 0.0
        %6952 = vmatprep.subr.mxu0 0.0
        %6953 = vmatpush1.msra.mxu0 0.0
        %6954 = vmatprep.subr.mxu0 0.0
        %6955 = vmatpush1.msra.mxu0 0.0
        %6956 = vmatprep.subr.mxu0 0.0
        %6957 = vmatpush1.msra.mxu0 0.0
        %6958 = vmatprep.subr.mxu0 0.0
        %6959 = vmatpush1.msra.mxu0 0.0
        %6960 = vmatprep.subr.mxu0 0.0
        %6961 = vmatpush1.msra.mxu0 0.0
        %6962 = vmatprep.subr.mxu0 0.0
        %6963 = vmatpush1.msra.mxu0 0.0
        %6964 = vmatprep.subr.mxu0 0.0
        %6965 = vmatpush1.msra.mxu0 0.0
        %6966 = vmatprep.mubr.f32.mxu0 0.0
        %v6967 = vand.u32 %v6575, 4294901760
        %6968 = vmatmul.mubr.f32.gmra.mrb[0].mxu0 %v6967
        %v6969 = vpop.f32.mrb[0].mxu0
        %v6970 = vadd.f32 %v6892, %v6969
        %v6971 = vpop.f32.mrb[0].mxu0
        %v6972 = vadd.f32 %v6894, %v6971
        %6973 = vdwg.mxu0
        %v6974 = vand.u32 %v6581, 4294901760
        %6975 = vmatprep.subr.mxu0 %v6974
        %v6976 = vand.u32 %v6578, 4294901760
        %6977 = vmatpush1.msra.mxu0 %v6976
        %6978 = vmatprep.subr.mxu0 0.0
        %6979 = vmatpush1.msra.mxu0 0.0
        %6980 = vmatprep.subr.mxu0 0.0
        %6981 = vmatpush1.msra.mxu0 0.0
        %6982 = vmatprep.subr.mxu0 0.0
        %6983 = vmatpush1.msra.mxu0 0.0
        %6984 = vmatprep.subr.mxu0 0.0
        %6985 = vmatpush1.msra.mxu0 0.0
        %6986 = vmatprep.subr.mxu0 0.0
        %6987 = vmatpush1.msra.mxu0 0.0
        %6988 = vmatprep.subr.mxu0 0.0
        %6989 = vmatpush1.msra.mxu0 0.0
        %6990 = vmatprep.subr.mxu0 0.0
        %6991 = vmatpush1.msra.mxu0 0.0
        %6992 = vmatprep.subr.mxu0 0.0
        %6993 = vmatpush1.msra.mxu0 0.0
        %6994 = vmatprep.subr.mxu0 0.0
        %6995 = vmatpush1.msra.mxu0 0.0
        %6996 = vmatprep.subr.mxu0 0.0
        %6997 = vmatpush1.msra.mxu0 0.0
        %6998 = vmatprep.subr.mxu0 0.0
        %6999 = vmatpush1.msra.mxu0 0.0
        %7000 = vmatprep.subr.mxu0 0.0
        %7001 = vmatpush1.msra.mxu0 0.0
        %7002 = vmatprep.subr.mxu0 0.0
        %7003 = vmatpush1.msra.mxu0 0.0
        %7004 = vmatprep.subr.mxu0 0.0
        %7005 = vmatpush1.msra.mxu0 0.0
        %7006 = vmatprep.subr.mxu0 0.0
        %7007 = vmatpush1.msra.mxu0 0.0
        %7008 = vmatprep.subr.mxu0 0.0
        %7009 = vmatpush1.msra.mxu0 0.0
        %7010 = vmatprep.subr.mxu0 0.0
        %7011 = vmatpush1.msra.mxu0 0.0
        %7012 = vmatprep.subr.mxu0 0.0
        %7013 = vmatpush1.msra.mxu0 0.0
        %7014 = vmatprep.subr.mxu0 0.0
        %7015 = vmatpush1.msra.mxu0 0.0
        %7016 = vmatprep.subr.mxu0 0.0
        %7017 = vmatpush1.msra.mxu0 0.0
        %7018 = vmatprep.subr.mxu0 0.0
        %7019 = vmatpush1.msra.mxu0 0.0
        %7020 = vmatprep.subr.mxu0 0.0
        %7021 = vmatpush1.msra.mxu0 0.0
        %7022 = vmatprep.subr.mxu0 0.0
        %7023 = vmatpush1.msra.mxu0 0.0
        %7024 = vmatprep.subr.mxu0 0.0
        %7025 = vmatpush1.msra.mxu0 0.0
        %7026 = vmatprep.subr.mxu0 0.0
        %7027 = vmatpush1.msra.mxu0 0.0
        %7028 = vmatprep.subr.mxu0 0.0
        %7029 = vmatpush1.msra.mxu0 0.0
        %7030 = vmatprep.subr.mxu0 0.0
        %7031 = vmatpush1.msra.mxu0 0.0
        %7032 = vmatprep.subr.mxu0 0.0
        %7033 = vmatpush1.msra.mxu0 0.0
        %7034 = vmatprep.subr.mxu0 0.0
        %7035 = vmatpush1.msra.mxu0 0.0
        %7036 = vmatprep.subr.mxu0 0.0
        %7037 = vmatpush1.msra.mxu0 0.0
        %7038 = vmatprep.subr.mxu0 0.0
        %7039 = vmatpush1.msra.mxu0 0.0
        %7040 = vmatprep.mubr.f32.mxu0 0.0
        %v7041 = vand.u32 %v6575, 4294901760
        %7042 = vmatmul.mubr.f32.gmra.mrb[0].mxu0 %v7041
        %v7043 = vpop.f32.mrb[0].mxu0
        %v7044 = vadd.f32 %v6970, %v7043
        %v7045 = vpop.f32.mrb[0].mxu0
        %v7046 = vadd.f32 %v6972, %v7045
        %7047 = vdwg.mxu0
        %v7048 = vadd.f32 %v6570, %v7044
        %v7049 = vadd.f32 %v6571, %v7046
        %s7050 = scalar_lea.vmem %s2, 28
        %v7051 = vld [vmem:[%s7050] sm:$0xf]
        %v7053 = vsel %vm262, %v7051, 0
        %v7056 = vsel %vm266, %v6092, 0
        %v7059 = vsel %vm266, %v6093, 0
        %v7061 = vand.u32 %v7059, 4294901760
        %7062 = vmatprep.subr.mxu0 %v7061
        %v7063 = vand.u32 %v7056, 4294901760
        %7064 = vmatpush1.msra.mxu0 %v7063
        %7065 = vmatprep.subr.mxu0 0.0
        %7066 = vmatpush1.msra.mxu0 0.0
        %7067 = vmatprep.subr.mxu0 0.0
        %7068 = vmatpush1.msra.mxu0 0.0
        %7069 = vmatprep.subr.mxu0 0.0
        %7070 = vmatpush1.msra.mxu0 0.0
        %7071 = vmatprep.subr.mxu0 0.0
        %7072 = vmatpush1.msra.mxu0 0.0
        %7073 = vmatprep.subr.mxu0 0.0
        %7074 = vmatpush1.msra.mxu0 0.0
        %7075 = vmatprep.subr.mxu0 0.0
        %7076 = vmatpush1.msra.mxu0 0.0
        %7077 = vmatprep.subr.mxu0 0.0
        %7078 = vmatpush1.msra.mxu0 0.0
        %7079 = vmatprep.subr.mxu0 0.0
        %7080 = vmatpush1.msra.mxu0 0.0
        %7081 = vmatprep.subr.mxu0 0.0
        %7082 = vmatpush1.msra.mxu0 0.0
        %7083 = vmatprep.subr.mxu0 0.0
        %7084 = vmatpush1.msra.mxu0 0.0
        %7085 = vmatprep.subr.mxu0 0.0
        %7086 = vmatpush1.msra.mxu0 0.0
        %7087 = vmatprep.subr.mxu0 0.0
        %7088 = vmatpush1.msra.mxu0 0.0
        %7089 = vmatprep.subr.mxu0 0.0
        %7090 = vmatpush1.msra.mxu0 0.0
        %7091 = vmatprep.subr.mxu0 0.0
        %7092 = vmatpush1.msra.mxu0 0.0
        %7093 = vmatprep.subr.mxu0 0.0
        %7094 = vmatpush1.msra.mxu0 0.0
        %7095 = vmatprep.subr.mxu0 0.0
        %7096 = vmatpush1.msra.mxu0 0.0
        %7097 = vmatprep.subr.mxu0 0.0
        %7098 = vmatpush1.msra.mxu0 0.0
        %7099 = vmatprep.subr.mxu0 0.0
        %7100 = vmatpush1.msra.mxu0 0.0
        %7101 = vmatprep.subr.mxu0 0.0
        %7102 = vmatpush1.msra.mxu0 0.0
        %7103 = vmatprep.subr.mxu0 0.0
        %7104 = vmatpush1.msra.mxu0 0.0
        %7105 = vmatprep.subr.mxu0 0.0
        %7106 = vmatpush1.msra.mxu0 0.0
        %7107 = vmatprep.subr.mxu0 0.0
        %7108 = vmatpush1.msra.mxu0 0.0
        %7109 = vmatprep.subr.mxu0 0.0
        %7110 = vmatpush1.msra.mxu0 0.0
        %7111 = vmatprep.subr.mxu0 0.0
        %7112 = vmatpush1.msra.mxu0 0.0
        %7113 = vmatprep.subr.mxu0 0.0
        %7114 = vmatpush1.msra.mxu0 0.0
        %7115 = vmatprep.subr.mxu0 0.0
        %7116 = vmatpush1.msra.mxu0 0.0
        %7117 = vmatprep.subr.mxu0 0.0
        %7118 = vmatpush1.msra.mxu0 0.0
        %7119 = vmatprep.subr.mxu0 0.0
        %7120 = vmatpush1.msra.mxu0 0.0
        %7121 = vmatprep.subr.mxu0 0.0
        %7122 = vmatpush1.msra.mxu0 0.0
        %7123 = vmatprep.subr.mxu0 0.0
        %7124 = vmatpush1.msra.mxu0 0.0
        %7125 = vmatprep.subr.mxu0 0.0
        %7126 = vmatpush1.msra.mxu0 0.0
        %7127 = vmatprep.mubr.f32.mxu0 0.0
        %v7128 = vand.u32 %v7053, 4294901760
        %v7129 = vsub.f32 %v7053, %v7128
        %v7130 = vand.u32 %v7129, 4294901760
        %v7131 = vsub.f32 %v7129, %v7130
        %v7132 = vand.u32 %v7131, 4294901760
        %7133 = vmatmul.mubr.f32.gmra.mrb[0].mxu0 %v7132
        %v7134 = vpop.f32.mrb[0].mxu0
        %v7135 = vadd.f32 0.0, %v7134
        %v7136 = vpop.f32.mrb[0].mxu0
        %v7137 = vadd.f32 0.0, %v7136
        %7138 = vdwg.mxu0
        %v7139 = vand.u32 %v7059, 4294901760
        %v7140 = vsub.f32 %v7059, %v7139
        %v7141 = vand.u32 %v7140, 4294901760
        %v7142 = vsub.f32 %v7140, %v7141
        %v7143 = vand.u32 %v7142, 4294901760
        %7144 = vmatprep.subr.mxu0 %v7143
        %v7145 = vand.u32 %v7056, 4294901760
        %v7146 = vsub.f32 %v7056, %v7145
        %v7147 = vand.u32 %v7146, 4294901760
        %v7148 = vsub.f32 %v7146, %v7147
        %v7149 = vand.u32 %v7148, 4294901760
        %7150 = vmatpush1.msra.mxu0 %v7149
        %7151 = vmatprep.subr.mxu0 0.0
        %7152 = vmatpush1.msra.mxu0 0.0
        %7153 = vmatprep.subr.mxu0 0.0
        %7154 = vmatpush1.msra.mxu0 0.0
        %7155 = vmatprep.subr.mxu0 0.0
        %7156 = vmatpush1.msra.mxu0 0.0
        %7157 = vmatprep.subr.mxu0 0.0
        %7158 = vmatpush1.msra.mxu0 0.0
        %7159 = vmatprep.subr.mxu0 0.0
        %7160 = vmatpush1.msra.mxu0 0.0
        %7161 = vmatprep.subr.mxu0 0.0
        %7162 = vmatpush1.msra.mxu0 0.0
        %7163 = vmatprep.subr.mxu0 0.0
        %7164 = vmatpush1.msra.mxu0 0.0
        %7165 = vmatprep.subr.mxu0 0.0
        %7166 = vmatpush1.msra.mxu0 0.0
        %7167 = vmatprep.subr.mxu0 0.0
        %7168 = vmatpush1.msra.mxu0 0.0
        %7169 = vmatprep.subr.mxu0 0.0
        %7170 = vmatpush1.msra.mxu0 0.0
        %7171 = vmatprep.subr.mxu0 0.0
        %7172 = vmatpush1.msra.mxu0 0.0
        %7173 = vmatprep.subr.mxu0 0.0
        %7174 = vmatpush1.msra.mxu0 0.0
        %7175 = vmatprep.subr.mxu0 0.0
        %7176 = vmatpush1.msra.mxu0 0.0
        %7177 = vmatprep.subr.mxu0 0.0
        %7178 = vmatpush1.msra.mxu0 0.0
        %7179 = vmatprep.subr.mxu0 0.0
        %7180 = vmatpush1.msra.mxu0 0.0
        %7181 = vmatprep.subr.mxu0 0.0
        %7182 = vmatpush1.msra.mxu0 0.0
        %7183 = vmatprep.subr.mxu0 0.0
        %7184 = vmatpush1.msra.mxu0 0.0
        %7185 = vmatprep.subr.mxu0 0.0
        %7186 = vmatpush1.msra.mxu0 0.0
        %7187 = vmatprep.subr.mxu0 0.0
        %7188 = vmatpush1.msra.mxu0 0.0
        %7189 = vmatprep.subr.mxu0 0.0
        %7190 = vmatpush1.msra.mxu0 0.0
        %7191 = vmatprep.subr.mxu0 0.0
        %7192 = vmatpush1.msra.mxu0 0.0
        %7193 = vmatprep.subr.mxu0 0.0
        %7194 = vmatpush1.msra.mxu0 0.0
        %7195 = vmatprep.subr.mxu0 0.0
        %7196 = vmatpush1.msra.mxu0 0.0
        %7197 = vmatprep.subr.mxu0 0.0
        %7198 = vmatpush1.msra.mxu0 0.0
        %7199 = vmatprep.subr.mxu0 0.0
        %7200 = vmatpush1.msra.mxu0 0.0
        %7201 = vmatprep.subr.mxu0 0.0
        %7202 = vmatpush1.msra.mxu0 0.0
        %7203 = vmatprep.subr.mxu0 0.0
        %7204 = vmatpush1.msra.mxu0 0.0
        %7205 = vmatprep.subr.mxu0 0.0
        %7206 = vmatpush1.msra.mxu0 0.0
        %7207 = vmatprep.subr.mxu0 0.0
        %7208 = vmatpush1.msra.mxu0 0.0
        %7209 = vmatprep.subr.mxu0 0.0
        %7210 = vmatpush1.msra.mxu0 0.0
        %7211 = vmatprep.subr.mxu0 0.0
        %7212 = vmatpush1.msra.mxu0 0.0
        %7213 = vmatprep.mubr.f32.mxu0 0.0
        %v7214 = vand.u32 %v7053, 4294901760
        %7215 = vmatmul.mubr.f32.gmra.mrb[0].mxu0 %v7214
        %v7216 = vpop.f32.mrb[0].mxu0
        %v7217 = vadd.f32 %v7135, %v7216
        %v7218 = vpop.f32.mrb[0].mxu0
        %v7219 = vadd.f32 %v7137, %v7218
        %7220 = vdwg.mxu0
        %v7221 = vand.u32 %v7059, 4294901760
        %v7222 = vsub.f32 %v7059, %v7221
        %7223 = vmatprep.subr.mxu0 %v7222
        %v7224 = vand.u32 %v7056, 4294901760
        %v7225 = vsub.f32 %v7056, %v7224
        %7226 = vmatpush1.msra.mxu0 %v7225
        %7227 = vmatprep.subr.mxu0 0.0
        %7228 = vmatpush1.msra.mxu0 0.0
        %7229 = vmatprep.subr.mxu0 0.0
        %7230 = vmatpush1.msra.mxu0 0.0
        %7231 = vmatprep.subr.mxu0 0.0
        %7232 = vmatpush1.msra.mxu0 0.0
        %7233 = vmatprep.subr.mxu0 0.0
        %7234 = vmatpush1.msra.mxu0 0.0
        %7235 = vmatprep.subr.mxu0 0.0
        %7236 = vmatpush1.msra.mxu0 0.0
        %7237 = vmatprep.subr.mxu0 0.0
        %7238 = vmatpush1.msra.mxu0 0.0
        %7239 = vmatprep.subr.mxu0 0.0
        %7240 = vmatpush1.msra.mxu0 0.0
        %7241 = vmatprep.subr.mxu0 0.0
        %7242 = vmatpush1.msra.mxu0 0.0
        %7243 = vmatprep.subr.mxu0 0.0
        %7244 = vmatpush1.msra.mxu0 0.0
        %7245 = vmatprep.subr.mxu0 0.0
        %7246 = vmatpush1.msra.mxu0 0.0
        %7247 = vmatprep.subr.mxu0 0.0
        %7248 = vmatpush1.msra.mxu0 0.0
        %7249 = vmatprep.subr.mxu0 0.0
        %7250 = vmatpush1.msra.mxu0 0.0
        %7251 = vmatprep.subr.mxu0 0.0
        %7252 = vmatpush1.msra.mxu0 0.0
        %7253 = vmatprep.subr.mxu0 0.0
        %7254 = vmatpush1.msra.mxu0 0.0
        %7255 = vmatprep.subr.mxu0 0.0
        %7256 = vmatpush1.msra.mxu0 0.0
        %7257 = vmatprep.subr.mxu0 0.0
        %7258 = vmatpush1.msra.mxu0 0.0
        %7259 = vmatprep.subr.mxu0 0.0
        %7260 = vmatpush1.msra.mxu0 0.0
        %7261 = vmatprep.subr.mxu0 0.0
        %7262 = vmatpush1.msra.mxu0 0.0
        %7263 = vmatprep.subr.mxu0 0.0
        %7264 = vmatpush1.msra.mxu0 0.0
        %7265 = vmatprep.subr.mxu0 0.0
        %7266 = vmatpush1.msra.mxu0 0.0
        %7267 = vmatprep.subr.mxu0 0.0
        %7268 = vmatpush1.msra.mxu0 0.0
        %7269 = vmatprep.subr.mxu0 0.0
        %7270 = vmatpush1.msra.mxu0 0.0
        %7271 = vmatprep.subr.mxu0 0.0
        %7272 = vmatpush1.msra.mxu0 0.0
        %7273 = vmatprep.subr.mxu0 0.0
        %7274 = vmatpush1.msra.mxu0 0.0
        %7275 = vmatprep.subr.mxu0 0.0
        %7276 = vmatpush1.msra.mxu0 0.0
        %7277 = vmatprep.subr.mxu0 0.0
        %7278 = vmatpush1.msra.mxu0 0.0
        %7279 = vmatprep.subr.mxu0 0.0
        %7280 = vmatpush1.msra.mxu0 0.0
        %7281 = vmatprep.subr.mxu0 0.0
        %7282 = vmatpush1.msra.mxu0 0.0
        %7283 = vmatprep.subr.mxu0 0.0
        %7284 = vmatpush1.msra.mxu0 0.0
        %7285 = vmatprep.subr.mxu0 0.0
        %7286 = vmatpush1.msra.mxu0 0.0
        %7287 = vmatprep.subr.mxu0 0.0
        %7288 = vmatpush1.msra.mxu0 0.0
        %7289 = vmatprep.mubr.f32.mxu0 0.0
        %v7290 = vand.u32 %v7053, 4294901760
        %v7291 = vsub.f32 %v7053, %v7290
        %7292 = vmatmul.mubr.f32.gmra.mrb[0].mxu0 %v7291
        %v7293 = vpop.f32.mrb[0].mxu0
        %v7294 = vadd.f32 %v7217, %v7293
        %v7295 = vpop.f32.mrb[0].mxu0
        %v7296 = vadd.f32 %v7219, %v7295
        %7297 = vdwg.mxu0
        %v7298 = vand.u32 %v7059, 4294901760
        %7299 = vmatprep.subr.mxu0 %v7298
        %v7300 = vand.u32 %v7056, 4294901760
        %7301 = vmatpush1.msra.mxu0 %v7300
        %7302 = vmatprep.subr.mxu0 0.0
        %7303 = vmatpush1.msra.mxu0 0.0
        %7304 = vmatprep.subr.mxu0 0.0
        %7305 = vmatpush1.msra.mxu0 0.0
        %7306 = vmatprep.subr.mxu0 0.0
        %7307 = vmatpush1.msra.mxu0 0.0
        %7308 = vmatprep.subr.mxu0 0.0
        %7309 = vmatpush1.msra.mxu0 0.0
        %7310 = vmatprep.subr.mxu0 0.0
        %7311 = vmatpush1.msra.mxu0 0.0
        %7312 = vmatprep.subr.mxu0 0.0
        %7313 = vmatpush1.msra.mxu0 0.0
        %7314 = vmatprep.subr.mxu0 0.0
        %7315 = vmatpush1.msra.mxu0 0.0
        %7316 = vmatprep.subr.mxu0 0.0
        %7317 = vmatpush1.msra.mxu0 0.0
        %7318 = vmatprep.subr.mxu0 0.0
        %7319 = vmatpush1.msra.mxu0 0.0
        %7320 = vmatprep.subr.mxu0 0.0
        %7321 = vmatpush1.msra.mxu0 0.0
        %7322 = vmatprep.subr.mxu0 0.0
        %7323 = vmatpush1.msra.mxu0 0.0
        %7324 = vmatprep.subr.mxu0 0.0
        %7325 = vmatpush1.msra.mxu0 0.0
        %7326 = vmatprep.subr.mxu0 0.0
        %7327 = vmatpush1.msra.mxu0 0.0
        %7328 = vmatprep.subr.mxu0 0.0
        %7329 = vmatpush1.msra.mxu0 0.0
        %7330 = vmatprep.subr.mxu0 0.0
        %7331 = vmatpush1.msra.mxu0 0.0
        %7332 = vmatprep.subr.mxu0 0.0
        %7333 = vmatpush1.msra.mxu0 0.0
        %7334 = vmatprep.subr.mxu0 0.0
        %7335 = vmatpush1.msra.mxu0 0.0
        %7336 = vmatprep.subr.mxu0 0.0
        %7337 = vmatpush1.msra.mxu0 0.0
        %7338 = vmatprep.subr.mxu0 0.0
        %7339 = vmatpush1.msra.mxu0 0.0
        %7340 = vmatprep.subr.mxu0 0.0
        %7341 = vmatpush1.msra.mxu0 0.0
        %7342 = vmatprep.subr.mxu0 0.0
        %7343 = vmatpush1.msra.mxu0 0.0
        %7344 = vmatprep.subr.mxu0 0.0
        %7345 = vmatpush1.msra.mxu0 0.0
        %7346 = vmatprep.subr.mxu0 0.0
        %7347 = vmatpush1.msra.mxu0 0.0
        %7348 = vmatprep.subr.mxu0 0.0
        %7349 = vmatpush1.msra.mxu0 0.0
        %7350 = vmatprep.subr.mxu0 0.0
        %7351 = vmatpush1.msra.mxu0 0.0
        %7352 = vmatprep.subr.mxu0 0.0
        %7353 = vmatpush1.msra.mxu0 0.0
        %7354 = vmatprep.subr.mxu0 0.0
        %7355 = vmatpush1.msra.mxu0 0.0
        %7356 = vmatprep.subr.mxu0 0.0
        %7357 = vmatpush1.msra.mxu0 0.0
        %7358 = vmatprep.subr.mxu0 0.0
        %7359 = vmatpush1.msra.mxu0 0.0
        %7360 = vmatprep.subr.mxu0 0.0
        %7361 = vmatpush1.msra.mxu0 0.0
        %7362 = vmatprep.subr.mxu0 0.0
        %7363 = vmatpush1.msra.mxu0 0.0
        %7364 = vmatprep.mubr.f32.mxu0 0.0
        %v7365 = vand.u32 %v7053, 4294901760
        %v7366 = vsub.f32 %v7053, %v7365
        %v7367 = vand.u32 %v7366, 4294901760
        %7368 = vmatmul.mubr.f32.gmra.mrb[0].mxu0 %v7367
        %v7369 = vpop.f32.mrb[0].mxu0
        %v7370 = vadd.f32 %v7294, %v7369
        %v7371 = vpop.f32.mrb[0].mxu0
        %v7372 = vadd.f32 %v7296, %v7371
        %7373 = vdwg.mxu0
        %v7374 = vand.u32 %v7059, 4294901760
        %v7375 = vsub.f32 %v7059, %v7374
        %v7376 = vand.u32 %v7375, 4294901760
        %7377 = vmatprep.subr.mxu0 %v7376
        %v7378 = vand.u32 %v7056, 4294901760
        %v7379 = vsub.f32 %v7056, %v7378
        %v7380 = vand.u32 %v7379, 4294901760
        %7381 = vmatpush1.msra.mxu0 %v7380
        %7382 = vmatprep.subr.mxu0 0.0
        %7383 = vmatpush1.msra.mxu0 0.0
        %7384 = vmatprep.subr.mxu0 0.0
        %7385 = vmatpush1.msra.mxu0 0.0
        %7386 = vmatprep.subr.mxu0 0.0
        %7387 = vmatpush1.msra.mxu0 0.0
        %7388 = vmatprep.subr.mxu0 0.0
        %7389 = vmatpush1.msra.mxu0 0.0
        %7390 = vmatprep.subr.mxu0 0.0
        %7391 = vmatpush1.msra.mxu0 0.0
        %7392 = vmatprep.subr.mxu0 0.0
        %7393 = vmatpush1.msra.mxu0 0.0
        %7394 = vmatprep.subr.mxu0 0.0
        %7395 = vmatpush1.msra.mxu0 0.0
        %7396 = vmatprep.subr.mxu0 0.0
        %7397 = vmatpush1.msra.mxu0 0.0
        %7398 = vmatprep.subr.mxu0 0.0
        %7399 = vmatpush1.msra.mxu0 0.0
        %7400 = vmatprep.subr.mxu0 0.0
        %7401 = vmatpush1.msra.mxu0 0.0
        %7402 = vmatprep.subr.mxu0 0.0
        %7403 = vmatpush1.msra.mxu0 0.0
        %7404 = vmatprep.subr.mxu0 0.0
        %7405 = vmatpush1.msra.mxu0 0.0
        %7406 = vmatprep.subr.mxu0 0.0
        %7407 = vmatpush1.msra.mxu0 0.0
        %7408 = vmatprep.subr.mxu0 0.0
        %7409 = vmatpush1.msra.mxu0 0.0
        %7410 = vmatprep.subr.mxu0 0.0
        %7411 = vmatpush1.msra.mxu0 0.0
        %7412 = vmatprep.subr.mxu0 0.0
        %7413 = vmatpush1.msra.mxu0 0.0
        %7414 = vmatprep.subr.mxu0 0.0
        %7415 = vmatpush1.msra.mxu0 0.0
        %7416 = vmatprep.subr.mxu0 0.0
        %7417 = vmatpush1.msra.mxu0 0.0
        %7418 = vmatprep.subr.mxu0 0.0
        %7419 = vmatpush1.msra.mxu0 0.0
        %7420 = vmatprep.subr.mxu0 0.0
        %7421 = vmatpush1.msra.mxu0 0.0
        %7422 = vmatprep.subr.mxu0 0.0
        %7423 = vmatpush1.msra.mxu0 0.0
        %7424 = vmatprep.subr.mxu0 0.0
        %7425 = vmatpush1.msra.mxu0 0.0
        %7426 = vmatprep.subr.mxu0 0.0
        %7427 = vmatpush1.msra.mxu0 0.0
        %7428 = vmatprep.subr.mxu0 0.0
        %7429 = vmatpush1.msra.mxu0 0.0
        %7430 = vmatprep.subr.mxu0 0.0
        %7431 = vmatpush1.msra.mxu0 0.0
        %7432 = vmatprep.subr.mxu0 0.0
        %7433 = vmatpush1.msra.mxu0 0.0
        %7434 = vmatprep.subr.mxu0 0.0
        %7435 = vmatpush1.msra.mxu0 0.0
        %7436 = vmatprep.subr.mxu0 0.0
        %7437 = vmatpush1.msra.mxu0 0.0
        %7438 = vmatprep.subr.mxu0 0.0
        %7439 = vmatpush1.msra.mxu0 0.0
        %7440 = vmatprep.subr.mxu0 0.0
        %7441 = vmatpush1.msra.mxu0 0.0
        %7442 = vmatprep.subr.mxu0 0.0
        %7443 = vmatpush1.msra.mxu0 0.0
        %7444 = vmatprep.mubr.f32.mxu0 0.0
        %v7445 = vand.u32 %v7053, 4294901760
        %7446 = vmatmul.mubr.f32.gmra.mrb[0].mxu0 %v7445
        %v7447 = vpop.f32.mrb[0].mxu0
        %v7448 = vadd.f32 %v7370, %v7447
        %v7449 = vpop.f32.mrb[0].mxu0
        %v7450 = vadd.f32 %v7372, %v7449
        %7451 = vdwg.mxu0
        %v7452 = vand.u32 %v7059, 4294901760
        %7453 = vmatprep.subr.mxu0 %v7452
        %v7454 = vand.u32 %v7056, 4294901760
        %7455 = vmatpush1.msra.mxu0 %v7454
        %7456 = vmatprep.subr.mxu0 0.0
        %7457 = vmatpush1.msra.mxu0 0.0
        %7458 = vmatprep.subr.mxu0 0.0
        %7459 = vmatpush1.msra.mxu0 0.0
        %7460 = vmatprep.subr.mxu0 0.0
        %7461 = vmatpush1.msra.mxu0 0.0
        %7462 = vmatprep.subr.mxu0 0.0
        %7463 = vmatpush1.msra.mxu0 0.0
        %7464 = vmatprep.subr.mxu0 0.0
        %7465 = vmatpush1.msra.mxu0 0.0
        %7466 = vmatprep.subr.mxu0 0.0
        %7467 = vmatpush1.msra.mxu0 0.0
        %7468 = vmatprep.subr.mxu0 0.0
        %7469 = vmatpush1.msra.mxu0 0.0
        %7470 = vmatprep.subr.mxu0 0.0
        %7471 = vmatpush1.msra.mxu0 0.0
        %7472 = vmatprep.subr.mxu0 0.0
        %7473 = vmatpush1.msra.mxu0 0.0
        %7474 = vmatprep.subr.mxu0 0.0
        %7475 = vmatpush1.msra.mxu0 0.0
        %7476 = vmatprep.subr.mxu0 0.0
        %7477 = vmatpush1.msra.mxu0 0.0
        %7478 = vmatprep.subr.mxu0 0.0
        %7479 = vmatpush1.msra.mxu0 0.0
        %7480 = vmatprep.subr.mxu0 0.0
        %7481 = vmatpush1.msra.mxu0 0.0
        %7482 = vmatprep.subr.mxu0 0.0
        %7483 = vmatpush1.msra.mxu0 0.0
        %7484 = vmatprep.subr.mxu0 0.0
        %7485 = vmatpush1.msra.mxu0 0.0
        %7486 = vmatprep.subr.mxu0 0.0
        %7487 = vmatpush1.msra.mxu0 0.0
        %7488 = vmatprep.subr.mxu0 0.0
        %7489 = vmatpush1.msra.mxu0 0.0
        %7490 = vmatprep.subr.mxu0 0.0
        %7491 = vmatpush1.msra.mxu0 0.0
        %7492 = vmatprep.subr.mxu0 0.0
        %7493 = vmatpush1.msra.mxu0 0.0
        %7494 = vmatprep.subr.mxu0 0.0
        %7495 = vmatpush1.msra.mxu0 0.0
        %7496 = vmatprep.subr.mxu0 0.0
        %7497 = vmatpush1.msra.mxu0 0.0
        %7498 = vmatprep.subr.mxu0 0.0
        %7499 = vmatpush1.msra.mxu0 0.0
        %7500 = vmatprep.subr.mxu0 0.0
        %7501 = vmatpush1.msra.mxu0 0.0
        %7502 = vmatprep.subr.mxu0 0.0
        %7503 = vmatpush1.msra.mxu0 0.0
        %7504 = vmatprep.subr.mxu0 0.0
        %7505 = vmatpush1.msra.mxu0 0.0
        %7506 = vmatprep.subr.mxu0 0.0
        %7507 = vmatpush1.msra.mxu0 0.0
        %7508 = vmatprep.subr.mxu0 0.0
        %7509 = vmatpush1.msra.mxu0 0.0
        %7510 = vmatprep.subr.mxu0 0.0
        %7511 = vmatpush1.msra.mxu0 0.0
        %7512 = vmatprep.subr.mxu0 0.0
        %7513 = vmatpush1.msra.mxu0 0.0
        %7514 = vmatprep.subr.mxu0 0.0
        %7515 = vmatpush1.msra.mxu0 0.0
        %7516 = vmatprep.subr.mxu0 0.0
        %7517 = vmatpush1.msra.mxu0 0.0
        %7518 = vmatprep.mubr.f32.mxu0 0.0
        %v7519 = vand.u32 %v7053, 4294901760
        %7520 = vmatmul.mubr.f32.gmra.mrb[0].mxu0 %v7519
        %v7521 = vpop.f32.mrb[0].mxu0
        %v7522 = vadd.f32 %v7448, %v7521
        %v7523 = vpop.f32.mrb[0].mxu0
        %v7524 = vadd.f32 %v7450, %v7523
        %7525 = vdwg.mxu0
        %v7526 = vadd.f32 %v7048, %v7522
        %v7527 = vadd.f32 %v7049, %v7524
        %7528 = vrot.lane.b32.xlu0 %v4631, 16
        %v7529 = vpop.permute.xlu0 %7528
        %7530 = vrot.lane.b32.xlu0 %v4632, 16
        %v7531 = vpop.permute.xlu0 %7530
        %v7532 = vsel %vm200, %v7529, %v7531
        %v7533 = vsel %vm200, %v7531, %v7529
        %7534 = vrot.lane.b32.xlu0 %v4631, 112
        %v7535 = vpop.permute.xlu0 %7534
        %7536 = vrot.lane.b32.xlu0 %v4632, 112
        %v7537 = vpop.permute.xlu0 %7536
        %v7538 = vsel %vm244, %v7535, %v7537
        %v7539 = vsel %vm244, %v7537, %v7535
        %v7540 = vsel %vm249, %v7538, %v7533
        %v7541 = vsel %vm250, %v7539, %v7532
        %v7542 = vsel %vm255, %v7533, %v7538
        %v7543 = vsel %vm256, %v7532, %v7539
        %s7544 = scalar_lea.vmem %s2, 8
        %v7545 = vld [vmem:[%s7544] sm:$0xf]
        %v7547 = vsel %vm262, %v7545, 0
        %v7550 = vsel %vm266, %v7540, 0
        %v7553 = vsel %vm266, %v7541, 0
        %v7555 = vand.u32 %v7553, 4294901760
        %7556 = vmatprep.subr.mxu0 %v7555
        %v7557 = vand.u32 %v7550, 4294901760
        %7558 = vmatpush1.msra.mxu0 %v7557
        %7559 = vmatprep.subr.mxu0 0.0
        %7560 = vmatpush1.msra.mxu0 0.0
        %7561 = vmatprep.subr.mxu0 0.0
        %7562 = vmatpush1.msra.mxu0 0.0
        %7563 = vmatprep.subr.mxu0 0.0
        %7564 = vmatpush1.msra.mxu0 0.0
        %7565 = vmatprep.subr.mxu0 0.0
        %7566 = vmatpush1.msra.mxu0 0.0
        %7567 = vmatprep.subr.mxu0 0.0
        %7568 = vmatpush1.msra.mxu0 0.0
        %7569 = vmatprep.subr.mxu0 0.0
        %7570 = vmatpush1.msra.mxu0 0.0
        %7571 = vmatprep.subr.mxu0 0.0
        %7572 = vmatpush1.msra.mxu0 0.0
        %7573 = vmatprep.subr.mxu0 0.0
        %7574 = vmatpush1.msra.mxu0 0.0
        %7575 = vmatprep.subr.mxu0 0.0
        %7576 = vmatpush1.msra.mxu0 0.0
        %7577 = vmatprep.subr.mxu0 0.0
        %7578 = vmatpush1.msra.mxu0 0.0
        %7579 = vmatprep.subr.mxu0 0.0
        %7580 = vmatpush1.msra.mxu0 0.0
        %7581 = vmatprep.subr.mxu0 0.0
        %7582 = vmatpush1.msra.mxu0 0.0
        %7583 = vmatprep.subr.mxu0 0.0
        %7584 = vmatpush1.msra.mxu0 0.0
        %7585 = vmatprep.subr.mxu0 0.0
        %7586 = vmatpush1.msra.mxu0 0.0
        %7587 = vmatprep.subr.mxu0 0.0
        %7588 = vmatpush1.msra.mxu0 0.0
        %7589 = vmatprep.subr.mxu0 0.0
        %7590 = vmatpush1.msra.mxu0 0.0
        %7591 = vmatprep.subr.mxu0 0.0
        %7592 = vmatpush1.msra.mxu0 0.0
        %7593 = vmatprep.subr.mxu0 0.0
        %7594 = vmatpush1.msra.mxu0 0.0
        %7595 = vmatprep.subr.mxu0 0.0
        %7596 = vmatpush1.msra.mxu0 0.0
        %7597 = vmatprep.subr.mxu0 0.0
        %7598 = vmatpush1.msra.mxu0 0.0
        %7599 = vmatprep.subr.mxu0 0.0
        %7600 = vmatpush1.msra.mxu0 0.0
        %7601 = vmatprep.subr.mxu0 0.0
        %7602 = vmatpush1.msra.mxu0 0.0
        %7603 = vmatprep.subr.mxu0 0.0
        %7604 = vmatpush1.msra.mxu0 0.0
        %7605 = vmatprep.subr.mxu0 0.0
        %7606 = vmatpush1.msra.mxu0 0.0
        %7607 = vmatprep.subr.mxu0 0.0
        %7608 = vmatpush1.msra.mxu0 0.0
        %7609 = vmatprep.subr.mxu0 0.0
        %7610 = vmatpush1.msra.mxu0 0.0
        %7611 = vmatprep.subr.mxu0 0.0
        %7612 = vmatpush1.msra.mxu0 0.0
        %7613 = vmatprep.subr.mxu0 0.0
        %7614 = vmatpush1.msra.mxu0 0.0
        %7615 = vmatprep.subr.mxu0 0.0
        %7616 = vmatpush1.msra.mxu0 0.0
        %7617 = vmatprep.subr.mxu0 0.0
        %7618 = vmatpush1.msra.mxu0 0.0
        %7619 = vmatprep.subr.mxu0 0.0
        %7620 = vmatpush1.msra.mxu0 0.0
        %7621 = vmatprep.mubr.f32.mxu0 0.0
        %v7622 = vand.u32 %v7547, 4294901760
        %v7623 = vsub.f32 %v7547, %v7622
        %v7624 = vand.u32 %v7623, 4294901760
        %v7625 = vsub.f32 %v7623, %v7624
        %v7626 = vand.u32 %v7625, 4294901760
        %7627 = vmatmul.mubr.f32.gmra.mrb[0].mxu0 %v7626
        %v7628 = vpop.f32.mrb[0].mxu0
        %v7629 = vadd.f32 0.0, %v7628
        %v7630 = vpop.f32.mrb[0].mxu0
        %v7631 = vadd.f32 0.0, %v7630
        %7632 = vdwg.mxu0
        %v7633 = vand.u32 %v7553, 4294901760
        %v7634 = vsub.f32 %v7553, %v7633
        %v7635 = vand.u32 %v7634, 4294901760
        %v7636 = vsub.f32 %v7634, %v7635
        %v7637 = vand.u32 %v7636, 4294901760
        %7638 = vmatprep.subr.mxu0 %v7637
        %v7639 = vand.u32 %v7550, 4294901760
        %v7640 = vsub.f32 %v7550, %v7639
        %v7641 = vand.u32 %v7640, 4294901760
        %v7642 = vsub.f32 %v7640, %v7641
        %v7643 = vand.u32 %v7642, 4294901760
        %7644 = vmatpush1.msra.mxu0 %v7643
        %7645 = vmatprep.subr.mxu0 0.0
        %7646 = vmatpush1.msra.mxu0 0.0
        %7647 = vmatprep.subr.mxu0 0.0
        %7648 = vmatpush1.msra.mxu0 0.0
        %7649 = vmatprep.subr.mxu0 0.0
        %7650 = vmatpush1.msra.mxu0 0.0
        %7651 = vmatprep.subr.mxu0 0.0
        %7652 = vmatpush1.msra.mxu0 0.0
        %7653 = vmatprep.subr.mxu0 0.0
        %7654 = vmatpush1.msra.mxu0 0.0
        %7655 = vmatprep.subr.mxu0 0.0
        %7656 = vmatpush1.msra.mxu0 0.0
        %7657 = vmatprep.subr.mxu0 0.0
        %7658 = vmatpush1.msra.mxu0 0.0
        %7659 = vmatprep.subr.mxu0 0.0
        %7660 = vmatpush1.msra.mxu0 0.0
        %7661 = vmatprep.subr.mxu0 0.0
        %7662 = vmatpush1.msra.mxu0 0.0
        %7663 = vmatprep.subr.mxu0 0.0
        %7664 = vmatpush1.msra.mxu0 0.0
        %7665 = vmatprep.subr.mxu0 0.0
        %7666 = vmatpush1.msra.mxu0 0.0
        %7667 = vmatprep.subr.mxu0 0.0
        %7668 = vmatpush1.msra.mxu0 0.0
        %7669 = vmatprep.subr.mxu0 0.0
        %7670 = vmatpush1.msra.mxu0 0.0
        %7671 = vmatprep.subr.mxu0 0.0
        %7672 = vmatpush1.msra.mxu0 0.0
        %7673 = vmatprep.subr.mxu0 0.0
        %7674 = vmatpush1.msra.mxu0 0.0
        %7675 = vmatprep.subr.mxu0 0.0
        %7676 = vmatpush1.msra.mxu0 0.0
        %7677 = vmatprep.subr.mxu0 0.0
        %7678 = vmatpush1.msra.mxu0 0.0
        %7679 = vmatprep.subr.mxu0 0.0
        %7680 = vmatpush1.msra.mxu0 0.0
        %7681 = vmatprep.subr.mxu0 0.0
        %7682 = vmatpush1.msra.mxu0 0.0
        %7683 = vmatprep.subr.mxu0 0.0
        %7684 = vmatpush1.msra.mxu0 0.0
        %7685 = vmatprep.subr.mxu0 0.0
        %7686 = vmatpush1.msra.mxu0 0.0
        %7687 = vmatprep.subr.mxu0 0.0
        %7688 = vmatpush1.msra.mxu0 0.0
        %7689 = vmatprep.subr.mxu0 0.0
        %7690 = vmatpush1.msra.mxu0 0.0
        %7691 = vmatprep.subr.mxu0 0.0
        %7692 = vmatpush1.msra.mxu0 0.0
        %7693 = vmatprep.subr.mxu0 0.0
        %7694 = vmatpush1.msra.mxu0 0.0
        %7695 = vmatprep.subr.mxu0 0.0
        %7696 = vmatpush1.msra.mxu0 0.0
        %7697 = vmatprep.subr.mxu0 0.0
        %7698 = vmatpush1.msra.mxu0 0.0
        %7699 = vmatprep.subr.mxu0 0.0
        %7700 = vmatpush1.msra.mxu0 0.0
        %7701 = vmatprep.subr.mxu0 0.0
        %7702 = vmatpush1.msra.mxu0 0.0
        %7703 = vmatprep.subr.mxu0 0.0
        %7704 = vmatpush1.msra.mxu0 0.0
        %7705 = vmatprep.subr.mxu0 0.0
        %7706 = vmatpush1.msra.mxu0 0.0
        %7707 = vmatprep.mubr.f32.mxu0 0.0
        %v7708 = vand.u32 %v7547, 4294901760
        %7709 = vmatmul.mubr.f32.gmra.mrb[0].mxu0 %v7708
        %v7710 = vpop.f32.mrb[0].mxu0
        %v7711 = vadd.f32 %v7629, %v7710
        %v7712 = vpop.f32.mrb[0].mxu0
        %v7713 = vadd.f32 %v7631, %v7712
        %7714 = vdwg.mxu0
        %v7715 = vand.u32 %v7553, 4294901760
        %v7716 = vsub.f32 %v7553, %v7715
        %7717 = vmatprep.subr.mxu0 %v7716
        %v7718 = vand.u32 %v7550, 4294901760
        %v7719 = vsub.f32 %v7550, %v7718
        %7720 = vmatpush1.msra.mxu0 %v7719
        %7721 = vmatprep.subr.mxu0 0.0
        %7722 = vmatpush1.msra.mxu0 0.0
        %7723 = vmatprep.subr.mxu0 0.0
        %7724 = vmatpush1.msra.mxu0 0.0
        %7725 = vmatprep.subr.mxu0 0.0
        %7726 = vmatpush1.msra.mxu0 0.0
        %7727 = vmatprep.subr.mxu0 0.0
        %7728 = vmatpush1.msra.mxu0 0.0
        %7729 = vmatprep.subr.mxu0 0.0
        %7730 = vmatpush1.msra.mxu0 0.0
        %7731 = vmatprep.subr.mxu0 0.0
        %7732 = vmatpush1.msra.mxu0 0.0
        %7733 = vmatprep.subr.mxu0 0.0
        %7734 = vmatpush1.msra.mxu0 0.0
        %7735 = vmatprep.subr.mxu0 0.0
        %7736 = vmatpush1.msra.mxu0 0.0
        %7737 = vmatprep.subr.mxu0 0.0
        %7738 = vmatpush1.msra.mxu0 0.0
        %7739 = vmatprep.subr.mxu0 0.0
        %7740 = vmatpush1.msra.mxu0 0.0
        %7741 = vmatprep.subr.mxu0 0.0
        %7742 = vmatpush1.msra.mxu0 0.0
        %7743 = vmatprep.subr.mxu0 0.0
        %7744 = vmatpush1.msra.mxu0 0.0
        %7745 = vmatprep.subr.mxu0 0.0
        %7746 = vmatpush1.msra.mxu0 0.0
        %7747 = vmatprep.subr.mxu0 0.0
        %7748 = vmatpush1.msra.mxu0 0.0
        %7749 = vmatprep.subr.mxu0 0.0
        %7750 = vmatpush1.msra.mxu0 0.0
        %7751 = vmatprep.subr.mxu0 0.0
        %7752 = vmatpush1.msra.mxu0 0.0
        %7753 = vmatprep.subr.mxu0 0.0
        %7754 = vmatpush1.msra.mxu0 0.0
        %7755 = vmatprep.subr.mxu0 0.0
        %7756 = vmatpush1.msra.mxu0 0.0
        %7757 = vmatprep.subr.mxu0 0.0
        %7758 = vmatpush1.msra.mxu0 0.0
        %7759 = vmatprep.subr.mxu0 0.0
        %7760 = vmatpush1.msra.mxu0 0.0
        %7761 = vmatprep.subr.mxu0 0.0
        %7762 = vmatpush1.msra.mxu0 0.0
        %7763 = vmatprep.subr.mxu0 0.0
        %7764 = vmatpush1.msra.mxu0 0.0
        %7765 = vmatprep.subr.mxu0 0.0
        %7766 = vmatpush1.msra.mxu0 0.0
        %7767 = vmatprep.subr.mxu0 0.0
        %7768 = vmatpush1.msra.mxu0 0.0
        %7769 = vmatprep.subr.mxu0 0.0
        %7770 = vmatpush1.msra.mxu0 0.0
        %7771 = vmatprep.subr.mxu0 0.0
        %7772 = vmatpush1.msra.mxu0 0.0
        %7773 = vmatprep.subr.mxu0 0.0
        %7774 = vmatpush1.msra.mxu0 0.0
        %7775 = vmatprep.subr.mxu0 0.0
        %7776 = vmatpush1.msra.mxu0 0.0
        %7777 = vmatprep.subr.mxu0 0.0
        %7778 = vmatpush1.msra.mxu0 0.0
        %7779 = vmatprep.subr.mxu0 0.0
        %7780 = vmatpush1.msra.mxu0 0.0
        %7781 = vmatprep.subr.mxu0 0.0
        %7782 = vmatpush1.msra.mxu0 0.0
        %7783 = vmatprep.mubr.f32.mxu0 0.0
        %v7784 = vand.u32 %v7547, 4294901760
        %v7785 = vsub.f32 %v7547, %v7784
        %7786 = vmatmul.mubr.f32.gmra.mrb[0].mxu0 %v7785
        %v7787 = vpop.f32.mrb[0].mxu0
        %v7788 = vadd.f32 %v7711, %v7787
        %v7789 = vpop.f32.mrb[0].mxu0
        %v7790 = vadd.f32 %v7713, %v7789
        %7791 = vdwg.mxu0
        %v7792 = vand.u32 %v7553, 4294901760
        %7793 = vmatprep.subr.mxu0 %v7792
        %v7794 = vand.u32 %v7550, 4294901760
        %7795 = vmatpush1.msra.mxu0 %v7794
        %7796 = vmatprep.subr.mxu0 0.0
        %7797 = vmatpush1.msra.mxu0 0.0
        %7798 = vmatprep.subr.mxu0 0.0
        %7799 = vmatpush1.msra.mxu0 0.0
        %7800 = vmatprep.subr.mxu0 0.0
        %7801 = vmatpush1.msra.mxu0 0.0
        %7802 = vmatprep.subr.mxu0 0.0
        %7803 = vmatpush1.msra.mxu0 0.0
        %7804 = vmatprep.subr.mxu0 0.0
        %7805 = vmatpush1.msra.mxu0 0.0
        %7806 = vmatprep.subr.mxu0 0.0
        %7807 = vmatpush1.msra.mxu0 0.0
        %7808 = vmatprep.subr.mxu0 0.0
        %7809 = vmatpush1.msra.mxu0 0.0
        %7810 = vmatprep.subr.mxu0 0.0
        %7811 = vmatpush1.msra.mxu0 0.0
        %7812 = vmatprep.subr.mxu0 0.0
        %7813 = vmatpush1.msra.mxu0 0.0
        %7814 = vmatprep.subr.mxu0 0.0
        %7815 = vmatpush1.msra.mxu0 0.0
        %7816 = vmatprep.subr.mxu0 0.0
        %7817 = vmatpush1.msra.mxu0 0.0
        %7818 = vmatprep.subr.mxu0 0.0
        %7819 = vmatpush1.msra.mxu0 0.0
        %7820 = vmatprep.subr.mxu0 0.0
        %7821 = vmatpush1.msra.mxu0 0.0
        %7822 = vmatprep.subr.mxu0 0.0
        %7823 = vmatpush1.msra.mxu0 0.0
        %7824 = vmatprep.subr.mxu0 0.0
        %7825 = vmatpush1.msra.mxu0 0.0
        %7826 = vmatprep.subr.mxu0 0.0
        %7827 = vmatpush1.msra.mxu0 0.0
        %7828 = vmatprep.subr.mxu0 0.0
        %7829 = vmatpush1.msra.mxu0 0.0
        %7830 = vmatprep.subr.mxu0 0.0
        %7831 = vmatpush1.msra.mxu0 0.0
        %7832 = vmatprep.subr.mxu0 0.0
        %7833 = vmatpush1.msra.mxu0 0.0
        %7834 = vmatprep.subr.mxu0 0.0
        %7835 = vmatpush1.msra.mxu0 0.0
        %7836 = vmatprep.subr.mxu0 0.0
        %7837 = vmatpush1.msra.mxu0 0.0
        %7838 = vmatprep.subr.mxu0 0.0
        %7839 = vmatpush1.msra.mxu0 0.0
        %7840 = vmatprep.subr.mxu0 0.0
        %7841 = vmatpush1.msra.mxu0 0.0
        %7842 = vmatprep.subr.mxu0 0.0
        %7843 = vmatpush1.msra.mxu0 0.0
        %7844 = vmatprep.subr.mxu0 0.0
        %7845 = vmatpush1.msra.mxu0 0.0
        %7846 = vmatprep.subr.mxu0 0.0
        %7847 = vmatpush1.msra.mxu0 0.0
        %7848 = vmatprep.subr.mxu0 0.0
        %7849 = vmatpush1.msra.mxu0 0.0
        %7850 = vmatprep.subr.mxu0 0.0
        %7851 = vmatpush1.msra.mxu0 0.0
        %7852 = vmatprep.subr.mxu0 0.0
        %7853 = vmatpush1.msra.mxu0 0.0
        %7854 = vmatprep.subr.mxu0 0.0
        %7855 = vmatpush1.msra.mxu0 0.0
        %7856 = vmatprep.subr.mxu0 0.0
        %7857 = vmatpush1.msra.mxu0 0.0
        %7858 = vmatprep.mubr.f32.mxu0 0.0
        %v7859 = vand.u32 %v7547, 4294901760
        %v7860 = vsub.f32 %v7547, %v7859
        %v7861 = vand.u32 %v7860, 4294901760
        %7862 = vmatmul.mubr.f32.gmra.mrb[0].mxu0 %v7861
        %v7863 = vpop.f32.mrb[0].mxu0
        %v7864 = vadd.f32 %v7788, %v7863
        %v7865 = vpop.f32.mrb[0].mxu0
        %v7866 = vadd.f32 %v7790, %v7865
        %7867 = vdwg.mxu0
        %v7868 = vand.u32 %v7553, 4294901760
        %v7869 = vsub.f32 %v7553, %v7868
        %v7870 = vand.u32 %v7869, 4294901760
        %7871 = vmatprep.subr.mxu0 %v7870
        %v7872 = vand.u32 %v7550, 4294901760
        %v7873 = vsub.f32 %v7550, %v7872
        %v7874 = vand.u32 %v7873, 4294901760
        %7875 = vmatpush1.msra.mxu0 %v7874
        %7876 = vmatprep.subr.mxu0 0.0
        %7877 = vmatpush1.msra.mxu0 0.0
        %7878 = vmatprep.subr.mxu0 0.0
        %7879 = vmatpush1.msra.mxu0 0.0
        %7880 = vmatprep.subr.mxu0 0.0
        %7881 = vmatpush1.msra.mxu0 0.0
        %7882 = vmatprep.subr.mxu0 0.0
        %7883 = vmatpush1.msra.mxu0 0.0
        %7884 = vmatprep.subr.mxu0 0.0
        %7885 = vmatpush1.msra.mxu0 0.0
        %7886 = vmatprep.subr.mxu0 0.0
        %7887 = vmatpush1.msra.mxu0 0.0
        %7888 = vmatprep.subr.mxu0 0.0
        %7889 = vmatpush1.msra.mxu0 0.0
        %7890 = vmatprep.subr.mxu0 0.0
        %7891 = vmatpush1.msra.mxu0 0.0
        %7892 = vmatprep.subr.mxu0 0.0
        %7893 = vmatpush1.msra.mxu0 0.0
        %7894 = vmatprep.subr.mxu0 0.0
        %7895 = vmatpush1.msra.mxu0 0.0
        %7896 = vmatprep.subr.mxu0 0.0
        %7897 = vmatpush1.msra.mxu0 0.0
        %7898 = vmatprep.subr.mxu0 0.0
        %7899 = vmatpush1.msra.mxu0 0.0
        %7900 = vmatprep.subr.mxu0 0.0
        %7901 = vmatpush1.msra.mxu0 0.0
        %7902 = vmatprep.subr.mxu0 0.0
        %7903 = vmatpush1.msra.mxu0 0.0
        %7904 = vmatprep.subr.mxu0 0.0
        %7905 = vmatpush1.msra.mxu0 0.0
        %7906 = vmatprep.subr.mxu0 0.0
        %7907 = vmatpush1.msra.mxu0 0.0
        %7908 = vmatprep.subr.mxu0 0.0
        %7909 = vmatpush1.msra.mxu0 0.0
        %7910 = vmatprep.subr.mxu0 0.0
        %7911 = vmatpush1.msra.mxu0 0.0
        %7912 = vmatprep.subr.mxu0 0.0
        %7913 = vmatpush1.msra.mxu0 0.0
        %7914 = vmatprep.subr.mxu0 0.0
        %7915 = vmatpush1.msra.mxu0 0.0
        %7916 = vmatprep.subr.mxu0 0.0
        %7917 = vmatpush1.msra.mxu0 0.0
        %7918 = vmatprep.subr.mxu0 0.0
        %7919 = vmatpush1.msra.mxu0 0.0
        %7920 = vmatprep.subr.mxu0 0.0
        %7921 = vmatpush1.msra.mxu0 0.0
        %7922 = vmatprep.subr.mxu0 0.0
        %7923 = vmatpush1.msra.mxu0 0.0
        %7924 = vmatprep.subr.mxu0 0.0
        %7925 = vmatpush1.msra.mxu0 0.0
        %7926 = vmatprep.subr.mxu0 0.0
        %7927 = vmatpush1.msra.mxu0 0.0
        %7928 = vmatprep.subr.mxu0 0.0
        %7929 = vmatpush1.msra.mxu0 0.0
        %7930 = vmatprep.subr.mxu0 0.0
        %7931 = vmatpush1.msra.mxu0 0.0
        %7932 = vmatprep.subr.mxu0 0.0
        %7933 = vmatpush1.msra.mxu0 0.0
        %7934 = vmatprep.subr.mxu0 0.0
        %7935 = vmatpush1.msra.mxu0 0.0
        %7936 = vmatprep.subr.mxu0 0.0
        %7937 = vmatpush1.msra.mxu0 0.0
        %7938 = vmatprep.mubr.f32.mxu0 0.0
        %v7939 = vand.u32 %v7547, 4294901760
        %7940 = vmatmul.mubr.f32.gmra.mrb[0].mxu0 %v7939
        %v7941 = vpop.f32.mrb[0].mxu0
        %v7942 = vadd.f32 %v7864, %v7941
        %v7943 = vpop.f32.mrb[0].mxu0
        %v7944 = vadd.f32 %v7866, %v7943
        %7945 = vdwg.mxu0
        %v7946 = vand.u32 %v7553, 4294901760
        %7947 = vmatprep.subr.mxu0 %v7946
        %v7948 = vand.u32 %v7550, 4294901760
        %7949 = vmatpush1.msra.mxu0 %v7948
        %7950 = vmatprep.subr.mxu0 0.0
        %7951 = vmatpush1.msra.mxu0 0.0
        %7952 = vmatprep.subr.mxu0 0.0
        %7953 = vmatpush1.msra.mxu0 0.0
        %7954 = vmatprep.subr.mxu0 0.0
        %7955 = vmatpush1.msra.mxu0 0.0
        %7956 = vmatprep.subr.mxu0 0.0
        %7957 = vmatpush1.msra.mxu0 0.0
        %7958 = vmatprep.subr.mxu0 0.0
        %7959 = vmatpush1.msra.mxu0 0.0
        %7960 = vmatprep.subr.mxu0 0.0
        %7961 = vmatpush1.msra.mxu0 0.0
        %7962 = vmatprep.subr.mxu0 0.0
        %7963 = vmatpush1.msra.mxu0 0.0
        %7964 = vmatprep.subr.mxu0 0.0
        %7965 = vmatpush1.msra.mxu0 0.0
        %7966 = vmatprep.subr.mxu0 0.0
        %7967 = vmatpush1.msra.mxu0 0.0
        %7968 = vmatprep.subr.mxu0 0.0
        %7969 = vmatpush1.msra.mxu0 0.0
        %7970 = vmatprep.subr.mxu0 0.0
        %7971 = vmatpush1.msra.mxu0 0.0
        %7972 = vmatprep.subr.mxu0 0.0
        %7973 = vmatpush1.msra.mxu0 0.0
        %7974 = vmatprep.subr.mxu0 0.0
        %7975 = vmatpush1.msra.mxu0 0.0
        %7976 = vmatprep.subr.mxu0 0.0
        %7977 = vmatpush1.msra.mxu0 0.0
        %7978 = vmatprep.subr.mxu0 0.0
        %7979 = vmatpush1.msra.mxu0 0.0
        %7980 = vmatprep.subr.mxu0 0.0
        %7981 = vmatpush1.msra.mxu0 0.0
        %7982 = vmatprep.subr.mxu0 0.0
        %7983 = vmatpush1.msra.mxu0 0.0
        %7984 = vmatprep.subr.mxu0 0.0
        %7985 = vmatpush1.msra.mxu0 0.0
        %7986 = vmatprep.subr.mxu0 0.0
        %7987 = vmatpush1.msra.mxu0 0.0
        %7988 = vmatprep.subr.mxu0 0.0
        %7989 = vmatpush1.msra.mxu0 0.0
        %7990 = vmatprep.subr.mxu0 0.0
        %7991 = vmatpush1.msra.mxu0 0.0
        %7992 = vmatprep.subr.mxu0 0.0
        %7993 = vmatpush1.msra.mxu0 0.0
        %7994 = vmatprep.subr.mxu0 0.0
        %7995 = vmatpush1.msra.mxu0 0.0
        %7996 = vmatprep.subr.mxu0 0.0
        %7997 = vmatpush1.msra.mxu0 0.0
        %7998 = vmatprep.subr.mxu0 0.0
        %7999 = vmatpush1.msra.mxu0 0.0
        %8000 = vmatprep.subr.mxu0 0.0
        %8001 = vmatpush1.msra.mxu0 0.0
        %8002 = vmatprep.subr.mxu0 0.0
        %8003 = vmatpush1.msra.mxu0 0.0
        %8004 = vmatprep.subr.mxu0 0.0
        %8005 = vmatpush1.msra.mxu0 0.0
        %8006 = vmatprep.subr.mxu0 0.0
        %8007 = vmatpush1.msra.mxu0 0.0
        %8008 = vmatprep.subr.mxu0 0.0
        %8009 = vmatpush1.msra.mxu0 0.0
        %8010 = vmatprep.subr.mxu0 0.0
        %8011 = vmatpush1.msra.mxu0 0.0
        %8012 = vmatprep.mubr.f32.mxu0 0.0
        %v8013 = vand.u32 %v7547, 4294901760
        %8014 = vmatmul.mubr.f32.gmra.mrb[0].mxu0 %v8013
        %v8015 = vpop.f32.mrb[0].mxu0
        %v8016 = vadd.f32 %v7942, %v8015
        %v8017 = vpop.f32.mrb[0].mxu0
        %v8018 = vadd.f32 %v7944, %v8017
        %8019 = vdwg.mxu0
        %v8020 = vadd.f32 %v7526, %v8016
        %v8021 = vadd.f32 %v7527, %v8018
        %s8022 = scalar_lea.vmem %s2, 20
        %v8023 = vld [vmem:[%s8022] sm:$0xf]
        %v8025 = vsel %vm262, %v8023, 0
        %v8028 = vsel %vm266, %v4631, 0
        %v8031 = vsel %vm266, %v4632, 0
        %v8033 = vand.u32 %v8031, 4294901760
        %8034 = vmatprep.subr.mxu0 %v8033
        %v8035 = vand.u32 %v8028, 4294901760
        %8036 = vmatpush1.msra.mxu0 %v8035
        %8037 = vmatprep.subr.mxu0 0.0
        %8038 = vmatpush1.msra.mxu0 0.0
        %8039 = vmatprep.subr.mxu0 0.0
        %8040 = vmatpush1.msra.mxu0 0.0
        %8041 = vmatprep.subr.mxu0 0.0
        %8042 = vmatpush1.msra.mxu0 0.0
        %8043 = vmatprep.subr.mxu0 0.0
        %8044 = vmatpush1.msra.mxu0 0.0
        %8045 = vmatprep.subr.mxu0 0.0
        %8046 = vmatpush1.msra.mxu0 0.0
        %8047 = vmatprep.subr.mxu0 0.0
        %8048 = vmatpush1.msra.mxu0 0.0
        %8049 = vmatprep.subr.mxu0 0.0
        %8050 = vmatpush1.msra.mxu0 0.0
        %8051 = vmatprep.subr.mxu0 0.0
        %8052 = vmatpush1.msra.mxu0 0.0
        %8053 = vmatprep.subr.mxu0 0.0
        %8054 = vmatpush1.msra.mxu0 0.0
        %8055 = vmatprep.subr.mxu0 0.0
        %8056 = vmatpush1.msra.mxu0 0.0
        %8057 = vmatprep.subr.mxu0 0.0
        %8058 = vmatpush1.msra.mxu0 0.0
        %8059 = vmatprep.subr.mxu0 0.0
        %8060 = vmatpush1.msra.mxu0 0.0
        %8061 = vmatprep.subr.mxu0 0.0
        %8062 = vmatpush1.msra.mxu0 0.0
        %8063 = vmatprep.subr.mxu0 0.0
        %8064 = vmatpush1.msra.mxu0 0.0
        %8065 = vmatprep.subr.mxu0 0.0
        %8066 = vmatpush1.msra.mxu0 0.0
        %8067 = vmatprep.subr.mxu0 0.0
        %8068 = vmatpush1.msra.mxu0 0.0
        %8069 = vmatprep.subr.mxu0 0.0
        %8070 = vmatpush1.msra.mxu0 0.0
        %8071 = vmatprep.subr.mxu0 0.0
        %8072 = vmatpush1.msra.mxu0 0.0
        %8073 = vmatprep.subr.mxu0 0.0
        %8074 = vmatpush1.msra.mxu0 0.0
        %8075 = vmatprep.subr.mxu0 0.0
        %8076 = vmatpush1.msra.mxu0 0.0
        %8077 = vmatprep.subr.mxu0 0.0
        %8078 = vmatpush1.msra.mxu0 0.0
        %8079 = vmatprep.subr.mxu0 0.0
        %8080 = vmatpush1.msra.mxu0 0.0
        %8081 = vmatprep.subr.mxu0 0.0
        %8082 = vmatpush1.msra.mxu0 0.0
        %8083 = vmatprep.subr.mxu0 0.0
        %8084 = vmatpush1.msra.mxu0 0.0
        %8085 = vmatprep.subr.mxu0 0.0
        %8086 = vmatpush1.msra.mxu0 0.0
        %8087 = vmatprep.subr.mxu0 0.0
        %8088 = vmatpush1.msra.mxu0 0.0
        %8089 = vmatprep.subr.mxu0 0.0
        %8090 = vmatpush1.msra.mxu0 0.0
        %8091 = vmatprep.subr.mxu0 0.0
        %8092 = vmatpush1.msra.mxu0 0.0
        %8093 = vmatprep.subr.mxu0 0.0
        %8094 = vmatpush1.msra.mxu0 0.0
        %8095 = vmatprep.subr.mxu0 0.0
        %8096 = vmatpush1.msra.mxu0 0.0
        %8097 = vmatprep.subr.mxu0 0.0
        %8098 = vmatpush1.msra.mxu0 0.0
        %8099 = vmatprep.mubr.f32.mxu0 0.0
        %v8100 = vand.u32 %v8025, 4294901760
        %v8101 = vsub.f32 %v8025, %v8100
        %v8102 = vand.u32 %v8101, 4294901760
        %v8103 = vsub.f32 %v8101, %v8102
        %v8104 = vand.u32 %v8103, 4294901760
        %8105 = vmatmul.mubr.f32.gmra.mrb[0].mxu0 %v8104
        %v8106 = vpop.f32.mrb[0].mxu0
        %v8107 = vadd.f32 0.0, %v8106
        %v8108 = vpop.f32.mrb[0].mxu0
        %v8109 = vadd.f32 0.0, %v8108
        %8110 = vdwg.mxu0
        %v8111 = vand.u32 %v8031, 4294901760
        %v8112 = vsub.f32 %v8031, %v8111
        %v8113 = vand.u32 %v8112, 4294901760
        %v8114 = vsub.f32 %v8112, %v8113
        %v8115 = vand.u32 %v8114, 4294901760
        %8116 = vmatprep.subr.mxu0 %v8115
        %v8117 = vand.u32 %v8028, 4294901760
        %v8118 = vsub.f32 %v8028, %v8117
        %v8119 = vand.u32 %v8118, 4294901760
        %v8120 = vsub.f32 %v8118, %v8119
        %v8121 = vand.u32 %v8120, 4294901760
        %8122 = vmatpush1.msra.mxu0 %v8121
        %8123 = vmatprep.subr.mxu0 0.0
        %8124 = vmatpush1.msra.mxu0 0.0
        %8125 = vmatprep.subr.mxu0 0.0
        %8126 = vmatpush1.msra.mxu0 0.0
        %8127 = vmatprep.subr.mxu0 0.0
        %8128 = vmatpush1.msra.mxu0 0.0
        %8129 = vmatprep.subr.mxu0 0.0
        %8130 = vmatpush1.msra.mxu0 0.0
        %8131 = vmatprep.subr.mxu0 0.0
        %8132 = vmatpush1.msra.mxu0 0.0
        %8133 = vmatprep.subr.mxu0 0.0
        %8134 = vmatpush1.msra.mxu0 0.0
        %8135 = vmatprep.subr.mxu0 0.0
        %8136 = vmatpush1.msra.mxu0 0.0
        %8137 = vmatprep.subr.mxu0 0.0
        %8138 = vmatpush1.msra.mxu0 0.0
        %8139 = vmatprep.subr.mxu0 0.0
        %8140 = vmatpush1.msra.mxu0 0.0
        %8141 = vmatprep.subr.mxu0 0.0
        %8142 = vmatpush1.msra.mxu0 0.0
        %8143 = vmatprep.subr.mxu0 0.0
        %8144 = vmatpush1.msra.mxu0 0.0
        %8145 = vmatprep.subr.mxu0 0.0
        %8146 = vmatpush1.msra.mxu0 0.0
        %8147 = vmatprep.subr.mxu0 0.0
        %8148 = vmatpush1.msra.mxu0 0.0
        %8149 = vmatprep.subr.mxu0 0.0
        %8150 = vmatpush1.msra.mxu0 0.0
        %8151 = vmatprep.subr.mxu0 0.0
        %8152 = vmatpush1.msra.mxu0 0.0
        %8153 = vmatprep.subr.mxu0 0.0
        %8154 = vmatpush1.msra.mxu0 0.0
        %8155 = vmatprep.subr.mxu0 0.0
        %8156 = vmatpush1.msra.mxu0 0.0
        %8157 = vmatprep.subr.mxu0 0.0
        %8158 = vmatpush1.msra.mxu0 0.0
        %8159 = vmatprep.subr.mxu0 0.0
        %8160 = vmatpush1.msra.mxu0 0.0
        %8161 = vmatprep.subr.mxu0 0.0
        %8162 = vmatpush1.msra.mxu0 0.0
        %8163 = vmatprep.subr.mxu0 0.0
        %8164 = vmatpush1.msra.mxu0 0.0
        %8165 = vmatprep.subr.mxu0 0.0
        %8166 = vmatpush1.msra.mxu0 0.0
        %8167 = vmatprep.subr.mxu0 0.0
        %8168 = vmatpush1.msra.mxu0 0.0
        %8169 = vmatprep.subr.mxu0 0.0
        %8170 = vmatpush1.msra.mxu0 0.0
        %8171 = vmatprep.subr.mxu0 0.0
        %8172 = vmatpush1.msra.mxu0 0.0
        %8173 = vmatprep.subr.mxu0 0.0
        %8174 = vmatpush1.msra.mxu0 0.0
        %8175 = vmatprep.subr.mxu0 0.0
        %8176 = vmatpush1.msra.mxu0 0.0
        %8177 = vmatprep.subr.mxu0 0.0
        %8178 = vmatpush1.msra.mxu0 0.0
        %8179 = vmatprep.subr.mxu0 0.0
        %8180 = vmatpush1.msra.mxu0 0.0
        %8181 = vmatprep.subr.mxu0 0.0
        %8182 = vmatpush1.msra.mxu0 0.0
        %8183 = vmatprep.subr.mxu0 0.0
        %8184 = vmatpush1.msra.mxu0 0.0
        %8185 = vmatprep.mubr.f32.mxu0 0.0
        %v8186 = vand.u32 %v8025, 4294901760
        %8187 = vmatmul.mubr.f32.gmra.mrb[0].mxu0 %v8186
        %v8188 = vpop.f32.mrb[0].mxu0
        %v8189 = vadd.f32 %v8107, %v8188
        %v8190 = vpop.f32.mrb[0].mxu0
        %v8191 = vadd.f32 %v8109, %v8190
        %8192 = vdwg.mxu0
        %v8193 = vand.u32 %v8031, 4294901760
        %v8194 = vsub.f32 %v8031, %v8193
        %8195 = vmatprep.subr.mxu0 %v8194
        %v8196 = vand.u32 %v8028, 4294901760
        %v8197 = vsub.f32 %v8028, %v8196
        %8198 = vmatpush1.msra.mxu0 %v8197
        %8199 = vmatprep.subr.mxu0 0.0
        %8200 = vmatpush1.msra.mxu0 0.0
        %8201 = vmatprep.subr.mxu0 0.0
        %8202 = vmatpush1.msra.mxu0 0.0
        %8203 = vmatprep.subr.mxu0 0.0
        %8204 = vmatpush1.msra.mxu0 0.0
        %8205 = vmatprep.subr.mxu0 0.0
        %8206 = vmatpush1.msra.mxu0 0.0
        %8207 = vmatprep.subr.mxu0 0.0
        %8208 = vmatpush1.msra.mxu0 0.0
        %8209 = vmatprep.subr.mxu0 0.0
        %8210 = vmatpush1.msra.mxu0 0.0
        %8211 = vmatprep.subr.mxu0 0.0
        %8212 = vmatpush1.msra.mxu0 0.0
        %8213 = vmatprep.subr.mxu0 0.0
        %8214 = vmatpush1.msra.mxu0 0.0
        %8215 = vmatprep.subr.mxu0 0.0
        %8216 = vmatpush1.msra.mxu0 0.0
        %8217 = vmatprep.subr.mxu0 0.0
        %8218 = vmatpush1.msra.mxu0 0.0
        %8219 = vmatprep.subr.mxu0 0.0
        %8220 = vmatpush1.msra.mxu0 0.0
        %8221 = vmatprep.subr.mxu0 0.0
        %8222 = vmatpush1.msra.mxu0 0.0
        %8223 = vmatprep.subr.mxu0 0.0
        %8224 = vmatpush1.msra.mxu0 0.0
        %8225 = vmatprep.subr.mxu0 0.0
        %8226 = vmatpush1.msra.mxu0 0.0
        %8227 = vmatprep.subr.mxu0 0.0
        %8228 = vmatpush1.msra.mxu0 0.0
        %8229 = vmatprep.subr.mxu0 0.0
        %8230 = vmatpush1.msra.mxu0 0.0
        %8231 = vmatprep.subr.mxu0 0.0
        %8232 = vmatpush1.msra.mxu0 0.0
        %8233 = vmatprep.subr.mxu0 0.0
        %8234 = vmatpush1.msra.mxu0 0.0
        %8235 = vmatprep.subr.mxu0 0.0
        %8236 = vmatpush1.msra.mxu0 0.0
        %8237 = vmatprep.subr.mxu0 0.0
        %8238 = vmatpush1.msra.mxu0 0.0
        %8239 = vmatprep.subr.mxu0 0.0
        %8240 = vmatpush1.msra.mxu0 0.0
        %8241 = vmatprep.subr.mxu0 0.0
        %8242 = vmatpush1.msra.mxu0 0.0
        %8243 = vmatprep.subr.mxu0 0.0
        %8244 = vmatpush1.msra.mxu0 0.0
        %8245 = vmatprep.subr.mxu0 0.0
        %8246 = vmatpush1.msra.mxu0 0.0
        %8247 = vmatprep.subr.mxu0 0.0
        %8248 = vmatpush1.msra.mxu0 0.0
        %8249 = vmatprep.subr.mxu0 0.0
        %8250 = vmatpush1.msra.mxu0 0.0
        %8251 = vmatprep.subr.mxu0 0.0
        %8252 = vmatpush1.msra.mxu0 0.0
        %8253 = vmatprep.subr.mxu0 0.0
        %8254 = vmatpush1.msra.mxu0 0.0
        %8255 = vmatprep.subr.mxu0 0.0
        %8256 = vmatpush1.msra.mxu0 0.0
        %8257 = vmatprep.subr.mxu0 0.0
        %8258 = vmatpush1.msra.mxu0 0.0
        %8259 = vmatprep.subr.mxu0 0.0
        %8260 = vmatpush1.msra.mxu0 0.0
        %8261 = vmatprep.mubr.f32.mxu0 0.0
        %v8262 = vand.u32 %v8025, 4294901760
        %v8263 = vsub.f32 %v8025, %v8262
        %8264 = vmatmul.mubr.f32.gmra.mrb[0].mxu0 %v8263
        %v8265 = vpop.f32.mrb[0].mxu0
        %v8266 = vadd.f32 %v8189, %v8265
        %v8267 = vpop.f32.mrb[0].mxu0
        %v8268 = vadd.f32 %v8191, %v8267
        %8269 = vdwg.mxu0
        %v8270 = vand.u32 %v8031, 4294901760
        %8271 = vmatprep.subr.mxu0 %v8270
        %v8272 = vand.u32 %v8028, 4294901760
        %8273 = vmatpush1.msra.mxu0 %v8272
        %8274 = vmatprep.subr.mxu0 0.0
        %8275 = vmatpush1.msra.mxu0 0.0
        %8276 = vmatprep.subr.mxu0 0.0
        %8277 = vmatpush1.msra.mxu0 0.0
        %8278 = vmatprep.subr.mxu0 0.0
        %8279 = vmatpush1.msra.mxu0 0.0
        %8280 = vmatprep.subr.mxu0 0.0
        %8281 = vmatpush1.msra.mxu0 0.0
        %8282 = vmatprep.subr.mxu0 0.0
        %8283 = vmatpush1.msra.mxu0 0.0
        %8284 = vmatprep.subr.mxu0 0.0
        %8285 = vmatpush1.msra.mxu0 0.0
        %8286 = vmatprep.subr.mxu0 0.0
        %8287 = vmatpush1.msra.mxu0 0.0
        %8288 = vmatprep.subr.mxu0 0.0
        %8289 = vmatpush1.msra.mxu0 0.0
        %8290 = vmatprep.subr.mxu0 0.0
        %8291 = vmatpush1.msra.mxu0 0.0
        %8292 = vmatprep.subr.mxu0 0.0
        %8293 = vmatpush1.msra.mxu0 0.0
        %8294 = vmatprep.subr.mxu0 0.0
        %8295 = vmatpush1.msra.mxu0 0.0
        %8296 = vmatprep.subr.mxu0 0.0
        %8297 = vmatpush1.msra.mxu0 0.0
        %8298 = vmatprep.subr.mxu0 0.0
        %8299 = vmatpush1.msra.mxu0 0.0
        %8300 = vmatprep.subr.mxu0 0.0
        %8301 = vmatpush1.msra.mxu0 0.0
        %8302 = vmatprep.subr.mxu0 0.0
        %8303 = vmatpush1.msra.mxu0 0.0
        %8304 = vmatprep.subr.mxu0 0.0
        %8305 = vmatpush1.msra.mxu0 0.0
        %8306 = vmatprep.subr.mxu0 0.0
        %8307 = vmatpush1.msra.mxu0 0.0
        %8308 = vmatprep.subr.mxu0 0.0
        %8309 = vmatpush1.msra.mxu0 0.0
        %8310 = vmatprep.subr.mxu0 0.0
        %8311 = vmatpush1.msra.mxu0 0.0
        %8312 = vmatprep.subr.mxu0 0.0
        %8313 = vmatpush1.msra.mxu0 0.0
        %8314 = vmatprep.subr.mxu0 0.0
        %8315 = vmatpush1.msra.mxu0 0.0
        %8316 = vmatprep.subr.mxu0 0.0
        %8317 = vmatpush1.msra.mxu0 0.0
        %8318 = vmatprep.subr.mxu0 0.0
        %8319 = vmatpush1.msra.mxu0 0.0
        %8320 = vmatprep.subr.mxu0 0.0
        %8321 = vmatpush1.msra.mxu0 0.0
        %8322 = vmatprep.subr.mxu0 0.0
        %8323 = vmatpush1.msra.mxu0 0.0
        %8324 = vmatprep.subr.mxu0 0.0
        %8325 = vmatpush1.msra.mxu0 0.0
        %8326 = vmatprep.subr.mxu0 0.0
        %8327 = vmatpush1.msra.mxu0 0.0
        %8328 = vmatprep.subr.mxu0 0.0
        %8329 = vmatpush1.msra.mxu0 0.0
        %8330 = vmatprep.subr.mxu0 0.0
        %8331 = vmatpush1.msra.mxu0 0.0
        %8332 = vmatprep.subr.mxu0 0.0
        %8333 = vmatpush1.msra.mxu0 0.0
        %8334 = vmatprep.subr.mxu0 0.0
        %8335 = vmatpush1.msra.mxu0 0.0
        %8336 = vmatprep.mubr.f32.mxu0 0.0
        %v8337 = vand.u32 %v8025, 4294901760
        %v8338 = vsub.f32 %v8025, %v8337
        %v8339 = vand.u32 %v8338, 4294901760
        %8340 = vmatmul.mubr.f32.gmra.mrb[0].mxu0 %v8339
        %v8341 = vpop.f32.mrb[0].mxu0
        %v8342 = vadd.f32 %v8266, %v8341
        %v8343 = vpop.f32.mrb[0].mxu0
        %v8344 = vadd.f32 %v8268, %v8343
        %8345 = vdwg.mxu0
        %v8346 = vand.u32 %v8031, 4294901760
        %v8347 = vsub.f32 %v8031, %v8346
        %v8348 = vand.u32 %v8347, 4294901760
        %8349 = vmatprep.subr.mxu0 %v8348
        %v8350 = vand.u32 %v8028, 4294901760
        %v8351 = vsub.f32 %v8028, %v8350
        %v8352 = vand.u32 %v8351, 4294901760
        %8353 = vmatpush1.msra.mxu0 %v8352
        %8354 = vmatprep.subr.mxu0 0.0
        %8355 = vmatpush1.msra.mxu0 0.0
        %8356 = vmatprep.subr.mxu0 0.0
        %8357 = vmatpush1.msra.mxu0 0.0
        %8358 = vmatprep.subr.mxu0 0.0
        %8359 = vmatpush1.msra.mxu0 0.0
        %8360 = vmatprep.subr.mxu0 0.0
        %8361 = vmatpush1.msra.mxu0 0.0
        %8362 = vmatprep.subr.mxu0 0.0
        %8363 = vmatpush1.msra.mxu0 0.0
        %8364 = vmatprep.subr.mxu0 0.0
        %8365 = vmatpush1.msra.mxu0 0.0
        %8366 = vmatprep.subr.mxu0 0.0
        %8367 = vmatpush1.msra.mxu0 0.0
        %8368 = vmatprep.subr.mxu0 0.0
        %8369 = vmatpush1.msra.mxu0 0.0
        %8370 = vmatprep.subr.mxu0 0.0
        %8371 = vmatpush1.msra.mxu0 0.0
        %8372 = vmatprep.subr.mxu0 0.0
        %8373 = vmatpush1.msra.mxu0 0.0
        %8374 = vmatprep.subr.mxu0 0.0
        %8375 = vmatpush1.msra.mxu0 0.0
        %8376 = vmatprep.subr.mxu0 0.0
        %8377 = vmatpush1.msra.mxu0 0.0
        %8378 = vmatprep.subr.mxu0 0.0
        %8379 = vmatpush1.msra.mxu0 0.0
        %8380 = vmatprep.subr.mxu0 0.0
        %8381 = vmatpush1.msra.mxu0 0.0
        %8382 = vmatprep.subr.mxu0 0.0
        %8383 = vmatpush1.msra.mxu0 0.0
        %8384 = vmatprep.subr.mxu0 0.0
        %8385 = vmatpush1.msra.mxu0 0.0
        %8386 = vmatprep.subr.mxu0 0.0
        %8387 = vmatpush1.msra.mxu0 0.0
        %8388 = vmatprep.subr.mxu0 0.0
        %8389 = vmatpush1.msra.mxu0 0.0
        %8390 = vmatprep.subr.mxu0 0.0
        %8391 = vmatpush1.msra.mxu0 0.0
        %8392 = vmatprep.subr.mxu0 0.0
        %8393 = vmatpush1.msra.mxu0 0.0
        %8394 = vmatprep.subr.mxu0 0.0
        %8395 = vmatpush1.msra.mxu0 0.0
        %8396 = vmatprep.subr.mxu0 0.0
        %8397 = vmatpush1.msra.mxu0 0.0
        %8398 = vmatprep.subr.mxu0 0.0
        %8399 = vmatpush1.msra.mxu0 0.0
        %8400 = vmatprep.subr.mxu0 0.0
        %8401 = vmatpush1.msra.mxu0 0.0
        %8402 = vmatprep.subr.mxu0 0.0
        %8403 = vmatpush1.msra.mxu0 0.0
        %8404 = vmatprep.subr.mxu0 0.0
        %8405 = vmatpush1.msra.mxu0 0.0
        %8406 = vmatprep.subr.mxu0 0.0
        %8407 = vmatpush1.msra.mxu0 0.0
        %8408 = vmatprep.subr.mxu0 0.0
        %8409 = vmatpush1.msra.mxu0 0.0
        %8410 = vmatprep.subr.mxu0 0.0
        %8411 = vmatpush1.msra.mxu0 0.0
        %8412 = vmatprep.subr.mxu0 0.0
        %8413 = vmatpush1.msra.mxu0 0.0
        %8414 = vmatprep.subr.mxu0 0.0
        %8415 = vmatpush1.msra.mxu0 0.0
        %8416 = vmatprep.mubr.f32.mxu0 0.0
        %v8417 = vand.u32 %v8025, 4294901760
        %8418 = vmatmul.mubr.f32.gmra.mrb[0].mxu0 %v8417
        %v8419 = vpop.f32.mrb[0].mxu0
        %v8420 = vadd.f32 %v8342, %v8419
        %v8421 = vpop.f32.mrb[0].mxu0
        %v8422 = vadd.f32 %v8344, %v8421
        %8423 = vdwg.mxu0
        %v8424 = vand.u32 %v8031, 4294901760
        %8425 = vmatprep.subr.mxu0 %v8424
        %v8426 = vand.u32 %v8028, 4294901760
        %8427 = vmatpush1.msra.mxu0 %v8426
        %8428 = vmatprep.subr.mxu0 0.0
        %8429 = vmatpush1.msra.mxu0 0.0
        %8430 = vmatprep.subr.mxu0 0.0
        %8431 = vmatpush1.msra.mxu0 0.0
        %8432 = vmatprep.subr.mxu0 0.0
        %8433 = vmatpush1.msra.mxu0 0.0
        %8434 = vmatprep.subr.mxu0 0.0
        %8435 = vmatpush1.msra.mxu0 0.0
        %8436 = vmatprep.subr.mxu0 0.0
        %8437 = vmatpush1.msra.mxu0 0.0
        %8438 = vmatprep.subr.mxu0 0.0
        %8439 = vmatpush1.msra.mxu0 0.0
        %8440 = vmatprep.subr.mxu0 0.0
        %8441 = vmatpush1.msra.mxu0 0.0
        %8442 = vmatprep.subr.mxu0 0.0
        %8443 = vmatpush1.msra.mxu0 0.0
        %8444 = vmatprep.subr.mxu0 0.0
        %8445 = vmatpush1.msra.mxu0 0.0
        %8446 = vmatprep.subr.mxu0 0.0
        %8447 = vmatpush1.msra.mxu0 0.0
        %8448 = vmatprep.subr.mxu0 0.0
        %8449 = vmatpush1.msra.mxu0 0.0
        %8450 = vmatprep.subr.mxu0 0.0
        %8451 = vmatpush1.msra.mxu0 0.0
        %8452 = vmatprep.subr.mxu0 0.0
        %8453 = vmatpush1.msra.mxu0 0.0
        %8454 = vmatprep.subr.mxu0 0.0
        %8455 = vmatpush1.msra.mxu0 0.0
        %8456 = vmatprep.subr.mxu0 0.0
        %8457 = vmatpush1.msra.mxu0 0.0
        %8458 = vmatprep.subr.mxu0 0.0
        %8459 = vmatpush1.msra.mxu0 0.0
        %8460 = vmatprep.subr.mxu0 0.0
        %8461 = vmatpush1.msra.mxu0 0.0
        %8462 = vmatprep.subr.mxu0 0.0
        %8463 = vmatpush1.msra.mxu0 0.0
        %8464 = vmatprep.subr.mxu0 0.0
        %8465 = vmatpush1.msra.mxu0 0.0
        %8466 = vmatprep.subr.mxu0 0.0
        %8467 = vmatpush1.msra.mxu0 0.0
        %8468 = vmatprep.subr.mxu0 0.0
        %8469 = vmatpush1.msra.mxu0 0.0
        %8470 = vmatprep.subr.mxu0 0.0
        %8471 = vmatpush1.msra.mxu0 0.0
        %8472 = vmatprep.subr.mxu0 0.0
        %8473 = vmatpush1.msra.mxu0 0.0
        %8474 = vmatprep.subr.mxu0 0.0
        %8475 = vmatpush1.msra.mxu0 0.0
        %8476 = vmatprep.subr.mxu0 0.0
        %8477 = vmatpush1.msra.mxu0 0.0
        %8478 = vmatprep.subr.mxu0 0.0
        %8479 = vmatpush1.msra.mxu0 0.0
        %8480 = vmatprep.subr.mxu0 0.0
        %8481 = vmatpush1.msra.mxu0 0.0
        %8482 = vmatprep.subr.mxu0 0.0
        %8483 = vmatpush1.msra.mxu0 0.0
        %8484 = vmatprep.subr.mxu0 0.0
        %8485 = vmatpush1.msra.mxu0 0.0
        %8486 = vmatprep.subr.mxu0 0.0
        %8487 = vmatpush1.msra.mxu0 0.0
        %8488 = vmatprep.subr.mxu0 0.0
        %8489 = vmatpush1.msra.mxu0 0.0
        %8490 = vmatprep.mubr.f32.mxu0 0.0
        %v8491 = vand.u32 %v8025, 4294901760
        %8492 = vmatmul.mubr.f32.gmra.mrb[0].mxu0 %v8491
        %v8493 = vpop.f32.mrb[0].mxu0
        %v8494 = vadd.f32 %v8420, %v8493
        %v8495 = vpop.f32.mrb[0].mxu0
        %v8496 = vadd.f32 %v8422, %v8495
        %8497 = vdwg.mxu0
        %v8498 = vadd.f32 %v8020, %v8494
        %v8499 = vadd.f32 %v8021, %v8496
        %s8500 = scalar_lea.vmem %s2, 32
        %v8501 = vld [vmem:[%s8500] sm:$0xf]
        %v8503 = vsel %vm262, %v8501, 0
        %v8506 = vsel %vm266, %v7542, 0
        %v8509 = vsel %vm266, %v7543, 0
        %v8511 = vand.u32 %v8509, 4294901760
        %8512 = vmatprep.subr.mxu0 %v8511
        %v8513 = vand.u32 %v8506, 4294901760
        %8514 = vmatpush1.msra.mxu0 %v8513
        %8515 = vmatprep.subr.mxu0 0.0
        %8516 = vmatpush1.msra.mxu0 0.0
        %8517 = vmatprep.subr.mxu0 0.0
        %8518 = vmatpush1.msra.mxu0 0.0
        %8519 = vmatprep.subr.mxu0 0.0
        %8520 = vmatpush1.msra.mxu0 0.0
        %8521 = vmatprep.subr.mxu0 0.0
        %8522 = vmatpush1.msra.mxu0 0.0
        %8523 = vmatprep.subr.mxu0 0.0
        %8524 = vmatpush1.msra.mxu0 0.0
        %8525 = vmatprep.subr.mxu0 0.0
        %8526 = vmatpush1.msra.mxu0 0.0
        %8527 = vmatprep.subr.mxu0 0.0
        %8528 = vmatpush1.msra.mxu0 0.0
        %8529 = vmatprep.subr.mxu0 0.0
        %8530 = vmatpush1.msra.mxu0 0.0
        %8531 = vmatprep.subr.mxu0 0.0
        %8532 = vmatpush1.msra.mxu0 0.0
        %8533 = vmatprep.subr.mxu0 0.0
        %8534 = vmatpush1.msra.mxu0 0.0
        %8535 = vmatprep.subr.mxu0 0.0
        %8536 = vmatpush1.msra.mxu0 0.0
        %8537 = vmatprep.subr.mxu0 0.0
        %8538 = vmatpush1.msra.mxu0 0.0
        %8539 = vmatprep.subr.mxu0 0.0
        %8540 = vmatpush1.msra.mxu0 0.0
        %8541 = vmatprep.subr.mxu0 0.0
        %8542 = vmatpush1.msra.mxu0 0.0
        %8543 = vmatprep.subr.mxu0 0.0
        %8544 = vmatpush1.msra.mxu0 0.0
        %8545 = vmatprep.subr.mxu0 0.0
        %8546 = vmatpush1.msra.mxu0 0.0
        %8547 = vmatprep.subr.mxu0 0.0
        %8548 = vmatpush1.msra.mxu0 0.0
        %8549 = vmatprep.subr.mxu0 0.0
        %8550 = vmatpush1.msra.mxu0 0.0
        %8551 = vmatprep.subr.mxu0 0.0
        %8552 = vmatpush1.msra.mxu0 0.0
        %8553 = vmatprep.subr.mxu0 0.0
        %8554 = vmatpush1.msra.mxu0 0.0
        %8555 = vmatprep.subr.mxu0 0.0
        %8556 = vmatpush1.msra.mxu0 0.0
        %8557 = vmatprep.subr.mxu0 0.0
        %8558 = vmatpush1.msra.mxu0 0.0
        %8559 = vmatprep.subr.mxu0 0.0
        %8560 = vmatpush1.msra.mxu0 0.0
        %8561 = vmatprep.subr.mxu0 0.0
        %8562 = vmatpush1.msra.mxu0 0.0
        %8563 = vmatprep.subr.mxu0 0.0
        %8564 = vmatpush1.msra.mxu0 0.0
        %8565 = vmatprep.subr.mxu0 0.0
        %8566 = vmatpush1.msra.mxu0 0.0
        %8567 = vmatprep.subr.mxu0 0.0
        %8568 = vmatpush1.msra.mxu0 0.0
        %8569 = vmatprep.subr.mxu0 0.0
        %8570 = vmatpush1.msra.mxu0 0.0
        %8571 = vmatprep.subr.mxu0 0.0
        %8572 = vmatpush1.msra.mxu0 0.0
        %8573 = vmatprep.subr.mxu0 0.0
        %8574 = vmatpush1.msra.mxu0 0.0
        %8575 = vmatprep.subr.mxu0 0.0
        %8576 = vmatpush1.msra.mxu0 0.0
        %8577 = vmatprep.mubr.f32.mxu0 0.0
        %v8578 = vand.u32 %v8503, 4294901760
        %v8579 = vsub.f32 %v8503, %v8578
        %v8580 = vand.u32 %v8579, 4294901760
        %v8581 = vsub.f32 %v8579, %v8580
        %v8582 = vand.u32 %v8581, 4294901760
        %8583 = vmatmul.mubr.f32.gmra.mrb[0].mxu0 %v8582
        %v8584 = vpop.f32.mrb[0].mxu0
        %v8585 = vadd.f32 0.0, %v8584
        %v8586 = vpop.f32.mrb[0].mxu0
        %v8587 = vadd.f32 0.0, %v8586
        %8588 = vdwg.mxu0
        %v8589 = vand.u32 %v8509, 4294901760
        %v8590 = vsub.f32 %v8509, %v8589
        %v8591 = vand.u32 %v8590, 4294901760
        %v8592 = vsub.f32 %v8590, %v8591
        %v8593 = vand.u32 %v8592, 4294901760
        %8594 = vmatprep.subr.mxu0 %v8593
        %v8595 = vand.u32 %v8506, 4294901760
        %v8596 = vsub.f32 %v8506, %v8595
        %v8597 = vand.u32 %v8596, 4294901760
        %v8598 = vsub.f32 %v8596, %v8597
        %v8599 = vand.u32 %v8598, 4294901760
        %8600 = vmatpush1.msra.mxu0 %v8599
        %8601 = vmatprep.subr.mxu0 0.0
        %8602 = vmatpush1.msra.mxu0 0.0
        %8603 = vmatprep.subr.mxu0 0.0
        %8604 = vmatpush1.msra.mxu0 0.0
        %8605 = vmatprep.subr.mxu0 0.0
        %8606 = vmatpush1.msra.mxu0 0.0
        %8607 = vmatprep.subr.mxu0 0.0
        %8608 = vmatpush1.msra.mxu0 0.0
        %8609 = vmatprep.subr.mxu0 0.0
        %8610 = vmatpush1.msra.mxu0 0.0
        %8611 = vmatprep.subr.mxu0 0.0
        %8612 = vmatpush1.msra.mxu0 0.0
        %8613 = vmatprep.subr.mxu0 0.0
        %8614 = vmatpush1.msra.mxu0 0.0
        %8615 = vmatprep.subr.mxu0 0.0
        %8616 = vmatpush1.msra.mxu0 0.0
        %8617 = vmatprep.subr.mxu0 0.0
        %8618 = vmatpush1.msra.mxu0 0.0
        %8619 = vmatprep.subr.mxu0 0.0
        %8620 = vmatpush1.msra.mxu0 0.0
        %8621 = vmatprep.subr.mxu0 0.0
        %8622 = vmatpush1.msra.mxu0 0.0
        %8623 = vmatprep.subr.mxu0 0.0
        %8624 = vmatpush1.msra.mxu0 0.0
        %8625 = vmatprep.subr.mxu0 0.0
        %8626 = vmatpush1.msra.mxu0 0.0
        %8627 = vmatprep.subr.mxu0 0.0
        %8628 = vmatpush1.msra.mxu0 0.0
        %8629 = vmatprep.subr.mxu0 0.0
        %8630 = vmatpush1.msra.mxu0 0.0
        %8631 = vmatprep.subr.mxu0 0.0
        %8632 = vmatpush1.msra.mxu0 0.0
        %8633 = vmatprep.subr.mxu0 0.0
        %8634 = vmatpush1.msra.mxu0 0.0
        %8635 = vmatprep.subr.mxu0 0.0
        %8636 = vmatpush1.msra.mxu0 0.0
        %8637 = vmatprep.subr.mxu0 0.0
        %8638 = vmatpush1.msra.mxu0 0.0
        %8639 = vmatprep.subr.mxu0 0.0
        %8640 = vmatpush1.msra.mxu0 0.0
        %8641 = vmatprep.subr.mxu0 0.0
        %8642 = vmatpush1.msra.mxu0 0.0
        %8643 = vmatprep.subr.mxu0 0.0
        %8644 = vmatpush1.msra.mxu0 0.0
        %8645 = vmatprep.subr.mxu0 0.0
        %8646 = vmatpush1.msra.mxu0 0.0
        %8647 = vmatprep.subr.mxu0 0.0
        %8648 = vmatpush1.msra.mxu0 0.0
        %8649 = vmatprep.subr.mxu0 0.0
        %8650 = vmatpush1.msra.mxu0 0.0
        %8651 = vmatprep.subr.mxu0 0.0
        %8652 = vmatpush1.msra.mxu0 0.0
        %8653 = vmatprep.subr.mxu0 0.0
        %8654 = vmatpush1.msra.mxu0 0.0
        %8655 = vmatprep.subr.mxu0 0.0
        %8656 = vmatpush1.msra.mxu0 0.0
        %8657 = vmatprep.subr.mxu0 0.0
        %8658 = vmatpush1.msra.mxu0 0.0
        %8659 = vmatprep.subr.mxu0 0.0
        %8660 = vmatpush1.msra.mxu0 0.0
        %8661 = vmatprep.subr.mxu0 0.0
        %8662 = vmatpush1.msra.mxu0 0.0
        %8663 = vmatprep.mubr.f32.mxu0 0.0
        %v8664 = vand.u32 %v8503, 4294901760
        %8665 = vmatmul.mubr.f32.gmra.mrb[0].mxu0 %v8664
        %v8666 = vpop.f32.mrb[0].mxu0
        %v8667 = vadd.f32 %v8585, %v8666
        %v8668 = vpop.f32.mrb[0].mxu0
        %v8669 = vadd.f32 %v8587, %v8668
        %8670 = vdwg.mxu0
        %v8671 = vand.u32 %v8509, 4294901760
        %v8672 = vsub.f32 %v8509, %v8671
        %8673 = vmatprep.subr.mxu0 %v8672
        %v8674 = vand.u32 %v8506, 4294901760
        %v8675 = vsub.f32 %v8506, %v8674
        %8676 = vmatpush1.msra.mxu0 %v8675
        %8677 = vmatprep.subr.mxu0 0.0
        %8678 = vmatpush1.msra.mxu0 0.0
        %8679 = vmatprep.subr.mxu0 0.0
        %8680 = vmatpush1.msra.mxu0 0.0
        %8681 = vmatprep.subr.mxu0 0.0
        %8682 = vmatpush1.msra.mxu0 0.0
        %8683 = vmatprep.subr.mxu0 0.0
        %8684 = vmatpush1.msra.mxu0 0.0
        %8685 = vmatprep.subr.mxu0 0.0
        %8686 = vmatpush1.msra.mxu0 0.0
        %8687 = vmatprep.subr.mxu0 0.0
        %8688 = vmatpush1.msra.mxu0 0.0
        %8689 = vmatprep.subr.mxu0 0.0
        %8690 = vmatpush1.msra.mxu0 0.0
        %8691 = vmatprep.subr.mxu0 0.0
        %8692 = vmatpush1.msra.mxu0 0.0
        %8693 = vmatprep.subr.mxu0 0.0
        %8694 = vmatpush1.msra.mxu0 0.0
        %8695 = vmatprep.subr.mxu0 0.0
        %8696 = vmatpush1.msra.mxu0 0.0
        %8697 = vmatprep.subr.mxu0 0.0
        %8698 = vmatpush1.msra.mxu0 0.0
        %8699 = vmatprep.subr.mxu0 0.0
        %8700 = vmatpush1.msra.mxu0 0.0
        %8701 = vmatprep.subr.mxu0 0.0
        %8702 = vmatpush1.msra.mxu0 0.0
        %8703 = vmatprep.subr.mxu0 0.0
        %8704 = vmatpush1.msra.mxu0 0.0
        %8705 = vmatprep.subr.mxu0 0.0
        %8706 = vmatpush1.msra.mxu0 0.0
        %8707 = vmatprep.subr.mxu0 0.0
        %8708 = vmatpush1.msra.mxu0 0.0
        %8709 = vmatprep.subr.mxu0 0.0
        %8710 = vmatpush1.msra.mxu0 0.0
        %8711 = vmatprep.subr.mxu0 0.0
        %8712 = vmatpush1.msra.mxu0 0.0
        %8713 = vmatprep.subr.mxu0 0.0
        %8714 = vmatpush1.msra.mxu0 0.0
        %8715 = vmatprep.subr.mxu0 0.0
        %8716 = vmatpush1.msra.mxu0 0.0
        %8717 = vmatprep.subr.mxu0 0.0
        %8718 = vmatpush1.msra.mxu0 0.0
        %8719 = vmatprep.subr.mxu0 0.0
        %8720 = vmatpush1.msra.mxu0 0.0
        %8721 = vmatprep.subr.mxu0 0.0
        %8722 = vmatpush1.msra.mxu0 0.0
        %8723 = vmatprep.subr.mxu0 0.0
        %8724 = vmatpush1.msra.mxu0 0.0
        %8725 = vmatprep.subr.mxu0 0.0
        %8726 = vmatpush1.msra.mxu0 0.0
        %8727 = vmatprep.subr.mxu0 0.0
        %8728 = vmatpush1.msra.mxu0 0.0
        %8729 = vmatprep.subr.mxu0 0.0
        %8730 = vmatpush1.msra.mxu0 0.0
        %8731 = vmatprep.subr.mxu0 0.0
        %8732 = vmatpush1.msra.mxu0 0.0
        %8733 = vmatprep.subr.mxu0 0.0
        %8734 = vmatpush1.msra.mxu0 0.0
        %8735 = vmatprep.subr.mxu0 0.0
        %8736 = vmatpush1.msra.mxu0 0.0
        %8737 = vmatprep.subr.mxu0 0.0
        %8738 = vmatpush1.msra.mxu0 0.0
        %8739 = vmatprep.mubr.f32.mxu0 0.0
        %v8740 = vand.u32 %v8503, 4294901760
        %v8741 = vsub.f32 %v8503, %v8740
        %8742 = vmatmul.mubr.f32.gmra.mrb[0].mxu0 %v8741
        %v8743 = vpop.f32.mrb[0].mxu0
        %v8744 = vadd.f32 %v8667, %v8743
        %v8745 = vpop.f32.mrb[0].mxu0
        %v8746 = vadd.f32 %v8669, %v8745
        %8747 = vdwg.mxu0
        %v8748 = vand.u32 %v8509, 4294901760
        %8749 = vmatprep.subr.mxu0 %v8748
        %v8750 = vand.u32 %v8506, 4294901760
        %8751 = vmatpush1.msra.mxu0 %v8750
        %8752 = vmatprep.subr.mxu0 0.0
        %8753 = vmatpush1.msra.mxu0 0.0
        %8754 = vmatprep.subr.mxu0 0.0
        %8755 = vmatpush1.msra.mxu0 0.0
        %8756 = vmatprep.subr.mxu0 0.0
        %8757 = vmatpush1.msra.mxu0 0.0
        %8758 = vmatprep.subr.mxu0 0.0
        %8759 = vmatpush1.msra.mxu0 0.0
        %8760 = vmatprep.subr.mxu0 0.0
        %8761 = vmatpush1.msra.mxu0 0.0
        %8762 = vmatprep.subr.mxu0 0.0
        %8763 = vmatpush1.msra.mxu0 0.0
        %8764 = vmatprep.subr.mxu0 0.0
        %8765 = vmatpush1.msra.mxu0 0.0
        %8766 = vmatprep.subr.mxu0 0.0
        %8767 = vmatpush1.msra.mxu0 0.0
        %8768 = vmatprep.subr.mxu0 0.0
        %8769 = vmatpush1.msra.mxu0 0.0
        %8770 = vmatprep.subr.mxu0 0.0
        %8771 = vmatpush1.msra.mxu0 0.0
        %8772 = vmatprep.subr.mxu0 0.0
        %8773 = vmatpush1.msra.mxu0 0.0
        %8774 = vmatprep.subr.mxu0 0.0
        %8775 = vmatpush1.msra.mxu0 0.0
        %8776 = vmatprep.subr.mxu0 0.0
        %8777 = vmatpush1.msra.mxu0 0.0
        %8778 = vmatprep.subr.mxu0 0.0
        %8779 = vmatpush1.msra.mxu0 0.0
        %8780 = vmatprep.subr.mxu0 0.0
        %8781 = vmatpush1.msra.mxu0 0.0
        %8782 = vmatprep.subr.mxu0 0.0
        %8783 = vmatpush1.msra.mxu0 0.0
        %8784 = vmatprep.subr.mxu0 0.0
        %8785 = vmatpush1.msra.mxu0 0.0
        %8786 = vmatprep.subr.mxu0 0.0
        %8787 = vmatpush1.msra.mxu0 0.0
        %8788 = vmatprep.subr.mxu0 0.0
        %8789 = vmatpush1.msra.mxu0 0.0
        %8790 = vmatprep.subr.mxu0 0.0
        %8791 = vmatpush1.msra.mxu0 0.0
        %8792 = vmatprep.subr.mxu0 0.0
        %8793 = vmatpush1.msra.mxu0 0.0
        %8794 = vmatprep.subr.mxu0 0.0
        %8795 = vmatpush1.msra.mxu0 0.0
        %8796 = vmatprep.subr.mxu0 0.0
        %8797 = vmatpush1.msra.mxu0 0.0
        %8798 = vmatprep.subr.mxu0 0.0
        %8799 = vmatpush1.msra.mxu0 0.0
        %8800 = vmatprep.subr.mxu0 0.0
        %8801 = vmatpush1.msra.mxu0 0.0
        %8802 = vmatprep.subr.mxu0 0.0
        %8803 = vmatpush1.msra.mxu0 0.0
        %8804 = vmatprep.subr.mxu0 0.0
        %8805 = vmatpush1.msra.mxu0 0.0
        %8806 = vmatprep.subr.mxu0 0.0
        %8807 = vmatpush1.msra.mxu0 0.0
        %8808 = vmatprep.subr.mxu0 0.0
        %8809 = vmatpush1.msra.mxu0 0.0
        %8810 = vmatprep.subr.mxu0 0.0
        %8811 = vmatpush1.msra.mxu0 0.0
        %8812 = vmatprep.subr.mxu0 0.0
        %8813 = vmatpush1.msra.mxu0 0.0
        %8814 = vmatprep.mubr.f32.mxu0 0.0
        %v8815 = vand.u32 %v8503, 4294901760
        %v8816 = vsub.f32 %v8503, %v8815
        %v8817 = vand.u32 %v8816, 4294901760
        %8818 = vmatmul.mubr.f32.gmra.mrb[0].mxu0 %v8817
        %v8819 = vpop.f32.mrb[0].mxu0
        %v8820 = vadd.f32 %v8744, %v8819
        %v8821 = vpop.f32.mrb[0].mxu0
        %v8822 = vadd.f32 %v8746, %v8821
        %8823 = vdwg.mxu0
        %v8824 = vand.u32 %v8509, 4294901760
        %v8825 = vsub.f32 %v8509, %v8824
        %v8826 = vand.u32 %v8825, 4294901760
        %8827 = vmatprep.subr.mxu0 %v8826
        %v8828 = vand.u32 %v8506, 4294901760
        %v8829 = vsub.f32 %v8506, %v8828
        %v8830 = vand.u32 %v8829, 4294901760
        %8831 = vmatpush1.msra.mxu0 %v8830
        %8832 = vmatprep.subr.mxu0 0.0
        %8833 = vmatpush1.msra.mxu0 0.0
        %8834 = vmatprep.subr.mxu0 0.0
        %8835 = vmatpush1.msra.mxu0 0.0
        %8836 = vmatprep.subr.mxu0 0.0
        %8837 = vmatpush1.msra.mxu0 0.0
        %8838 = vmatprep.subr.mxu0 0.0
        %8839 = vmatpush1.msra.mxu0 0.0
        %8840 = vmatprep.subr.mxu0 0.0
        %8841 = vmatpush1.msra.mxu0 0.0
        %8842 = vmatprep.subr.mxu0 0.0
        %8843 = vmatpush1.msra.mxu0 0.0
        %8844 = vmatprep.subr.mxu0 0.0
        %8845 = vmatpush1.msra.mxu0 0.0
        %8846 = vmatprep.subr.mxu0 0.0
        %8847 = vmatpush1.msra.mxu0 0.0
        %8848 = vmatprep.subr.mxu0 0.0
        %8849 = vmatpush1.msra.mxu0 0.0
        %8850 = vmatprep.subr.mxu0 0.0
        %8851 = vmatpush1.msra.mxu0 0.0
        %8852 = vmatprep.subr.mxu0 0.0
        %8853 = vmatpush1.msra.mxu0 0.0
        %8854 = vmatprep.subr.mxu0 0.0
        %8855 = vmatpush1.msra.mxu0 0.0
        %8856 = vmatprep.subr.mxu0 0.0
        %8857 = vmatpush1.msra.mxu0 0.0
        %8858 = vmatprep.subr.mxu0 0.0
        %8859 = vmatpush1.msra.mxu0 0.0
        %8860 = vmatprep.subr.mxu0 0.0
        %8861 = vmatpush1.msra.mxu0 0.0
        %8862 = vmatprep.subr.mxu0 0.0
        %8863 = vmatpush1.msra.mxu0 0.0
        %8864 = vmatprep.subr.mxu0 0.0
        %8865 = vmatpush1.msra.mxu0 0.0
        %8866 = vmatprep.subr.mxu0 0.0
        %8867 = vmatpush1.msra.mxu0 0.0
        %8868 = vmatprep.subr.mxu0 0.0
        %8869 = vmatpush1.msra.mxu0 0.0
        %8870 = vmatprep.subr.mxu0 0.0
        %8871 = vmatpush1.msra.mxu0 0.0
        %8872 = vmatprep.subr.mxu0 0.0
        %8873 = vmatpush1.msra.mxu0 0.0
        %8874 = vmatprep.subr.mxu0 0.0
        %8875 = vmatpush1.msra.mxu0 0.0
        %8876 = vmatprep.subr.mxu0 0.0
        %8877 = vmatpush1.msra.mxu0 0.0
        %8878 = vmatprep.subr.mxu0 0.0
        %8879 = vmatpush1.msra.mxu0 0.0
        %8880 = vmatprep.subr.mxu0 0.0
        %8881 = vmatpush1.msra.mxu0 0.0
        %8882 = vmatprep.subr.mxu0 0.0
        %8883 = vmatpush1.msra.mxu0 0.0
        %8884 = vmatprep.subr.mxu0 0.0
        %8885 = vmatpush1.msra.mxu0 0.0
        %8886 = vmatprep.subr.mxu0 0.0
        %8887 = vmatpush1.msra.mxu0 0.0
        %8888 = vmatprep.subr.mxu0 0.0
        %8889 = vmatpush1.msra.mxu0 0.0
        %8890 = vmatprep.subr.mxu0 0.0
        %8891 = vmatpush1.msra.mxu0 0.0
        %8892 = vmatprep.subr.mxu0 0.0
        %8893 = vmatpush1.msra.mxu0 0.0
        %8894 = vmatprep.mubr.f32.mxu0 0.0
        %v8895 = vand.u32 %v8503, 4294901760
        %8896 = vmatmul.mubr.f32.gmra.mrb[0].mxu0 %v8895
        %v8897 = vpop.f32.mrb[0].mxu0
        %v8898 = vadd.f32 %v8820, %v8897
        %v8899 = vpop.f32.mrb[0].mxu0
        %v8900 = vadd.f32 %v8822, %v8899
        %8901 = vdwg.mxu0
        %v8902 = vand.u32 %v8509, 4294901760
        %8903 = vmatprep.subr.mxu0 %v8902
        %v8904 = vand.u32 %v8506, 4294901760
        %8905 = vmatpush1.msra.mxu0 %v8904
        %8906 = vmatprep.subr.mxu0 0.0
        %8907 = vmatpush1.msra.mxu0 0.0
        %8908 = vmatprep.subr.mxu0 0.0
        %8909 = vmatpush1.msra.mxu0 0.0
        %8910 = vmatprep.subr.mxu0 0.0
        %8911 = vmatpush1.msra.mxu0 0.0
        %8912 = vmatprep.subr.mxu0 0.0
        %8913 = vmatpush1.msra.mxu0 0.0
        %8914 = vmatprep.subr.mxu0 0.0
        %8915 = vmatpush1.msra.mxu0 0.0
        %8916 = vmatprep.subr.mxu0 0.0
        %8917 = vmatpush1.msra.mxu0 0.0
        %8918 = vmatprep.subr.mxu0 0.0
        %8919 = vmatpush1.msra.mxu0 0.0
        %8920 = vmatprep.subr.mxu0 0.0
        %8921 = vmatpush1.msra.mxu0 0.0
        %8922 = vmatprep.subr.mxu0 0.0
        %8923 = vmatpush1.msra.mxu0 0.0
        %8924 = vmatprep.subr.mxu0 0.0
        %8925 = vmatpush1.msra.mxu0 0.0
        %8926 = vmatprep.subr.mxu0 0.0
        %8927 = vmatpush1.msra.mxu0 0.0
        %8928 = vmatprep.subr.mxu0 0.0
        %8929 = vmatpush1.msra.mxu0 0.0
        %8930 = vmatprep.subr.mxu0 0.0
        %8931 = vmatpush1.msra.mxu0 0.0
        %8932 = vmatprep.subr.mxu0 0.0
        %8933 = vmatpush1.msra.mxu0 0.0
        %8934 = vmatprep.subr.mxu0 0.0
        %8935 = vmatpush1.msra.mxu0 0.0
        %8936 = vmatprep.subr.mxu0 0.0
        %8937 = vmatpush1.msra.mxu0 0.0
        %8938 = vmatprep.subr.mxu0 0.0
        %8939 = vmatpush1.msra.mxu0 0.0
        %8940 = vmatprep.subr.mxu0 0.0
        %8941 = vmatpush1.msra.mxu0 0.0
        %8942 = vmatprep.subr.mxu0 0.0
        %8943 = vmatpush1.msra.mxu0 0.0
        %8944 = vmatprep.subr.mxu0 0.0
        %8945 = vmatpush1.msra.mxu0 0.0
        %8946 = vmatprep.subr.mxu0 0.0
        %8947 = vmatpush1.msra.mxu0 0.0
        %8948 = vmatprep.subr.mxu0 0.0
        %8949 = vmatpush1.msra.mxu0 0.0
        %8950 = vmatprep.subr.mxu0 0.0
        %8951 = vmatpush1.msra.mxu0 0.0
        %8952 = vmatprep.subr.mxu0 0.0
        %8953 = vmatpush1.msra.mxu0 0.0
        %8954 = vmatprep.subr.mxu0 0.0
        %8955 = vmatpush1.msra.mxu0 0.0
        %8956 = vmatprep.subr.mxu0 0.0
        %8957 = vmatpush1.msra.mxu0 0.0
        %8958 = vmatprep.subr.mxu0 0.0
        %8959 = vmatpush1.msra.mxu0 0.0
        %8960 = vmatprep.subr.mxu0 0.0
        %8961 = vmatpush1.msra.mxu0 0.0
        %8962 = vmatprep.subr.mxu0 0.0
        %8963 = vmatpush1.msra.mxu0 0.0
        %8964 = vmatprep.subr.mxu0 0.0
        %8965 = vmatpush1.msra.mxu0 0.0
        %8966 = vmatprep.subr.mxu0 0.0
        %8967 = vmatpush1.msra.mxu0 0.0
        %8968 = vmatprep.mubr.f32.mxu0 0.0
        %v8969 = vand.u32 %v8503, 4294901760
        %8970 = vmatmul.mubr.f32.gmra.mrb[0].mxu0 %v8969
        %v8971 = vpop.f32.mrb[0].mxu0
        %v8972 = vadd.f32 %v8898, %v8971
        %v8973 = vpop.f32.mrb[0].mxu0
        %v8974 = vadd.f32 %v8900, %v8973
        %8975 = vdwg.mxu0
        %v8976 = vadd.f32 %v8498, %v8972
        %v8977 = vadd.f32 %v8499, %v8974
        %v8978 = vsel %vm266, %v8976, 0.0
        %v8979 = vsel %vm266, %v8977, 0.0
        %v8980 = vadd.f32 %v8978, %v8979
        %8981 = vadd.xlane.f32.xlu0 %v8980
        %v8982 = vpop.xlane.xlu0 %8981
        %v8983 = vmul.f32 %v8982, 0.00390625
        %v8984 = vmul.f32 %v8976, %v8976
        %v8985 = vmul.f32 %v8977, %v8977
        %v8986 = vsel %vm266, %v8984, 0.0
        %v8987 = vsel %vm266, %v8985, 0.0
        %v8988 = vadd.f32 %v8986, %v8987
        %8989 = vadd.xlane.f32.xlu0 %v8988
        %v8990 = vpop.xlane.xlu0 %8989
        %v8991 = vmul.f32 %v8990, 0.00390625
        %v8992 = vmul.f32 %v8983, %v8983
        %v8993 = vsub.f32 %v8991, %v8992
        %v8994 = vmax.f32 %v8993, 0.0
        %v8995 = vsub.f32 %v8976, %v8983
        %v8996 = vsub.f32 %v8977, %v8983
        %v8997 = vadd.f32 %v8994, 1e-05
        %v8998 = vrsqrt.pop %v8997
        %v8999 = vmul.f32 %v8995, %v8998
        %v9000 = vmul.f32 %v8996, %v8998
        %v9001 = vadd.f32 %v8999, %v204
        %v9002 = vadd.f32 %v9000, %v206
        %v9005 = vcombine.low %v9001, %v9002
        %9007 = vst [vmem:[%s163] sm:$0xff] %v9005
        %s9008 = sand.u32 %s93, 1
        %s9009 = scalar_lea.sflag [#allocation3], %s9008
        %s9010 = sand.u32 %s93, 1
        %s9011 = smul.addr %s9010, 8
        %s9012 = scalar_lea.vmem [#allocation2], %s9011
        // Predicated region
        $region33: #{tpu_custom_call.1} parent=31 // pred_check
          %p9013 = pneg %p103
        $region34: #{tpu_custom_call.1} parent=31 // pred_check_branch
          %9015 = sbr.rel (%p9013) target = $region36
        $region35: #{tpu_custom_call.1} parent=31 // pred_region
          %s9017 = ssub.s32 128, 128
          %9018 = vsyncadd %s9009, %s9017
          %s9019 = smul.addr %s17, 2
          %s9020 = smul.addr %s9019, 64
          %s9021 = scalar_lea.hbm %s3, %s9020
          %s9023 = sshll.u32 %s9012, 4
          %s9024 = int_to_ptr.vmem [resolvable:$true] %s9023
          %9026 = dma.vmem_to_hbm [thread:$0]  %s9024, 128, %s9021, %s9009
        $region36: #{tpu_custom_call.1} parent=31 // pred_fallthru
          _
      $region32: #{tpu_custom_call.1} parent=5 // pred_fallthru
        _
      %p9027 = scmp.le.s32.totalorder 2, %s12
      // Predicated region
      $region37: #{tpu_custom_call.1} parent=5 // pred_check
        %p9028 = pneg %p9027
      $region38: #{tpu_custom_call.1} parent=5 // pred_check_branch
        %9030 = sbr.rel (%p9028) target = $region40
      $region39: #{tpu_custom_call.1} parent=5 // pred_region
        %s9031 = ssub.s32 %s12, 2
        // Predicated region
        $region41: #{tpu_custom_call.1} parent=39 // pred_check
          %p9032 = pneg %p109
        $region42: #{tpu_custom_call.1} parent=39 // pred_check_branch
          %9034 = sbr.rel (%p9032) target = $region44
        $region43: #{tpu_custom_call.1} parent=39 // pred_region
          %s9035 = sand.u32 %s94, 1
          %s9036 = scalar_lea.sflag [#allocation3], %s9035
          %s9037 = sand.u32 %s94, 1
          %s9038 = smul.addr %s9037, 8
          %s9039 = scalar_lea.vmem [#allocation2], %s9038
          %9040 = dma.done %s9036, 128
        $region44: #{tpu_custom_call.1} parent=39 // pred_fallthru
          _
      $region40: #{tpu_custom_call.1} parent=5 // pred_fallthru
        _
    $region6: #{tpu_custom_call.1} parent=1 // loop_footer
      %s16 = sadd.s32 1, %s12
    $region7: #{tpu_custom_call.1} parent=1 // loop_footer_branch
      %11 = sbr.rel target = $region3
    $region8: #{tpu_custom_call.1} parent=1 // loop_exit
      _
    %9041 = vsyncpa [#allocation3], 1
    %s9042 = scalar_lea.sflag [#allocation3], 1
    %9043 = vsyncpa %s9042, 1

</llo_original>
